<compile_context>
chip_gen: v7x
topology: tpu7x:2x2x1
jax: 0.10.0
libtpu: 0.0.40
codegen_flags: <defaults>
</compile_context>

<pallas_src>
import functools

import jax
import jax.numpy as jnp
from jax import lax
from jax.experimental import pallas as pl
from jax.experimental.pallas import tpu as pltpu


# --------------- fused conv3x3 + bias + InstanceNorm (+ReLU/+res) ----------

def _conv3x3_in_kernel(*refs, eps, relu, has_residual):
    """One grid step = one image.

    x_ref: (1, H+2, W+2, Cin) bf16   reflect-padded input image
    w_ref: (3, 3, Cin, Cout)  bf16   conv weights (resident in VMEM)
    b_ref: (1, Cout)          f32    conv bias
    r_ref: (1, H, W, Cout)    f32    residual (only when has_residual)
    o_ref: (1, H, W, Cout)           output
    """
    if has_residual:
        x_ref, w_ref, b_ref, r_ref, o_ref = refs
    else:
        x_ref, w_ref, b_ref, o_ref = refs
        r_ref = None

    _, Hp, Wp, Cin = x_ref.shape
    H, W = Hp - 2, Wp - 2
    Cout = o_ref.shape[-1]

    # 3x3 conv as nine (H*W, Cin) x (Cin, Cout) MXU matmuls, f32 accumulation.
    acc = jnp.zeros((H * W, Cout), jnp.float32)
    for kh in range(3):
        for kw in range(3):
            win = x_ref[0, kh:kh + H, kw:kw + W, :]          # (H, W, Cin) bf16
            acc = acc + jnp.dot(win.reshape(H * W, Cin),
                                w_ref[kh, kw, :, :],
                                preferred_element_type=jnp.float32)
    acc = acc + b_ref[...]                                   # (1, Cout) bcast

    # InstanceNorm2d(affine=False): per-channel stats over the H*W rows.
    inv_hw = jnp.float32(1.0 / (H * W))
    mean = jnp.sum(acc, axis=0, keepdims=True) * inv_hw      # (1, Cout)
    xc = acc - mean
    var = jnp.sum(xc * xc, axis=0, keepdims=True) * inv_hw
    y = xc * lax.rsqrt(var + eps)
    if relu:
        y = jnp.maximum(y, 0.0)

    y = y.reshape(H, W, Cout)
    if has_residual:
        y = y + r_ref[0].astype(jnp.float32)
    o_ref[0] = y.astype(o_ref.dtype)


def conv3x3_in(xp, w, b, *, relu, residual=None, eps=1e-5,
               out_dtype=jnp.float32):
    """xp: (B, H+2, W+2, Cin) bf16 reflect-padded NHWC input.
    w: (3, 3, Cin, Cout) bf16.  b: (1, Cout) f32.
    residual: optional (B, H, W, Cout) f32 added after the norm."""
    B, Hp, Wp, Cin = xp.shape
    H, W = Hp - 2, Wp - 2
    Cout = w.shape[-1]

    in_specs = [
        pl.BlockSpec((1, Hp, Wp, Cin), lambda bi: (bi, 0, 0, 0)),
        pl.BlockSpec((3, 3, Cin, Cout), lambda bi: (0, 0, 0, 0)),
        pl.BlockSpec((1, Cout), lambda bi: (0, 0)),
    ]
    args = [xp, w, b]
    if residual is not None:
        in_specs.append(pl.BlockSpec((1, H, W, Cout), lambda bi: (bi, 0, 0, 0)))
        args.append(residual)

    out_bytes = B * H * W * Cout * jnp.dtype(out_dtype).itemsize
    res_bytes = (residual.size * residual.dtype.itemsize
                 if residual is not None else 0)
    cost = pl.CostEstimate(
        flops=2 * B * H * W * 9 * Cin * Cout,
        transcendentals=B * Cout,
        bytes_accessed=int(xp.size * 2 + w.size * 2 + b.size * 4
                           + out_bytes + res_bytes))

    kern = functools.partial(_conv3x3_in_kernel, eps=eps, relu=relu,
                             has_residual=residual is not None)
    return pl.pallas_call(
        kern,
        grid=(B,),
        in_specs=in_specs,
        out_specs=pl.BlockSpec((1, H, W, Cout), lambda bi: (bi, 0, 0, 0)),
        out_shape=jax.ShapeDtypeStruct((B, H, W, Cout), out_dtype),
        compiler_params=pltpu.CompilerParams(
            dimension_semantics=("parallel",),
            vmem_limit_bytes=32 * 1024 * 1024),
        cost_estimate=cost,
    )(*args)


# ------------------------------ ResidualBlock ------------------------------

class PallasResidualBlock:
    """x + ConvBlock(act=False)(ConvBlock(act=True)(x)), 3x3 reflect convs."""

    def __init__(self, channels, key=None):
        if key is None:
            key = jax.random.PRNGKey(0)
        k1, k2, k3, k4 = jax.random.split(key, 4)
        scale = (1.0 / (channels * 9)) ** 0.5
        self.w1 = scale * jax.random.normal(k1, (channels, channels, 3, 3),
                                            jnp.float32)
        self.b1 = scale * jax.random.normal(k2, (channels,), jnp.float32)
        self.w2 = scale * jax.random.normal(k3, (channels, channels, 3, 3),
                                            jnp.float32)
        self.b2 = scale * jax.random.normal(k4, (channels,), jnp.float32)

    def __call__(self, x_nchw):
        # NCHW -> NHWC once at the module boundary (channels on the lane dim).
        x = jnp.transpose(x_nchw, (0, 2, 3, 1)).astype(jnp.float32)

        w1 = jnp.transpose(self.w1, (2, 3, 1, 0)).astype(jnp.bfloat16)
        w2 = jnp.transpose(self.w2, (2, 3, 1, 0)).astype(jnp.bfloat16)
        b1 = self.b1.reshape(1, -1).astype(jnp.float32)
        b2 = self.b2.reshape(1, -1).astype(jnp.float32)

        # TODO(synk): reflect padding + layout transposes are plain-JAX glue.
        xp = jnp.pad(x, ((0, 0), (1, 1), (1, 1), (0, 0)),
                     mode="reflect").astype(jnp.bfloat16)
        h = conv3x3_in(xp, w1, b1, relu=True, out_dtype=jnp.bfloat16)
        hp = jnp.pad(h, ((0, 0), (1, 1), (1, 1), (0, 0)), mode="reflect")
        out = conv3x3_in(hp, w2, b2, relu=False, residual=x,
                         out_dtype=jnp.float32)          # x + IN(conv2(h))
        return jnp.transpose(out, (0, 3, 1, 2))          # back to NCHW


# ----------------------------------- main -----------------------------------

if __name__ == "__main__":
    B, C, H, W = 2, 128, 16, 16                           # lane-dense channels

    key = jax.random.PRNGKey(0)
    k_param, k_input = jax.random.split(key)

    block = PallasResidualBlock(C, key=k_param)
    x = jax.random.normal(k_input, (B, C, H, W), jnp.float32)

    fwd = jax.jit(block.__call__)
    out = jax.block_until_ready(fwd(x))

    assert out.shape == (B, C, H, W), out.shape
    assert bool(jnp.all(jnp.isfinite(out)))

    # Pure-JAX reference with the same bf16-rounded conv operands.
    def ref_forward(x_nchw):
        xh = jnp.transpose(x_nchw, (0, 2, 3, 1)).astype(jnp.float32)

        def conv(vp_bf16, w, b):
            vp = vp_bf16.astype(jnp.float32)
            wk = jnp.transpose(w, (2, 3, 1, 0)).astype(jnp.bfloat16)
            wk = wk.astype(jnp.float32)
            y = lax.conv_general_dilated(
                vp, wk, (1, 1), "VALID",
                dimension_numbers=("NHWC", "HWIO", "NHWC"))
            return y + b.reshape(1, 1, 1, -1)

        def inorm(v):
            m = jnp.mean(v, axis=(1, 2), keepdims=True)
            var = jnp.mean((v - m) ** 2, axis=(1, 2), keepdims=True)
            return (v - m) * lax.rsqrt(var + 1e-5)

        xp = jnp.pad(xh, ((0, 0), (1, 1), (1, 1), (0, 0)),
                     mode="reflect").astype(jnp.bfloat16)
        h = jax.nn.relu(inorm(conv(xp, block.w1, block.b1)))
        h = h.astype(jnp.bfloat16)
        hp = jnp.pad(h, ((0, 0), (1, 1), (1, 1), (0, 0)), mode="reflect")
        h2 = inorm(conv(hp, block.w2, block.b2))
        return jnp.transpose(xh + h2, (0, 3, 1, 2))

    ref = jax.block_until_ready(jax.jit(ref_forward)(x))
    max_err = float(jnp.max(jnp.abs(out - ref)))
    assert max_err < 5e-2, f"max abs err vs reference = {max_err}"

    print("KERNEL_OK")
</pallas_src>

<mosaic_0001>
module attributes {stable_mosaic.version = 11 : i64} {
  func.func @_conv3x3_in_kernel(%arg0: i32, %arg1: memref<1x18x18x128xbf16, #tpu.memory_space<vmem>>, %arg2: memref<3x3x128x128xbf16, #tpu.memory_space<vmem>>, %arg3: memref<1x128xf32, #tpu.memory_space<vmem>>, %arg4: memref<1x16x16x128xbf16, #tpu.memory_space<vmem>>) attributes {dimension_semantics = [#tpu.dimension_semantics<parallel>], iteration_bounds = array<i64: 2>, scalar_prefetch = 0 : i64, scratch_operands = 0 : i64, tpu.core_type = #tpu.core_type<tc>, window_params = [{transform_indices = @transform_0, window_bounds = array<i64: 1, 18, 18, 128>}, {pipeline_mode = #tpu.pipeline_mode<synchronous>, transform_indices = @transform_1, window_bounds = array<i64: 3, 3, 128, 128>}, {pipeline_mode = #tpu.pipeline_mode<synchronous>, transform_indices = @transform_2, window_bounds = array<i64: 1, 128>}, {transform_indices = @transform_3, window_bounds = array<i64: 1, 16, 16, 128>}]} {
    %cst = arith.constant 0.000000e+00 : f32
    %0 = vector.broadcast %cst : f32 to vector<256x128xf32>
    %c0 = arith.constant 0 : index
    %c0_0 = arith.constant 0 : index
    %c0_1 = arith.constant 0 : index
    %c0_2 = arith.constant 0 : index
    %1 = vector.load %arg1[%c0, %c0_0, %c0_1, %c0_2] : memref<1x18x18x128xbf16, #tpu.memory_space<vmem>>, vector<1x16x16x128xbf16>
    %2 = vector.shape_cast %1 : vector<1x16x16x128xbf16> to vector<16x16x128xbf16>
    %3 = vector.shape_cast %2 : vector<16x16x128xbf16> to vector<256x128xbf16>
    %c0_3 = arith.constant 0 : index
    %c0_4 = arith.constant 0 : index
    %c0_5 = arith.constant 0 : index
    %c0_6 = arith.constant 0 : index
    %4 = vector.load %arg2[%c0_3, %c0_4, %c0_5, %c0_6] : memref<3x3x128x128xbf16, #tpu.memory_space<vmem>>, vector<1x1x128x128xbf16>
    %5 = vector.shape_cast %4 : vector<1x1x128x128xbf16> to vector<128x128xbf16>
    %cst_7 = arith.constant dense<0.000000e+00> : vector<256x128xf32>
    %6 = tpu.matmul %3, %5, %cst_7 {dimension_numbers = #tpu.dot_dimension_numbers<[1], [0], [0], [1], [0, 0, 1, 1], [], []>} : vector<256x128xbf16>, vector<128x128xbf16>, vector<256x128xf32> -> vector<256x128xf32>
    %7 = arith.addf %0, %6 : vector<256x128xf32>
    %c0_8 = arith.constant 0 : index
    %c0_9 = arith.constant 0 : index
    %c1 = arith.constant 1 : index
    %c0_10 = arith.constant 0 : index
    %8 = vector.load %arg1[%c0_8, %c0_9, %c1, %c0_10] : memref<1x18x18x128xbf16, #tpu.memory_space<vmem>>, vector<1x16x16x128xbf16>
    %9 = vector.shape_cast %8 : vector<1x16x16x128xbf16> to vector<16x16x128xbf16>
    %10 = vector.shape_cast %9 : vector<16x16x128xbf16> to vector<256x128xbf16>
    %c0_11 = arith.constant 0 : index
    %c1_12 = arith.constant 1 : index
    %c0_13 = arith.constant 0 : index
    %c0_14 = arith.constant 0 : index
    %11 = vector.load %arg2[%c0_11, %c1_12, %c0_13, %c0_14] : memref<3x3x128x128xbf16, #tpu.memory_space<vmem>>, vector<1x1x128x128xbf16>
    %12 = vector.shape_cast %11 : vector<1x1x128x128xbf16> to vector<128x128xbf16>
    %cst_15 = arith.constant dense<0.000000e+00> : vector<256x128xf32>
    %13 = tpu.matmul %10, %12, %cst_15 {dimension_numbers = #tpu.dot_dimension_numbers<[1], [0], [0], [1], [0, 0, 1, 1], [], []>} : vector<256x128xbf16>, vector<128x128xbf16>, vector<256x128xf32> -> vector<256x128xf32>
    %14 = arith.addf %7, %13 : vector<256x128xf32>
    %c0_16 = arith.constant 0 : index
    %c0_17 = arith.constant 0 : index
    %c2 = arith.constant 2 : index
    %c0_18 = arith.constant 0 : index
    %15 = vector.load %arg1[%c0_16, %c0_17, %c2, %c0_18] : memref<1x18x18x128xbf16, #tpu.memory_space<vmem>>, vector<1x16x16x128xbf16>
    %16 = vector.shape_cast %15 : vector<1x16x16x128xbf16> to vector<16x16x128xbf16>
    %17 = vector.shape_cast %16 : vector<16x16x128xbf16> to vector<256x128xbf16>
    %c0_19 = arith.constant 0 : index
    %c2_20 = arith.constant 2 : index
    %c0_21 = arith.constant 0 : index
    %c0_22 = arith.constant 0 : index
    %18 = vector.load %arg2[%c0_19, %c2_20, %c0_21, %c0_22] : memref<3x3x128x128xbf16, #tpu.memory_space<vmem>>, vector<1x1x128x128xbf16>
    %19 = vector.shape_cast %18 : vector<1x1x128x128xbf16> to vector<128x128xbf16>
    %cst_23 = arith.constant dense<0.000000e+00> : vector<256x128xf32>
    %20 = tpu.matmul %17, %19, %cst_23 {dimension_numbers = #tpu.dot_dimension_numbers<[1], [0], [0], [1], [0, 0, 1, 1], [], []>} : vector<256x128xbf16>, vector<128x128xbf16>, vector<256x128xf32> -> vector<256x128xf32>
    %21 = arith.addf %14, %20 : vector<256x128xf32>
    %c0_24 = arith.constant 0 : index
    %c1_25 = arith.constant 1 : index
    %c0_26 = arith.constant 0 : index
    %c0_27 = arith.constant 0 : index
    %22 = vector.load %arg1[%c0_24, %c1_25, %c0_26, %c0_27] : memref<1x18x18x128xbf16, #tpu.memory_space<vmem>>, vector<1x16x16x128xbf16>
    %23 = vector.shape_cast %22 : vector<1x16x16x128xbf16> to vector<16x16x128xbf16>
    %24 = vector.shape_cast %23 : vector<16x16x128xbf16> to vector<256x128xbf16>
    %c1_28 = arith.constant 1 : index
    %c0_29 = arith.constant 0 : index
    %c0_30 = arith.constant 0 : index
    %c0_31 = arith.constant 0 : index
    %25 = vector.load %arg2[%c1_28, %c0_29, %c0_30, %c0_31] : memref<3x3x128x128xbf16, #tpu.memory_space<vmem>>, vector<1x1x128x128xbf16>
    %26 = vector.shape_cast %25 : vector<1x1x128x128xbf16> to vector<128x128xbf16>
    %cst_32 = arith.constant dense<0.000000e+00> : vector<256x128xf32>
    %27 = tpu.matmul %24, %26, %cst_32 {dimension_numbers = #tpu.dot_dimension_numbers<[1], [0], [0], [1], [0, 0, 1, 1], [], []>} : vector<256x128xbf16>, vector<128x128xbf16>, vector<256x128xf32> -> vector<256x128xf32>
    %28 = arith.addf %21, %27 : vector<256x128xf32>
    %c0_33 = arith.constant 0 : index
    %c1_34 = arith.constant 1 : index
    %c1_35 = arith.constant 1 : index
    %c0_36 = arith.constant 0 : index
    %29 = vector.load %arg1[%c0_33, %c1_34, %c1_35, %c0_36] : memref<1x18x18x128xbf16, #tpu.memory_space<vmem>>, vector<1x16x16x128xbf16>
    %30 = vector.shape_cast %29 : vector<1x16x16x128xbf16> to vector<16x16x128xbf16>
    %31 = vector.shape_cast %30 : vector<16x16x128xbf16> to vector<256x128xbf16>
    %c1_37 = arith.constant 1 : index
    %c1_38 = arith.constant 1 : index
    %c0_39 = arith.constant 0 : index
    %c0_40 = arith.constant 0 : index
    %32 = vector.load %arg2[%c1_37, %c1_38, %c0_39, %c0_40] : memref<3x3x128x128xbf16, #tpu.memory_space<vmem>>, vector<1x1x128x128xbf16>
    %33 = vector.shape_cast %32 : vector<1x1x128x128xbf16> to vector<128x128xbf16>
    %cst_41 = arith.constant dense<0.000000e+00> : vector<256x128xf32>
    %34 = tpu.matmul %31, %33, %cst_41 {dimension_numbers = #tpu.dot_dimension_numbers<[1], [0], [0], [1], [0, 0, 1, 1], [], []>} : vector<256x128xbf16>, vector<128x128xbf16>, vector<256x128xf32> -> vector<256x128xf32>
    %35 = arith.addf %28, %34 : vector<256x128xf32>
    %c0_42 = arith.constant 0 : index
    %c1_43 = arith.constant 1 : index
    %c2_44 = arith.constant 2 : index
    %c0_45 = arith.constant 0 : index
    %36 = vector.load %arg1[%c0_42, %c1_43, %c2_44, %c0_45] : memref<1x18x18x128xbf16, #tpu.memory_space<vmem>>, vector<1x16x16x128xbf16>
    %37 = vector.shape_cast %36 : vector<1x16x16x128xbf16> to vector<16x16x128xbf16>
    %38 = vector.shape_cast %37 : vector<16x16x128xbf16> to vector<256x128xbf16>
    %c1_46 = arith.constant 1 : index
    %c2_47 = arith.constant 2 : index
    %c0_48 = arith.constant 0 : index
    %c0_49 = arith.constant 0 : index
    %39 = vector.load %arg2[%c1_46, %c2_47, %c0_48, %c0_49] : memref<3x3x128x128xbf16, #tpu.memory_space<vmem>>, vector<1x1x128x128xbf16>
    %40 = vector.shape_cast %39 : vector<1x1x128x128xbf16> to vector<128x128xbf16>
    %cst_50 = arith.constant dense<0.000000e+00> : vector<256x128xf32>
    %41 = tpu.matmul %38, %40, %cst_50 {dimension_numbers = #tpu.dot_dimension_numbers<[1], [0], [0], [1], [0, 0, 1, 1], [], []>} : vector<256x128xbf16>, vector<128x128xbf16>, vector<256x128xf32> -> vector<256x128xf32>
    %42 = arith.addf %35, %41 : vector<256x128xf32>
    %c0_51 = arith.constant 0 : index
    %c2_52 = arith.constant 2 : index
    %c0_53 = arith.constant 0 : index
    %c0_54 = arith.constant 0 : index
    %43 = vector.load %arg1[%c0_51, %c2_52, %c0_53, %c0_54] : memref<1x18x18x128xbf16, #tpu.memory_space<vmem>>, vector<1x16x16x128xbf16>
    %44 = vector.shape_cast %43 : vector<1x16x16x128xbf16> to vector<16x16x128xbf16>
    %45 = vector.shape_cast %44 : vector<16x16x128xbf16> to vector<256x128xbf16>
    %c2_55 = arith.constant 2 : index
    %c0_56 = arith.constant 0 : index
    %c0_57 = arith.constant 0 : index
    %c0_58 = arith.constant 0 : index
    %46 = vector.load %arg2[%c2_55, %c0_56, %c0_57, %c0_58] : memref<3x3x128x128xbf16, #tpu.memory_space<vmem>>, vector<1x1x128x128xbf16>
    %47 = vector.shape_cast %46 : vector<1x1x128x128xbf16> to vector<128x128xbf16>
    %cst_59 = arith.constant dense<0.000000e+00> : vector<256x128xf32>
    %48 = tpu.matmul %45, %47, %cst_59 {dimension_numbers = #tpu.dot_dimension_numbers<[1], [0], [0], [1], [0, 0, 1, 1], [], []>} : vector<256x128xbf16>, vector<128x128xbf16>, vector<256x128xf32> -> vector<256x128xf32>
    %49 = arith.addf %42, %48 : vector<256x128xf32>
    %c0_60 = arith.constant 0 : index
    %c2_61 = arith.constant 2 : index
    %c1_62 = arith.constant 1 : index
    %c0_63 = arith.constant 0 : index
    %50 = vector.load %arg1[%c0_60, %c2_61, %c1_62, %c0_63] : memref<1x18x18x128xbf16, #tpu.memory_space<vmem>>, vector<1x16x16x128xbf16>
    %51 = vector.shape_cast %50 : vector<1x16x16x128xbf16> to vector<16x16x128xbf16>
    %52 = vector.shape_cast %51 : vector<16x16x128xbf16> to vector<256x128xbf16>
    %c2_64 = arith.constant 2 : index
    %c1_65 = arith.constant 1 : index
    %c0_66 = arith.constant 0 : index
    %c0_67 = arith.constant 0 : index
    %53 = vector.load %arg2[%c2_64, %c1_65, %c0_66, %c0_67] : memref<3x3x128x128xbf16, #tpu.memory_space<vmem>>, vector<1x1x128x128xbf16>
    %54 = vector.shape_cast %53 : vector<1x1x128x128xbf16> to vector<128x128xbf16>
    %cst_68 = arith.constant dense<0.000000e+00> : vector<256x128xf32>
    %55 = tpu.matmul %52, %54, %cst_68 {dimension_numbers = #tpu.dot_dimension_numbers<[1], [0], [0], [1], [0, 0, 1, 1], [], []>} : vector<256x128xbf16>, vector<128x128xbf16>, vector<256x128xf32> -> vector<256x128xf32>
    %56 = arith.addf %49, %55 : vector<256x128xf32>
    %c0_69 = arith.constant 0 : index
    %c2_70 = arith.constant 2 : index
    %c2_71 = arith.constant 2 : index
    %c0_72 = arith.constant 0 : index
    %57 = vector.load %arg1[%c0_69, %c2_70, %c2_71, %c0_72] : memref<1x18x18x128xbf16, #tpu.memory_space<vmem>>, vector<1x16x16x128xbf16>
    %58 = vector.shape_cast %57 : vector<1x16x16x128xbf16> to vector<16x16x128xbf16>
    %59 = vector.shape_cast %58 : vector<16x16x128xbf16> to vector<256x128xbf16>
    %c2_73 = arith.constant 2 : index
    %c2_74 = arith.constant 2 : index
    %c0_75 = arith.constant 0 : index
    %c0_76 = arith.constant 0 : index
    %60 = vector.load %arg2[%c2_73, %c2_74, %c0_75, %c0_76] : memref<3x3x128x128xbf16, #tpu.memory_space<vmem>>, vector<1x1x128x128xbf16>
    %61 = vector.shape_cast %60 : vector<1x1x128x128xbf16> to vector<128x128xbf16>
    %cst_77 = arith.constant dense<0.000000e+00> : vector<256x128xf32>
    %62 = tpu.matmul %59, %61, %cst_77 {dimension_numbers = #tpu.dot_dimension_numbers<[1], [0], [0], [1], [0, 0, 1, 1], [], []>} : vector<256x128xbf16>, vector<128x128xbf16>, vector<256x128xf32> -> vector<256x128xf32>
    %63 = arith.addf %56, %62 : vector<256x128xf32>
    %c0_78 = arith.constant 0 : index
    %c0_79 = arith.constant 0 : index
    %64 = vector.load %arg3[%c0_78, %c0_79] : memref<1x128xf32, #tpu.memory_space<vmem>>, vector<1x128xf32>
    %65 = vector.broadcast %64 : vector<1x128xf32> to vector<256x128xf32>
    %66 = arith.addf %63, %65 : vector<256x128xf32>
    %cst_80 = arith.constant dense<0.000000e+00> : vector<128xf32>
    %67 = vector.multi_reduction <add>, %66, %cst_80 [0] : vector<256x128xf32> to vector<128xf32>
    %68 = vector.shape_cast %67 : vector<128xf32> to vector<1x128xf32>
    %cst_81 = arith.constant 3.906250e-03 : f32
    %69 = vector.broadcast %cst_81 : f32 to vector<1x128xf32>
    %70 = arith.mulf %68, %69 : vector<1x128xf32>
    %71 = vector.broadcast %70 : vector<1x128xf32> to vector<256x128xf32>
    %72 = arith.subf %66, %71 : vector<256x128xf32>
    %73 = arith.mulf %72, %72 : vector<256x128xf32>
    %cst_82 = arith.constant dense<0.000000e+00> : vector<128xf32>
    %74 = vector.multi_reduction <add>, %73, %cst_82 [0] : vector<256x128xf32> to vector<128xf32>
    %75 = vector.shape_cast %74 : vector<128xf32> to vector<1x128xf32>
    %cst_83 = arith.constant 3.906250e-03 : f32
    %76 = vector.broadcast %cst_83 : f32 to vector<1x128xf32>
    %77 = arith.mulf %75, %76 : vector<1x128xf32>
    %cst_84 = arith.constant 9.99999974E-6 : f32
    %78 = vector.broadcast %cst_84 : f32 to vector<1x128xf32>
    %79 = arith.addf %77, %78 : vector<1x128xf32>
    %80 = math.rsqrt %79 : vector<1x128xf32>
    %81 = vector.broadcast %80 : vector<1x128xf32> to vector<256x128xf32>
    %82 = arith.mulf %72, %81 : vector<256x128xf32>
    %cst_85 = arith.constant 0.000000e+00 : f32
    %83 = vector.broadcast %cst_85 : f32 to vector<256x128xf32>
    %84 = arith.maximumf %82, %83 : vector<256x128xf32>
    %85 = vector.shape_cast %84 : vector<256x128xf32> to vector<16x16x128xf32>
    %86 = arith.truncf %85 : vector<16x16x128xf32> to vector<16x16x128xbf16>
    %c0_86 = arith.constant 0 : index
    %c0_87 = arith.constant 0 : index
    %c0_88 = arith.constant 0 : index
    %c0_89 = arith.constant 0 : index
    %87 = vector.load %arg4[%c0_86, %c0_87, %c0_88, %c0_89] : memref<1x16x16x128xbf16, #tpu.memory_space<vmem>>, vector<1x16x16x128xbf16>
    %88 = vector.shape_cast %87 : vector<1x16x16x128xbf16> to vector<16x16x128xbf16>
    %89 = vector.shape_cast %86 : vector<16x16x128xbf16> to vector<1x16x16x128xbf16>
    tpu.vector_store %arg4[%c0_86, %c0_87, %c0_88, %c0_89], %89 {strides = array<i32>} : memref<1x16x16x128xbf16, #tpu.memory_space<vmem>>, vector<1x16x16x128xbf16>,
    return
  }
  func.func @transform_0(%arg0: i32) -> (i32, i32, i32, i32) {
    %c0_i32 = arith.constant 0 : i32
    %c0_i32_0 = arith.constant 0 : i32
    %c0_i32_1 = arith.constant 0 : i32
    %c0_i32_2 = arith.constant 0 : i32
    return %arg0, %c0_i32, %c0_i32_0, %c0_i32_1 : i32, i32, i32, i32
  }
  func.func @transform_1(%arg0: i32) -> (i32, i32, i32, i32) {
    %c0_i32 = arith.constant 0 : i32
    %c0_i32_0 = arith.constant 0 : i32
    %c0_i32_1 = arith.constant 0 : i32
    %c0_i32_2 = arith.constant 0 : i32
    %c0_i32_3 = arith.constant 0 : i32
    return %c0_i32, %c0_i32_0, %c0_i32_1, %c0_i32_2 : i32, i32, i32, i32
  }
  func.func @transform_2(%arg0: i32) -> (i32, i32) {
    %c0_i32 = arith.constant 0 : i32
    %c0_i32_0 = arith.constant 0 : i32
    %c0_i32_1 = arith.constant 0 : i32
    return %c0_i32, %c0_i32_0 : i32, i32
  }
  func.func @transform_3(%arg0: i32) -> (i32, i32, i32, i32) {
    %c0_i32 = arith.constant 0 : i32
    %c0_i32_0 = arith.constant 0 : i32
    %c0_i32_1 = arith.constant 0 : i32
    %c0_i32_2 = arith.constant 0 : i32
    return %arg0, %c0_i32, %c0_i32_0, %c0_i32_1 : i32, i32, i32, i32
  }
}

module attributes {stable_mosaic.version = 11 : i64} {
  func.func @_conv3x3_in_kernel(%arg0: i32, %arg1: memref<1x18x18x128xbf16, #tpu.memory_space<vmem>>, %arg2: memref<3x3x128x128xbf16, #tpu.memory_space<vmem>>, %arg3: memref<1x128xf32, #tpu.memory_space<vmem>>, %arg4: memref<1x16x16x128xf32, #tpu.memory_space<vmem>>, %arg5: memref<1x16x16x128xf32, #tpu.memory_space<vmem>>) attributes {dimension_semantics = [#tpu.dimension_semantics<parallel>], iteration_bounds = array<i64: 2>, scalar_prefetch = 0 : i64, scratch_operands = 0 : i64, tpu.core_type = #tpu.core_type<tc>, window_params = [{transform_indices = @transform_0, window_bounds = array<i64: 1, 18, 18, 128>}, {pipeline_mode = #tpu.pipeline_mode<synchronous>, transform_indices = @transform_1, window_bounds = array<i64: 3, 3, 128, 128>}, {pipeline_mode = #tpu.pipeline_mode<synchronous>, transform_indices = @transform_2, window_bounds = array<i64: 1, 128>}, {transform_indices = @transform_3, window_bounds = array<i64: 1, 16, 16, 128>}, {transform_indices = @transform_4, window_bounds = array<i64: 1, 16, 16, 128>}]} {
    %cst = arith.constant 0.000000e+00 : f32
    %0 = vector.broadcast %cst : f32 to vector<256x128xf32>
    %c0 = arith.constant 0 : index
    %c0_0 = arith.constant 0 : index
    %c0_1 = arith.constant 0 : index
    %c0_2 = arith.constant 0 : index
    %1 = vector.load %arg1[%c0, %c0_0, %c0_1, %c0_2] : memref<1x18x18x128xbf16, #tpu.memory_space<vmem>>, vector<1x16x16x128xbf16>
    %2 = vector.shape_cast %1 : vector<1x16x16x128xbf16> to vector<16x16x128xbf16>
    %3 = vector.shape_cast %2 : vector<16x16x128xbf16> to vector<256x128xbf16>
    %c0_3 = arith.constant 0 : index
    %c0_4 = arith.constant 0 : index
    %c0_5 = arith.constant 0 : index
    %c0_6 = arith.constant 0 : index
    %4 = vector.load %arg2[%c0_3, %c0_4, %c0_5, %c0_6] : memref<3x3x128x128xbf16, #tpu.memory_space<vmem>>, vector<1x1x128x128xbf16>
    %5 = vector.shape_cast %4 : vector<1x1x128x128xbf16> to vector<128x128xbf16>
    %cst_7 = arith.constant dense<0.000000e+00> : vector<256x128xf32>
    %6 = tpu.matmul %3, %5, %cst_7 {dimension_numbers = #tpu.dot_dimension_numbers<[1], [0], [0], [1], [0, 0, 1, 1], [], []>} : vector<256x128xbf16>, vector<128x128xbf16>, vector<256x128xf32> -> vector<256x128xf32>
    %7 = arith.addf %0, %6 : vector<256x128xf32>
    %c0_8 = arith.constant 0 : index
    %c0_9 = arith.constant 0 : index
    %c1 = arith.constant 1 : index
    %c0_10 = arith.constant 0 : index
    %8 = vector.load %arg1[%c0_8, %c0_9, %c1, %c0_10] : memref<1x18x18x128xbf16, #tpu.memory_space<vmem>>, vector<1x16x16x128xbf16>
    %9 = vector.shape_cast %8 : vector<1x16x16x128xbf16> to vector<16x16x128xbf16>
    %10 = vector.shape_cast %9 : vector<16x16x128xbf16> to vector<256x128xbf16>
    %c0_11 = arith.constant 0 : index
    %c1_12 = arith.constant 1 : index
    %c0_13 = arith.constant 0 : index
    %c0_14 = arith.constant 0 : index
    %11 = vector.load %arg2[%c0_11, %c1_12, %c0_13, %c0_14] : memref<3x3x128x128xbf16, #tpu.memory_space<vmem>>, vector<1x1x128x128xbf16>
    %12 = vector.shape_cast %11 : vector<1x1x128x128xbf16> to vector<128x128xbf16>
    %cst_15 = arith.constant dense<0.000000e+00> : vector<256x128xf32>
    %13 = tpu.matmul %10, %12, %cst_15 {dimension_numbers = #tpu.dot_dimension_numbers<[1], [0], [0], [1], [0, 0, 1, 1], [], []>} : vector<256x128xbf16>, vector<128x128xbf16>, vector<256x128xf32> -> vector<256x128xf32>
    %14 = arith.addf %7, %13 : vector<256x128xf32>
    %c0_16 = arith.constant 0 : index
    %c0_17 = arith.constant 0 : index
    %c2 = arith.constant 2 : index
    %c0_18 = arith.constant 0 : index
    %15 = vector.load %arg1[%c0_16, %c0_17, %c2, %c0_18] : memref<1x18x18x128xbf16, #tpu.memory_space<vmem>>, vector<1x16x16x128xbf16>
    %16 = vector.shape_cast %15 : vector<1x16x16x128xbf16> to vector<16x16x128xbf16>
    %17 = vector.shape_cast %16 : vector<16x16x128xbf16> to vector<256x128xbf16>
    %c0_19 = arith.constant 0 : index
    %c2_20 = arith.constant 2 : index
    %c0_21 = arith.constant 0 : index
    %c0_22 = arith.constant 0 : index
    %18 = vector.load %arg2[%c0_19, %c2_20, %c0_21, %c0_22] : memref<3x3x128x128xbf16, #tpu.memory_space<vmem>>, vector<1x1x128x128xbf16>
    %19 = vector.shape_cast %18 : vector<1x1x128x128xbf16> to vector<128x128xbf16>
    %cst_23 = arith.constant dense<0.000000e+00> : vector<256x128xf32>
    %20 = tpu.matmul %17, %19, %cst_23 {dimension_numbers = #tpu.dot_dimension_numbers<[1], [0], [0], [1], [0, 0, 1, 1], [], []>} : vector<256x128xbf16>, vector<128x128xbf16>, vector<256x128xf32> -> vector<256x128xf32>
    %21 = arith.addf %14, %20 : vector<256x128xf32>
    %c0_24 = arith.constant 0 : index
    %c1_25 = arith.constant 1 : index
    %c0_26 = arith.constant 0 : index
    %c0_27 = arith.constant 0 : index
    %22 = vector.load %arg1[%c0_24, %c1_25, %c0_26, %c0_27] : memref<1x18x18x128xbf16, #tpu.memory_space<vmem>>, vector<1x16x16x128xbf16>
    %23 = vector.shape_cast %22 : vector<1x16x16x128xbf16> to vector<16x16x128xbf16>
    %24 = vector.shape_cast %23 : vector<16x16x128xbf16> to vector<256x128xbf16>
    %c1_28 = arith.constant 1 : index
    %c0_29 = arith.constant 0 : index
    %c0_30 = arith.constant 0 : index
    %c0_31 = arith.constant 0 : index
    %25 = vector.load %arg2[%c1_28, %c0_29, %c0_30, %c0_31] : memref<3x3x128x128xbf16, #tpu.memory_space<vmem>>, vector<1x1x128x128xbf16>
    %26 = vector.shape_cast %25 : vector<1x1x128x128xbf16> to vector<128x128xbf16>
    %cst_32 = arith.constant dense<0.000000e+00> : vector<256x128xf32>
    %27 = tpu.matmul %24, %26, %cst_32 {dimension_numbers = #tpu.dot_dimension_numbers<[1], [0], [0], [1], [0, 0, 1, 1], [], []>} : vector<256x128xbf16>, vector<128x128xbf16>, vector<256x128xf32> -> vector<256x128xf32>
    %28 = arith.addf %21, %27 : vector<256x128xf32>
    %c0_33 = arith.constant 0 : index
    %c1_34 = arith.constant 1 : index
    %c1_35 = arith.constant 1 : index
    %c0_36 = arith.constant 0 : index
    %29 = vector.load %arg1[%c0_33, %c1_34, %c1_35, %c0_36] : memref<1x18x18x128xbf16, #tpu.memory_space<vmem>>, vector<1x16x16x128xbf16>
    %30 = vector.shape_cast %29 : vector<1x16x16x128xbf16> to vector<16x16x128xbf16>
    %31 = vector.shape_cast %30 : vector<16x16x128xbf16> to vector<256x128xbf16>
    %c1_37 = arith.constant 1 : index
    %c1_38 = arith.constant 1 : index
    %c0_39 = arith.constant 0 : index
    %c0_40 = arith.constant 0 : index
    %32 = vector.load %arg2[%c1_37, %c1_38, %c0_39, %c0_40] : memref<3x3x128x128xbf16, #tpu.memory_space<vmem>>, vector<1x1x128x128xbf16>
    %33 = vector.shape_cast %32 : vector<1x1x128x128xbf16> to vector<128x128xbf16>
    %cst_41 = arith.constant dense<0.000000e+00> : vector<256x128xf32>
    %34 = tpu.matmul %31, %33, %cst_41 {dimension_numbers = #tpu.dot_dimension_numbers<[1], [0], [0], [1], [0, 0, 1, 1], [], []>} : vector<256x128xbf16>, vector<128x128xbf16>, vector<256x128xf32> -> vector<256x128xf32>
    %35 = arith.addf %28, %34 : vector<256x128xf32>
    %c0_42 = arith.constant 0 : index
    %c1_43 = arith.constant 1 : index
    %c2_44 = arith.constant 2 : index
    %c0_45 = arith.constant 0 : index
    %36 = vector.load %arg1[%c0_42, %c1_43, %c2_44, %c0_45] : memref<1x18x18x128xbf16, #tpu.memory_space<vmem>>, vector<1x16x16x128xbf16>
    %37 = vector.shape_cast %36 : vector<1x16x16x128xbf16> to vector<16x16x128xbf16>
    %38 = vector.shape_cast %37 : vector<16x16x128xbf16> to vector<256x128xbf16>
    %c1_46 = arith.constant 1 : index
    %c2_47 = arith.constant 2 : index
    %c0_48 = arith.constant 0 : index
    %c0_49 = arith.constant 0 : index
    %39 = vector.load %arg2[%c1_46, %c2_47, %c0_48, %c0_49] : memref<3x3x128x128xbf16, #tpu.memory_space<vmem>>, vector<1x1x128x128xbf16>
    %40 = vector.shape_cast %39 : vector<1x1x128x128xbf16> to vector<128x128xbf16>
    %cst_50 = arith.constant dense<0.000000e+00> : vector<256x128xf32>
    %41 = tpu.matmul %38, %40, %cst_50 {dimension_numbers = #tpu.dot_dimension_numbers<[1], [0], [0], [1], [0, 0, 1, 1], [], []>} : vector<256x128xbf16>, vector<128x128xbf16>, vector<256x128xf32> -> vector<256x128xf32>
    %42 = arith.addf %35, %41 : vector<256x128xf32>
    %c0_51 = arith.constant 0 : index
    %c2_52 = arith.constant 2 : index
    %c0_53 = arith.constant 0 : index
    %c0_54 = arith.constant 0 : index
    %43 = vector.load %arg1[%c0_51, %c2_52, %c0_53, %c0_54] : memref<1x18x18x128xbf16, #tpu.memory_space<vmem>>, vector<1x16x16x128xbf16>
    %44 = vector.shape_cast %43 : vector<1x16x16x128xbf16> to vector<16x16x128xbf16>
    %45 = vector.shape_cast %44 : vector<16x16x128xbf16> to vector<256x128xbf16>
    %c2_55 = arith.constant 2 : index
    %c0_56 = arith.constant 0 : index
    %c0_57 = arith.constant 0 : index
    %c0_58 = arith.constant 0 : index
    %46 = vector.load %arg2[%c2_55, %c0_56, %c0_57, %c0_58] : memref<3x3x128x128xbf16, #tpu.memory_space<vmem>>, vector<1x1x128x128xbf16>
    %47 = vector.shape_cast %46 : vector<1x1x128x128xbf16> to vector<128x128xbf16>
    %cst_59 = arith.constant dense<0.000000e+00> : vector<256x128xf32>
    %48 = tpu.matmul %45, %47, %cst_59 {dimension_numbers = #tpu.dot_dimension_numbers<[1], [0], [0], [1], [0, 0, 1, 1], [], []>} : vector<256x128xbf16>, vector<128x128xbf16>, vector<256x128xf32> -> vector<256x128xf32>
    %49 = arith.addf %42, %48 : vector<256x128xf32>
    %c0_60 = arith.constant 0 : index
    %c2_61 = arith.constant 2 : index
    %c1_62 = arith.constant 1 : index
    %c0_63 = arith.constant 0 : index
    %50 = vector.load %arg1[%c0_60, %c2_61, %c1_62, %c0_63] : memref<1x18x18x128xbf16, #tpu.memory_space<vmem>>, vector<1x16x16x128xbf16>
    %51 = vector.shape_cast %50 : vector<1x16x16x128xbf16> to vector<16x16x128xbf16>
    %52 = vector.shape_cast %51 : vector<16x16x128xbf16> to vector<256x128xbf16>
    %c2_64 = arith.constant 2 : index
    %c1_65 = arith.constant 1 : index
    %c0_66 = arith.constant 0 : index
    %c0_67 = arith.constant 0 : index
    %53 = vector.load %arg2[%c2_64, %c1_65, %c0_66, %c0_67] : memref<3x3x128x128xbf16, #tpu.memory_space<vmem>>, vector<1x1x128x128xbf16>
    %54 = vector.shape_cast %53 : vector<1x1x128x128xbf16> to vector<128x128xbf16>
    %cst_68 = arith.constant dense<0.000000e+00> : vector<256x128xf32>
    %55 = tpu.matmul %52, %54, %cst_68 {dimension_numbers = #tpu.dot_dimension_numbers<[1], [0], [0], [1], [0, 0, 1, 1], [], []>} : vector<256x128xbf16>, vector<128x128xbf16>, vector<256x128xf32> -> vector<256x128xf32>
    %56 = arith.addf %49, %55 : vector<256x128xf32>
    %c0_69 = arith.constant 0 : index
    %c2_70 = arith.constant 2 : index
    %c2_71 = arith.constant 2 : index
    %c0_72 = arith.constant 0 : index
    %57 = vector.load %arg1[%c0_69, %c2_70, %c2_71, %c0_72] : memref<1x18x18x128xbf16, #tpu.memory_space<vmem>>, vector<1x16x16x128xbf16>
    %58 = vector.shape_cast %57 : vector<1x16x16x128xbf16> to vector<16x16x128xbf16>
    %59 = vector.shape_cast %58 : vector<16x16x128xbf16> to vector<256x128xbf16>
    %c2_73 = arith.constant 2 : index
    %c2_74 = arith.constant 2 : index
    %c0_75 = arith.constant 0 : index
    %c0_76 = arith.constant 0 : index
    %60 = vector.load %arg2[%c2_73, %c2_74, %c0_75, %c0_76] : memref<3x3x128x128xbf16, #tpu.memory_space<vmem>>, vector<1x1x128x128xbf16>
    %61 = vector.shape_cast %60 : vector<1x1x128x128xbf16> to vector<128x128xbf16>
    %cst_77 = arith.constant dense<0.000000e+00> : vector<256x128xf32>
    %62 = tpu.matmul %59, %61, %cst_77 {dimension_numbers = #tpu.dot_dimension_numbers<[1], [0], [0], [1], [0, 0, 1, 1], [], []>} : vector<256x128xbf16>, vector<128x128xbf16>, vector<256x128xf32> -> vector<256x128xf32>
    %63 = arith.addf %56, %62 : vector<256x128xf32>
    %c0_78 = arith.constant 0 : index
    %c0_79 = arith.constant 0 : index
    %64 = vector.load %arg3[%c0_78, %c0_79] : memref<1x128xf32, #tpu.memory_space<vmem>>, vector<1x128xf32>
    %65 = vector.broadcast %64 : vector<1x128xf32> to vector<256x128xf32>
    %66 = arith.addf %63, %65 : vector<256x128xf32>
    %cst_80 = arith.constant dense<0.000000e+00> : vector<128xf32>
    %67 = vector.multi_reduction <add>, %66, %cst_80 [0] : vector<256x128xf32> to vector<128xf32>
    %68 = vector.shape_cast %67 : vector<128xf32> to vector<1x128xf32>
    %cst_81 = arith.constant 3.906250e-03 : f32
    %69 = vector.broadcast %cst_81 : f32 to vector<1x128xf32>
    %70 = arith.mulf %68, %69 : vector<1x128xf32>
    %71 = vector.broadcast %70 : vector<1x128xf32> to vector<256x128xf32>
    %72 = arith.subf %66, %71 : vector<256x128xf32>
    %73 = arith.mulf %72, %72 : vector<256x128xf32>
    %cst_82 = arith.constant dense<0.000000e+00> : vector<128xf32>
    %74 = vector.multi_reduction <add>, %73, %cst_82 [0] : vector<256x128xf32> to vector<128xf32>
    %75 = vector.shape_cast %74 : vector<128xf32> to vector<1x128xf32>
    %cst_83 = arith.constant 3.906250e-03 : f32
    %76 = vector.broadcast %cst_83 : f32 to vector<1x128xf32>
    %77 = arith.mulf %75, %76 : vector<1x128xf32>
    %cst_84 = arith.constant 9.99999974E-6 : f32
    %78 = vector.broadcast %cst_84 : f32 to vector<1x128xf32>
    %79 = arith.addf %77, %78 : vector<1x128xf32>
    %80 = math.rsqrt %79 : vector<1x128xf32>
    %81 = vector.broadcast %80 : vector<1x128xf32> to vector<256x128xf32>
    %82 = arith.mulf %72, %81 : vector<256x128xf32>
    %83 = vector.shape_cast %82 : vector<256x128xf32> to vector<16x16x128xf32>
    %c0_85 = arith.constant 0 : index
    %c0_86 = arith.constant 0 : index
    %c0_87 = arith.constant 0 : index
    %c0_88 = arith.constant 0 : index
    %84 = vector.load %arg4[%c0_85, %c0_86, %c0_87, %c0_88] : memref<1x16x16x128xf32, #tpu.memory_space<vmem>>, vector<1x16x16x128xf32>
    %85 = vector.shape_cast %84 : vector<1x16x16x128xf32> to vector<16x16x128xf32>
    %86 = arith.addf %83, %85 : vector<16x16x128xf32>
    %c0_89 = arith.constant 0 : index
    %c0_90 = arith.constant 0 : index
    %c0_91 = arith.constant 0 : index
    %c0_92 = arith.constant 0 : index
    %87 = vector.load %arg5[%c0_89, %c0_90, %c0_91, %c0_92] : memref<1x16x16x128xf32, #tpu.memory_space<vmem>>, vector<1x16x16x128xf32>
    %88 = vector.shape_cast %87 : vector<1x16x16x128xf32> to vector<16x16x128xf32>
    %89 = vector.shape_cast %86 : vector<16x16x128xf32> to vector<1x16x16x128xf32>
    tpu.vector_store %arg5[%c0_89, %c0_90, %c0_91, %c0_92], %89 {strides = array<i32>} : memref<1x16x16x128xf32, #tpu.memory_space<vmem>>, vector<1x16x16x128xf32>,
    return
  }
  func.func @transform_0(%arg0: i32) -> (i32, i32, i32, i32) {
    %c0_i32 = arith.constant 0 : i32
    %c0_i32_0 = arith.constant 0 : i32
    %c0_i32_1 = arith.constant 0 : i32
    %c0_i32_2 = arith.constant 0 : i32
    return %arg0, %c0_i32, %c0_i32_0, %c0_i32_1 : i32, i32, i32, i32
  }
  func.func @transform_1(%arg0: i32) -> (i32, i32, i32, i32) {
    %c0_i32 = arith.constant 0 : i32
    %c0_i32_0 = arith.constant 0 : i32
    %c0_i32_1 = arith.constant 0 : i32
    %c0_i32_2 = arith.constant 0 : i32
    %c0_i32_3 = arith.constant 0 : i32
    return %c0_i32, %c0_i32_0, %c0_i32_1, %c0_i32_2 : i32, i32, i32, i32
  }
  func.func @transform_2(%arg0: i32) -> (i32, i32) {
    %c0_i32 = arith.constant 0 : i32
    %c0_i32_0 = arith.constant 0 : i32
    %c0_i32_1 = arith.constant 0 : i32
    return %c0_i32, %c0_i32_0 : i32, i32
  }
  func.func @transform_3(%arg0: i32) -> (i32, i32, i32, i32) {
    %c0_i32 = arith.constant 0 : i32
    %c0_i32_0 = arith.constant 0 : i32
    %c0_i32_1 = arith.constant 0 : i32
    %c0_i32_2 = arith.constant 0 : i32
    return %arg0, %c0_i32, %c0_i32_0, %c0_i32_1 : i32, i32, i32, i32
  }
  func.func @transform_4(%arg0: i32) -> (i32, i32, i32, i32) {
    %c0_i32 = arith.constant 0 : i32
    %c0_i32_0 = arith.constant 0 : i32
    %c0_i32_1 = arith.constant 0 : i32
    %c0_i32_2 = arith.constant 0 : i32
    return %arg0, %c0_i32, %c0_i32_0, %c0_i32_1 : i32, i32, i32, i32
  }
}

</mosaic_0001>

<llo_original>
// kernel: a_call__.2
$region0: #{a_call__.2}
  #allocation0 [shape = 'u32[]', space=smem, size = 0x4, offset = 0x4, fixed_abs, tag = 'smem constant byte address 0x4 - core index']
  #allocation1 [shape = 'u32[144,128]{1,0:T(1,128)}', space=vmem, size = 0x12000, scoped, tag = 'internal scratch']
  %s0 = inlined_call_operand.vmem [shape: bf16[2,18,18,128], index: 0, kind: input, shape index: {}]
  %s1 = inlined_call_operand.vmem [shape: bf16[3,3,128,128], index: 1, kind: input, shape index: {}]
  %s2 = inlined_call_operand.vmem [shape: f32[1,128], index: 2, kind: input, shape index: {}]
  %s3 = inlined_call_operand.vmem [shape: bf16[2,16,16,128], index: 3, kind: output, shape index: {}]
  %s4 = sld [smem:[#allocation0]]
  $region45: #{a_call__.2} parent=0
    _
  %s6 = ssub.s32 1, %s4
  %s7 = scalar_select 0, %s6, %s4
  loop: start=0, step=1, limit=4
  $region2: #{a_call__.2} parent=0 // loop_pre_header
    _
  $region3: #{a_call__.2} parent=0 // loop_header
    %s9 = sphi 0, %s13
    %p10 = scmp.ge.s32.totalorder %s9, 4
    %s19 = sphi 0, %s21
    %s22 = sphi 0, %s19
    %s23 = sphi 0, %s22
    %s39 = sphi 0, %s23
    %s43 = sphi 0, %s43
    %s45 = sphi 0, %s43
    %s46 = sphi 0, %s45
    %s60 = sphi 0, %s46
    %s64 = sphi 0, %s64
    %s66 = sphi 0, %s64
    %s67 = sphi 0, %s66
    %s81 = sphi 0, %s67
    %s87 = sphi 0, %s89
    %s90 = sphi 0, %s87
    %s91 = sphi 0, %s90
    %s107 = sphi 0, %s91
  $region4: #{a_call__.2} parent=0 // loop_header_branch
    %12 = sbr.rel (%p10) target = $region8
  $region5: #{a_call__.2} parent=0 // loop_body
    %s14 = ssub.s32 %s9, 1
    %s15 = ssub.s32 %s9, 2
    %s16 = sadd.s32 %s9, 1
    %s17 = ssub.s32 %s9, %s16
    %p18 = scmp.eq.s32.totalorder %s17, 0
    %s20 = sadd.s32 %s19, 1
    %s21 = scalar_select %p18, %s19, %s20
    %p24 = pneg %p18
    %p25 = scmp.eq.s32.totalorder %s9, 1
    %p26 = por %p24, %p25
    %p27 = scmp.ne.s32.totalorder %s19, %s22
    %p28 = scmp.eq.s32.totalorder %s9, 0
    %p29 = por %p27, %p28
    %p30 = scmp.ne.s32.totalorder %s19, %s22
    %p31 = scmp.eq.s32.totalorder %s14, 1
    %p32 = por %p30, %p31
    %p33 = scmp.ne.s32.totalorder %s22, %s23
    %p34 = scmp.eq.s32.totalorder %s14, 0
    %p35 = por %p33, %p34
    %p36 = scmp.ne.s32.totalorder %s22, %s23
    %p37 = scmp.eq.s32.totalorder %s15, 1
    %p38 = por %p36, %p37
    %p40 = scmp.ne.s32.totalorder %s23, %s39
    %p41 = scmp.eq.s32.totalorder %s15, 0
    %p42 = por %p40, %p41
    %s44 = sadd.s32 %s43, 1
    %p47 = scmp.eq.s32.totalorder %s9, 1
    %p48 = scmp.ne.s32.totalorder %s43, %s45
    %p49 = scmp.eq.s32.totalorder %s9, 0
    %p50 = por %p48, %p49
    %p51 = scmp.ne.s32.totalorder %s43, %s45
    %p52 = scmp.eq.s32.totalorder %s14, 1
    %p53 = por %p51, %p52
    %p54 = scmp.ne.s32.totalorder %s45, %s46
    %p55 = scmp.eq.s32.totalorder %s14, 0
    %p56 = por %p54, %p55
    %p57 = scmp.ne.s32.totalorder %s45, %s46
    %p58 = scmp.eq.s32.totalorder %s15, 1
    %p59 = por %p57, %p58
    %p61 = scmp.ne.s32.totalorder %s46, %s60
    %p62 = scmp.eq.s32.totalorder %s15, 0
    %p63 = por %p61, %p62
    %s65 = sadd.s32 %s64, 1
    %p68 = scmp.eq.s32.totalorder %s9, 1
    %p69 = scmp.ne.s32.totalorder %s64, %s66
    %p70 = scmp.eq.s32.totalorder %s9, 0
    %p71 = por %p69, %p70
    %p72 = scmp.ne.s32.totalorder %s64, %s66
    %p73 = scmp.eq.s32.totalorder %s14, 1
    %p74 = por %p72, %p73
    %p75 = scmp.ne.s32.totalorder %s66, %s67
    %p76 = scmp.eq.s32.totalorder %s14, 0
    %p77 = por %p75, %p76
    %p78 = scmp.ne.s32.totalorder %s66, %s67
    %p79 = scmp.eq.s32.totalorder %s15, 1
    %p80 = por %p78, %p79
    %p82 = scmp.ne.s32.totalorder %s67, %s81
    %p83 = scmp.eq.s32.totalorder %s15, 0
    %p84 = por %p82, %p83
    %s85 = ssub.s32 %s9, %s16
    %p86 = scmp.eq.s32.totalorder %s85, 0
    %s88 = sadd.s32 %s87, 1
    %s89 = scalar_select %p86, %s87, %s88
    %p92 = pneg %p86
    %p93 = scmp.eq.s32.totalorder %s9, 1
    %p94 = por %p92, %p93
    %p95 = scmp.ne.s32.totalorder %s87, %s90
    %p96 = scmp.eq.s32.totalorder %s9, 0
    %p97 = por %p95, %p96
    %p98 = scmp.ne.s32.totalorder %s87, %s90
    %p99 = scmp.eq.s32.totalorder %s14, 1
    %p100 = por %p98, %p99
    %p101 = scmp.ne.s32.totalorder %s90, %s91
    %p102 = scmp.eq.s32.totalorder %s14, 0
    %p103 = por %p101, %p102
    %p104 = scmp.ne.s32.totalorder %s90, %s91
    %p105 = scmp.eq.s32.totalorder %s15, 1
    %p106 = por %p104, %p105
    %p108 = scmp.ne.s32.totalorder %s91, %s107
    %p109 = scmp.eq.s32.totalorder %s15, 0
    %p110 = por %p108, %p109
    %p111 = scmp.le.s32.totalorder 1, %s9
    %p112 = scmp.lt.s32.totalorder %s9, 3
    %p113 = pnand %p111, %p112
    %p114 = pneg %p113
    // Predicated region
    $region9: #{a_call__.2} parent=5 // pred_check
      _
    $region10: #{a_call__.2} parent=5 // pred_check_branch
      %116 = sbr.rel (%p113) target = $region12
    $region11: #{a_call__.2} parent=5 // pred_region
      %s117 = ssub.s32 %s9, 1
      // Predicated region
      $region13: #{a_call__.2} parent=11 // pred_check
        %p118 = pneg %p56
      $region14: #{a_call__.2} parent=11 // pred_check_branch
        %120 = sbr.rel (%p118) target = $region16
      $region15: #{a_call__.2} parent=11 // pred_region
        _
      $region16: #{a_call__.2} parent=11 // pred_fallthru
        _
      // Predicated region
      $region17: #{a_call__.2} parent=11 // pred_check
        %p121 = pneg %p77
      $region18: #{a_call__.2} parent=11 // pred_check_branch
        %123 = sbr.rel (%p121) target = $region20
      $region19: #{a_call__.2} parent=11 // pred_region
        _
      $region20: #{a_call__.2} parent=11 // pred_fallthru
        _
    $region12: #{a_call__.2} parent=5 // pred_fallthru
      _
    %p124 = scmp.lt.s32.totalorder %s9, 2
    // Predicated region
    $region21: #{a_call__.2} parent=5 // pred_check
      %p125 = pneg %p124
    $region22: #{a_call__.2} parent=5 // pred_check_branch
      %127 = sbr.rel (%p125) target = $region24
    $region23: #{a_call__.2} parent=5 // pred_region
      // Predicated region
      $region25: #{a_call__.2} parent=23 // pred_check
        %p128 = pneg %p29
      $region26: #{a_call__.2} parent=23 // pred_check_branch
        %130 = sbr.rel (%p128) target = $region28
      $region27: #{a_call__.2} parent=23 // pred_region
        %p131 = scmp.lt.s32.totalorder %s9, 1
        %s132 = scalar_select %p131, %s9, 1
        %s133 = smul.addr %s132, 54
        %s134 = smul.addr %s133, 4
        %s135 = scalar_lea.vmem %s0, %s134
      $region28: #{a_call__.2} parent=23 // pred_fallthru
        _
    $region24: #{a_call__.2} parent=5 // pred_fallthru
      _
    %p136 = scmp.le.s32.totalorder 1, %s9
    %p137 = scmp.lt.s32.totalorder %s9, 3
    %p138 = pnand %p136, %p137
    %p139 = pneg %p138
    // Predicated region
    $region29: #{a_call__.2} parent=5 // pred_check
      _
    $region30: #{a_call__.2} parent=5 // pred_check_branch
      %141 = sbr.rel (%p138) target = $region32
    $region31: #{a_call__.2} parent=5 // pred_region
      %s142 = ssub.s32 %s9, 1
      %p143 = scmp.lt.s32.totalorder %s14, 1
      %s144 = scalar_select %p143, %s14, 1
      %s145 = smul.addr %s144, 54
      %s146 = smul.addr %s145, 4
      %s147 = scalar_lea.vmem %s0, %s146
      %p148 = pneg %p35
      %p149 = pneg %p32
      %p150 = pneg %p56
      %p151 = pneg %p53
      %p152 = pneg %p77
      %p153 = pneg %p74
      %p154 = pneg %p103
      %p155 = pneg %p100
      %p156 = scmp.lt.s32.totalorder %s14, 1
      %s157 = scalar_select %p156, %s14, 1
      %s158 = smul.addr %s157, 32
      %s159 = smul.addr %s158, 4
      %s160 = scalar_lea.vmem %s3, %s159
      %p161 = scmp.lt.s32.totalorder %s14, 1
      %s162 = scalar_select %p161, %s14, 1
      %s163 = smul.addr %s162, 54
      %s164 = smul.addr %s163, 4
      %s165 = scalar_lea.vmem %s0, %s164
      %p166 = scmp.lt.s32.totalorder %s14, 1
      %s167 = scalar_select %p166, %s14, 1
      %s168 = smul.addr %s167, 32
      %s169 = smul.addr %s168, 4
      %s170 = scalar_lea.vmem %s3, %s169
      %v172 = vld [vmem:[%s165] sm:$0xf]
      %v173 = vld [vmem:[%s165 + $0x4] sm:$0xf]
      %v174 = vld [vmem:[%s165 + $0xc] sm:$0xf]
      %v175 = vld [vmem:[%s165 + $0x10] sm:$0xf]
      %v176 = vld [vmem:[%s165 + $0x18] sm:$0xf]
      %v177 = vld [vmem:[%s165 + $0x1c] sm:$0xf]
      %v178 = vld [vmem:[%s165 + $0x24] sm:$0xf]
      %v179 = vld [vmem:[%s165 + $0x28] sm:$0xf]
      %v180 = vld [vmem:[%s165 + $0x30] sm:$0xf]
      %v181 = vld [vmem:[%s165 + $0x34] sm:$0xf]
      %v182 = vld [vmem:[%s165 + $0x3c] sm:$0xf]
      %v183 = vld [vmem:[%s165 + $0x40] sm:$0xf]
      %v184 = vld [vmem:[%s165 + $0x48] sm:$0xf]
      %v185 = vld [vmem:[%s165 + $0x4c] sm:$0xf]
      %v186 = vld [vmem:[%s165 + $0x54] sm:$0xf]
      %v187 = vld [vmem:[%s165 + $0x58] sm:$0xf]
      %v188 = vld [vmem:[%s165 + $0x60] sm:$0xf]
      %v189 = vld [vmem:[%s165 + $0x64] sm:$0xf]
      %v190 = vld [vmem:[%s165 + $0x6c] sm:$0xf]
      %v191 = vld [vmem:[%s165 + $0x70] sm:$0xf]
      %v192 = vld [vmem:[%s165 + $0x78] sm:$0xf]
      %v193 = vld [vmem:[%s165 + $0x7c] sm:$0xf]
      %v194 = vld [vmem:[%s165 + $0x84] sm:$0xf]
      %v195 = vld [vmem:[%s165 + $0x88] sm:$0xf]
      %v196 = vld [vmem:[%s165 + $0x90] sm:$0xf]
      %v197 = vld [vmem:[%s165 + $0x94] sm:$0xf]
      %v198 = vld [vmem:[%s165 + $0x9c] sm:$0xf]
      %v199 = vld [vmem:[%s165 + $0xa0] sm:$0xf]
      %v200 = vld [vmem:[%s165 + $0xa8] sm:$0xf]
      %v201 = vld [vmem:[%s165 + $0xac] sm:$0xf]
      %v202 = vld [vmem:[%s165 + $0xb4] sm:$0xf]
      %v203 = vld [vmem:[%s165 + $0xb8] sm:$0xf]
      %v204 = vld [vmem:[%s1] sm:$0xf]
      %v205 = vld [vmem:[%s1 + $0x4] sm:$0xf]
      %v206 = vld [vmem:[%s1 + $0x8] sm:$0xf]
      %v207 = vld [vmem:[%s1 + $0xc] sm:$0xf]
      %v208 = vld [vmem:[%s1 + $0x10] sm:$0xf]
      %v209 = vld [vmem:[%s1 + $0x14] sm:$0xf]
      %v210 = vld [vmem:[%s1 + $0x18] sm:$0xf]
      %v211 = vld [vmem:[%s1 + $0x1c] sm:$0xf]
      %v212 = vld [vmem:[%s1 + $0x20] sm:$0xf]
      %v213 = vld [vmem:[%s1 + $0x24] sm:$0xf]
      %v214 = vld [vmem:[%s1 + $0x28] sm:$0xf]
      %v215 = vld [vmem:[%s1 + $0x2c] sm:$0xf]
      %v216 = vld [vmem:[%s1 + $0x30] sm:$0xf]
      %v217 = vld [vmem:[%s1 + $0x34] sm:$0xf]
      %v218 = vld [vmem:[%s1 + $0x38] sm:$0xf]
      %v219 = vld [vmem:[%s1 + $0x3c] sm:$0xf]
      %v220 = vld [vmem:[%s165 + $0x8] sm:$0x1]
      %v221 = vld [vmem:[%s165 + $0x14] sm:$0x1]
      %v222 = vld [vmem:[%s165 + $0x20] sm:$0x1]
      %v223 = vld [vmem:[%s165 + $0x2c] sm:$0x1]
      %v224 = vld [vmem:[%s165 + $0x38] sm:$0x1]
      %v225 = vld [vmem:[%s165 + $0x44] sm:$0x1]
      %v226 = vld [vmem:[%s165 + $0x50] sm:$0x1]
      %v227 = vld [vmem:[%s165 + $0x5c] sm:$0x1]
      %v228 = vld [vmem:[%s165 + $0x68] sm:$0x1]
      %v229 = vld [vmem:[%s165 + $0x74] sm:$0x1]
      %v230 = vld [vmem:[%s165 + $0x80] sm:$0x1]
      %v231 = vld [vmem:[%s165 + $0x8c] sm:$0x1]
      %v232 = vld [vmem:[%s165 + $0x98] sm:$0x1]
      %v233 = vld [vmem:[%s165 + $0xa4] sm:$0x1]
      %v234 = vld [vmem:[%s165 + $0xb0] sm:$0x1]
      %v235 = vld [vmem:[%s165 + $0xbc] sm:$0x1]
      %vm236 = vsmask.f32 3328
      %vm237 = vsmask.f32 7440
      %vm238 = vmor %vm236, %vm237
      %v240 = vshrl.u32 %v172, 16
      %v242 = vrot.slane %v240, 4
      %v243 = vshll.u32 %v172, 16
      %v245 = vrot.slane %v243, 5
      %v246 = vor.u32 %v242, %v245
      %v247 = vrot.slane %v246, 4
      %v249 = vshll.u32 %v173, 16
      %v251 = vrot.slane %v249, 5
      %v252 = vsel %vm238, %v247, %v251
      %v253 = vshrl.u32 %v173, 16
      %v255 = vrot.slane %v253, 4
      %v256 = vor.u32 %v255, %v251
      %v257 = vrot.slane %v256, 4
      %v259 = vshll.u32 %v220, 16
      %v261 = vrot.slane %v259, 5
      %v262 = vsel %vm238, %v257, %v261
      %v264 = vshrl.u32 %v174, 16
      %v266 = vrot.slane %v264, 4
      %v267 = vshll.u32 %v174, 16
      %v269 = vrot.slane %v267, 5
      %v270 = vor.u32 %v266, %v269
      %v271 = vrot.slane %v270, 4
      %v273 = vshll.u32 %v175, 16
      %v275 = vrot.slane %v273, 5
      %v276 = vsel %vm238, %v271, %v275
      %v277 = vshrl.u32 %v175, 16
      %v279 = vrot.slane %v277, 4
      %v280 = vor.u32 %v279, %v275
      %v281 = vrot.slane %v280, 4
      %v283 = vshll.u32 %v221, 16
      %v285 = vrot.slane %v283, 5
      %v286 = vsel %vm238, %v281, %v285
      %v288 = vshrl.u32 %v176, 16
      %v290 = vrot.slane %v288, 4
      %v291 = vshll.u32 %v176, 16
      %v293 = vrot.slane %v291, 5
      %v294 = vor.u32 %v290, %v293
      %v295 = vrot.slane %v294, 4
      %v297 = vshll.u32 %v177, 16
      %v299 = vrot.slane %v297, 5
      %v300 = vsel %vm238, %v295, %v299
      %v301 = vshrl.u32 %v177, 16
      %v303 = vrot.slane %v301, 4
      %v304 = vor.u32 %v303, %v299
      %v305 = vrot.slane %v304, 4
      %v307 = vshll.u32 %v222, 16
      %v309 = vrot.slane %v307, 5
      %v310 = vsel %vm238, %v305, %v309
      %v312 = vshrl.u32 %v178, 16
      %v314 = vrot.slane %v312, 4
      %v315 = vshll.u32 %v178, 16
      %v317 = vrot.slane %v315, 5
      %v318 = vor.u32 %v314, %v317
      %v319 = vrot.slane %v318, 4
      %v321 = vshll.u32 %v179, 16
      %v323 = vrot.slane %v321, 5
      %v324 = vsel %vm238, %v319, %v323
      %v325 = vshrl.u32 %v179, 16
      %v327 = vrot.slane %v325, 4
      %v328 = vor.u32 %v327, %v323
      %v329 = vrot.slane %v328, 4
      %v331 = vshll.u32 %v223, 16
      %v333 = vrot.slane %v331, 5
      %v334 = vsel %vm238, %v329, %v333
      %v336 = vshrl.u32 %v180, 16
      %v338 = vrot.slane %v336, 4
      %v339 = vshll.u32 %v180, 16
      %v341 = vrot.slane %v339, 5
      %v342 = vor.u32 %v338, %v341
      %v343 = vrot.slane %v342, 4
      %v345 = vshll.u32 %v181, 16
      %v347 = vrot.slane %v345, 5
      %v348 = vsel %vm238, %v343, %v347
      %v349 = vshrl.u32 %v181, 16
      %v351 = vrot.slane %v349, 4
      %v352 = vor.u32 %v351, %v347
      %v353 = vrot.slane %v352, 4
      %v355 = vshll.u32 %v224, 16
      %v357 = vrot.slane %v355, 5
      %v358 = vsel %vm238, %v353, %v357
      %v360 = vshrl.u32 %v182, 16
      %v362 = vrot.slane %v360, 4
      %v363 = vshll.u32 %v182, 16
      %v365 = vrot.slane %v363, 5
      %v366 = vor.u32 %v362, %v365
      %v367 = vrot.slane %v366, 4
      %v369 = vshll.u32 %v183, 16
      %v371 = vrot.slane %v369, 5
      %v372 = vsel %vm238, %v367, %v371
      %v373 = vshrl.u32 %v183, 16
      %v375 = vrot.slane %v373, 4
      %v376 = vor.u32 %v375, %v371
      %v377 = vrot.slane %v376, 4
      %v379 = vshll.u32 %v225, 16
      %v381 = vrot.slane %v379, 5
      %v382 = vsel %vm238, %v377, %v381
      %v384 = vshrl.u32 %v184, 16
      %v386 = vrot.slane %v384, 4
      %v387 = vshll.u32 %v184, 16
      %v389 = vrot.slane %v387, 5
      %v390 = vor.u32 %v386, %v389
      %v391 = vrot.slane %v390, 4
      %v393 = vshll.u32 %v185, 16
      %v395 = vrot.slane %v393, 5
      %v396 = vsel %vm238, %v391, %v395
      %v397 = vshrl.u32 %v185, 16
      %v399 = vrot.slane %v397, 4
      %v400 = vor.u32 %v399, %v395
      %v401 = vrot.slane %v400, 4
      %v403 = vshll.u32 %v226, 16
      %v405 = vrot.slane %v403, 5
      %v406 = vsel %vm238, %v401, %v405
      %v408 = vshrl.u32 %v186, 16
      %v410 = vrot.slane %v408, 4
      %v411 = vshll.u32 %v186, 16
      %v413 = vrot.slane %v411, 5
      %v414 = vor.u32 %v410, %v413
      %v415 = vrot.slane %v414, 4
      %v417 = vshll.u32 %v187, 16
      %v419 = vrot.slane %v417, 5
      %v420 = vsel %vm238, %v415, %v419
      %v421 = vshrl.u32 %v187, 16
      %v423 = vrot.slane %v421, 4
      %v424 = vor.u32 %v423, %v419
      %v425 = vrot.slane %v424, 4
      %v427 = vshll.u32 %v227, 16
      %v429 = vrot.slane %v427, 5
      %v430 = vsel %vm238, %v425, %v429
      %v432 = vshrl.u32 %v188, 16
      %v434 = vrot.slane %v432, 4
      %v435 = vshll.u32 %v188, 16
      %v437 = vrot.slane %v435, 5
      %v438 = vor.u32 %v434, %v437
      %v439 = vrot.slane %v438, 4
      %v441 = vshll.u32 %v189, 16
      %v443 = vrot.slane %v441, 5
      %v444 = vsel %vm238, %v439, %v443
      %v445 = vshrl.u32 %v189, 16
      %v447 = vrot.slane %v445, 4
      %v448 = vor.u32 %v447, %v443
      %v449 = vrot.slane %v448, 4
      %v451 = vshll.u32 %v228, 16
      %v453 = vrot.slane %v451, 5
      %v454 = vsel %vm238, %v449, %v453
      %v456 = vshrl.u32 %v190, 16
      %v458 = vrot.slane %v456, 4
      %v459 = vshll.u32 %v190, 16
      %v461 = vrot.slane %v459, 5
      %v462 = vor.u32 %v458, %v461
      %v463 = vrot.slane %v462, 4
      %v465 = vshll.u32 %v191, 16
      %v467 = vrot.slane %v465, 5
      %v468 = vsel %vm238, %v463, %v467
      %v469 = vshrl.u32 %v191, 16
      %v471 = vrot.slane %v469, 4
      %v472 = vor.u32 %v471, %v467
      %v473 = vrot.slane %v472, 4
      %v475 = vshll.u32 %v229, 16
      %v477 = vrot.slane %v475, 5
      %v478 = vsel %vm238, %v473, %v477
      %v480 = vshrl.u32 %v192, 16
      %v482 = vrot.slane %v480, 4
      %v483 = vshll.u32 %v192, 16
      %v485 = vrot.slane %v483, 5
      %v486 = vor.u32 %v482, %v485
      %v487 = vrot.slane %v486, 4
      %v489 = vshll.u32 %v193, 16
      %v491 = vrot.slane %v489, 5
      %v492 = vsel %vm238, %v487, %v491
      %v493 = vshrl.u32 %v193, 16
      %v495 = vrot.slane %v493, 4
      %v496 = vor.u32 %v495, %v491
      %v497 = vrot.slane %v496, 4
      %v499 = vshll.u32 %v230, 16
      %v501 = vrot.slane %v499, 5
      %v502 = vsel %vm238, %v497, %v501
      %v504 = vshrl.u32 %v194, 16
      %v506 = vrot.slane %v504, 4
      %v507 = vshll.u32 %v194, 16
      %v509 = vrot.slane %v507, 5
      %v510 = vor.u32 %v506, %v509
      %v511 = vrot.slane %v510, 4
      %v513 = vshll.u32 %v195, 16
      %v515 = vrot.slane %v513, 5
      %v516 = vsel %vm238, %v511, %v515
      %v517 = vshrl.u32 %v195, 16
      %v519 = vrot.slane %v517, 4
      %v520 = vor.u32 %v519, %v515
      %v521 = vrot.slane %v520, 4
      %v523 = vshll.u32 %v231, 16
      %v525 = vrot.slane %v523, 5
      %v526 = vsel %vm238, %v521, %v525
      %v528 = vshrl.u32 %v196, 16
      %v530 = vrot.slane %v528, 4
      %v531 = vshll.u32 %v196, 16
      %v533 = vrot.slane %v531, 5
      %v534 = vor.u32 %v530, %v533
      %v535 = vrot.slane %v534, 4
      %v537 = vshll.u32 %v197, 16
      %v539 = vrot.slane %v537, 5
      %v540 = vsel %vm238, %v535, %v539
      %v541 = vshrl.u32 %v197, 16
      %v543 = vrot.slane %v541, 4
      %v544 = vor.u32 %v543, %v539
      %v545 = vrot.slane %v544, 4
      %v547 = vshll.u32 %v232, 16
      %v549 = vrot.slane %v547, 5
      %v550 = vsel %vm238, %v545, %v549
      %v552 = vshrl.u32 %v198, 16
      %v554 = vrot.slane %v552, 4
      %v555 = vshll.u32 %v198, 16
      %v557 = vrot.slane %v555, 5
      %v558 = vor.u32 %v554, %v557
      %v559 = vrot.slane %v558, 4
      %v561 = vshll.u32 %v199, 16
      %v563 = vrot.slane %v561, 5
      %v564 = vsel %vm238, %v559, %v563
      %v565 = vshrl.u32 %v199, 16
      %v567 = vrot.slane %v565, 4
      %v568 = vor.u32 %v567, %v563
      %v569 = vrot.slane %v568, 4
      %v571 = vshll.u32 %v233, 16
      %v573 = vrot.slane %v571, 5
      %v574 = vsel %vm238, %v569, %v573
      %v576 = vshrl.u32 %v200, 16
      %v578 = vrot.slane %v576, 4
      %v579 = vshll.u32 %v200, 16
      %v581 = vrot.slane %v579, 5
      %v582 = vor.u32 %v578, %v581
      %v583 = vrot.slane %v582, 4
      %v585 = vshll.u32 %v201, 16
      %v587 = vrot.slane %v585, 5
      %v588 = vsel %vm238, %v583, %v587
      %v589 = vshrl.u32 %v201, 16
      %v591 = vrot.slane %v589, 4
      %v592 = vor.u32 %v591, %v587
      %v593 = vrot.slane %v592, 4
      %v595 = vshll.u32 %v234, 16
      %v597 = vrot.slane %v595, 5
      %v598 = vsel %vm238, %v593, %v597
      %v600 = vshrl.u32 %v202, 16
      %v602 = vrot.slane %v600, 4
      %v603 = vshll.u32 %v202, 16
      %v605 = vrot.slane %v603, 5
      %v606 = vor.u32 %v602, %v605
      %v607 = vrot.slane %v606, 4
      %v609 = vshll.u32 %v203, 16
      %v611 = vrot.slane %v609, 5
      %v612 = vsel %vm238, %v607, %v611
      %v613 = vshrl.u32 %v203, 16
      %v615 = vrot.slane %v613, 4
      %v616 = vor.u32 %v615, %v611
      %v617 = vrot.slane %v616, 4
      %v619 = vshll.u32 %v235, 16
      %v621 = vrot.slane %v619, 5
      %v622 = vsel %vm238, %v617, %v621
      %s623 = scalar_lea.vmem %s1, 64
      %v624 = vld [vmem:[%s623] sm:$0xf]
      %v625 = vld [vmem:[%s623 + $0x4] sm:$0xf]
      %v626 = vld [vmem:[%s623 + $0x8] sm:$0xf]
      %v627 = vld [vmem:[%s623 + $0xc] sm:$0xf]
      %v628 = vld [vmem:[%s623 + $0x10] sm:$0xf]
      %v629 = vld [vmem:[%s623 + $0x14] sm:$0xf]
      %v630 = vld [vmem:[%s623 + $0x18] sm:$0xf]
      %v631 = vld [vmem:[%s623 + $0x1c] sm:$0xf]
      %v632 = vld [vmem:[%s623 + $0x20] sm:$0xf]
      %v633 = vld [vmem:[%s623 + $0x24] sm:$0xf]
      %v634 = vld [vmem:[%s623 + $0x28] sm:$0xf]
      %v635 = vld [vmem:[%s623 + $0x2c] sm:$0xf]
      %v636 = vld [vmem:[%s623 + $0x30] sm:$0xf]
      %v637 = vld [vmem:[%s623 + $0x34] sm:$0xf]
      %v638 = vld [vmem:[%s623 + $0x38] sm:$0xf]
      %v639 = vld [vmem:[%s623 + $0x3c] sm:$0xf]
      %v640 = vunpack.c.l.b16 %v252
      %v641 = vunpack.c.l.b16 %v262
      %v642 = vunpack.c.l.b16 %v276
      %v643 = vunpack.c.l.b16 %v286
      %v644 = vunpack.c.l.b16 %v300
      %v645 = vunpack.c.l.b16 %v310
      %v646 = vunpack.c.l.b16 %v324
      %v647 = vunpack.c.l.b16 %v334
      %v648 = vunpack.c.l.b16 %v348
      %v649 = vunpack.c.l.b16 %v358
      %v650 = vunpack.c.l.b16 %v372
      %v651 = vunpack.c.l.b16 %v382
      %v652 = vunpack.c.l.b16 %v396
      %v653 = vunpack.c.l.b16 %v406
      %v654 = vunpack.c.l.b16 %v420
      %v655 = vunpack.c.l.b16 %v430
      %v656 = vunpack.c.l.b16 %v444
      %v657 = vunpack.c.l.b16 %v454
      %v658 = vunpack.c.l.b16 %v468
      %v659 = vunpack.c.l.b16 %v478
      %v660 = vunpack.c.l.b16 %v492
      %v661 = vunpack.c.l.b16 %v502
      %v662 = vunpack.c.l.b16 %v516
      %v663 = vunpack.c.l.b16 %v526
      %v664 = vunpack.c.l.b16 %v540
      %v665 = vunpack.c.l.b16 %v550
      %v666 = vunpack.c.l.b16 %v564
      %v667 = vunpack.c.l.b16 %v574
      %v668 = vunpack.c.l.b16 %v588
      %v669 = vunpack.c.l.b16 %v598
      %v670 = vunpack.c.l.b16 %v612
      %v671 = vunpack.c.l.b16 %v622
      %v672 = vpack.c.b16 %v641, %v640
      %v673 = vpack.c.b16 %v643, %v642
      %v674 = vpack.c.b16 %v645, %v644
      %v675 = vpack.c.b16 %v647, %v646
      %v676 = vpack.c.b16 %v649, %v648
      %v677 = vpack.c.b16 %v651, %v650
      %v678 = vpack.c.b16 %v653, %v652
      %v679 = vpack.c.b16 %v655, %v654
      %v680 = vpack.c.b16 %v657, %v656
      %v681 = vpack.c.b16 %v659, %v658
      %v682 = vpack.c.b16 %v661, %v660
      %v683 = vpack.c.b16 %v663, %v662
      %v684 = vpack.c.b16 %v665, %v664
      %v685 = vpack.c.b16 %v667, %v666
      %v686 = vpack.c.b16 %v669, %v668
      %v687 = vpack.c.b16 %v671, %v670
      %v720 = vunpack.c.l.b16 %v624
      %v721 = vunpack.c.l.b16 %v625
      %v722 = vunpack.c.l.b16 %v626
      %v723 = vunpack.c.l.b16 %v627
      %v724 = vunpack.c.l.b16 %v628
      %v725 = vunpack.c.l.b16 %v629
      %v726 = vunpack.c.l.b16 %v630
      %v727 = vunpack.c.l.b16 %v631
      %v728 = vunpack.c.l.b16 %v632
      %v729 = vunpack.c.l.b16 %v633
      %v730 = vunpack.c.l.b16 %v634
      %v731 = vunpack.c.l.b16 %v635
      %v732 = vunpack.c.l.b16 %v636
      %v733 = vunpack.c.l.b16 %v637
      %v734 = vunpack.c.l.b16 %v638
      %v735 = vunpack.c.l.b16 %v639
      %v736 = vpack.c.b16 %v721, %v720
      %v737 = vpack.c.b16 %v723, %v722
      %v738 = vpack.c.b16 %v725, %v724
      %v739 = vpack.c.b16 %v727, %v726
      %v740 = vpack.c.b16 %v729, %v728
      %v741 = vpack.c.b16 %v731, %v730
      %v742 = vpack.c.b16 %v733, %v732
      %v743 = vpack.c.b16 %v735, %v734
      %752 = vmatprep.subr.bf16.mxu0 0
      %753 = vmatpush1.bf16.msra.mxu0 %v736
      %754 = vmatprep.subr.bf16.mxu0 0
      %755 = vmatpush1.bf16.msra.mxu0 %v737
      %756 = vmatprep.subr.bf16.mxu0 0
      %757 = vmatpush1.bf16.msra.mxu0 %v738
      %758 = vmatprep.subr.bf16.mxu0 0
      %759 = vmatpush1.bf16.msra.mxu0 %v739
      %760 = vmatprep.subr.bf16.mxu0 0
      %761 = vmatpush1.bf16.msra.mxu0 %v740
      %762 = vmatprep.subr.bf16.mxu0 0
      %763 = vmatpush1.bf16.msra.mxu0 %v741
      %764 = vmatprep.subr.bf16.mxu0 0
      %765 = vmatpush1.bf16.msra.mxu0 %v742
      %766 = vmatprep.subr.bf16.mxu0 0
      %767 = vmatpush1.bf16.msra.mxu0 %v743
      %768 = vmatprep.subr.bf16.mxu0 0
      %769 = vmatpush1.bf16.msra.mxu0 0
      %770 = vmatprep.subr.bf16.mxu0 0
      %771 = vmatpush1.bf16.msra.mxu0 0
      %772 = vmatprep.subr.bf16.mxu0 0
      %773 = vmatpush1.bf16.msra.mxu0 0
      %774 = vmatprep.subr.bf16.mxu0 0
      %775 = vmatpush1.bf16.msra.mxu0 0
      %776 = vmatprep.subr.bf16.mxu0 0
      %777 = vmatpush1.bf16.msra.mxu0 0
      %778 = vmatprep.subr.bf16.mxu0 0
      %779 = vmatpush1.bf16.msra.mxu0 0
      %780 = vmatprep.subr.bf16.mxu0 0
      %781 = vmatpush1.bf16.msra.mxu0 0
      %782 = vmatprep.subr.bf16.mxu0 0
      %783 = vmatpush1.bf16.msra.mxu0 0
      %784 = vmatprep.mubr.bf16.mxu0 0
      %785 = vmatmul.mubr.bf16.gmra.mrb[0].mxu0 %v672
      %v786 = vpop.f32.mrb[0].mxu0
      %v787 = vadd.f32 0.0, %v786
      %v788 = vpop.f32.mrb[0].mxu0
      %v789 = vpop.f32.mrb[0].mxu0
      %v790 = vadd.f32 0.0, %v789
      %v791 = vpop.f32.mrb[0].mxu0
      %792 = vmatprep.mubr.bf16.mxu0 0
      %793 = vmatmul.mubr.bf16.gmra.mrb[0].mxu0 %v673
      %v794 = vpop.f32.mrb[0].mxu0
      %v795 = vadd.f32 0.0, %v794
      %v796 = vpop.f32.mrb[0].mxu0
      %v797 = vpop.f32.mrb[0].mxu0
      %v798 = vadd.f32 0.0, %v797
      %v799 = vpop.f32.mrb[0].mxu0
      %800 = vmatprep.mubr.bf16.mxu0 0
      %801 = vmatmul.mubr.bf16.gmra.mrb[0].mxu0 %v674
      %v802 = vpop.f32.mrb[0].mxu0
      %v803 = vadd.f32 0.0, %v802
      %v804 = vpop.f32.mrb[0].mxu0
      %v805 = vpop.f32.mrb[0].mxu0
      %v806 = vadd.f32 0.0, %v805
      %v807 = vpop.f32.mrb[0].mxu0
      %808 = vmatprep.mubr.bf16.mxu0 0
      %809 = vmatmul.mubr.bf16.gmra.mrb[0].mxu0 %v675
      %v810 = vpop.f32.mrb[0].mxu0
      %v811 = vadd.f32 0.0, %v810
      %v812 = vpop.f32.mrb[0].mxu0
      %v813 = vpop.f32.mrb[0].mxu0
      %v814 = vadd.f32 0.0, %v813
      %v815 = vpop.f32.mrb[0].mxu0
      %816 = vmatprep.mubr.bf16.mxu0 0
      %817 = vmatmul.mubr.bf16.gmra.mrb[0].mxu0 %v676
      %v818 = vpop.f32.mrb[0].mxu0
      %v819 = vadd.f32 0.0, %v818
      %v820 = vpop.f32.mrb[0].mxu0
      %v821 = vpop.f32.mrb[0].mxu0
      %v822 = vadd.f32 0.0, %v821
      %v823 = vpop.f32.mrb[0].mxu0
      %824 = vmatprep.mubr.bf16.mxu0 0
      %825 = vmatmul.mubr.bf16.gmra.mrb[0].mxu0 %v677
      %v826 = vpop.f32.mrb[0].mxu0
      %v827 = vadd.f32 0.0, %v826
      %v828 = vpop.f32.mrb[0].mxu0
      %v829 = vpop.f32.mrb[0].mxu0
      %v830 = vadd.f32 0.0, %v829
      %v831 = vpop.f32.mrb[0].mxu0
      %832 = vmatprep.mubr.bf16.mxu0 0
      %833 = vmatmul.mubr.bf16.gmra.mrb[0].mxu0 %v678
      %v834 = vpop.f32.mrb[0].mxu0
      %v835 = vadd.f32 0.0, %v834
      %v836 = vpop.f32.mrb[0].mxu0
      %v837 = vpop.f32.mrb[0].mxu0
      %v838 = vadd.f32 0.0, %v837
      %v839 = vpop.f32.mrb[0].mxu0
      %840 = vmatprep.mubr.bf16.mxu0 0
      %841 = vmatmul.mubr.bf16.gmra.mrb[0].mxu0 %v679
      %v842 = vpop.f32.mrb[0].mxu0
      %v843 = vadd.f32 0.0, %v842
      %v844 = vpop.f32.mrb[0].mxu0
      %v845 = vpop.f32.mrb[0].mxu0
      %v846 = vadd.f32 0.0, %v845
      %v847 = vpop.f32.mrb[0].mxu0
      %848 = vmatprep.mubr.bf16.mxu0 0
      %849 = vmatmul.mubr.bf16.gmra.mrb[0].mxu0 %v680
      %v850 = vpop.f32.mrb[0].mxu0
      %v851 = vadd.f32 0.0, %v850
      %v852 = vpop.f32.mrb[0].mxu0
      %v853 = vpop.f32.mrb[0].mxu0
      %v854 = vadd.f32 0.0, %v853
      %v855 = vpop.f32.mrb[0].mxu0
      %856 = vmatprep.mubr.bf16.mxu0 0
      %857 = vmatmul.mubr.bf16.gmra.mrb[0].mxu0 %v681
      %v858 = vpop.f32.mrb[0].mxu0
      %v859 = vadd.f32 0.0, %v858
      %v860 = vpop.f32.mrb[0].mxu0
      %v861 = vpop.f32.mrb[0].mxu0
      %v862 = vadd.f32 0.0, %v861
      %v863 = vpop.f32.mrb[0].mxu0
      %864 = vmatprep.mubr.bf16.mxu0 0
      %865 = vmatmul.mubr.bf16.gmra.mrb[0].mxu0 %v682
      %v866 = vpop.f32.mrb[0].mxu0
      %v867 = vadd.f32 0.0, %v866
      %v868 = vpop.f32.mrb[0].mxu0
      %v869 = vpop.f32.mrb[0].mxu0
      %v870 = vadd.f32 0.0, %v869
      %v871 = vpop.f32.mrb[0].mxu0
      %872 = vmatprep.mubr.bf16.mxu0 0
      %873 = vmatmul.mubr.bf16.gmra.mrb[0].mxu0 %v683
      %v874 = vpop.f32.mrb[0].mxu0
      %v875 = vadd.f32 0.0, %v874
      %v876 = vpop.f32.mrb[0].mxu0
      %v877 = vpop.f32.mrb[0].mxu0
      %v878 = vadd.f32 0.0, %v877
      %v879 = vpop.f32.mrb[0].mxu0
      %880 = vmatprep.mubr.bf16.mxu0 0
      %881 = vmatmul.mubr.bf16.gmra.mrb[0].mxu0 %v684
      %v882 = vpop.f32.mrb[0].mxu0
      %v883 = vadd.f32 0.0, %v882
      %v884 = vpop.f32.mrb[0].mxu0
      %v885 = vpop.f32.mrb[0].mxu0
      %v886 = vadd.f32 0.0, %v885
      %v887 = vpop.f32.mrb[0].mxu0
      %888 = vmatprep.mubr.bf16.mxu0 0
      %889 = vmatmul.mubr.bf16.gmra.mrb[0].mxu0 %v685
      %v890 = vpop.f32.mrb[0].mxu0
      %v891 = vadd.f32 0.0, %v890
      %v892 = vpop.f32.mrb[0].mxu0
      %v893 = vpop.f32.mrb[0].mxu0
      %v894 = vadd.f32 0.0, %v893
      %v895 = vpop.f32.mrb[0].mxu0
      %896 = vmatprep.mubr.bf16.mxu0 0
      %897 = vmatmul.mubr.bf16.gmra.mrb[0].mxu0 %v686
      %v898 = vpop.f32.mrb[0].mxu0
      %v899 = vadd.f32 0.0, %v898
      %v900 = vpop.f32.mrb[0].mxu0
      %v901 = vpop.f32.mrb[0].mxu0
      %v902 = vadd.f32 0.0, %v901
      %v903 = vpop.f32.mrb[0].mxu0
      %904 = vmatprep.mubr.bf16.mxu0 0
      %905 = vmatmul.mubr.bf16.gmra.mrb[0].mxu0 %v687
      %v906 = vpop.f32.mrb[0].mxu0
      %v907 = vadd.f32 0.0, %v906
      %v908 = vpop.f32.mrb[0].mxu0
      %v909 = vpop.f32.mrb[0].mxu0
      %v910 = vadd.f32 0.0, %v909
      %v911 = vpop.f32.mrb[0].mxu0
      %912 = vdwg.mxu0
      %v945 = vunpack.c.l.b16 %v172
      %v946 = vunpack.c.l.b16 %v173
      %v947 = vunpack.c.l.b16 %v174
      %v948 = vunpack.c.l.b16 %v175
      %v949 = vunpack.c.l.b16 %v176
      %v950 = vunpack.c.l.b16 %v177
      %v951 = vunpack.c.l.b16 %v178
      %v952 = vunpack.c.l.b16 %v179
      %v953 = vunpack.c.l.b16 %v180
      %v954 = vunpack.c.l.b16 %v181
      %v955 = vunpack.c.l.b16 %v182
      %v956 = vunpack.c.l.b16 %v183
      %v957 = vunpack.c.l.b16 %v184
      %v958 = vunpack.c.l.b16 %v185
      %v959 = vunpack.c.l.b16 %v186
      %v960 = vunpack.c.l.b16 %v187
      %v961 = vunpack.c.l.b16 %v188
      %v962 = vunpack.c.l.b16 %v189
      %v963 = vunpack.c.l.b16 %v190
      %v964 = vunpack.c.l.b16 %v191
      %v965 = vunpack.c.l.b16 %v192
      %v966 = vunpack.c.l.b16 %v193
      %v967 = vunpack.c.l.b16 %v194
      %v968 = vunpack.c.l.b16 %v195
      %v969 = vunpack.c.l.b16 %v196
      %v970 = vunpack.c.l.b16 %v197
      %v971 = vunpack.c.l.b16 %v198
      %v972 = vunpack.c.l.b16 %v199
      %v973 = vunpack.c.l.b16 %v200
      %v974 = vunpack.c.l.b16 %v201
      %v975 = vunpack.c.l.b16 %v202
      %v976 = vunpack.c.l.b16 %v203
      %v977 = vpack.c.b16 %v946, %v945
      %v978 = vpack.c.b16 %v948, %v947
      %v979 = vpack.c.b16 %v950, %v949
      %v980 = vpack.c.b16 %v952, %v951
      %v981 = vpack.c.b16 %v954, %v953
      %v982 = vpack.c.b16 %v956, %v955
      %v983 = vpack.c.b16 %v958, %v957
      %v984 = vpack.c.b16 %v960, %v959
      %v985 = vpack.c.b16 %v962, %v961
      %v986 = vpack.c.b16 %v964, %v963
      %v987 = vpack.c.b16 %v966, %v965
      %v988 = vpack.c.b16 %v968, %v967
      %v989 = vpack.c.b16 %v970, %v969
      %v990 = vpack.c.b16 %v972, %v971
      %v991 = vpack.c.b16 %v974, %v973
      %v992 = vpack.c.b16 %v976, %v975
      %v1025 = vunpack.c.l.b16 %v204
      %v1026 = vunpack.c.l.b16 %v205
      %v1027 = vunpack.c.l.b16 %v206
      %v1028 = vunpack.c.l.b16 %v207
      %v1029 = vunpack.c.l.b16 %v208
      %v1030 = vunpack.c.l.b16 %v209
      %v1031 = vunpack.c.l.b16 %v210
      %v1032 = vunpack.c.l.b16 %v211
      %v1033 = vunpack.c.l.b16 %v212
      %v1034 = vunpack.c.l.b16 %v213
      %v1035 = vunpack.c.l.b16 %v214
      %v1036 = vunpack.c.l.b16 %v215
      %v1037 = vunpack.c.l.b16 %v216
      %v1038 = vunpack.c.l.b16 %v217
      %v1039 = vunpack.c.l.b16 %v218
      %v1040 = vunpack.c.l.b16 %v219
      %v1041 = vpack.c.b16 %v1026, %v1025
      %v1042 = vpack.c.b16 %v1028, %v1027
      %v1043 = vpack.c.b16 %v1030, %v1029
      %v1044 = vpack.c.b16 %v1032, %v1031
      %v1045 = vpack.c.b16 %v1034, %v1033
      %v1046 = vpack.c.b16 %v1036, %v1035
      %v1047 = vpack.c.b16 %v1038, %v1037
      %v1048 = vpack.c.b16 %v1040, %v1039
      %1057 = vmatprep.subr.bf16.mxu0 0
      %1058 = vmatpush1.bf16.msra.mxu0 %v1041
      %1059 = vmatprep.subr.bf16.mxu0 0
      %1060 = vmatpush1.bf16.msra.mxu0 %v1042
      %1061 = vmatprep.subr.bf16.mxu0 0
      %1062 = vmatpush1.bf16.msra.mxu0 %v1043
      %1063 = vmatprep.subr.bf16.mxu0 0
      %1064 = vmatpush1.bf16.msra.mxu0 %v1044
      %1065 = vmatprep.subr.bf16.mxu0 0
      %1066 = vmatpush1.bf16.msra.mxu0 %v1045
      %1067 = vmatprep.subr.bf16.mxu0 0
      %1068 = vmatpush1.bf16.msra.mxu0 %v1046
      %1069 = vmatprep.subr.bf16.mxu0 0
      %1070 = vmatpush1.bf16.msra.mxu0 %v1047
      %1071 = vmatprep.subr.bf16.mxu0 0
      %1072 = vmatpush1.bf16.msra.mxu0 %v1048
      %1073 = vmatprep.subr.bf16.mxu0 0
      %1074 = vmatpush1.bf16.msra.mxu0 0
      %1075 = vmatprep.subr.bf16.mxu0 0
      %1076 = vmatpush1.bf16.msra.mxu0 0
      %1077 = vmatprep.subr.bf16.mxu0 0
      %1078 = vmatpush1.bf16.msra.mxu0 0
      %1079 = vmatprep.subr.bf16.mxu0 0
      %1080 = vmatpush1.bf16.msra.mxu0 0
      %1081 = vmatprep.subr.bf16.mxu0 0
      %1082 = vmatpush1.bf16.msra.mxu0 0
      %1083 = vmatprep.subr.bf16.mxu0 0
      %1084 = vmatpush1.bf16.msra.mxu0 0
      %1085 = vmatprep.subr.bf16.mxu0 0
      %1086 = vmatpush1.bf16.msra.mxu0 0
      %1087 = vmatprep.subr.bf16.mxu0 0
      %1088 = vmatpush1.bf16.msra.mxu0 0
      %1089 = vmatprep.mubr.bf16.mxu0 0
      %1090 = vmatmul.mubr.bf16.gmra.mrb[0].mxu0 %v977
      %v1091 = vpop.f32.mrb[0].mxu0
      %v1092 = vadd.f32 %v787, %v1091
      %v1093 = vpop.f32.mrb[0].mxu0
      %v1094 = vpop.f32.mrb[0].mxu0
      %v1095 = vadd.f32 %v790, %v1094
      %v1096 = vpop.f32.mrb[0].mxu0
      %1097 = vmatprep.mubr.bf16.mxu0 0
      %1098 = vmatmul.mubr.bf16.gmra.mrb[0].mxu0 %v978
      %v1099 = vpop.f32.mrb[0].mxu0
      %v1100 = vadd.f32 %v795, %v1099
      %v1101 = vpop.f32.mrb[0].mxu0
      %v1102 = vpop.f32.mrb[0].mxu0
      %v1103 = vadd.f32 %v798, %v1102
      %v1104 = vpop.f32.mrb[0].mxu0
      %1105 = vmatprep.mubr.bf16.mxu0 0
      %1106 = vmatmul.mubr.bf16.gmra.mrb[0].mxu0 %v979
      %v1107 = vpop.f32.mrb[0].mxu0
      %v1108 = vadd.f32 %v803, %v1107
      %v1109 = vpop.f32.mrb[0].mxu0
      %v1110 = vpop.f32.mrb[0].mxu0
      %v1111 = vadd.f32 %v806, %v1110
      %v1112 = vpop.f32.mrb[0].mxu0
      %1113 = vmatprep.mubr.bf16.mxu0 0
      %1114 = vmatmul.mubr.bf16.gmra.mrb[0].mxu0 %v980
      %v1115 = vpop.f32.mrb[0].mxu0
      %v1116 = vadd.f32 %v811, %v1115
      %v1117 = vpop.f32.mrb[0].mxu0
      %v1118 = vpop.f32.mrb[0].mxu0
      %v1119 = vadd.f32 %v814, %v1118
      %v1120 = vpop.f32.mrb[0].mxu0
      %1121 = vmatprep.mubr.bf16.mxu0 0
      %1122 = vmatmul.mubr.bf16.gmra.mrb[0].mxu0 %v981
      %v1123 = vpop.f32.mrb[0].mxu0
      %v1124 = vadd.f32 %v819, %v1123
      %v1125 = vpop.f32.mrb[0].mxu0
      %v1126 = vpop.f32.mrb[0].mxu0
      %v1127 = vadd.f32 %v822, %v1126
      %v1128 = vpop.f32.mrb[0].mxu0
      %1129 = vmatprep.mubr.bf16.mxu0 0
      %1130 = vmatmul.mubr.bf16.gmra.mrb[0].mxu0 %v982
      %v1131 = vpop.f32.mrb[0].mxu0
      %v1132 = vadd.f32 %v827, %v1131
      %v1133 = vpop.f32.mrb[0].mxu0
      %v1134 = vpop.f32.mrb[0].mxu0
      %v1135 = vadd.f32 %v830, %v1134
      %v1136 = vpop.f32.mrb[0].mxu0
      %1137 = vmatprep.mubr.bf16.mxu0 0
      %1138 = vmatmul.mubr.bf16.gmra.mrb[0].mxu0 %v983
      %v1139 = vpop.f32.mrb[0].mxu0
      %v1140 = vadd.f32 %v835, %v1139
      %v1141 = vpop.f32.mrb[0].mxu0
      %v1142 = vpop.f32.mrb[0].mxu0
      %v1143 = vadd.f32 %v838, %v1142
      %v1144 = vpop.f32.mrb[0].mxu0
      %1145 = vmatprep.mubr.bf16.mxu0 0
      %1146 = vmatmul.mubr.bf16.gmra.mrb[0].mxu0 %v984
      %v1147 = vpop.f32.mrb[0].mxu0
      %v1148 = vadd.f32 %v843, %v1147
      %v1149 = vpop.f32.mrb[0].mxu0
      %v1150 = vpop.f32.mrb[0].mxu0
      %v1151 = vadd.f32 %v846, %v1150
      %v1152 = vpop.f32.mrb[0].mxu0
      %1153 = vmatprep.mubr.bf16.mxu0 0
      %1154 = vmatmul.mubr.bf16.gmra.mrb[0].mxu0 %v985
      %v1155 = vpop.f32.mrb[0].mxu0
      %v1156 = vadd.f32 %v851, %v1155
      %v1157 = vpop.f32.mrb[0].mxu0
      %v1158 = vpop.f32.mrb[0].mxu0
      %v1159 = vadd.f32 %v854, %v1158
      %v1160 = vpop.f32.mrb[0].mxu0
      %1161 = vmatprep.mubr.bf16.mxu0 0
      %1162 = vmatmul.mubr.bf16.gmra.mrb[0].mxu0 %v986
      %v1163 = vpop.f32.mrb[0].mxu0
      %v1164 = vadd.f32 %v859, %v1163
      %v1165 = vpop.f32.mrb[0].mxu0
      %v1166 = vpop.f32.mrb[0].mxu0
      %v1167 = vadd.f32 %v862, %v1166
      %v1168 = vpop.f32.mrb[0].mxu0
      %1169 = vmatprep.mubr.bf16.mxu0 0
      %1170 = vmatmul.mubr.bf16.gmra.mrb[0].mxu0 %v987
      %v1171 = vpop.f32.mrb[0].mxu0
      %v1172 = vadd.f32 %v867, %v1171
      %v1173 = vpop.f32.mrb[0].mxu0
      %v1174 = vpop.f32.mrb[0].mxu0
      %v1175 = vadd.f32 %v870, %v1174
      %v1176 = vpop.f32.mrb[0].mxu0
      %1177 = vmatprep.mubr.bf16.mxu0 0
      %1178 = vmatmul.mubr.bf16.gmra.mrb[0].mxu0 %v988
      %v1179 = vpop.f32.mrb[0].mxu0
      %v1180 = vadd.f32 %v875, %v1179
      %v1181 = vpop.f32.mrb[0].mxu0
      %v1182 = vpop.f32.mrb[0].mxu0
      %v1183 = vadd.f32 %v878, %v1182
      %v1184 = vpop.f32.mrb[0].mxu0
      %1185 = vmatprep.mubr.bf16.mxu0 0
      %1186 = vmatmul.mubr.bf16.gmra.mrb[0].mxu0 %v989
      %v1187 = vpop.f32.mrb[0].mxu0
      %v1188 = vadd.f32 %v883, %v1187
      %v1189 = vpop.f32.mrb[0].mxu0
      %v1190 = vpop.f32.mrb[0].mxu0
      %v1191 = vadd.f32 %v886, %v1190
      %v1192 = vpop.f32.mrb[0].mxu0
      %1193 = vmatprep.mubr.bf16.mxu0 0
      %1194 = vmatmul.mubr.bf16.gmra.mrb[0].mxu0 %v990
      %v1195 = vpop.f32.mrb[0].mxu0
      %v1196 = vadd.f32 %v891, %v1195
      %v1197 = vpop.f32.mrb[0].mxu0
      %v1198 = vpop.f32.mrb[0].mxu0
      %v1199 = vadd.f32 %v894, %v1198
      %v1200 = vpop.f32.mrb[0].mxu0
      %1201 = vmatprep.mubr.bf16.mxu0 0
      %1202 = vmatmul.mubr.bf16.gmra.mrb[0].mxu0 %v991
      %v1203 = vpop.f32.mrb[0].mxu0
      %v1204 = vadd.f32 %v899, %v1203
      %v1205 = vpop.f32.mrb[0].mxu0
      %v1206 = vpop.f32.mrb[0].mxu0
      %v1207 = vadd.f32 %v902, %v1206
      %v1208 = vpop.f32.mrb[0].mxu0
      %1209 = vmatprep.mubr.bf16.mxu0 0
      %1210 = vmatmul.mubr.bf16.gmra.mrb[0].mxu0 %v992
      %v1211 = vpop.f32.mrb[0].mxu0
      %v1212 = vadd.f32 %v907, %v1211
      %v1213 = vpop.f32.mrb[0].mxu0
      %v1214 = vpop.f32.mrb[0].mxu0
      %v1215 = vadd.f32 %v910, %v1214
      %v1216 = vpop.f32.mrb[0].mxu0
      %1217 = vdwg.mxu0
      %v1218 = vld [vmem:[%s165] sm:$0xe]
      %v1219 = vld [vmem:[%s165 + $0xc] sm:$0xe]
      %v1220 = vld [vmem:[%s165 + $0x18] sm:$0xe]
      %v1221 = vld [vmem:[%s165 + $0x24] sm:$0xe]
      %v1222 = vld [vmem:[%s165 + $0x30] sm:$0xe]
      %v1223 = vld [vmem:[%s165 + $0x3c] sm:$0xe]
      %v1224 = vld [vmem:[%s165 + $0x48] sm:$0xe]
      %v1225 = vld [vmem:[%s165 + $0x54] sm:$0xe]
      %v1226 = vld [vmem:[%s165 + $0x60] sm:$0xe]
      %v1227 = vld [vmem:[%s165 + $0x6c] sm:$0xe]
      %v1228 = vld [vmem:[%s165 + $0x78] sm:$0xe]
      %v1229 = vld [vmem:[%s165 + $0x84] sm:$0xe]
      %v1230 = vld [vmem:[%s165 + $0x90] sm:$0xe]
      %v1231 = vld [vmem:[%s165 + $0x9c] sm:$0xe]
      %v1232 = vld [vmem:[%s165 + $0xa8] sm:$0xe]
      %v1233 = vld [vmem:[%s165 + $0xb4] sm:$0xe]
      %vm1266 = vcmask 1042432
      %vm1267 = vcmask 1046532
      %vm1268 = vmor %vm1266, %vm1267
      %v1269 = vrot.slane %v1218, 5
      %v1270 = vrot.slane %v1269, 4
      %v1271 = vrot.slane %v173, 5
      %v1272 = vsel %vm1268, %v1270, %v1271
      %v1273 = vrot.slane %v1271, 4
      %v1274 = vrot.slane %v220, 5
      %v1275 = vsel %vm1268, %v1273, %v1274
      %v1276 = vrot.slane %v1219, 5
      %v1277 = vrot.slane %v1276, 4
      %v1278 = vrot.slane %v175, 5
      %v1279 = vsel %vm1268, %v1277, %v1278
      %v1280 = vrot.slane %v1278, 4
      %v1281 = vrot.slane %v221, 5
      %v1282 = vsel %vm1268, %v1280, %v1281
      %v1283 = vrot.slane %v1220, 5
      %v1284 = vrot.slane %v1283, 4
      %v1285 = vrot.slane %v177, 5
      %v1286 = vsel %vm1268, %v1284, %v1285
      %v1287 = vrot.slane %v1285, 4
      %v1288 = vrot.slane %v222, 5
      %v1289 = vsel %vm1268, %v1287, %v1288
      %v1290 = vrot.slane %v1221, 5
      %v1291 = vrot.slane %v1290, 4
      %v1292 = vrot.slane %v179, 5
      %v1293 = vsel %vm1268, %v1291, %v1292
      %v1294 = vrot.slane %v1292, 4
      %v1295 = vrot.slane %v223, 5
      %v1296 = vsel %vm1268, %v1294, %v1295
      %v1297 = vrot.slane %v1222, 5
      %v1298 = vrot.slane %v1297, 4
      %v1299 = vrot.slane %v181, 5
      %v1300 = vsel %vm1268, %v1298, %v1299
      %v1301 = vrot.slane %v1299, 4
      %v1302 = vrot.slane %v224, 5
      %v1303 = vsel %vm1268, %v1301, %v1302
      %v1304 = vrot.slane %v1223, 5
      %v1305 = vrot.slane %v1304, 4
      %v1306 = vrot.slane %v183, 5
      %v1307 = vsel %vm1268, %v1305, %v1306
      %v1308 = vrot.slane %v1306, 4
      %v1309 = vrot.slane %v225, 5
      %v1310 = vsel %vm1268, %v1308, %v1309
      %v1311 = vrot.slane %v1224, 5
      %v1312 = vrot.slane %v1311, 4
      %v1313 = vrot.slane %v185, 5
      %v1314 = vsel %vm1268, %v1312, %v1313
      %v1315 = vrot.slane %v1313, 4
      %v1316 = vrot.slane %v226, 5
      %v1317 = vsel %vm1268, %v1315, %v1316
      %v1318 = vrot.slane %v1225, 5
      %v1319 = vrot.slane %v1318, 4
      %v1320 = vrot.slane %v187, 5
      %v1321 = vsel %vm1268, %v1319, %v1320
      %v1322 = vrot.slane %v1320, 4
      %v1323 = vrot.slane %v227, 5
      %v1324 = vsel %vm1268, %v1322, %v1323
      %v1325 = vrot.slane %v1226, 5
      %v1326 = vrot.slane %v1325, 4
      %v1327 = vrot.slane %v189, 5
      %v1328 = vsel %vm1268, %v1326, %v1327
      %v1329 = vrot.slane %v1327, 4
      %v1330 = vrot.slane %v228, 5
      %v1331 = vsel %vm1268, %v1329, %v1330
      %v1332 = vrot.slane %v1227, 5
      %v1333 = vrot.slane %v1332, 4
      %v1334 = vrot.slane %v191, 5
      %v1335 = vsel %vm1268, %v1333, %v1334
      %v1336 = vrot.slane %v1334, 4
      %v1337 = vrot.slane %v229, 5
      %v1338 = vsel %vm1268, %v1336, %v1337
      %v1339 = vrot.slane %v1228, 5
      %v1340 = vrot.slane %v1339, 4
      %v1341 = vrot.slane %v193, 5
      %v1342 = vsel %vm1268, %v1340, %v1341
      %v1343 = vrot.slane %v1341, 4
      %v1344 = vrot.slane %v230, 5
      %v1345 = vsel %vm1268, %v1343, %v1344
      %v1346 = vrot.slane %v1229, 5
      %v1347 = vrot.slane %v1346, 4
      %v1348 = vrot.slane %v195, 5
      %v1349 = vsel %vm1268, %v1347, %v1348
      %v1350 = vrot.slane %v1348, 4
      %v1351 = vrot.slane %v231, 5
      %v1352 = vsel %vm1268, %v1350, %v1351
      %v1353 = vrot.slane %v1230, 5
      %v1354 = vrot.slane %v1353, 4
      %v1355 = vrot.slane %v197, 5
      %v1356 = vsel %vm1268, %v1354, %v1355
      %v1357 = vrot.slane %v1355, 4
      %v1358 = vrot.slane %v232, 5
      %v1359 = vsel %vm1268, %v1357, %v1358
      %v1360 = vrot.slane %v1231, 5
      %v1361 = vrot.slane %v1360, 4
      %v1362 = vrot.slane %v199, 5
      %v1363 = vsel %vm1268, %v1361, %v1362
      %v1364 = vrot.slane %v1362, 4
      %v1365 = vrot.slane %v233, 5
      %v1366 = vsel %vm1268, %v1364, %v1365
      %v1367 = vrot.slane %v1232, 5
      %v1368 = vrot.slane %v1367, 4
      %v1369 = vrot.slane %v201, 5
      %v1370 = vsel %vm1268, %v1368, %v1369
      %v1371 = vrot.slane %v1369, 4
      %v1372 = vrot.slane %v234, 5
      %v1373 = vsel %vm1268, %v1371, %v1372
      %v1374 = vrot.slane %v1233, 5
      %v1375 = vrot.slane %v1374, 4
      %v1376 = vrot.slane %v203, 5
      %v1377 = vsel %vm1268, %v1375, %v1376
      %v1378 = vrot.slane %v1376, 4
      %v1379 = vrot.slane %v235, 5
      %v1380 = vsel %vm1268, %v1378, %v1379
      %s1381 = scalar_lea.vmem %s1, 128
      %v1382 = vld [vmem:[%s1381] sm:$0xf]
      %v1383 = vld [vmem:[%s1381 + $0x4] sm:$0xf]
      %v1384 = vld [vmem:[%s1381 + $0x8] sm:$0xf]
      %v1385 = vld [vmem:[%s1381 + $0xc] sm:$0xf]
      %v1386 = vld [vmem:[%s1381 + $0x10] sm:$0xf]
      %v1387 = vld [vmem:[%s1381 + $0x14] sm:$0xf]
      %v1388 = vld [vmem:[%s1381 + $0x18] sm:$0xf]
      %v1389 = vld [vmem:[%s1381 + $0x1c] sm:$0xf]
      %v1390 = vld [vmem:[%s1381 + $0x20] sm:$0xf]
      %v1391 = vld [vmem:[%s1381 + $0x24] sm:$0xf]
      %v1392 = vld [vmem:[%s1381 + $0x28] sm:$0xf]
      %v1393 = vld [vmem:[%s1381 + $0x2c] sm:$0xf]
      %v1394 = vld [vmem:[%s1381 + $0x30] sm:$0xf]
      %v1395 = vld [vmem:[%s1381 + $0x34] sm:$0xf]
      %v1396 = vld [vmem:[%s1381 + $0x38] sm:$0xf]
      %v1397 = vld [vmem:[%s1381 + $0x3c] sm:$0xf]
      %v1398 = vunpack.c.l.b16 %v1272
      %v1399 = vunpack.c.l.b16 %v1275
      %v1400 = vunpack.c.l.b16 %v1279
      %v1401 = vunpack.c.l.b16 %v1282
      %v1402 = vunpack.c.l.b16 %v1286
      %v1403 = vunpack.c.l.b16 %v1289
      %v1404 = vunpack.c.l.b16 %v1293
      %v1405 = vunpack.c.l.b16 %v1296
      %v1406 = vunpack.c.l.b16 %v1300
      %v1407 = vunpack.c.l.b16 %v1303
      %v1408 = vunpack.c.l.b16 %v1307
      %v1409 = vunpack.c.l.b16 %v1310
      %v1410 = vunpack.c.l.b16 %v1314
      %v1411 = vunpack.c.l.b16 %v1317
      %v1412 = vunpack.c.l.b16 %v1321
      %v1413 = vunpack.c.l.b16 %v1324
      %v1414 = vunpack.c.l.b16 %v1328
      %v1415 = vunpack.c.l.b16 %v1331
      %v1416 = vunpack.c.l.b16 %v1335
      %v1417 = vunpack.c.l.b16 %v1338
      %v1418 = vunpack.c.l.b16 %v1342
      %v1419 = vunpack.c.l.b16 %v1345
      %v1420 = vunpack.c.l.b16 %v1349
      %v1421 = vunpack.c.l.b16 %v1352
      %v1422 = vunpack.c.l.b16 %v1356
      %v1423 = vunpack.c.l.b16 %v1359
      %v1424 = vunpack.c.l.b16 %v1363
      %v1425 = vunpack.c.l.b16 %v1366
      %v1426 = vunpack.c.l.b16 %v1370
      %v1427 = vunpack.c.l.b16 %v1373
      %v1428 = vunpack.c.l.b16 %v1377
      %v1429 = vunpack.c.l.b16 %v1380
      %v1430 = vpack.c.b16 %v1399, %v1398
      %v1431 = vpack.c.b16 %v1401, %v1400
      %v1432 = vpack.c.b16 %v1403, %v1402
      %v1433 = vpack.c.b16 %v1405, %v1404
      %v1434 = vpack.c.b16 %v1407, %v1406
      %v1435 = vpack.c.b16 %v1409, %v1408
      %v1436 = vpack.c.b16 %v1411, %v1410
      %v1437 = vpack.c.b16 %v1413, %v1412
      %v1438 = vpack.c.b16 %v1415, %v1414
      %v1439 = vpack.c.b16 %v1417, %v1416
      %v1440 = vpack.c.b16 %v1419, %v1418
      %v1441 = vpack.c.b16 %v1421, %v1420
      %v1442 = vpack.c.b16 %v1423, %v1422
      %v1443 = vpack.c.b16 %v1425, %v1424
      %v1444 = vpack.c.b16 %v1427, %v1426
      %v1445 = vpack.c.b16 %v1429, %v1428
      %v1478 = vunpack.c.l.b16 %v1382
      %v1479 = vunpack.c.l.b16 %v1383
      %v1480 = vunpack.c.l.b16 %v1384
      %v1481 = vunpack.c.l.b16 %v1385
      %v1482 = vunpack.c.l.b16 %v1386
      %v1483 = vunpack.c.l.b16 %v1387
      %v1484 = vunpack.c.l.b16 %v1388
      %v1485 = vunpack.c.l.b16 %v1389
      %v1486 = vunpack.c.l.b16 %v1390
      %v1487 = vunpack.c.l.b16 %v1391
      %v1488 = vunpack.c.l.b16 %v1392
      %v1489 = vunpack.c.l.b16 %v1393
      %v1490 = vunpack.c.l.b16 %v1394
      %v1491 = vunpack.c.l.b16 %v1395
      %v1492 = vunpack.c.l.b16 %v1396
      %v1493 = vunpack.c.l.b16 %v1397
      %v1494 = vpack.c.b16 %v1479, %v1478
      %v1495 = vpack.c.b16 %v1481, %v1480
      %v1496 = vpack.c.b16 %v1483, %v1482
      %v1497 = vpack.c.b16 %v1485, %v1484
      %v1498 = vpack.c.b16 %v1487, %v1486
      %v1499 = vpack.c.b16 %v1489, %v1488
      %v1500 = vpack.c.b16 %v1491, %v1490
      %v1501 = vpack.c.b16 %v1493, %v1492
      %1510 = vmatprep.subr.bf16.mxu0 0
      %1511 = vmatpush1.bf16.msra.mxu0 %v1494
      %1512 = vmatprep.subr.bf16.mxu0 0
      %1513 = vmatpush1.bf16.msra.mxu0 %v1495
      %1514 = vmatprep.subr.bf16.mxu0 0
      %1515 = vmatpush1.bf16.msra.mxu0 %v1496
      %1516 = vmatprep.subr.bf16.mxu0 0
      %1517 = vmatpush1.bf16.msra.mxu0 %v1497
      %1518 = vmatprep.subr.bf16.mxu0 0
      %1519 = vmatpush1.bf16.msra.mxu0 %v1498
      %1520 = vmatprep.subr.bf16.mxu0 0
      %1521 = vmatpush1.bf16.msra.mxu0 %v1499
      %1522 = vmatprep.subr.bf16.mxu0 0
      %1523 = vmatpush1.bf16.msra.mxu0 %v1500
      %1524 = vmatprep.subr.bf16.mxu0 0
      %1525 = vmatpush1.bf16.msra.mxu0 %v1501
      %1526 = vmatprep.subr.bf16.mxu0 0
      %1527 = vmatpush1.bf16.msra.mxu0 0
      %1528 = vmatprep.subr.bf16.mxu0 0
      %1529 = vmatpush1.bf16.msra.mxu0 0
      %1530 = vmatprep.subr.bf16.mxu0 0
      %1531 = vmatpush1.bf16.msra.mxu0 0
      %1532 = vmatprep.subr.bf16.mxu0 0
      %1533 = vmatpush1.bf16.msra.mxu0 0
      %1534 = vmatprep.subr.bf16.mxu0 0
      %1535 = vmatpush1.bf16.msra.mxu0 0
      %1536 = vmatprep.subr.bf16.mxu0 0
      %1537 = vmatpush1.bf16.msra.mxu0 0
      %1538 = vmatprep.subr.bf16.mxu0 0
      %1539 = vmatpush1.bf16.msra.mxu0 0
      %1540 = vmatprep.subr.bf16.mxu0 0
      %1541 = vmatpush1.bf16.msra.mxu0 0
      %1542 = vmatprep.mubr.bf16.mxu0 0
      %1543 = vmatmul.mubr.bf16.gmra.mrb[0].mxu0 %v1430
      %v1544 = vpop.f32.mrb[0].mxu0
      %v1545 = vadd.f32 0.0, %v1544
      %v1546 = vpop.f32.mrb[0].mxu0
      %v1547 = vpop.f32.mrb[0].mxu0
      %v1548 = vadd.f32 0.0, %v1547
      %v1549 = vpop.f32.mrb[0].mxu0
      %1550 = vmatprep.mubr.bf16.mxu0 0
      %1551 = vmatmul.mubr.bf16.gmra.mrb[0].mxu0 %v1431
      %v1552 = vpop.f32.mrb[0].mxu0
      %v1553 = vadd.f32 0.0, %v1552
      %v1554 = vpop.f32.mrb[0].mxu0
      %v1555 = vpop.f32.mrb[0].mxu0
      %v1556 = vadd.f32 0.0, %v1555
      %v1557 = vpop.f32.mrb[0].mxu0
      %1558 = vmatprep.mubr.bf16.mxu0 0
      %1559 = vmatmul.mubr.bf16.gmra.mrb[0].mxu0 %v1432
      %v1560 = vpop.f32.mrb[0].mxu0
      %v1561 = vadd.f32 0.0, %v1560
      %v1562 = vpop.f32.mrb[0].mxu0
      %v1563 = vpop.f32.mrb[0].mxu0
      %v1564 = vadd.f32 0.0, %v1563
      %v1565 = vpop.f32.mrb[0].mxu0
      %1566 = vmatprep.mubr.bf16.mxu0 0
      %1567 = vmatmul.mubr.bf16.gmra.mrb[0].mxu0 %v1433
      %v1568 = vpop.f32.mrb[0].mxu0
      %v1569 = vadd.f32 0.0, %v1568
      %v1570 = vpop.f32.mrb[0].mxu0
      %v1571 = vpop.f32.mrb[0].mxu0
      %v1572 = vadd.f32 0.0, %v1571
      %v1573 = vpop.f32.mrb[0].mxu0
      %1574 = vmatprep.mubr.bf16.mxu0 0
      %1575 = vmatmul.mubr.bf16.gmra.mrb[0].mxu0 %v1434
      %v1576 = vpop.f32.mrb[0].mxu0
      %v1577 = vadd.f32 0.0, %v1576
      %v1578 = vpop.f32.mrb[0].mxu0
      %v1579 = vpop.f32.mrb[0].mxu0
      %v1580 = vadd.f32 0.0, %v1579
      %v1581 = vpop.f32.mrb[0].mxu0
      %1582 = vmatprep.mubr.bf16.mxu0 0
      %1583 = vmatmul.mubr.bf16.gmra.mrb[0].mxu0 %v1435
      %v1584 = vpop.f32.mrb[0].mxu0
      %v1585 = vadd.f32 0.0, %v1584
      %v1586 = vpop.f32.mrb[0].mxu0
      %v1587 = vpop.f32.mrb[0].mxu0
      %v1588 = vadd.f32 0.0, %v1587
      %v1589 = vpop.f32.mrb[0].mxu0
      %1590 = vmatprep.mubr.bf16.mxu0 0
      %1591 = vmatmul.mubr.bf16.gmra.mrb[0].mxu0 %v1436
      %v1592 = vpop.f32.mrb[0].mxu0
      %v1593 = vadd.f32 0.0, %v1592
      %v1594 = vpop.f32.mrb[0].mxu0
      %v1595 = vpop.f32.mrb[0].mxu0
      %v1596 = vadd.f32 0.0, %v1595
      %v1597 = vpop.f32.mrb[0].mxu0
      %1598 = vmatprep.mubr.bf16.mxu0 0
      %1599 = vmatmul.mubr.bf16.gmra.mrb[0].mxu0 %v1437
      %v1600 = vpop.f32.mrb[0].mxu0
      %v1601 = vadd.f32 0.0, %v1600
      %v1602 = vpop.f32.mrb[0].mxu0
      %v1603 = vpop.f32.mrb[0].mxu0
      %v1604 = vadd.f32 0.0, %v1603
      %v1605 = vpop.f32.mrb[0].mxu0
      %1606 = vmatprep.mubr.bf16.mxu0 0
      %1607 = vmatmul.mubr.bf16.gmra.mrb[0].mxu0 %v1438
      %v1608 = vpop.f32.mrb[0].mxu0
      %v1609 = vadd.f32 0.0, %v1608
      %v1610 = vpop.f32.mrb[0].mxu0
      %v1611 = vpop.f32.mrb[0].mxu0
      %v1612 = vadd.f32 0.0, %v1611
      %v1613 = vpop.f32.mrb[0].mxu0
      %1614 = vmatprep.mubr.bf16.mxu0 0
      %1615 = vmatmul.mubr.bf16.gmra.mrb[0].mxu0 %v1439
      %v1616 = vpop.f32.mrb[0].mxu0
      %v1617 = vadd.f32 0.0, %v1616
      %v1618 = vpop.f32.mrb[0].mxu0
      %v1619 = vpop.f32.mrb[0].mxu0
      %v1620 = vadd.f32 0.0, %v1619
      %v1621 = vpop.f32.mrb[0].mxu0
      %1622 = vmatprep.mubr.bf16.mxu0 0
      %1623 = vmatmul.mubr.bf16.gmra.mrb[0].mxu0 %v1440
      %v1624 = vpop.f32.mrb[0].mxu0
      %v1625 = vadd.f32 0.0, %v1624
      %v1626 = vpop.f32.mrb[0].mxu0
      %v1627 = vpop.f32.mrb[0].mxu0
      %v1628 = vadd.f32 0.0, %v1627
      %v1629 = vpop.f32.mrb[0].mxu0
      %1630 = vmatprep.mubr.bf16.mxu0 0
      %1631 = vmatmul.mubr.bf16.gmra.mrb[0].mxu0 %v1441
      %v1632 = vpop.f32.mrb[0].mxu0
      %v1633 = vadd.f32 0.0, %v1632
      %v1634 = vpop.f32.mrb[0].mxu0
      %v1635 = vpop.f32.mrb[0].mxu0
      %v1636 = vadd.f32 0.0, %v1635
      %v1637 = vpop.f32.mrb[0].mxu0
      %1638 = vmatprep.mubr.bf16.mxu0 0
      %1639 = vmatmul.mubr.bf16.gmra.mrb[0].mxu0 %v1442
      %v1640 = vpop.f32.mrb[0].mxu0
      %v1641 = vadd.f32 0.0, %v1640
      %v1642 = vpop.f32.mrb[0].mxu0
      %v1643 = vpop.f32.mrb[0].mxu0
      %v1644 = vadd.f32 0.0, %v1643
      %v1645 = vpop.f32.mrb[0].mxu0
      %1646 = vmatprep.mubr.bf16.mxu0 0
      %1647 = vmatmul.mubr.bf16.gmra.mrb[0].mxu0 %v1443
      %v1648 = vpop.f32.mrb[0].mxu0
      %v1649 = vadd.f32 0.0, %v1648
      %v1650 = vpop.f32.mrb[0].mxu0
      %v1651 = vpop.f32.mrb[0].mxu0
      %v1652 = vadd.f32 0.0, %v1651
      %v1653 = vpop.f32.mrb[0].mxu0
      %1654 = vmatprep.mubr.bf16.mxu0 0
      %1655 = vmatmul.mubr.bf16.gmra.mrb[0].mxu0 %v1444
      %v1656 = vpop.f32.mrb[0].mxu0
      %v1657 = vadd.f32 0.0, %v1656
      %v1658 = vpop.f32.mrb[0].mxu0
      %v1659 = vpop.f32.mrb[0].mxu0
      %v1660 = vadd.f32 0.0, %v1659
      %v1661 = vpop.f32.mrb[0].mxu0
      %1662 = vmatprep.mubr.bf16.mxu0 0
      %1663 = vmatmul.mubr.bf16.gmra.mrb[0].mxu0 %v1445
      %v1664 = vpop.f32.mrb[0].mxu0
      %v1665 = vadd.f32 0.0, %v1664
      %v1666 = vpop.f32.mrb[0].mxu0
      %v1667 = vpop.f32.mrb[0].mxu0
      %v1668 = vadd.f32 0.0, %v1667
      %v1669 = vpop.f32.mrb[0].mxu0
      %1670 = vdwg.mxu0
      %v1671 = vadd.f32 %v1092, %v1545
      %v1672 = vadd.f32 %v1095, %v1548
      %v1673 = vadd.f32 %v1100, %v1553
      %v1674 = vadd.f32 %v1103, %v1556
      %v1675 = vadd.f32 %v1108, %v1561
      %v1676 = vadd.f32 %v1111, %v1564
      %v1677 = vadd.f32 %v1116, %v1569
      %v1678 = vadd.f32 %v1119, %v1572
      %v1679 = vadd.f32 %v1124, %v1577
      %v1680 = vadd.f32 %v1127, %v1580
      %v1681 = vadd.f32 %v1132, %v1585
      %v1682 = vadd.f32 %v1135, %v1588
      %v1683 = vadd.f32 %v1140, %v1593
      %v1684 = vadd.f32 %v1143, %v1596
      %v1685 = vadd.f32 %v1148, %v1601
      %v1686 = vadd.f32 %v1151, %v1604
      %v1687 = vadd.f32 %v1156, %v1609
      %v1688 = vadd.f32 %v1159, %v1612
      %v1689 = vadd.f32 %v1164, %v1617
      %v1690 = vadd.f32 %v1167, %v1620
      %v1691 = vadd.f32 %v1172, %v1625
      %v1692 = vadd.f32 %v1175, %v1628
      %v1693 = vadd.f32 %v1180, %v1633
      %v1694 = vadd.f32 %v1183, %v1636
      %v1695 = vadd.f32 %v1188, %v1641
      %v1696 = vadd.f32 %v1191, %v1644
      %v1697 = vadd.f32 %v1196, %v1649
      %v1698 = vadd.f32 %v1199, %v1652
      %v1699 = vadd.f32 %v1204, %v1657
      %v1700 = vadd.f32 %v1207, %v1660
      %v1701 = vadd.f32 %v1212, %v1665
      %v1702 = vadd.f32 %v1215, %v1668
      %s1703 = scalar_lea.vmem %s165, 12
      %v1704 = vld [vmem:[%s1703] sm:$0xf]
      %v1705 = vld [vmem:[%s1703 + $0x4] sm:$0xf]
      %v1706 = vld [vmem:[%s1703 + $0xc] sm:$0xf]
      %v1707 = vld [vmem:[%s1703 + $0x10] sm:$0xf]
      %v1708 = vld [vmem:[%s1703 + $0x18] sm:$0xf]
      %v1709 = vld [vmem:[%s1703 + $0x1c] sm:$0xf]
      %v1710 = vld [vmem:[%s1703 + $0x24] sm:$0xf]
      %v1711 = vld [vmem:[%s1703 + $0x28] sm:$0xf]
      %v1712 = vld [vmem:[%s1703 + $0x30] sm:$0xf]
      %v1713 = vld [vmem:[%s1703 + $0x34] sm:$0xf]
      %v1714 = vld [vmem:[%s1703 + $0x3c] sm:$0xf]
      %v1715 = vld [vmem:[%s1703 + $0x40] sm:$0xf]
      %v1716 = vld [vmem:[%s1703 + $0x48] sm:$0xf]
      %v1717 = vld [vmem:[%s1703 + $0x4c] sm:$0xf]
      %v1718 = vld [vmem:[%s1703 + $0x54] sm:$0xf]
      %v1719 = vld [vmem:[%s1703 + $0x58] sm:$0xf]
      %v1720 = vld [vmem:[%s1703 + $0x60] sm:$0xf]
      %v1721 = vld [vmem:[%s1703 + $0x64] sm:$0xf]
      %v1722 = vld [vmem:[%s1703 + $0x6c] sm:$0xf]
      %v1723 = vld [vmem:[%s1703 + $0x70] sm:$0xf]
      %v1724 = vld [vmem:[%s1703 + $0x78] sm:$0xf]
      %v1725 = vld [vmem:[%s1703 + $0x7c] sm:$0xf]
      %v1726 = vld [vmem:[%s1703 + $0x84] sm:$0xf]
      %v1727 = vld [vmem:[%s1703 + $0x88] sm:$0xf]
      %v1728 = vld [vmem:[%s1703 + $0x90] sm:$0xf]
      %v1729 = vld [vmem:[%s1703 + $0x94] sm:$0xf]
      %v1730 = vld [vmem:[%s1703 + $0x9c] sm:$0xf]
      %v1731 = vld [vmem:[%s1703 + $0xa0] sm:$0xf]
      %v1732 = vld [vmem:[%s1703 + $0xa8] sm:$0xf]
      %v1733 = vld [vmem:[%s1703 + $0xac] sm:$0xf]
      %v1734 = vld [vmem:[%s1703 + $0xb4] sm:$0xf]
      %v1735 = vld [vmem:[%s1703 + $0xb8] sm:$0xf]
      %s1736 = scalar_lea.vmem %s1, 192
      %v1737 = vld [vmem:[%s1736] sm:$0xf]
      %v1738 = vld [vmem:[%s1736 + $0x4] sm:$0xf]
      %v1739 = vld [vmem:[%s1736 + $0x8] sm:$0xf]
      %v1740 = vld [vmem:[%s1736 + $0xc] sm:$0xf]
      %v1741 = vld [vmem:[%s1736 + $0x10] sm:$0xf]
      %v1742 = vld [vmem:[%s1736 + $0x14] sm:$0xf]
      %v1743 = vld [vmem:[%s1736 + $0x18] sm:$0xf]
      %v1744 = vld [vmem:[%s1736 + $0x1c] sm:$0xf]
      %v1745 = vld [vmem:[%s1736 + $0x20] sm:$0xf]
      %v1746 = vld [vmem:[%s1736 + $0x24] sm:$0xf]
      %v1747 = vld [vmem:[%s1736 + $0x28] sm:$0xf]
      %v1748 = vld [vmem:[%s1736 + $0x2c] sm:$0xf]
      %v1749 = vld [vmem:[%s1736 + $0x30] sm:$0xf]
      %v1750 = vld [vmem:[%s1736 + $0x34] sm:$0xf]
      %v1751 = vld [vmem:[%s1736 + $0x38] sm:$0xf]
      %v1752 = vld [vmem:[%s1736 + $0x3c] sm:$0xf]
      %v1785 = vunpack.c.l.b16 %v1704
      %v1786 = vunpack.c.l.b16 %v1705
      %v1787 = vunpack.c.l.b16 %v1706
      %v1788 = vunpack.c.l.b16 %v1707
      %v1789 = vunpack.c.l.b16 %v1708
      %v1790 = vunpack.c.l.b16 %v1709
      %v1791 = vunpack.c.l.b16 %v1710
      %v1792 = vunpack.c.l.b16 %v1711
      %v1793 = vunpack.c.l.b16 %v1712
      %v1794 = vunpack.c.l.b16 %v1713
      %v1795 = vunpack.c.l.b16 %v1714
      %v1796 = vunpack.c.l.b16 %v1715
      %v1797 = vunpack.c.l.b16 %v1716
      %v1798 = vunpack.c.l.b16 %v1717
      %v1799 = vunpack.c.l.b16 %v1718
      %v1800 = vunpack.c.l.b16 %v1719
      %v1801 = vunpack.c.l.b16 %v1720
      %v1802 = vunpack.c.l.b16 %v1721
      %v1803 = vunpack.c.l.b16 %v1722
      %v1804 = vunpack.c.l.b16 %v1723
      %v1805 = vunpack.c.l.b16 %v1724
      %v1806 = vunpack.c.l.b16 %v1725
      %v1807 = vunpack.c.l.b16 %v1726
      %v1808 = vunpack.c.l.b16 %v1727
      %v1809 = vunpack.c.l.b16 %v1728
      %v1810 = vunpack.c.l.b16 %v1729
      %v1811 = vunpack.c.l.b16 %v1730
      %v1812 = vunpack.c.l.b16 %v1731
      %v1813 = vunpack.c.l.b16 %v1732
      %v1814 = vunpack.c.l.b16 %v1733
      %v1815 = vunpack.c.l.b16 %v1734
      %v1816 = vunpack.c.l.b16 %v1735
      %v1817 = vpack.c.b16 %v1786, %v1785
      %v1818 = vpack.c.b16 %v1788, %v1787
      %v1819 = vpack.c.b16 %v1790, %v1789
      %v1820 = vpack.c.b16 %v1792, %v1791
      %v1821 = vpack.c.b16 %v1794, %v1793
      %v1822 = vpack.c.b16 %v1796, %v1795
      %v1823 = vpack.c.b16 %v1798, %v1797
      %v1824 = vpack.c.b16 %v1800, %v1799
      %v1825 = vpack.c.b16 %v1802, %v1801
      %v1826 = vpack.c.b16 %v1804, %v1803
      %v1827 = vpack.c.b16 %v1806, %v1805
      %v1828 = vpack.c.b16 %v1808, %v1807
      %v1829 = vpack.c.b16 %v1810, %v1809
      %v1830 = vpack.c.b16 %v1812, %v1811
      %v1831 = vpack.c.b16 %v1814, %v1813
      %v1832 = vpack.c.b16 %v1816, %v1815
      %v1865 = vunpack.c.l.b16 %v1737
      %v1866 = vunpack.c.l.b16 %v1738
      %v1867 = vunpack.c.l.b16 %v1739
      %v1868 = vunpack.c.l.b16 %v1740
      %v1869 = vunpack.c.l.b16 %v1741
      %v1870 = vunpack.c.l.b16 %v1742
      %v1871 = vunpack.c.l.b16 %v1743
      %v1872 = vunpack.c.l.b16 %v1744
      %v1873 = vunpack.c.l.b16 %v1745
      %v1874 = vunpack.c.l.b16 %v1746
      %v1875 = vunpack.c.l.b16 %v1747
      %v1876 = vunpack.c.l.b16 %v1748
      %v1877 = vunpack.c.l.b16 %v1749
      %v1878 = vunpack.c.l.b16 %v1750
      %v1879 = vunpack.c.l.b16 %v1751
      %v1880 = vunpack.c.l.b16 %v1752
      %v1881 = vpack.c.b16 %v1866, %v1865
      %v1882 = vpack.c.b16 %v1868, %v1867
      %v1883 = vpack.c.b16 %v1870, %v1869
      %v1884 = vpack.c.b16 %v1872, %v1871
      %v1885 = vpack.c.b16 %v1874, %v1873
      %v1886 = vpack.c.b16 %v1876, %v1875
      %v1887 = vpack.c.b16 %v1878, %v1877
      %v1888 = vpack.c.b16 %v1880, %v1879
      %1897 = vmatprep.subr.bf16.mxu0 0
      %1898 = vmatpush1.bf16.msra.mxu0 %v1881
      %1899 = vmatprep.subr.bf16.mxu0 0
      %1900 = vmatpush1.bf16.msra.mxu0 %v1882
      %1901 = vmatprep.subr.bf16.mxu0 0
      %1902 = vmatpush1.bf16.msra.mxu0 %v1883
      %1903 = vmatprep.subr.bf16.mxu0 0
      %1904 = vmatpush1.bf16.msra.mxu0 %v1884
      %1905 = vmatprep.subr.bf16.mxu0 0
      %1906 = vmatpush1.bf16.msra.mxu0 %v1885
      %1907 = vmatprep.subr.bf16.mxu0 0
      %1908 = vmatpush1.bf16.msra.mxu0 %v1886
      %1909 = vmatprep.subr.bf16.mxu0 0
      %1910 = vmatpush1.bf16.msra.mxu0 %v1887
      %1911 = vmatprep.subr.bf16.mxu0 0
      %1912 = vmatpush1.bf16.msra.mxu0 %v1888
      %1913 = vmatprep.subr.bf16.mxu0 0
      %1914 = vmatpush1.bf16.msra.mxu0 0
      %1915 = vmatprep.subr.bf16.mxu0 0
      %1916 = vmatpush1.bf16.msra.mxu0 0
      %1917 = vmatprep.subr.bf16.mxu0 0
      %1918 = vmatpush1.bf16.msra.mxu0 0
      %1919 = vmatprep.subr.bf16.mxu0 0
      %1920 = vmatpush1.bf16.msra.mxu0 0
      %1921 = vmatprep.subr.bf16.mxu0 0
      %1922 = vmatpush1.bf16.msra.mxu0 0
      %1923 = vmatprep.subr.bf16.mxu0 0
      %1924 = vmatpush1.bf16.msra.mxu0 0
      %1925 = vmatprep.subr.bf16.mxu0 0
      %1926 = vmatpush1.bf16.msra.mxu0 0
      %1927 = vmatprep.subr.bf16.mxu0 0
      %1928 = vmatpush1.bf16.msra.mxu0 0
      %1929 = vmatprep.mubr.bf16.mxu0 0
      %1930 = vmatmul.mubr.bf16.gmra.mrb[0].mxu0 %v1817
      %v1931 = vpop.f32.mrb[0].mxu0
      %v1932 = vadd.f32 0.0, %v1931
      %v1933 = vpop.f32.mrb[0].mxu0
      %v1934 = vpop.f32.mrb[0].mxu0
      %v1935 = vadd.f32 0.0, %v1934
      %v1936 = vpop.f32.mrb[0].mxu0
      %1937 = vmatprep.mubr.bf16.mxu0 0
      %1938 = vmatmul.mubr.bf16.gmra.mrb[0].mxu0 %v1818
      %v1939 = vpop.f32.mrb[0].mxu0
      %v1940 = vadd.f32 0.0, %v1939
      %v1941 = vpop.f32.mrb[0].mxu0
      %v1942 = vpop.f32.mrb[0].mxu0
      %v1943 = vadd.f32 0.0, %v1942
      %v1944 = vpop.f32.mrb[0].mxu0
      %1945 = vmatprep.mubr.bf16.mxu0 0
      %1946 = vmatmul.mubr.bf16.gmra.mrb[0].mxu0 %v1819
      %v1947 = vpop.f32.mrb[0].mxu0
      %v1948 = vadd.f32 0.0, %v1947
      %v1949 = vpop.f32.mrb[0].mxu0
      %v1950 = vpop.f32.mrb[0].mxu0
      %v1951 = vadd.f32 0.0, %v1950
      %v1952 = vpop.f32.mrb[0].mxu0
      %1953 = vmatprep.mubr.bf16.mxu0 0
      %1954 = vmatmul.mubr.bf16.gmra.mrb[0].mxu0 %v1820
      %v1955 = vpop.f32.mrb[0].mxu0
      %v1956 = vadd.f32 0.0, %v1955
      %v1957 = vpop.f32.mrb[0].mxu0
      %v1958 = vpop.f32.mrb[0].mxu0
      %v1959 = vadd.f32 0.0, %v1958
      %v1960 = vpop.f32.mrb[0].mxu0
      %1961 = vmatprep.mubr.bf16.mxu0 0
      %1962 = vmatmul.mubr.bf16.gmra.mrb[0].mxu0 %v1821
      %v1963 = vpop.f32.mrb[0].mxu0
      %v1964 = vadd.f32 0.0, %v1963
      %v1965 = vpop.f32.mrb[0].mxu0
      %v1966 = vpop.f32.mrb[0].mxu0
      %v1967 = vadd.f32 0.0, %v1966
      %v1968 = vpop.f32.mrb[0].mxu0
      %1969 = vmatprep.mubr.bf16.mxu0 0
      %1970 = vmatmul.mubr.bf16.gmra.mrb[0].mxu0 %v1822
      %v1971 = vpop.f32.mrb[0].mxu0
      %v1972 = vadd.f32 0.0, %v1971
      %v1973 = vpop.f32.mrb[0].mxu0
      %v1974 = vpop.f32.mrb[0].mxu0
      %v1975 = vadd.f32 0.0, %v1974
      %v1976 = vpop.f32.mrb[0].mxu0
      %1977 = vmatprep.mubr.bf16.mxu0 0
      %1978 = vmatmul.mubr.bf16.gmra.mrb[0].mxu0 %v1823
      %v1979 = vpop.f32.mrb[0].mxu0
      %v1980 = vadd.f32 0.0, %v1979
      %v1981 = vpop.f32.mrb[0].mxu0
      %v1982 = vpop.f32.mrb[0].mxu0
      %v1983 = vadd.f32 0.0, %v1982
      %v1984 = vpop.f32.mrb[0].mxu0
      %1985 = vmatprep.mubr.bf16.mxu0 0
      %1986 = vmatmul.mubr.bf16.gmra.mrb[0].mxu0 %v1824
      %v1987 = vpop.f32.mrb[0].mxu0
      %v1988 = vadd.f32 0.0, %v1987
      %v1989 = vpop.f32.mrb[0].mxu0
      %v1990 = vpop.f32.mrb[0].mxu0
      %v1991 = vadd.f32 0.0, %v1990
      %v1992 = vpop.f32.mrb[0].mxu0
      %1993 = vmatprep.mubr.bf16.mxu0 0
      %1994 = vmatmul.mubr.bf16.gmra.mrb[0].mxu0 %v1825
      %v1995 = vpop.f32.mrb[0].mxu0
      %v1996 = vadd.f32 0.0, %v1995
      %v1997 = vpop.f32.mrb[0].mxu0
      %v1998 = vpop.f32.mrb[0].mxu0
      %v1999 = vadd.f32 0.0, %v1998
      %v2000 = vpop.f32.mrb[0].mxu0
      %2001 = vmatprep.mubr.bf16.mxu0 0
      %2002 = vmatmul.mubr.bf16.gmra.mrb[0].mxu0 %v1826
      %v2003 = vpop.f32.mrb[0].mxu0
      %v2004 = vadd.f32 0.0, %v2003
      %v2005 = vpop.f32.mrb[0].mxu0
      %v2006 = vpop.f32.mrb[0].mxu0
      %v2007 = vadd.f32 0.0, %v2006
      %v2008 = vpop.f32.mrb[0].mxu0
      %2009 = vmatprep.mubr.bf16.mxu0 0
      %2010 = vmatmul.mubr.bf16.gmra.mrb[0].mxu0 %v1827
      %v2011 = vpop.f32.mrb[0].mxu0
      %v2012 = vadd.f32 0.0, %v2011
      %v2013 = vpop.f32.mrb[0].mxu0
      %v2014 = vpop.f32.mrb[0].mxu0
      %v2015 = vadd.f32 0.0, %v2014
      %v2016 = vpop.f32.mrb[0].mxu0
      %2017 = vmatprep.mubr.bf16.mxu0 0
      %2018 = vmatmul.mubr.bf16.gmra.mrb[0].mxu0 %v1828
      %v2019 = vpop.f32.mrb[0].mxu0
      %v2020 = vadd.f32 0.0, %v2019
      %v2021 = vpop.f32.mrb[0].mxu0
      %v2022 = vpop.f32.mrb[0].mxu0
      %v2023 = vadd.f32 0.0, %v2022
      %v2024 = vpop.f32.mrb[0].mxu0
      %2025 = vmatprep.mubr.bf16.mxu0 0
      %2026 = vmatmul.mubr.bf16.gmra.mrb[0].mxu0 %v1829
      %v2027 = vpop.f32.mrb[0].mxu0
      %v2028 = vadd.f32 0.0, %v2027
      %v2029 = vpop.f32.mrb[0].mxu0
      %v2030 = vpop.f32.mrb[0].mxu0
      %v2031 = vadd.f32 0.0, %v2030
      %v2032 = vpop.f32.mrb[0].mxu0
      %2033 = vmatprep.mubr.bf16.mxu0 0
      %2034 = vmatmul.mubr.bf16.gmra.mrb[0].mxu0 %v1830
      %v2035 = vpop.f32.mrb[0].mxu0
      %v2036 = vadd.f32 0.0, %v2035
      %v2037 = vpop.f32.mrb[0].mxu0
      %v2038 = vpop.f32.mrb[0].mxu0
      %v2039 = vadd.f32 0.0, %v2038
      %v2040 = vpop.f32.mrb[0].mxu0
      %2041 = vmatprep.mubr.bf16.mxu0 0
      %2042 = vmatmul.mubr.bf16.gmra.mrb[0].mxu0 %v1831
      %v2043 = vpop.f32.mrb[0].mxu0
      %v2044 = vadd.f32 0.0, %v2043
      %v2045 = vpop.f32.mrb[0].mxu0
      %v2046 = vpop.f32.mrb[0].mxu0
      %v2047 = vadd.f32 0.0, %v2046
      %v2048 = vpop.f32.mrb[0].mxu0
      %2049 = vmatprep.mubr.bf16.mxu0 0
      %2050 = vmatmul.mubr.bf16.gmra.mrb[0].mxu0 %v1832
      %v2051 = vpop.f32.mrb[0].mxu0
      %v2052 = vadd.f32 0.0, %v2051
      %v2053 = vpop.f32.mrb[0].mxu0
      %v2054 = vpop.f32.mrb[0].mxu0
      %v2055 = vadd.f32 0.0, %v2054
      %v2056 = vpop.f32.mrb[0].mxu0
      %2057 = vdwg.mxu0
      %v2058 = vadd.f32 %v1671, %v1932
      %v2059 = vadd.f32 %v1672, %v1935
      %v2060 = vadd.f32 %v1673, %v1940
      %v2061 = vadd.f32 %v1674, %v1943
      %v2062 = vadd.f32 %v1675, %v1948
      %v2063 = vadd.f32 %v1676, %v1951
      %v2064 = vadd.f32 %v1677, %v1956
      %v2065 = vadd.f32 %v1678, %v1959
      %v2066 = vadd.f32 %v1679, %v1964
      %v2067 = vadd.f32 %v1680, %v1967
      %v2068 = vadd.f32 %v1681, %v1972
      %v2069 = vadd.f32 %v1682, %v1975
      %v2070 = vadd.f32 %v1683, %v1980
      %v2071 = vadd.f32 %v1684, %v1983
      %v2072 = vadd.f32 %v1685, %v1988
      %v2073 = vadd.f32 %v1686, %v1991
      %v2074 = vadd.f32 %v1687, %v1996
      %v2075 = vadd.f32 %v1688, %v1999
      %v2076 = vadd.f32 %v1689, %v2004
      %v2077 = vadd.f32 %v1690, %v2007
      %v2078 = vadd.f32 %v1691, %v2012
      %v2079 = vadd.f32 %v1692, %v2015
      %v2080 = vadd.f32 %v1693, %v2020
      %v2081 = vadd.f32 %v1694, %v2023
      %v2082 = vadd.f32 %v1695, %v2028
      %v2083 = vadd.f32 %v1696, %v2031
      %v2084 = vadd.f32 %v1697, %v2036
      %v2085 = vadd.f32 %v1698, %v2039
      %v2086 = vadd.f32 %v1699, %v2044
      %v2087 = vadd.f32 %v1700, %v2047
      %v2088 = vadd.f32 %v1701, %v2052
      %v2089 = vadd.f32 %v1702, %v2055
      %v2090 = vld [vmem:[%s1703] sm:$0xf]
      %v2091 = vld [vmem:[%s1703 + $0x4] sm:$0xf]
      %v2092 = vld [vmem:[%s1703 + $0x8] sm:$0x1]
      %v2093 = vld [vmem:[%s1703 + $0xc] sm:$0xf]
      %v2094 = vld [vmem:[%s1703 + $0x10] sm:$0xf]
      %v2095 = vld [vmem:[%s1703 + $0x14] sm:$0x1]
      %v2096 = vld [vmem:[%s1703 + $0x18] sm:$0xf]
      %v2097 = vld [vmem:[%s1703 + $0x1c] sm:$0xf]
      %v2098 = vld [vmem:[%s1703 + $0x20] sm:$0x1]
      %v2099 = vld [vmem:[%s1703 + $0x24] sm:$0xf]
      %v2100 = vld [vmem:[%s1703 + $0x28] sm:$0xf]
      %v2101 = vld [vmem:[%s1703 + $0x2c] sm:$0x1]
      %v2102 = vld [vmem:[%s1703 + $0x30] sm:$0xf]
      %v2103 = vld [vmem:[%s1703 + $0x34] sm:$0xf]
      %v2104 = vld [vmem:[%s1703 + $0x38] sm:$0x1]
      %v2105 = vld [vmem:[%s1703 + $0x3c] sm:$0xf]
      %v2106 = vld [vmem:[%s1703 + $0x40] sm:$0xf]
      %v2107 = vld [vmem:[%s1703 + $0x44] sm:$0x1]
      %v2108 = vld [vmem:[%s1703 + $0x48] sm:$0xf]
      %v2109 = vld [vmem:[%s1703 + $0x4c] sm:$0xf]
      %v2110 = vld [vmem:[%s1703 + $0x50] sm:$0x1]
      %v2111 = vld [vmem:[%s1703 + $0x54] sm:$0xf]
      %v2112 = vld [vmem:[%s1703 + $0x58] sm:$0xf]
      %v2113 = vld [vmem:[%s1703 + $0x5c] sm:$0x1]
      %v2114 = vld [vmem:[%s1703 + $0x60] sm:$0xf]
      %v2115 = vld [vmem:[%s1703 + $0x64] sm:$0xf]
      %v2116 = vld [vmem:[%s1703 + $0x68] sm:$0x1]
      %v2117 = vld [vmem:[%s1703 + $0x6c] sm:$0xf]
      %v2118 = vld [vmem:[%s1703 + $0x70] sm:$0xf]
      %v2119 = vld [vmem:[%s1703 + $0x74] sm:$0x1]
      %v2120 = vld [vmem:[%s1703 + $0x78] sm:$0xf]
      %v2121 = vld [vmem:[%s1703 + $0x7c] sm:$0xf]
      %v2122 = vld [vmem:[%s1703 + $0x80] sm:$0x1]
      %v2123 = vld [vmem:[%s1703 + $0x84] sm:$0xf]
      %v2124 = vld [vmem:[%s1703 + $0x88] sm:$0xf]
      %v2125 = vld [vmem:[%s1703 + $0x8c] sm:$0x1]
      %v2126 = vld [vmem:[%s1703 + $0x90] sm:$0xf]
      %v2127 = vld [vmem:[%s1703 + $0x94] sm:$0xf]
      %v2128 = vld [vmem:[%s1703 + $0x98] sm:$0x1]
      %v2129 = vld [vmem:[%s1703 + $0x9c] sm:$0xf]
      %v2130 = vld [vmem:[%s1703 + $0xa0] sm:$0xf]
      %v2131 = vld [vmem:[%s1703 + $0xa4] sm:$0x1]
      %v2132 = vld [vmem:[%s1703 + $0xa8] sm:$0xf]
      %v2133 = vld [vmem:[%s1703 + $0xac] sm:$0xf]
      %v2134 = vld [vmem:[%s1703 + $0xb0] sm:$0x1]
      %v2135 = vld [vmem:[%s1703 + $0xb4] sm:$0xf]
      %v2136 = vld [vmem:[%s1703 + $0xb8] sm:$0xf]
      %v2137 = vld [vmem:[%s1703 + $0xbc] sm:$0x1]
      %v2139 = vshrl.u32 %v2090, 16
      %v2141 = vrot.slane %v2139, 4
      %v2142 = vshll.u32 %v2090, 16
      %v2144 = vrot.slane %v2142, 5
      %v2145 = vor.u32 %v2141, %v2144
      %v2146 = vrot.slane %v2145, 4
      %v2148 = vshll.u32 %v2091, 16
      %v2150 = vrot.slane %v2148, 5
      %v2151 = vsel %vm238, %v2146, %v2150
      %v2152 = vshrl.u32 %v2091, 16
      %v2154 = vrot.slane %v2152, 4
      %v2155 = vor.u32 %v2154, %v2150
      %v2156 = vrot.slane %v2155, 4
      %v2158 = vshll.u32 %v2092, 16
      %v2160 = vrot.slane %v2158, 5
      %v2161 = vsel %vm238, %v2156, %v2160
      %v2163 = vshrl.u32 %v2093, 16
      %v2165 = vrot.slane %v2163, 4
      %v2166 = vshll.u32 %v2093, 16
      %v2168 = vrot.slane %v2166, 5
      %v2169 = vor.u32 %v2165, %v2168
      %v2170 = vrot.slane %v2169, 4
      %v2172 = vshll.u32 %v2094, 16
      %v2174 = vrot.slane %v2172, 5
      %v2175 = vsel %vm238, %v2170, %v2174
      %v2176 = vshrl.u32 %v2094, 16
      %v2178 = vrot.slane %v2176, 4
      %v2179 = vor.u32 %v2178, %v2174
      %v2180 = vrot.slane %v2179, 4
      %v2182 = vshll.u32 %v2095, 16
      %v2184 = vrot.slane %v2182, 5
      %v2185 = vsel %vm238, %v2180, %v2184
      %v2187 = vshrl.u32 %v2096, 16
      %v2189 = vrot.slane %v2187, 4
      %v2190 = vshll.u32 %v2096, 16
      %v2192 = vrot.slane %v2190, 5
      %v2193 = vor.u32 %v2189, %v2192
      %v2194 = vrot.slane %v2193, 4
      %v2196 = vshll.u32 %v2097, 16
      %v2198 = vrot.slane %v2196, 5
      %v2199 = vsel %vm238, %v2194, %v2198
      %v2200 = vshrl.u32 %v2097, 16
      %v2202 = vrot.slane %v2200, 4
      %v2203 = vor.u32 %v2202, %v2198
      %v2204 = vrot.slane %v2203, 4
      %v2206 = vshll.u32 %v2098, 16
      %v2208 = vrot.slane %v2206, 5
      %v2209 = vsel %vm238, %v2204, %v2208
      %v2211 = vshrl.u32 %v2099, 16
      %v2213 = vrot.slane %v2211, 4
      %v2214 = vshll.u32 %v2099, 16
      %v2216 = vrot.slane %v2214, 5
      %v2217 = vor.u32 %v2213, %v2216
      %v2218 = vrot.slane %v2217, 4
      %v2220 = vshll.u32 %v2100, 16
      %v2222 = vrot.slane %v2220, 5
      %v2223 = vsel %vm238, %v2218, %v2222
      %v2224 = vshrl.u32 %v2100, 16
      %v2226 = vrot.slane %v2224, 4
      %v2227 = vor.u32 %v2226, %v2222
      %v2228 = vrot.slane %v2227, 4
      %v2230 = vshll.u32 %v2101, 16
      %v2232 = vrot.slane %v2230, 5
      %v2233 = vsel %vm238, %v2228, %v2232
      %v2235 = vshrl.u32 %v2102, 16
      %v2237 = vrot.slane %v2235, 4
      %v2238 = vshll.u32 %v2102, 16
      %v2240 = vrot.slane %v2238, 5
      %v2241 = vor.u32 %v2237, %v2240
      %v2242 = vrot.slane %v2241, 4
      %v2244 = vshll.u32 %v2103, 16
      %v2246 = vrot.slane %v2244, 5
      %v2247 = vsel %vm238, %v2242, %v2246
      %v2248 = vshrl.u32 %v2103, 16
      %v2250 = vrot.slane %v2248, 4
      %v2251 = vor.u32 %v2250, %v2246
      %v2252 = vrot.slane %v2251, 4
      %v2254 = vshll.u32 %v2104, 16
      %v2256 = vrot.slane %v2254, 5
      %v2257 = vsel %vm238, %v2252, %v2256
      %v2259 = vshrl.u32 %v2105, 16
      %v2261 = vrot.slane %v2259, 4
      %v2262 = vshll.u32 %v2105, 16
      %v2264 = vrot.slane %v2262, 5
      %v2265 = vor.u32 %v2261, %v2264
      %v2266 = vrot.slane %v2265, 4
      %v2268 = vshll.u32 %v2106, 16
      %v2270 = vrot.slane %v2268, 5
      %v2271 = vsel %vm238, %v2266, %v2270
      %v2272 = vshrl.u32 %v2106, 16
      %v2274 = vrot.slane %v2272, 4
      %v2275 = vor.u32 %v2274, %v2270
      %v2276 = vrot.slane %v2275, 4
      %v2278 = vshll.u32 %v2107, 16
      %v2280 = vrot.slane %v2278, 5
      %v2281 = vsel %vm238, %v2276, %v2280
      %v2283 = vshrl.u32 %v2108, 16
      %v2285 = vrot.slane %v2283, 4
      %v2286 = vshll.u32 %v2108, 16
      %v2288 = vrot.slane %v2286, 5
      %v2289 = vor.u32 %v2285, %v2288
      %v2290 = vrot.slane %v2289, 4
      %v2292 = vshll.u32 %v2109, 16
      %v2294 = vrot.slane %v2292, 5
      %v2295 = vsel %vm238, %v2290, %v2294
      %v2296 = vshrl.u32 %v2109, 16
      %v2298 = vrot.slane %v2296, 4
      %v2299 = vor.u32 %v2298, %v2294
      %v2300 = vrot.slane %v2299, 4
      %v2302 = vshll.u32 %v2110, 16
      %v2304 = vrot.slane %v2302, 5
      %v2305 = vsel %vm238, %v2300, %v2304
      %v2307 = vshrl.u32 %v2111, 16
      %v2309 = vrot.slane %v2307, 4
      %v2310 = vshll.u32 %v2111, 16
      %v2312 = vrot.slane %v2310, 5
      %v2313 = vor.u32 %v2309, %v2312
      %v2314 = vrot.slane %v2313, 4
      %v2316 = vshll.u32 %v2112, 16
      %v2318 = vrot.slane %v2316, 5
      %v2319 = vsel %vm238, %v2314, %v2318
      %v2320 = vshrl.u32 %v2112, 16
      %v2322 = vrot.slane %v2320, 4
      %v2323 = vor.u32 %v2322, %v2318
      %v2324 = vrot.slane %v2323, 4
      %v2326 = vshll.u32 %v2113, 16
      %v2328 = vrot.slane %v2326, 5
      %v2329 = vsel %vm238, %v2324, %v2328
      %v2331 = vshrl.u32 %v2114, 16
      %v2333 = vrot.slane %v2331, 4
      %v2334 = vshll.u32 %v2114, 16
      %v2336 = vrot.slane %v2334, 5
      %v2337 = vor.u32 %v2333, %v2336
      %v2338 = vrot.slane %v2337, 4
      %v2340 = vshll.u32 %v2115, 16
      %v2342 = vrot.slane %v2340, 5
      %v2343 = vsel %vm238, %v2338, %v2342
      %v2344 = vshrl.u32 %v2115, 16
      %v2346 = vrot.slane %v2344, 4
      %v2347 = vor.u32 %v2346, %v2342
      %v2348 = vrot.slane %v2347, 4
      %v2350 = vshll.u32 %v2116, 16
      %v2352 = vrot.slane %v2350, 5
      %v2353 = vsel %vm238, %v2348, %v2352
      %v2355 = vshrl.u32 %v2117, 16
      %v2357 = vrot.slane %v2355, 4
      %v2358 = vshll.u32 %v2117, 16
      %v2360 = vrot.slane %v2358, 5
      %v2361 = vor.u32 %v2357, %v2360
      %v2362 = vrot.slane %v2361, 4
      %v2364 = vshll.u32 %v2118, 16
      %v2366 = vrot.slane %v2364, 5
      %v2367 = vsel %vm238, %v2362, %v2366
      %v2368 = vshrl.u32 %v2118, 16
      %v2370 = vrot.slane %v2368, 4
      %v2371 = vor.u32 %v2370, %v2366
      %v2372 = vrot.slane %v2371, 4
      %v2374 = vshll.u32 %v2119, 16
      %v2376 = vrot.slane %v2374, 5
      %v2377 = vsel %vm238, %v2372, %v2376
      %v2379 = vshrl.u32 %v2120, 16
      %v2381 = vrot.slane %v2379, 4
      %v2382 = vshll.u32 %v2120, 16
      %v2384 = vrot.slane %v2382, 5
      %v2385 = vor.u32 %v2381, %v2384
      %v2386 = vrot.slane %v2385, 4
      %v2388 = vshll.u32 %v2121, 16
      %v2390 = vrot.slane %v2388, 5
      %v2391 = vsel %vm238, %v2386, %v2390
      %v2392 = vshrl.u32 %v2121, 16
      %v2394 = vrot.slane %v2392, 4
      %v2395 = vor.u32 %v2394, %v2390
      %v2396 = vrot.slane %v2395, 4
      %v2398 = vshll.u32 %v2122, 16
      %v2400 = vrot.slane %v2398, 5
      %v2401 = vsel %vm238, %v2396, %v2400
      %v2403 = vshrl.u32 %v2123, 16
      %v2405 = vrot.slane %v2403, 4
      %v2406 = vshll.u32 %v2123, 16
      %v2408 = vrot.slane %v2406, 5
      %v2409 = vor.u32 %v2405, %v2408
      %v2410 = vrot.slane %v2409, 4
      %v2412 = vshll.u32 %v2124, 16
      %v2414 = vrot.slane %v2412, 5
      %v2415 = vsel %vm238, %v2410, %v2414
      %v2416 = vshrl.u32 %v2124, 16
      %v2418 = vrot.slane %v2416, 4
      %v2419 = vor.u32 %v2418, %v2414
      %v2420 = vrot.slane %v2419, 4
      %v2422 = vshll.u32 %v2125, 16
      %v2424 = vrot.slane %v2422, 5
      %v2425 = vsel %vm238, %v2420, %v2424
      %v2427 = vshrl.u32 %v2126, 16
      %v2429 = vrot.slane %v2427, 4
      %v2430 = vshll.u32 %v2126, 16
      %v2432 = vrot.slane %v2430, 5
      %v2433 = vor.u32 %v2429, %v2432
      %v2434 = vrot.slane %v2433, 4
      %v2436 = vshll.u32 %v2127, 16
      %v2438 = vrot.slane %v2436, 5
      %v2439 = vsel %vm238, %v2434, %v2438
      %v2440 = vshrl.u32 %v2127, 16
      %v2442 = vrot.slane %v2440, 4
      %v2443 = vor.u32 %v2442, %v2438
      %v2444 = vrot.slane %v2443, 4
      %v2446 = vshll.u32 %v2128, 16
      %v2448 = vrot.slane %v2446, 5
      %v2449 = vsel %vm238, %v2444, %v2448
      %v2451 = vshrl.u32 %v2129, 16
      %v2453 = vrot.slane %v2451, 4
      %v2454 = vshll.u32 %v2129, 16
      %v2456 = vrot.slane %v2454, 5
      %v2457 = vor.u32 %v2453, %v2456
      %v2458 = vrot.slane %v2457, 4
      %v2460 = vshll.u32 %v2130, 16
      %v2462 = vrot.slane %v2460, 5
      %v2463 = vsel %vm238, %v2458, %v2462
      %v2464 = vshrl.u32 %v2130, 16
      %v2466 = vrot.slane %v2464, 4
      %v2467 = vor.u32 %v2466, %v2462
      %v2468 = vrot.slane %v2467, 4
      %v2470 = vshll.u32 %v2131, 16
      %v2472 = vrot.slane %v2470, 5
      %v2473 = vsel %vm238, %v2468, %v2472
      %v2475 = vshrl.u32 %v2132, 16
      %v2477 = vrot.slane %v2475, 4
      %v2478 = vshll.u32 %v2132, 16
      %v2480 = vrot.slane %v2478, 5
      %v2481 = vor.u32 %v2477, %v2480
      %v2482 = vrot.slane %v2481, 4
      %v2484 = vshll.u32 %v2133, 16
      %v2486 = vrot.slane %v2484, 5
      %v2487 = vsel %vm238, %v2482, %v2486
      %v2488 = vshrl.u32 %v2133, 16
      %v2490 = vrot.slane %v2488, 4
      %v2491 = vor.u32 %v2490, %v2486
      %v2492 = vrot.slane %v2491, 4
      %v2494 = vshll.u32 %v2134, 16
      %v2496 = vrot.slane %v2494, 5
      %v2497 = vsel %vm238, %v2492, %v2496
      %v2499 = vshrl.u32 %v2135, 16
      %v2501 = vrot.slane %v2499, 4
      %v2502 = vshll.u32 %v2135, 16
      %v2504 = vrot.slane %v2502, 5
      %v2505 = vor.u32 %v2501, %v2504
      %v2506 = vrot.slane %v2505, 4
      %v2508 = vshll.u32 %v2136, 16
      %v2510 = vrot.slane %v2508, 5
      %v2511 = vsel %vm238, %v2506, %v2510
      %v2512 = vshrl.u32 %v2136, 16
      %v2514 = vrot.slane %v2512, 4
      %v2515 = vor.u32 %v2514, %v2510
      %v2516 = vrot.slane %v2515, 4
      %v2518 = vshll.u32 %v2137, 16
      %v2520 = vrot.slane %v2518, 5
      %v2521 = vsel %vm238, %v2516, %v2520
      %s2522 = scalar_lea.vmem %s1, 256
      %v2523 = vld [vmem:[%s2522] sm:$0xf]
      %v2524 = vld [vmem:[%s2522 + $0x4] sm:$0xf]
      %v2525 = vld [vmem:[%s2522 + $0x8] sm:$0xf]
      %v2526 = vld [vmem:[%s2522 + $0xc] sm:$0xf]
      %v2527 = vld [vmem:[%s2522 + $0x10] sm:$0xf]
      %v2528 = vld [vmem:[%s2522 + $0x14] sm:$0xf]
      %v2529 = vld [vmem:[%s2522 + $0x18] sm:$0xf]
      %v2530 = vld [vmem:[%s2522 + $0x1c] sm:$0xf]
      %v2531 = vld [vmem:[%s2522 + $0x20] sm:$0xf]
      %v2532 = vld [vmem:[%s2522 + $0x24] sm:$0xf]
      %v2533 = vld [vmem:[%s2522 + $0x28] sm:$0xf]
      %v2534 = vld [vmem:[%s2522 + $0x2c] sm:$0xf]
      %v2535 = vld [vmem:[%s2522 + $0x30] sm:$0xf]
      %v2536 = vld [vmem:[%s2522 + $0x34] sm:$0xf]
      %v2537 = vld [vmem:[%s2522 + $0x38] sm:$0xf]
      %v2538 = vld [vmem:[%s2522 + $0x3c] sm:$0xf]
      %v2539 = vunpack.c.l.b16 %v2151
      %v2540 = vunpack.c.l.b16 %v2161
      %v2541 = vunpack.c.l.b16 %v2175
      %v2542 = vunpack.c.l.b16 %v2185
      %v2543 = vunpack.c.l.b16 %v2199
      %v2544 = vunpack.c.l.b16 %v2209
      %v2545 = vunpack.c.l.b16 %v2223
      %v2546 = vunpack.c.l.b16 %v2233
      %v2547 = vunpack.c.l.b16 %v2247
      %v2548 = vunpack.c.l.b16 %v2257
      %v2549 = vunpack.c.l.b16 %v2271
      %v2550 = vunpack.c.l.b16 %v2281
      %v2551 = vunpack.c.l.b16 %v2295
      %v2552 = vunpack.c.l.b16 %v2305
      %v2553 = vunpack.c.l.b16 %v2319
      %v2554 = vunpack.c.l.b16 %v2329
      %v2555 = vunpack.c.l.b16 %v2343
      %v2556 = vunpack.c.l.b16 %v2353
      %v2557 = vunpack.c.l.b16 %v2367
      %v2558 = vunpack.c.l.b16 %v2377
      %v2559 = vunpack.c.l.b16 %v2391
      %v2560 = vunpack.c.l.b16 %v2401
      %v2561 = vunpack.c.l.b16 %v2415
      %v2562 = vunpack.c.l.b16 %v2425
      %v2563 = vunpack.c.l.b16 %v2439
      %v2564 = vunpack.c.l.b16 %v2449
      %v2565 = vunpack.c.l.b16 %v2463
      %v2566 = vunpack.c.l.b16 %v2473
      %v2567 = vunpack.c.l.b16 %v2487
      %v2568 = vunpack.c.l.b16 %v2497
      %v2569 = vunpack.c.l.b16 %v2511
      %v2570 = vunpack.c.l.b16 %v2521
      %v2571 = vpack.c.b16 %v2540, %v2539
      %v2572 = vpack.c.b16 %v2542, %v2541
      %v2573 = vpack.c.b16 %v2544, %v2543
      %v2574 = vpack.c.b16 %v2546, %v2545
      %v2575 = vpack.c.b16 %v2548, %v2547
      %v2576 = vpack.c.b16 %v2550, %v2549
      %v2577 = vpack.c.b16 %v2552, %v2551
      %v2578 = vpack.c.b16 %v2554, %v2553
      %v2579 = vpack.c.b16 %v2556, %v2555
      %v2580 = vpack.c.b16 %v2558, %v2557
      %v2581 = vpack.c.b16 %v2560, %v2559
      %v2582 = vpack.c.b16 %v2562, %v2561
      %v2583 = vpack.c.b16 %v2564, %v2563
      %v2584 = vpack.c.b16 %v2566, %v2565
      %v2585 = vpack.c.b16 %v2568, %v2567
      %v2586 = vpack.c.b16 %v2570, %v2569
      %v2619 = vunpack.c.l.b16 %v2523
      %v2620 = vunpack.c.l.b16 %v2524
      %v2621 = vunpack.c.l.b16 %v2525
      %v2622 = vunpack.c.l.b16 %v2526
      %v2623 = vunpack.c.l.b16 %v2527
      %v2624 = vunpack.c.l.b16 %v2528
      %v2625 = vunpack.c.l.b16 %v2529
      %v2626 = vunpack.c.l.b16 %v2530
      %v2627 = vunpack.c.l.b16 %v2531
      %v2628 = vunpack.c.l.b16 %v2532
      %v2629 = vunpack.c.l.b16 %v2533
      %v2630 = vunpack.c.l.b16 %v2534
      %v2631 = vunpack.c.l.b16 %v2535
      %v2632 = vunpack.c.l.b16 %v2536
      %v2633 = vunpack.c.l.b16 %v2537
      %v2634 = vunpack.c.l.b16 %v2538
      %v2635 = vpack.c.b16 %v2620, %v2619
      %v2636 = vpack.c.b16 %v2622, %v2621
      %v2637 = vpack.c.b16 %v2624, %v2623
      %v2638 = vpack.c.b16 %v2626, %v2625
      %v2639 = vpack.c.b16 %v2628, %v2627
      %v2640 = vpack.c.b16 %v2630, %v2629
      %v2641 = vpack.c.b16 %v2632, %v2631
      %v2642 = vpack.c.b16 %v2634, %v2633
      %2651 = vmatprep.subr.bf16.mxu0 0
      %2652 = vmatpush1.bf16.msra.mxu0 %v2635
      %2653 = vmatprep.subr.bf16.mxu0 0
      %2654 = vmatpush1.bf16.msra.mxu0 %v2636
      %2655 = vmatprep.subr.bf16.mxu0 0
      %2656 = vmatpush1.bf16.msra.mxu0 %v2637
      %2657 = vmatprep.subr.bf16.mxu0 0
      %2658 = vmatpush1.bf16.msra.mxu0 %v2638
      %2659 = vmatprep.subr.bf16.mxu0 0
      %2660 = vmatpush1.bf16.msra.mxu0 %v2639
      %2661 = vmatprep.subr.bf16.mxu0 0
      %2662 = vmatpush1.bf16.msra.mxu0 %v2640
      %2663 = vmatprep.subr.bf16.mxu0 0
      %2664 = vmatpush1.bf16.msra.mxu0 %v2641
      %2665 = vmatprep.subr.bf16.mxu0 0
      %2666 = vmatpush1.bf16.msra.mxu0 %v2642
      %2667 = vmatprep.subr.bf16.mxu0 0
      %2668 = vmatpush1.bf16.msra.mxu0 0
      %2669 = vmatprep.subr.bf16.mxu0 0
      %2670 = vmatpush1.bf16.msra.mxu0 0
      %2671 = vmatprep.subr.bf16.mxu0 0
      %2672 = vmatpush1.bf16.msra.mxu0 0
      %2673 = vmatprep.subr.bf16.mxu0 0
      %2674 = vmatpush1.bf16.msra.mxu0 0
      %2675 = vmatprep.subr.bf16.mxu0 0
      %2676 = vmatpush1.bf16.msra.mxu0 0
      %2677 = vmatprep.subr.bf16.mxu0 0
      %2678 = vmatpush1.bf16.msra.mxu0 0
      %2679 = vmatprep.subr.bf16.mxu0 0
      %2680 = vmatpush1.bf16.msra.mxu0 0
      %2681 = vmatprep.subr.bf16.mxu0 0
      %2682 = vmatpush1.bf16.msra.mxu0 0
      %2683 = vmatprep.mubr.bf16.mxu0 0
      %2684 = vmatmul.mubr.bf16.gmra.mrb[0].mxu0 %v2571
      %v2685 = vpop.f32.mrb[0].mxu0
      %v2686 = vadd.f32 0.0, %v2685
      %v2687 = vpop.f32.mrb[0].mxu0
      %v2688 = vpop.f32.mrb[0].mxu0
      %v2689 = vadd.f32 0.0, %v2688
      %v2690 = vpop.f32.mrb[0].mxu0
      %2691 = vmatprep.mubr.bf16.mxu0 0
      %2692 = vmatmul.mubr.bf16.gmra.mrb[0].mxu0 %v2572
      %v2693 = vpop.f32.mrb[0].mxu0
      %v2694 = vadd.f32 0.0, %v2693
      %v2695 = vpop.f32.mrb[0].mxu0
      %v2696 = vpop.f32.mrb[0].mxu0
      %v2697 = vadd.f32 0.0, %v2696
      %v2698 = vpop.f32.mrb[0].mxu0
      %2699 = vmatprep.mubr.bf16.mxu0 0
      %2700 = vmatmul.mubr.bf16.gmra.mrb[0].mxu0 %v2573
      %v2701 = vpop.f32.mrb[0].mxu0
      %v2702 = vadd.f32 0.0, %v2701
      %v2703 = vpop.f32.mrb[0].mxu0
      %v2704 = vpop.f32.mrb[0].mxu0
      %v2705 = vadd.f32 0.0, %v2704
      %v2706 = vpop.f32.mrb[0].mxu0
      %2707 = vmatprep.mubr.bf16.mxu0 0
      %2708 = vmatmul.mubr.bf16.gmra.mrb[0].mxu0 %v2574
      %v2709 = vpop.f32.mrb[0].mxu0
      %v2710 = vadd.f32 0.0, %v2709
      %v2711 = vpop.f32.mrb[0].mxu0
      %v2712 = vpop.f32.mrb[0].mxu0
      %v2713 = vadd.f32 0.0, %v2712
      %v2714 = vpop.f32.mrb[0].mxu0
      %2715 = vmatprep.mubr.bf16.mxu0 0
      %2716 = vmatmul.mubr.bf16.gmra.mrb[0].mxu0 %v2575
      %v2717 = vpop.f32.mrb[0].mxu0
      %v2718 = vadd.f32 0.0, %v2717
      %v2719 = vpop.f32.mrb[0].mxu0
      %v2720 = vpop.f32.mrb[0].mxu0
      %v2721 = vadd.f32 0.0, %v2720
      %v2722 = vpop.f32.mrb[0].mxu0
      %2723 = vmatprep.mubr.bf16.mxu0 0
      %2724 = vmatmul.mubr.bf16.gmra.mrb[0].mxu0 %v2576
      %v2725 = vpop.f32.mrb[0].mxu0
      %v2726 = vadd.f32 0.0, %v2725
      %v2727 = vpop.f32.mrb[0].mxu0
      %v2728 = vpop.f32.mrb[0].mxu0
      %v2729 = vadd.f32 0.0, %v2728
      %v2730 = vpop.f32.mrb[0].mxu0
      %2731 = vmatprep.mubr.bf16.mxu0 0
      %2732 = vmatmul.mubr.bf16.gmra.mrb[0].mxu0 %v2577
      %v2733 = vpop.f32.mrb[0].mxu0
      %v2734 = vadd.f32 0.0, %v2733
      %v2735 = vpop.f32.mrb[0].mxu0
      %v2736 = vpop.f32.mrb[0].mxu0
      %v2737 = vadd.f32 0.0, %v2736
      %v2738 = vpop.f32.mrb[0].mxu0
      %2739 = vmatprep.mubr.bf16.mxu0 0
      %2740 = vmatmul.mubr.bf16.gmra.mrb[0].mxu0 %v2578
      %v2741 = vpop.f32.mrb[0].mxu0
      %v2742 = vadd.f32 0.0, %v2741
      %v2743 = vpop.f32.mrb[0].mxu0
      %v2744 = vpop.f32.mrb[0].mxu0
      %v2745 = vadd.f32 0.0, %v2744
      %v2746 = vpop.f32.mrb[0].mxu0
      %2747 = vmatprep.mubr.bf16.mxu0 0
      %2748 = vmatmul.mubr.bf16.gmra.mrb[0].mxu0 %v2579
      %v2749 = vpop.f32.mrb[0].mxu0
      %v2750 = vadd.f32 0.0, %v2749
      %v2751 = vpop.f32.mrb[0].mxu0
      %v2752 = vpop.f32.mrb[0].mxu0
      %v2753 = vadd.f32 0.0, %v2752
      %v2754 = vpop.f32.mrb[0].mxu0
      %2755 = vmatprep.mubr.bf16.mxu0 0
      %2756 = vmatmul.mubr.bf16.gmra.mrb[0].mxu0 %v2580
      %v2757 = vpop.f32.mrb[0].mxu0
      %v2758 = vadd.f32 0.0, %v2757
      %v2759 = vpop.f32.mrb[0].mxu0
      %v2760 = vpop.f32.mrb[0].mxu0
      %v2761 = vadd.f32 0.0, %v2760
      %v2762 = vpop.f32.mrb[0].mxu0
      %2763 = vmatprep.mubr.bf16.mxu0 0
      %2764 = vmatmul.mubr.bf16.gmra.mrb[0].mxu0 %v2581
      %v2765 = vpop.f32.mrb[0].mxu0
      %v2766 = vadd.f32 0.0, %v2765
      %v2767 = vpop.f32.mrb[0].mxu0
      %v2768 = vpop.f32.mrb[0].mxu0
      %v2769 = vadd.f32 0.0, %v2768
      %v2770 = vpop.f32.mrb[0].mxu0
      %2771 = vmatprep.mubr.bf16.mxu0 0
      %2772 = vmatmul.mubr.bf16.gmra.mrb[0].mxu0 %v2582
      %v2773 = vpop.f32.mrb[0].mxu0
      %v2774 = vadd.f32 0.0, %v2773
      %v2775 = vpop.f32.mrb[0].mxu0
      %v2776 = vpop.f32.mrb[0].mxu0
      %v2777 = vadd.f32 0.0, %v2776
      %v2778 = vpop.f32.mrb[0].mxu0
      %2779 = vmatprep.mubr.bf16.mxu0 0
      %2780 = vmatmul.mubr.bf16.gmra.mrb[0].mxu0 %v2583
      %v2781 = vpop.f32.mrb[0].mxu0
      %v2782 = vadd.f32 0.0, %v2781
      %v2783 = vpop.f32.mrb[0].mxu0
      %v2784 = vpop.f32.mrb[0].mxu0
      %v2785 = vadd.f32 0.0, %v2784
      %v2786 = vpop.f32.mrb[0].mxu0
      %2787 = vmatprep.mubr.bf16.mxu0 0
      %2788 = vmatmul.mubr.bf16.gmra.mrb[0].mxu0 %v2584
      %v2789 = vpop.f32.mrb[0].mxu0
      %v2790 = vadd.f32 0.0, %v2789
      %v2791 = vpop.f32.mrb[0].mxu0
      %v2792 = vpop.f32.mrb[0].mxu0
      %v2793 = vadd.f32 0.0, %v2792
      %v2794 = vpop.f32.mrb[0].mxu0
      %2795 = vmatprep.mubr.bf16.mxu0 0
      %2796 = vmatmul.mubr.bf16.gmra.mrb[0].mxu0 %v2585
      %v2797 = vpop.f32.mrb[0].mxu0
      %v2798 = vadd.f32 0.0, %v2797
      %v2799 = vpop.f32.mrb[0].mxu0
      %v2800 = vpop.f32.mrb[0].mxu0
      %v2801 = vadd.f32 0.0, %v2800
      %v2802 = vpop.f32.mrb[0].mxu0
      %2803 = vmatprep.mubr.bf16.mxu0 0
      %2804 = vmatmul.mubr.bf16.gmra.mrb[0].mxu0 %v2586
      %v2805 = vpop.f32.mrb[0].mxu0
      %v2806 = vadd.f32 0.0, %v2805
      %v2807 = vpop.f32.mrb[0].mxu0
      %v2808 = vpop.f32.mrb[0].mxu0
      %v2809 = vadd.f32 0.0, %v2808
      %v2810 = vpop.f32.mrb[0].mxu0
      %2811 = vdwg.mxu0
      %v2812 = vadd.f32 %v2058, %v2686
      %v2813 = vadd.f32 %v2059, %v2689
      %v2814 = vadd.f32 %v2060, %v2694
      %v2815 = vadd.f32 %v2061, %v2697
      %v2816 = vadd.f32 %v2062, %v2702
      %v2817 = vadd.f32 %v2063, %v2705
      %v2818 = vadd.f32 %v2064, %v2710
      %v2819 = vadd.f32 %v2065, %v2713
      %v2820 = vadd.f32 %v2066, %v2718
      %v2821 = vadd.f32 %v2067, %v2721
      %v2822 = vadd.f32 %v2068, %v2726
      %v2823 = vadd.f32 %v2069, %v2729
      %v2824 = vadd.f32 %v2070, %v2734
      %v2825 = vadd.f32 %v2071, %v2737
      %v2826 = vadd.f32 %v2072, %v2742
      %v2827 = vadd.f32 %v2073, %v2745
      %v2828 = vadd.f32 %v2074, %v2750
      %v2829 = vadd.f32 %v2075, %v2753
      %v2830 = vadd.f32 %v2076, %v2758
      %v2831 = vadd.f32 %v2077, %v2761
      %v2832 = vadd.f32 %v2078, %v2766
      %v2833 = vadd.f32 %v2079, %v2769
      %v2834 = vadd.f32 %v2080, %v2774
      %v2835 = vadd.f32 %v2081, %v2777
      %v2836 = vadd.f32 %v2082, %v2782
      %v2837 = vadd.f32 %v2083, %v2785
      %v2838 = vadd.f32 %v2084, %v2790
      %v2839 = vadd.f32 %v2085, %v2793
      %v2840 = vadd.f32 %v2086, %v2798
      %v2841 = vadd.f32 %v2087, %v2801
      %v2842 = vadd.f32 %v2088, %v2806
      %v2843 = vadd.f32 %v2089, %v2809
      %v2844 = vld [vmem:[%s1703] sm:$0xe]
      %v2845 = vld [vmem:[%s1703 + $0xc] sm:$0xe]
      %v2846 = vld [vmem:[%s1703 + $0x18] sm:$0xe]
      %v2847 = vld [vmem:[%s1703 + $0x24] sm:$0xe]
      %v2848 = vld [vmem:[%s1703 + $0x30] sm:$0xe]
      %v2849 = vld [vmem:[%s1703 + $0x3c] sm:$0xe]
      %v2850 = vld [vmem:[%s1703 + $0x48] sm:$0xe]
      %v2851 = vld [vmem:[%s1703 + $0x54] sm:$0xe]
      %v2852 = vld [vmem:[%s1703 + $0x60] sm:$0xe]
      %v2853 = vld [vmem:[%s1703 + $0x6c] sm:$0xe]
      %v2854 = vld [vmem:[%s1703 + $0x78] sm:$0xe]
      %v2855 = vld [vmem:[%s1703 + $0x84] sm:$0xe]
      %v2856 = vld [vmem:[%s1703 + $0x90] sm:$0xe]
      %v2857 = vld [vmem:[%s1703 + $0x9c] sm:$0xe]
      %v2858 = vld [vmem:[%s1703 + $0xa8] sm:$0xe]
      %v2859 = vld [vmem:[%s1703 + $0xb4] sm:$0xe]
      %v2908 = vrot.slane %v2844, 5
      %v2909 = vrot.slane %v2908, 4
      %v2910 = vrot.slane %v2091, 5
      %v2911 = vsel %vm1268, %v2909, %v2910
      %v2912 = vrot.slane %v2910, 4
      %v2913 = vrot.slane %v2092, 5
      %v2914 = vsel %vm1268, %v2912, %v2913
      %v2915 = vrot.slane %v2845, 5
      %v2916 = vrot.slane %v2915, 4
      %v2917 = vrot.slane %v2094, 5
      %v2918 = vsel %vm1268, %v2916, %v2917
      %v2919 = vrot.slane %v2917, 4
      %v2920 = vrot.slane %v2095, 5
      %v2921 = vsel %vm1268, %v2919, %v2920
      %v2922 = vrot.slane %v2846, 5
      %v2923 = vrot.slane %v2922, 4
      %v2924 = vrot.slane %v2097, 5
      %v2925 = vsel %vm1268, %v2923, %v2924
      %v2926 = vrot.slane %v2924, 4
      %v2927 = vrot.slane %v2098, 5
      %v2928 = vsel %vm1268, %v2926, %v2927
      %v2929 = vrot.slane %v2847, 5
      %v2930 = vrot.slane %v2929, 4
      %v2931 = vrot.slane %v2100, 5
      %v2932 = vsel %vm1268, %v2930, %v2931
      %v2933 = vrot.slane %v2931, 4
      %v2934 = vrot.slane %v2101, 5
      %v2935 = vsel %vm1268, %v2933, %v2934
      %v2936 = vrot.slane %v2848, 5
      %v2937 = vrot.slane %v2936, 4
      %v2938 = vrot.slane %v2103, 5
      %v2939 = vsel %vm1268, %v2937, %v2938
      %v2940 = vrot.slane %v2938, 4
      %v2941 = vrot.slane %v2104, 5
      %v2942 = vsel %vm1268, %v2940, %v2941
      %v2943 = vrot.slane %v2849, 5
      %v2944 = vrot.slane %v2943, 4
      %v2945 = vrot.slane %v2106, 5
      %v2946 = vsel %vm1268, %v2944, %v2945
      %v2947 = vrot.slane %v2945, 4
      %v2948 = vrot.slane %v2107, 5
      %v2949 = vsel %vm1268, %v2947, %v2948
      %v2950 = vrot.slane %v2850, 5
      %v2951 = vrot.slane %v2950, 4
      %v2952 = vrot.slane %v2109, 5
      %v2953 = vsel %vm1268, %v2951, %v2952
      %v2954 = vrot.slane %v2952, 4
      %v2955 = vrot.slane %v2110, 5
      %v2956 = vsel %vm1268, %v2954, %v2955
      %v2957 = vrot.slane %v2851, 5
      %v2958 = vrot.slane %v2957, 4
      %v2959 = vrot.slane %v2112, 5
      %v2960 = vsel %vm1268, %v2958, %v2959
      %v2961 = vrot.slane %v2959, 4
      %v2962 = vrot.slane %v2113, 5
      %v2963 = vsel %vm1268, %v2961, %v2962
      %v2964 = vrot.slane %v2852, 5
      %v2965 = vrot.slane %v2964, 4
      %v2966 = vrot.slane %v2115, 5
      %v2967 = vsel %vm1268, %v2965, %v2966
      %v2968 = vrot.slane %v2966, 4
      %v2969 = vrot.slane %v2116, 5
      %v2970 = vsel %vm1268, %v2968, %v2969
      %v2971 = vrot.slane %v2853, 5
      %v2972 = vrot.slane %v2971, 4
      %v2973 = vrot.slane %v2118, 5
      %v2974 = vsel %vm1268, %v2972, %v2973
      %v2975 = vrot.slane %v2973, 4
      %v2976 = vrot.slane %v2119, 5
      %v2977 = vsel %vm1268, %v2975, %v2976
      %v2978 = vrot.slane %v2854, 5
      %v2979 = vrot.slane %v2978, 4
      %v2980 = vrot.slane %v2121, 5
      %v2981 = vsel %vm1268, %v2979, %v2980
      %v2982 = vrot.slane %v2980, 4
      %v2983 = vrot.slane %v2122, 5
      %v2984 = vsel %vm1268, %v2982, %v2983
      %v2985 = vrot.slane %v2855, 5
      %v2986 = vrot.slane %v2985, 4
      %v2987 = vrot.slane %v2124, 5
      %v2988 = vsel %vm1268, %v2986, %v2987
      %v2989 = vrot.slane %v2987, 4
      %v2990 = vrot.slane %v2125, 5
      %v2991 = vsel %vm1268, %v2989, %v2990
      %v2992 = vrot.slane %v2856, 5
      %v2993 = vrot.slane %v2992, 4
      %v2994 = vrot.slane %v2127, 5
      %v2995 = vsel %vm1268, %v2993, %v2994
      %v2996 = vrot.slane %v2994, 4
      %v2997 = vrot.slane %v2128, 5
      %v2998 = vsel %vm1268, %v2996, %v2997
      %v2999 = vrot.slane %v2857, 5
      %v3000 = vrot.slane %v2999, 4
      %v3001 = vrot.slane %v2130, 5
      %v3002 = vsel %vm1268, %v3000, %v3001
      %v3003 = vrot.slane %v3001, 4
      %v3004 = vrot.slane %v2131, 5
      %v3005 = vsel %vm1268, %v3003, %v3004
      %v3006 = vrot.slane %v2858, 5
      %v3007 = vrot.slane %v3006, 4
      %v3008 = vrot.slane %v2133, 5
      %v3009 = vsel %vm1268, %v3007, %v3008
      %v3010 = vrot.slane %v3008, 4
      %v3011 = vrot.slane %v2134, 5
      %v3012 = vsel %vm1268, %v3010, %v3011
      %v3013 = vrot.slane %v2859, 5
      %v3014 = vrot.slane %v3013, 4
      %v3015 = vrot.slane %v2136, 5
      %v3016 = vsel %vm1268, %v3014, %v3015
      %v3017 = vrot.slane %v3015, 4
      %v3018 = vrot.slane %v2137, 5
      %v3019 = vsel %vm1268, %v3017, %v3018
      %s3020 = scalar_lea.vmem %s1, 320
      %v3021 = vld [vmem:[%s3020] sm:$0xf]
      %v3022 = vld [vmem:[%s3020 + $0x4] sm:$0xf]
      %v3023 = vld [vmem:[%s3020 + $0x8] sm:$0xf]
      %v3024 = vld [vmem:[%s3020 + $0xc] sm:$0xf]
      %v3025 = vld [vmem:[%s3020 + $0x10] sm:$0xf]
      %v3026 = vld [vmem:[%s3020 + $0x14] sm:$0xf]
      %v3027 = vld [vmem:[%s3020 + $0x18] sm:$0xf]
      %v3028 = vld [vmem:[%s3020 + $0x1c] sm:$0xf]
      %v3029 = vld [vmem:[%s3020 + $0x20] sm:$0xf]
      %v3030 = vld [vmem:[%s3020 + $0x24] sm:$0xf]
      %v3031 = vld [vmem:[%s3020 + $0x28] sm:$0xf]
      %v3032 = vld [vmem:[%s3020 + $0x2c] sm:$0xf]
      %v3033 = vld [vmem:[%s3020 + $0x30] sm:$0xf]
      %v3034 = vld [vmem:[%s3020 + $0x34] sm:$0xf]
      %v3035 = vld [vmem:[%s3020 + $0x38] sm:$0xf]
      %v3036 = vld [vmem:[%s3020 + $0x3c] sm:$0xf]
      %v3037 = vunpack.c.l.b16 %v2911
      %v3038 = vunpack.c.l.b16 %v2914
      %v3039 = vunpack.c.l.b16 %v2918
      %v3040 = vunpack.c.l.b16 %v2921
      %v3041 = vunpack.c.l.b16 %v2925
      %v3042 = vunpack.c.l.b16 %v2928
      %v3043 = vunpack.c.l.b16 %v2932
      %v3044 = vunpack.c.l.b16 %v2935
      %v3045 = vunpack.c.l.b16 %v2939
      %v3046 = vunpack.c.l.b16 %v2942
      %v3047 = vunpack.c.l.b16 %v2946
      %v3048 = vunpack.c.l.b16 %v2949
      %v3049 = vunpack.c.l.b16 %v2953
      %v3050 = vunpack.c.l.b16 %v2956
      %v3051 = vunpack.c.l.b16 %v2960
      %v3052 = vunpack.c.l.b16 %v2963
      %v3053 = vunpack.c.l.b16 %v2967
      %v3054 = vunpack.c.l.b16 %v2970
      %v3055 = vunpack.c.l.b16 %v2974
      %v3056 = vunpack.c.l.b16 %v2977
      %v3057 = vunpack.c.l.b16 %v2981
      %v3058 = vunpack.c.l.b16 %v2984
      %v3059 = vunpack.c.l.b16 %v2988
      %v3060 = vunpack.c.l.b16 %v2991
      %v3061 = vunpack.c.l.b16 %v2995
      %v3062 = vunpack.c.l.b16 %v2998
      %v3063 = vunpack.c.l.b16 %v3002
      %v3064 = vunpack.c.l.b16 %v3005
      %v3065 = vunpack.c.l.b16 %v3009
      %v3066 = vunpack.c.l.b16 %v3012
      %v3067 = vunpack.c.l.b16 %v3016
      %v3068 = vunpack.c.l.b16 %v3019
      %v3069 = vpack.c.b16 %v3038, %v3037
      %v3070 = vpack.c.b16 %v3040, %v3039
      %v3071 = vpack.c.b16 %v3042, %v3041
      %v3072 = vpack.c.b16 %v3044, %v3043
      %v3073 = vpack.c.b16 %v3046, %v3045
      %v3074 = vpack.c.b16 %v3048, %v3047
      %v3075 = vpack.c.b16 %v3050, %v3049
      %v3076 = vpack.c.b16 %v3052, %v3051
      %v3077 = vpack.c.b16 %v3054, %v3053
      %v3078 = vpack.c.b16 %v3056, %v3055
      %v3079 = vpack.c.b16 %v3058, %v3057
      %v3080 = vpack.c.b16 %v3060, %v3059
      %v3081 = vpack.c.b16 %v3062, %v3061
      %v3082 = vpack.c.b16 %v3064, %v3063
      %v3083 = vpack.c.b16 %v3066, %v3065
      %v3084 = vpack.c.b16 %v3068, %v3067
      %v3117 = vunpack.c.l.b16 %v3021
      %v3118 = vunpack.c.l.b16 %v3022
      %v3119 = vunpack.c.l.b16 %v3023
      %v3120 = vunpack.c.l.b16 %v3024
      %v3121 = vunpack.c.l.b16 %v3025
      %v3122 = vunpack.c.l.b16 %v3026
      %v3123 = vunpack.c.l.b16 %v3027
      %v3124 = vunpack.c.l.b16 %v3028
      %v3125 = vunpack.c.l.b16 %v3029
      %v3126 = vunpack.c.l.b16 %v3030
      %v3127 = vunpack.c.l.b16 %v3031
      %v3128 = vunpack.c.l.b16 %v3032
      %v3129 = vunpack.c.l.b16 %v3033
      %v3130 = vunpack.c.l.b16 %v3034
      %v3131 = vunpack.c.l.b16 %v3035
      %v3132 = vunpack.c.l.b16 %v3036
      %v3133 = vpack.c.b16 %v3118, %v3117
      %v3134 = vpack.c.b16 %v3120, %v3119
      %v3135 = vpack.c.b16 %v3122, %v3121
      %v3136 = vpack.c.b16 %v3124, %v3123
      %v3137 = vpack.c.b16 %v3126, %v3125
      %v3138 = vpack.c.b16 %v3128, %v3127
      %v3139 = vpack.c.b16 %v3130, %v3129
      %v3140 = vpack.c.b16 %v3132, %v3131
      %3149 = vmatprep.subr.bf16.mxu0 0
      %3150 = vmatpush1.bf16.msra.mxu0 %v3133
      %3151 = vmatprep.subr.bf16.mxu0 0
      %3152 = vmatpush1.bf16.msra.mxu0 %v3134
      %3153 = vmatprep.subr.bf16.mxu0 0
      %3154 = vmatpush1.bf16.msra.mxu0 %v3135
      %3155 = vmatprep.subr.bf16.mxu0 0
      %3156 = vmatpush1.bf16.msra.mxu0 %v3136
      %3157 = vmatprep.subr.bf16.mxu0 0
      %3158 = vmatpush1.bf16.msra.mxu0 %v3137
      %3159 = vmatprep.subr.bf16.mxu0 0
      %3160 = vmatpush1.bf16.msra.mxu0 %v3138
      %3161 = vmatprep.subr.bf16.mxu0 0
      %3162 = vmatpush1.bf16.msra.mxu0 %v3139
      %3163 = vmatprep.subr.bf16.mxu0 0
      %3164 = vmatpush1.bf16.msra.mxu0 %v3140
      %3165 = vmatprep.subr.bf16.mxu0 0
      %3166 = vmatpush1.bf16.msra.mxu0 0
      %3167 = vmatprep.subr.bf16.mxu0 0
      %3168 = vmatpush1.bf16.msra.mxu0 0
      %3169 = vmatprep.subr.bf16.mxu0 0
      %3170 = vmatpush1.bf16.msra.mxu0 0
      %3171 = vmatprep.subr.bf16.mxu0 0
      %3172 = vmatpush1.bf16.msra.mxu0 0
      %3173 = vmatprep.subr.bf16.mxu0 0
      %3174 = vmatpush1.bf16.msra.mxu0 0
      %3175 = vmatprep.subr.bf16.mxu0 0
      %3176 = vmatpush1.bf16.msra.mxu0 0
      %3177 = vmatprep.subr.bf16.mxu0 0
      %3178 = vmatpush1.bf16.msra.mxu0 0
      %3179 = vmatprep.subr.bf16.mxu0 0
      %3180 = vmatpush1.bf16.msra.mxu0 0
      %3181 = vmatprep.mubr.bf16.mxu0 0
      %3182 = vmatmul.mubr.bf16.gmra.mrb[0].mxu0 %v3069
      %v3183 = vpop.f32.mrb[0].mxu0
      %v3184 = vadd.f32 0.0, %v3183
      %v3185 = vpop.f32.mrb[0].mxu0
      %v3186 = vpop.f32.mrb[0].mxu0
      %v3187 = vadd.f32 0.0, %v3186
      %v3188 = vpop.f32.mrb[0].mxu0
      %3189 = vmatprep.mubr.bf16.mxu0 0
      %3190 = vmatmul.mubr.bf16.gmra.mrb[0].mxu0 %v3070
      %v3191 = vpop.f32.mrb[0].mxu0
      %v3192 = vadd.f32 0.0, %v3191
      %v3193 = vpop.f32.mrb[0].mxu0
      %v3194 = vpop.f32.mrb[0].mxu0
      %v3195 = vadd.f32 0.0, %v3194
      %v3196 = vpop.f32.mrb[0].mxu0
      %3197 = vmatprep.mubr.bf16.mxu0 0
      %3198 = vmatmul.mubr.bf16.gmra.mrb[0].mxu0 %v3071
      %v3199 = vpop.f32.mrb[0].mxu0
      %v3200 = vadd.f32 0.0, %v3199
      %v3201 = vpop.f32.mrb[0].mxu0
      %v3202 = vpop.f32.mrb[0].mxu0
      %v3203 = vadd.f32 0.0, %v3202
      %v3204 = vpop.f32.mrb[0].mxu0
      %3205 = vmatprep.mubr.bf16.mxu0 0
      %3206 = vmatmul.mubr.bf16.gmra.mrb[0].mxu0 %v3072
      %v3207 = vpop.f32.mrb[0].mxu0
      %v3208 = vadd.f32 0.0, %v3207
      %v3209 = vpop.f32.mrb[0].mxu0
      %v3210 = vpop.f32.mrb[0].mxu0
      %v3211 = vadd.f32 0.0, %v3210
      %v3212 = vpop.f32.mrb[0].mxu0
      %3213 = vmatprep.mubr.bf16.mxu0 0
      %3214 = vmatmul.mubr.bf16.gmra.mrb[0].mxu0 %v3073
      %v3215 = vpop.f32.mrb[0].mxu0
      %v3216 = vadd.f32 0.0, %v3215
      %v3217 = vpop.f32.mrb[0].mxu0
      %v3218 = vpop.f32.mrb[0].mxu0
      %v3219 = vadd.f32 0.0, %v3218
      %v3220 = vpop.f32.mrb[0].mxu0
      %3221 = vmatprep.mubr.bf16.mxu0 0
      %3222 = vmatmul.mubr.bf16.gmra.mrb[0].mxu0 %v3074
      %v3223 = vpop.f32.mrb[0].mxu0
      %v3224 = vadd.f32 0.0, %v3223
      %v3225 = vpop.f32.mrb[0].mxu0
      %v3226 = vpop.f32.mrb[0].mxu0
      %v3227 = vadd.f32 0.0, %v3226
      %v3228 = vpop.f32.mrb[0].mxu0
      %3229 = vmatprep.mubr.bf16.mxu0 0
      %3230 = vmatmul.mubr.bf16.gmra.mrb[0].mxu0 %v3075
      %v3231 = vpop.f32.mrb[0].mxu0
      %v3232 = vadd.f32 0.0, %v3231
      %v3233 = vpop.f32.mrb[0].mxu0
      %v3234 = vpop.f32.mrb[0].mxu0
      %v3235 = vadd.f32 0.0, %v3234
      %v3236 = vpop.f32.mrb[0].mxu0
      %3237 = vmatprep.mubr.bf16.mxu0 0
      %3238 = vmatmul.mubr.bf16.gmra.mrb[0].mxu0 %v3076
      %v3239 = vpop.f32.mrb[0].mxu0
      %v3240 = vadd.f32 0.0, %v3239
      %v3241 = vpop.f32.mrb[0].mxu0
      %v3242 = vpop.f32.mrb[0].mxu0
      %v3243 = vadd.f32 0.0, %v3242
      %v3244 = vpop.f32.mrb[0].mxu0
      %3245 = vmatprep.mubr.bf16.mxu0 0
      %3246 = vmatmul.mubr.bf16.gmra.mrb[0].mxu0 %v3077
      %v3247 = vpop.f32.mrb[0].mxu0
      %v3248 = vadd.f32 0.0, %v3247
      %v3249 = vpop.f32.mrb[0].mxu0
      %v3250 = vpop.f32.mrb[0].mxu0
      %v3251 = vadd.f32 0.0, %v3250
      %v3252 = vpop.f32.mrb[0].mxu0
      %3253 = vmatprep.mubr.bf16.mxu0 0
      %3254 = vmatmul.mubr.bf16.gmra.mrb[0].mxu0 %v3078
      %v3255 = vpop.f32.mrb[0].mxu0
      %v3256 = vadd.f32 0.0, %v3255
      %v3257 = vpop.f32.mrb[0].mxu0
      %v3258 = vpop.f32.mrb[0].mxu0
      %v3259 = vadd.f32 0.0, %v3258
      %v3260 = vpop.f32.mrb[0].mxu0
      %3261 = vmatprep.mubr.bf16.mxu0 0
      %3262 = vmatmul.mubr.bf16.gmra.mrb[0].mxu0 %v3079
      %v3263 = vpop.f32.mrb[0].mxu0
      %v3264 = vadd.f32 0.0, %v3263
      %v3265 = vpop.f32.mrb[0].mxu0
      %v3266 = vpop.f32.mrb[0].mxu0
      %v3267 = vadd.f32 0.0, %v3266
      %v3268 = vpop.f32.mrb[0].mxu0
      %3269 = vmatprep.mubr.bf16.mxu0 0
      %3270 = vmatmul.mubr.bf16.gmra.mrb[0].mxu0 %v3080
      %v3271 = vpop.f32.mrb[0].mxu0
      %v3272 = vadd.f32 0.0, %v3271
      %v3273 = vpop.f32.mrb[0].mxu0
      %v3274 = vpop.f32.mrb[0].mxu0
      %v3275 = vadd.f32 0.0, %v3274
      %v3276 = vpop.f32.mrb[0].mxu0
      %3277 = vmatprep.mubr.bf16.mxu0 0
      %3278 = vmatmul.mubr.bf16.gmra.mrb[0].mxu0 %v3081
      %v3279 = vpop.f32.mrb[0].mxu0
      %v3280 = vadd.f32 0.0, %v3279
      %v3281 = vpop.f32.mrb[0].mxu0
      %v3282 = vpop.f32.mrb[0].mxu0
      %v3283 = vadd.f32 0.0, %v3282
      %v3284 = vpop.f32.mrb[0].mxu0
      %3285 = vmatprep.mubr.bf16.mxu0 0
      %3286 = vmatmul.mubr.bf16.gmra.mrb[0].mxu0 %v3082
      %v3287 = vpop.f32.mrb[0].mxu0
      %v3288 = vadd.f32 0.0, %v3287
      %v3289 = vpop.f32.mrb[0].mxu0
      %v3290 = vpop.f32.mrb[0].mxu0
      %v3291 = vadd.f32 0.0, %v3290
      %v3292 = vpop.f32.mrb[0].mxu0
      %3293 = vmatprep.mubr.bf16.mxu0 0
      %3294 = vmatmul.mubr.bf16.gmra.mrb[0].mxu0 %v3083
      %v3295 = vpop.f32.mrb[0].mxu0
      %v3296 = vadd.f32 0.0, %v3295
      %v3297 = vpop.f32.mrb[0].mxu0
      %v3298 = vpop.f32.mrb[0].mxu0
      %v3299 = vadd.f32 0.0, %v3298
      %v3300 = vpop.f32.mrb[0].mxu0
      %3301 = vmatprep.mubr.bf16.mxu0 0
      %3302 = vmatmul.mubr.bf16.gmra.mrb[0].mxu0 %v3084
      %v3303 = vpop.f32.mrb[0].mxu0
      %v3304 = vadd.f32 0.0, %v3303
      %v3305 = vpop.f32.mrb[0].mxu0
      %v3306 = vpop.f32.mrb[0].mxu0
      %v3307 = vadd.f32 0.0, %v3306
      %v3308 = vpop.f32.mrb[0].mxu0
      %3309 = vdwg.mxu0
      %v3310 = vadd.f32 %v2812, %v3184
      %v3311 = vadd.f32 %v2813, %v3187
      %v3312 = vadd.f32 %v2814, %v3192
      %v3313 = vadd.f32 %v2815, %v3195
      %v3314 = vadd.f32 %v2816, %v3200
      %v3315 = vadd.f32 %v2817, %v3203
      %v3316 = vadd.f32 %v2818, %v3208
      %v3317 = vadd.f32 %v2819, %v3211
      %v3318 = vadd.f32 %v2820, %v3216
      %v3319 = vadd.f32 %v2821, %v3219
      %v3320 = vadd.f32 %v2822, %v3224
      %v3321 = vadd.f32 %v2823, %v3227
      %v3322 = vadd.f32 %v2824, %v3232
      %v3323 = vadd.f32 %v2825, %v3235
      %v3324 = vadd.f32 %v2826, %v3240
      %v3325 = vadd.f32 %v2827, %v3243
      %v3326 = vadd.f32 %v2828, %v3248
      %v3327 = vadd.f32 %v2829, %v3251
      %v3328 = vadd.f32 %v2830, %v3256
      %v3329 = vadd.f32 %v2831, %v3259
      %v3330 = vadd.f32 %v2832, %v3264
      %v3331 = vadd.f32 %v2833, %v3267
      %v3332 = vadd.f32 %v2834, %v3272
      %v3333 = vadd.f32 %v2835, %v3275
      %v3334 = vadd.f32 %v2836, %v3280
      %v3335 = vadd.f32 %v2837, %v3283
      %v3336 = vadd.f32 %v2838, %v3288
      %v3337 = vadd.f32 %v2839, %v3291
      %v3338 = vadd.f32 %v2840, %v3296
      %v3339 = vadd.f32 %v2841, %v3299
      %v3340 = vadd.f32 %v2842, %v3304
      %v3341 = vadd.f32 %v2843, %v3307
      %s3342 = scalar_lea.vmem %s165, 24
      %v3343 = vld [vmem:[%s3342] sm:$0xf]
      %v3344 = vld [vmem:[%s3342 + $0x4] sm:$0xf]
      %v3345 = vld [vmem:[%s3342 + $0xc] sm:$0xf]
      %v3346 = vld [vmem:[%s3342 + $0x10] sm:$0xf]
      %v3347 = vld [vmem:[%s3342 + $0x18] sm:$0xf]
      %v3348 = vld [vmem:[%s3342 + $0x1c] sm:$0xf]
      %v3349 = vld [vmem:[%s3342 + $0x24] sm:$0xf]
      %v3350 = vld [vmem:[%s3342 + $0x28] sm:$0xf]
      %v3351 = vld [vmem:[%s3342 + $0x30] sm:$0xf]
      %v3352 = vld [vmem:[%s3342 + $0x34] sm:$0xf]
      %v3353 = vld [vmem:[%s3342 + $0x3c] sm:$0xf]
      %v3354 = vld [vmem:[%s3342 + $0x40] sm:$0xf]
      %v3355 = vld [vmem:[%s3342 + $0x48] sm:$0xf]
      %v3356 = vld [vmem:[%s3342 + $0x4c] sm:$0xf]
      %v3357 = vld [vmem:[%s3342 + $0x54] sm:$0xf]
      %v3358 = vld [vmem:[%s3342 + $0x58] sm:$0xf]
      %v3359 = vld [vmem:[%s3342 + $0x60] sm:$0xf]
      %v3360 = vld [vmem:[%s3342 + $0x64] sm:$0xf]
      %v3361 = vld [vmem:[%s3342 + $0x6c] sm:$0xf]
      %v3362 = vld [vmem:[%s3342 + $0x70] sm:$0xf]
      %v3363 = vld [vmem:[%s3342 + $0x78] sm:$0xf]
      %v3364 = vld [vmem:[%s3342 + $0x7c] sm:$0xf]
      %v3365 = vld [vmem:[%s3342 + $0x84] sm:$0xf]
      %v3366 = vld [vmem:[%s3342 + $0x88] sm:$0xf]
      %v3367 = vld [vmem:[%s3342 + $0x90] sm:$0xf]
      %v3368 = vld [vmem:[%s3342 + $0x94] sm:$0xf]
      %v3369 = vld [vmem:[%s3342 + $0x9c] sm:$0xf]
      %v3370 = vld [vmem:[%s3342 + $0xa0] sm:$0xf]
      %v3371 = vld [vmem:[%s3342 + $0xa8] sm:$0xf]
      %v3372 = vld [vmem:[%s3342 + $0xac] sm:$0xf]
      %v3373 = vld [vmem:[%s3342 + $0xb4] sm:$0xf]
      %v3374 = vld [vmem:[%s3342 + $0xb8] sm:$0xf]
      %s3375 = scalar_lea.vmem %s1, 384
      %v3376 = vld [vmem:[%s3375] sm:$0xf]
      %v3377 = vld [vmem:[%s3375 + $0x4] sm:$0xf]
      %v3378 = vld [vmem:[%s3375 + $0x8] sm:$0xf]
      %v3379 = vld [vmem:[%s3375 + $0xc] sm:$0xf]
      %v3380 = vld [vmem:[%s3375 + $0x10] sm:$0xf]
      %v3381 = vld [vmem:[%s3375 + $0x14] sm:$0xf]
      %v3382 = vld [vmem:[%s3375 + $0x18] sm:$0xf]
      %v3383 = vld [vmem:[%s3375 + $0x1c] sm:$0xf]
      %v3384 = vld [vmem:[%s3375 + $0x20] sm:$0xf]
      %v3385 = vld [vmem:[%s3375 + $0x24] sm:$0xf]
      %v3386 = vld [vmem:[%s3375 + $0x28] sm:$0xf]
      %v3387 = vld [vmem:[%s3375 + $0x2c] sm:$0xf]
      %v3388 = vld [vmem:[%s3375 + $0x30] sm:$0xf]
      %v3389 = vld [vmem:[%s3375 + $0x34] sm:$0xf]
      %v3390 = vld [vmem:[%s3375 + $0x38] sm:$0xf]
      %v3391 = vld [vmem:[%s3375 + $0x3c] sm:$0xf]
      %v3424 = vunpack.c.l.b16 %v3343
      %v3425 = vunpack.c.l.b16 %v3344
      %v3426 = vunpack.c.l.b16 %v3345
      %v3427 = vunpack.c.l.b16 %v3346
      %v3428 = vunpack.c.l.b16 %v3347
      %v3429 = vunpack.c.l.b16 %v3348
      %v3430 = vunpack.c.l.b16 %v3349
      %v3431 = vunpack.c.l.b16 %v3350
      %v3432 = vunpack.c.l.b16 %v3351
      %v3433 = vunpack.c.l.b16 %v3352
      %v3434 = vunpack.c.l.b16 %v3353
      %v3435 = vunpack.c.l.b16 %v3354
      %v3436 = vunpack.c.l.b16 %v3355
      %v3437 = vunpack.c.l.b16 %v3356
      %v3438 = vunpack.c.l.b16 %v3357
      %v3439 = vunpack.c.l.b16 %v3358
      %v3440 = vunpack.c.l.b16 %v3359
      %v3441 = vunpack.c.l.b16 %v3360
      %v3442 = vunpack.c.l.b16 %v3361
      %v3443 = vunpack.c.l.b16 %v3362
      %v3444 = vunpack.c.l.b16 %v3363
      %v3445 = vunpack.c.l.b16 %v3364
      %v3446 = vunpack.c.l.b16 %v3365
      %v3447 = vunpack.c.l.b16 %v3366
      %v3448 = vunpack.c.l.b16 %v3367
      %v3449 = vunpack.c.l.b16 %v3368
      %v3450 = vunpack.c.l.b16 %v3369
      %v3451 = vunpack.c.l.b16 %v3370
      %v3452 = vunpack.c.l.b16 %v3371
      %v3453 = vunpack.c.l.b16 %v3372
      %v3454 = vunpack.c.l.b16 %v3373
      %v3455 = vunpack.c.l.b16 %v3374
      %v3456 = vpack.c.b16 %v3425, %v3424
      %v3457 = vpack.c.b16 %v3427, %v3426
      %v3458 = vpack.c.b16 %v3429, %v3428
      %v3459 = vpack.c.b16 %v3431, %v3430
      %v3460 = vpack.c.b16 %v3433, %v3432
      %v3461 = vpack.c.b16 %v3435, %v3434
      %v3462 = vpack.c.b16 %v3437, %v3436
      %v3463 = vpack.c.b16 %v3439, %v3438
      %v3464 = vpack.c.b16 %v3441, %v3440
      %v3465 = vpack.c.b16 %v3443, %v3442
      %v3466 = vpack.c.b16 %v3445, %v3444
      %v3467 = vpack.c.b16 %v3447, %v3446
      %v3468 = vpack.c.b16 %v3449, %v3448
      %v3469 = vpack.c.b16 %v3451, %v3450
      %v3470 = vpack.c.b16 %v3453, %v3452
      %v3471 = vpack.c.b16 %v3455, %v3454
      %v3504 = vunpack.c.l.b16 %v3376
      %v3505 = vunpack.c.l.b16 %v3377
      %v3506 = vunpack.c.l.b16 %v3378
      %v3507 = vunpack.c.l.b16 %v3379
      %v3508 = vunpack.c.l.b16 %v3380
      %v3509 = vunpack.c.l.b16 %v3381
      %v3510 = vunpack.c.l.b16 %v3382
      %v3511 = vunpack.c.l.b16 %v3383
      %v3512 = vunpack.c.l.b16 %v3384
      %v3513 = vunpack.c.l.b16 %v3385
      %v3514 = vunpack.c.l.b16 %v3386
      %v3515 = vunpack.c.l.b16 %v3387
      %v3516 = vunpack.c.l.b16 %v3388
      %v3517 = vunpack.c.l.b16 %v3389
      %v3518 = vunpack.c.l.b16 %v3390
      %v3519 = vunpack.c.l.b16 %v3391
      %v3520 = vpack.c.b16 %v3505, %v3504
      %v3521 = vpack.c.b16 %v3507, %v3506
      %v3522 = vpack.c.b16 %v3509, %v3508
      %v3523 = vpack.c.b16 %v3511, %v3510
      %v3524 = vpack.c.b16 %v3513, %v3512
      %v3525 = vpack.c.b16 %v3515, %v3514
      %v3526 = vpack.c.b16 %v3517, %v3516
      %v3527 = vpack.c.b16 %v3519, %v3518
      %3536 = vmatprep.subr.bf16.mxu0 0
      %3537 = vmatpush1.bf16.msra.mxu0 %v3520
      %3538 = vmatprep.subr.bf16.mxu0 0
      %3539 = vmatpush1.bf16.msra.mxu0 %v3521
      %3540 = vmatprep.subr.bf16.mxu0 0
      %3541 = vmatpush1.bf16.msra.mxu0 %v3522
      %3542 = vmatprep.subr.bf16.mxu0 0
      %3543 = vmatpush1.bf16.msra.mxu0 %v3523
      %3544 = vmatprep.subr.bf16.mxu0 0
      %3545 = vmatpush1.bf16.msra.mxu0 %v3524
      %3546 = vmatprep.subr.bf16.mxu0 0
      %3547 = vmatpush1.bf16.msra.mxu0 %v3525
      %3548 = vmatprep.subr.bf16.mxu0 0
      %3549 = vmatpush1.bf16.msra.mxu0 %v3526
      %3550 = vmatprep.subr.bf16.mxu0 0
      %3551 = vmatpush1.bf16.msra.mxu0 %v3527
      %3552 = vmatprep.subr.bf16.mxu0 0
      %3553 = vmatpush1.bf16.msra.mxu0 0
      %3554 = vmatprep.subr.bf16.mxu0 0
      %3555 = vmatpush1.bf16.msra.mxu0 0
      %3556 = vmatprep.subr.bf16.mxu0 0
      %3557 = vmatpush1.bf16.msra.mxu0 0
      %3558 = vmatprep.subr.bf16.mxu0 0
      %3559 = vmatpush1.bf16.msra.mxu0 0
      %3560 = vmatprep.subr.bf16.mxu0 0
      %3561 = vmatpush1.bf16.msra.mxu0 0
      %3562 = vmatprep.subr.bf16.mxu0 0
      %3563 = vmatpush1.bf16.msra.mxu0 0
      %3564 = vmatprep.subr.bf16.mxu0 0
      %3565 = vmatpush1.bf16.msra.mxu0 0
      %3566 = vmatprep.subr.bf16.mxu0 0
      %3567 = vmatpush1.bf16.msra.mxu0 0
      %3568 = vmatprep.mubr.bf16.mxu0 0
      %3569 = vmatmul.mubr.bf16.gmra.mrb[0].mxu0 %v3456
      %v3570 = vpop.f32.mrb[0].mxu0
      %v3571 = vadd.f32 0.0, %v3570
      %v3572 = vpop.f32.mrb[0].mxu0
      %v3573 = vpop.f32.mrb[0].mxu0
      %v3574 = vadd.f32 0.0, %v3573
      %v3575 = vpop.f32.mrb[0].mxu0
      %3576 = vmatprep.mubr.bf16.mxu0 0
      %3577 = vmatmul.mubr.bf16.gmra.mrb[0].mxu0 %v3457
      %v3578 = vpop.f32.mrb[0].mxu0
      %v3579 = vadd.f32 0.0, %v3578
      %v3580 = vpop.f32.mrb[0].mxu0
      %v3581 = vpop.f32.mrb[0].mxu0
      %v3582 = vadd.f32 0.0, %v3581
      %v3583 = vpop.f32.mrb[0].mxu0
      %3584 = vmatprep.mubr.bf16.mxu0 0
      %3585 = vmatmul.mubr.bf16.gmra.mrb[0].mxu0 %v3458
      %v3586 = vpop.f32.mrb[0].mxu0
      %v3587 = vadd.f32 0.0, %v3586
      %v3588 = vpop.f32.mrb[0].mxu0
      %v3589 = vpop.f32.mrb[0].mxu0
      %v3590 = vadd.f32 0.0, %v3589
      %v3591 = vpop.f32.mrb[0].mxu0
      %3592 = vmatprep.mubr.bf16.mxu0 0
      %3593 = vmatmul.mubr.bf16.gmra.mrb[0].mxu0 %v3459
      %v3594 = vpop.f32.mrb[0].mxu0
      %v3595 = vadd.f32 0.0, %v3594
      %v3596 = vpop.f32.mrb[0].mxu0
      %v3597 = vpop.f32.mrb[0].mxu0
      %v3598 = vadd.f32 0.0, %v3597
      %v3599 = vpop.f32.mrb[0].mxu0
      %3600 = vmatprep.mubr.bf16.mxu0 0
      %3601 = vmatmul.mubr.bf16.gmra.mrb[0].mxu0 %v3460
      %v3602 = vpop.f32.mrb[0].mxu0
      %v3603 = vadd.f32 0.0, %v3602
      %v3604 = vpop.f32.mrb[0].mxu0
      %v3605 = vpop.f32.mrb[0].mxu0
      %v3606 = vadd.f32 0.0, %v3605
      %v3607 = vpop.f32.mrb[0].mxu0
      %3608 = vmatprep.mubr.bf16.mxu0 0
      %3609 = vmatmul.mubr.bf16.gmra.mrb[0].mxu0 %v3461
      %v3610 = vpop.f32.mrb[0].mxu0
      %v3611 = vadd.f32 0.0, %v3610
      %v3612 = vpop.f32.mrb[0].mxu0
      %v3613 = vpop.f32.mrb[0].mxu0
      %v3614 = vadd.f32 0.0, %v3613
      %v3615 = vpop.f32.mrb[0].mxu0
      %3616 = vmatprep.mubr.bf16.mxu0 0
      %3617 = vmatmul.mubr.bf16.gmra.mrb[0].mxu0 %v3462
      %v3618 = vpop.f32.mrb[0].mxu0
      %v3619 = vadd.f32 0.0, %v3618
      %v3620 = vpop.f32.mrb[0].mxu0
      %v3621 = vpop.f32.mrb[0].mxu0
      %v3622 = vadd.f32 0.0, %v3621
      %v3623 = vpop.f32.mrb[0].mxu0
      %3624 = vmatprep.mubr.bf16.mxu0 0
      %3625 = vmatmul.mubr.bf16.gmra.mrb[0].mxu0 %v3463
      %v3626 = vpop.f32.mrb[0].mxu0
      %v3627 = vadd.f32 0.0, %v3626
      %v3628 = vpop.f32.mrb[0].mxu0
      %v3629 = vpop.f32.mrb[0].mxu0
      %v3630 = vadd.f32 0.0, %v3629
      %v3631 = vpop.f32.mrb[0].mxu0
      %3632 = vmatprep.mubr.bf16.mxu0 0
      %3633 = vmatmul.mubr.bf16.gmra.mrb[0].mxu0 %v3464
      %v3634 = vpop.f32.mrb[0].mxu0
      %v3635 = vadd.f32 0.0, %v3634
      %v3636 = vpop.f32.mrb[0].mxu0
      %v3637 = vpop.f32.mrb[0].mxu0
      %v3638 = vadd.f32 0.0, %v3637
      %v3639 = vpop.f32.mrb[0].mxu0
      %3640 = vmatprep.mubr.bf16.mxu0 0
      %3641 = vmatmul.mubr.bf16.gmra.mrb[0].mxu0 %v3465
      %v3642 = vpop.f32.mrb[0].mxu0
      %v3643 = vadd.f32 0.0, %v3642
      %v3644 = vpop.f32.mrb[0].mxu0
      %v3645 = vpop.f32.mrb[0].mxu0
      %v3646 = vadd.f32 0.0, %v3645
      %v3647 = vpop.f32.mrb[0].mxu0
      %3648 = vmatprep.mubr.bf16.mxu0 0
      %3649 = vmatmul.mubr.bf16.gmra.mrb[0].mxu0 %v3466
      %v3650 = vpop.f32.mrb[0].mxu0
      %v3651 = vadd.f32 0.0, %v3650
      %v3652 = vpop.f32.mrb[0].mxu0
      %v3653 = vpop.f32.mrb[0].mxu0
      %v3654 = vadd.f32 0.0, %v3653
      %v3655 = vpop.f32.mrb[0].mxu0
      %3656 = vmatprep.mubr.bf16.mxu0 0
      %3657 = vmatmul.mubr.bf16.gmra.mrb[0].mxu0 %v3467
      %v3658 = vpop.f32.mrb[0].mxu0
      %v3659 = vadd.f32 0.0, %v3658
      %v3660 = vpop.f32.mrb[0].mxu0
      %v3661 = vpop.f32.mrb[0].mxu0
      %v3662 = vadd.f32 0.0, %v3661
      %v3663 = vpop.f32.mrb[0].mxu0
      %3664 = vmatprep.mubr.bf16.mxu0 0
      %3665 = vmatmul.mubr.bf16.gmra.mrb[0].mxu0 %v3468
      %v3666 = vpop.f32.mrb[0].mxu0
      %v3667 = vadd.f32 0.0, %v3666
      %v3668 = vpop.f32.mrb[0].mxu0
      %v3669 = vpop.f32.mrb[0].mxu0
      %v3670 = vadd.f32 0.0, %v3669
      %v3671 = vpop.f32.mrb[0].mxu0
      %3672 = vmatprep.mubr.bf16.mxu0 0
      %3673 = vmatmul.mubr.bf16.gmra.mrb[0].mxu0 %v3469
      %v3674 = vpop.f32.mrb[0].mxu0
      %v3675 = vadd.f32 0.0, %v3674
      %v3676 = vpop.f32.mrb[0].mxu0
      %v3677 = vpop.f32.mrb[0].mxu0
      %v3678 = vadd.f32 0.0, %v3677
      %v3679 = vpop.f32.mrb[0].mxu0
      %3680 = vmatprep.mubr.bf16.mxu0 0
      %3681 = vmatmul.mubr.bf16.gmra.mrb[0].mxu0 %v3470
      %v3682 = vpop.f32.mrb[0].mxu0
      %v3683 = vadd.f32 0.0, %v3682
      %v3684 = vpop.f32.mrb[0].mxu0
      %v3685 = vpop.f32.mrb[0].mxu0
      %v3686 = vadd.f32 0.0, %v3685
      %v3687 = vpop.f32.mrb[0].mxu0
      %3688 = vmatprep.mubr.bf16.mxu0 0
      %3689 = vmatmul.mubr.bf16.gmra.mrb[0].mxu0 %v3471
      %v3690 = vpop.f32.mrb[0].mxu0
      %v3691 = vadd.f32 0.0, %v3690
      %v3692 = vpop.f32.mrb[0].mxu0
      %v3693 = vpop.f32.mrb[0].mxu0
      %v3694 = vadd.f32 0.0, %v3693
      %v3695 = vpop.f32.mrb[0].mxu0
      %3696 = vdwg.mxu0
      %v3697 = vadd.f32 %v3310, %v3571
      %v3698 = vadd.f32 %v3311, %v3574
      %v3699 = vadd.f32 %v3312, %v3579
      %v3700 = vadd.f32 %v3313, %v3582
      %v3701 = vadd.f32 %v3314, %v3587
      %v3702 = vadd.f32 %v3315, %v3590
      %v3703 = vadd.f32 %v3316, %v3595
      %v3704 = vadd.f32 %v3317, %v3598
      %v3705 = vadd.f32 %v3318, %v3603
      %v3706 = vadd.f32 %v3319, %v3606
      %v3707 = vadd.f32 %v3320, %v3611
      %v3708 = vadd.f32 %v3321, %v3614
      %v3709 = vadd.f32 %v3322, %v3619
      %v3710 = vadd.f32 %v3323, %v3622
      %v3711 = vadd.f32 %v3324, %v3627
      %v3712 = vadd.f32 %v3325, %v3630
      %v3713 = vadd.f32 %v3326, %v3635
      %v3714 = vadd.f32 %v3327, %v3638
      %v3715 = vadd.f32 %v3328, %v3643
      %v3716 = vadd.f32 %v3329, %v3646
      %v3717 = vadd.f32 %v3330, %v3651
      %v3718 = vadd.f32 %v3331, %v3654
      %v3719 = vadd.f32 %v3332, %v3659
      %v3720 = vadd.f32 %v3333, %v3662
      %v3721 = vadd.f32 %v3334, %v3667
      %v3722 = vadd.f32 %v3335, %v3670
      %v3723 = vadd.f32 %v3336, %v3675
      %v3724 = vadd.f32 %v3337, %v3678
      %v3725 = vadd.f32 %v3338, %v3683
      %v3726 = vadd.f32 %v3339, %v3686
      %v3727 = vadd.f32 %v3340, %v3691
      %v3728 = vadd.f32 %v3341, %v3694
      %v3729 = vld [vmem:[%s3342] sm:$0xf]
      %v3730 = vld [vmem:[%s3342 + $0x4] sm:$0xf]
      %v3731 = vld [vmem:[%s3342 + $0x8] sm:$0x1]
      %v3732 = vld [vmem:[%s3342 + $0xc] sm:$0xf]
      %v3733 = vld [vmem:[%s3342 + $0x10] sm:$0xf]
      %v3734 = vld [vmem:[%s3342 + $0x14] sm:$0x1]
      %v3735 = vld [vmem:[%s3342 + $0x18] sm:$0xf]
      %v3736 = vld [vmem:[%s3342 + $0x1c] sm:$0xf]
      %v3737 = vld [vmem:[%s3342 + $0x20] sm:$0x1]
      %v3738 = vld [vmem:[%s3342 + $0x24] sm:$0xf]
      %v3739 = vld [vmem:[%s3342 + $0x28] sm:$0xf]
      %v3740 = vld [vmem:[%s3342 + $0x2c] sm:$0x1]
      %v3741 = vld [vmem:[%s3342 + $0x30] sm:$0xf]
      %v3742 = vld [vmem:[%s3342 + $0x34] sm:$0xf]
      %v3743 = vld [vmem:[%s3342 + $0x38] sm:$0x1]
      %v3744 = vld [vmem:[%s3342 + $0x3c] sm:$0xf]
      %v3745 = vld [vmem:[%s3342 + $0x40] sm:$0xf]
      %v3746 = vld [vmem:[%s3342 + $0x44] sm:$0x1]
      %v3747 = vld [vmem:[%s3342 + $0x48] sm:$0xf]
      %v3748 = vld [vmem:[%s3342 + $0x4c] sm:$0xf]
      %v3749 = vld [vmem:[%s3342 + $0x50] sm:$0x1]
      %v3750 = vld [vmem:[%s3342 + $0x54] sm:$0xf]
      %v3751 = vld [vmem:[%s3342 + $0x58] sm:$0xf]
      %v3752 = vld [vmem:[%s3342 + $0x5c] sm:$0x1]
      %v3753 = vld [vmem:[%s3342 + $0x60] sm:$0xf]
      %v3754 = vld [vmem:[%s3342 + $0x64] sm:$0xf]
      %v3755 = vld [vmem:[%s3342 + $0x68] sm:$0x1]
      %v3756 = vld [vmem:[%s3342 + $0x6c] sm:$0xf]
      %v3757 = vld [vmem:[%s3342 + $0x70] sm:$0xf]
      %v3758 = vld [vmem:[%s3342 + $0x74] sm:$0x1]
      %v3759 = vld [vmem:[%s3342 + $0x78] sm:$0xf]
      %v3760 = vld [vmem:[%s3342 + $0x7c] sm:$0xf]
      %v3761 = vld [vmem:[%s3342 + $0x80] sm:$0x1]
      %v3762 = vld [vmem:[%s3342 + $0x84] sm:$0xf]
      %v3763 = vld [vmem:[%s3342 + $0x88] sm:$0xf]
      %v3764 = vld [vmem:[%s3342 + $0x8c] sm:$0x1]
      %v3765 = vld [vmem:[%s3342 + $0x90] sm:$0xf]
      %v3766 = vld [vmem:[%s3342 + $0x94] sm:$0xf]
      %v3767 = vld [vmem:[%s3342 + $0x98] sm:$0x1]
      %v3768 = vld [vmem:[%s3342 + $0x9c] sm:$0xf]
      %v3769 = vld [vmem:[%s3342 + $0xa0] sm:$0xf]
      %v3770 = vld [vmem:[%s3342 + $0xa4] sm:$0x1]
      %v3771 = vld [vmem:[%s3342 + $0xa8] sm:$0xf]
      %v3772 = vld [vmem:[%s3342 + $0xac] sm:$0xf]
      %v3773 = vld [vmem:[%s3342 + $0xb0] sm:$0x1]
      %v3774 = vld [vmem:[%s3342 + $0xb4] sm:$0xf]
      %v3775 = vld [vmem:[%s3342 + $0xb8] sm:$0xf]
      %v3776 = vld [vmem:[%s3342 + $0xbc] sm:$0x1]
      %v3778 = vshrl.u32 %v3729, 16
      %v3780 = vrot.slane %v3778, 4
      %v3781 = vshll.u32 %v3729, 16
      %v3783 = vrot.slane %v3781, 5
      %v3784 = vor.u32 %v3780, %v3783
      %v3785 = vrot.slane %v3784, 4
      %v3787 = vshll.u32 %v3730, 16
      %v3789 = vrot.slane %v3787, 5
      %v3790 = vsel %vm238, %v3785, %v3789
      %v3791 = vshrl.u32 %v3730, 16
      %v3793 = vrot.slane %v3791, 4
      %v3794 = vor.u32 %v3793, %v3789
      %v3795 = vrot.slane %v3794, 4
      %v3797 = vshll.u32 %v3731, 16
      %v3799 = vrot.slane %v3797, 5
      %v3800 = vsel %vm238, %v3795, %v3799
      %v3802 = vshrl.u32 %v3732, 16
      %v3804 = vrot.slane %v3802, 4
      %v3805 = vshll.u32 %v3732, 16
      %v3807 = vrot.slane %v3805, 5
      %v3808 = vor.u32 %v3804, %v3807
      %v3809 = vrot.slane %v3808, 4
      %v3811 = vshll.u32 %v3733, 16
      %v3813 = vrot.slane %v3811, 5
      %v3814 = vsel %vm238, %v3809, %v3813
      %v3815 = vshrl.u32 %v3733, 16
      %v3817 = vrot.slane %v3815, 4
      %v3818 = vor.u32 %v3817, %v3813
      %v3819 = vrot.slane %v3818, 4
      %v3821 = vshll.u32 %v3734, 16
      %v3823 = vrot.slane %v3821, 5
      %v3824 = vsel %vm238, %v3819, %v3823
      %v3826 = vshrl.u32 %v3735, 16
      %v3828 = vrot.slane %v3826, 4
      %v3829 = vshll.u32 %v3735, 16
      %v3831 = vrot.slane %v3829, 5
      %v3832 = vor.u32 %v3828, %v3831
      %v3833 = vrot.slane %v3832, 4
      %v3835 = vshll.u32 %v3736, 16
      %v3837 = vrot.slane %v3835, 5
      %v3838 = vsel %vm238, %v3833, %v3837
      %v3839 = vshrl.u32 %v3736, 16
      %v3841 = vrot.slane %v3839, 4
      %v3842 = vor.u32 %v3841, %v3837
      %v3843 = vrot.slane %v3842, 4
      %v3845 = vshll.u32 %v3737, 16
      %v3847 = vrot.slane %v3845, 5
      %v3848 = vsel %vm238, %v3843, %v3847
      %v3850 = vshrl.u32 %v3738, 16
      %v3852 = vrot.slane %v3850, 4
      %v3853 = vshll.u32 %v3738, 16
      %v3855 = vrot.slane %v3853, 5
      %v3856 = vor.u32 %v3852, %v3855
      %v3857 = vrot.slane %v3856, 4
      %v3859 = vshll.u32 %v3739, 16
      %v3861 = vrot.slane %v3859, 5
      %v3862 = vsel %vm238, %v3857, %v3861
      %v3863 = vshrl.u32 %v3739, 16
      %v3865 = vrot.slane %v3863, 4
      %v3866 = vor.u32 %v3865, %v3861
      %v3867 = vrot.slane %v3866, 4
      %v3869 = vshll.u32 %v3740, 16
      %v3871 = vrot.slane %v3869, 5
      %v3872 = vsel %vm238, %v3867, %v3871
      %v3874 = vshrl.u32 %v3741, 16
      %v3876 = vrot.slane %v3874, 4
      %v3877 = vshll.u32 %v3741, 16
      %v3879 = vrot.slane %v3877, 5
      %v3880 = vor.u32 %v3876, %v3879
      %v3881 = vrot.slane %v3880, 4
      %v3883 = vshll.u32 %v3742, 16
      %v3885 = vrot.slane %v3883, 5
      %v3886 = vsel %vm238, %v3881, %v3885
      %v3887 = vshrl.u32 %v3742, 16
      %v3889 = vrot.slane %v3887, 4
      %v3890 = vor.u32 %v3889, %v3885
      %v3891 = vrot.slane %v3890, 4
      %v3893 = vshll.u32 %v3743, 16
      %v3895 = vrot.slane %v3893, 5
      %v3896 = vsel %vm238, %v3891, %v3895
      %v3898 = vshrl.u32 %v3744, 16
      %v3900 = vrot.slane %v3898, 4
      %v3901 = vshll.u32 %v3744, 16
      %v3903 = vrot.slane %v3901, 5
      %v3904 = vor.u32 %v3900, %v3903
      %v3905 = vrot.slane %v3904, 4
      %v3907 = vshll.u32 %v3745, 16
      %v3909 = vrot.slane %v3907, 5
      %v3910 = vsel %vm238, %v3905, %v3909
      %v3911 = vshrl.u32 %v3745, 16
      %v3913 = vrot.slane %v3911, 4
      %v3914 = vor.u32 %v3913, %v3909
      %v3915 = vrot.slane %v3914, 4
      %v3917 = vshll.u32 %v3746, 16
      %v3919 = vrot.slane %v3917, 5
      %v3920 = vsel %vm238, %v3915, %v3919
      %v3922 = vshrl.u32 %v3747, 16
      %v3924 = vrot.slane %v3922, 4
      %v3925 = vshll.u32 %v3747, 16
      %v3927 = vrot.slane %v3925, 5
      %v3928 = vor.u32 %v3924, %v3927
      %v3929 = vrot.slane %v3928, 4
      %v3931 = vshll.u32 %v3748, 16
      %v3933 = vrot.slane %v3931, 5
      %v3934 = vsel %vm238, %v3929, %v3933
      %v3935 = vshrl.u32 %v3748, 16
      %v3937 = vrot.slane %v3935, 4
      %v3938 = vor.u32 %v3937, %v3933
      %v3939 = vrot.slane %v3938, 4
      %v3941 = vshll.u32 %v3749, 16
      %v3943 = vrot.slane %v3941, 5
      %v3944 = vsel %vm238, %v3939, %v3943
      %v3946 = vshrl.u32 %v3750, 16
      %v3948 = vrot.slane %v3946, 4
      %v3949 = vshll.u32 %v3750, 16
      %v3951 = vrot.slane %v3949, 5
      %v3952 = vor.u32 %v3948, %v3951
      %v3953 = vrot.slane %v3952, 4
      %v3955 = vshll.u32 %v3751, 16
      %v3957 = vrot.slane %v3955, 5
      %v3958 = vsel %vm238, %v3953, %v3957
      %v3959 = vshrl.u32 %v3751, 16
      %v3961 = vrot.slane %v3959, 4
      %v3962 = vor.u32 %v3961, %v3957
      %v3963 = vrot.slane %v3962, 4
      %v3965 = vshll.u32 %v3752, 16
      %v3967 = vrot.slane %v3965, 5
      %v3968 = vsel %vm238, %v3963, %v3967
      %v3970 = vshrl.u32 %v3753, 16
      %v3972 = vrot.slane %v3970, 4
      %v3973 = vshll.u32 %v3753, 16
      %v3975 = vrot.slane %v3973, 5
      %v3976 = vor.u32 %v3972, %v3975
      %v3977 = vrot.slane %v3976, 4
      %v3979 = vshll.u32 %v3754, 16
      %v3981 = vrot.slane %v3979, 5
      %v3982 = vsel %vm238, %v3977, %v3981
      %v3983 = vshrl.u32 %v3754, 16
      %v3985 = vrot.slane %v3983, 4
      %v3986 = vor.u32 %v3985, %v3981
      %v3987 = vrot.slane %v3986, 4
      %v3989 = vshll.u32 %v3755, 16
      %v3991 = vrot.slane %v3989, 5
      %v3992 = vsel %vm238, %v3987, %v3991
      %v3994 = vshrl.u32 %v3756, 16
      %v3996 = vrot.slane %v3994, 4
      %v3997 = vshll.u32 %v3756, 16
      %v3999 = vrot.slane %v3997, 5
      %v4000 = vor.u32 %v3996, %v3999
      %v4001 = vrot.slane %v4000, 4
      %v4003 = vshll.u32 %v3757, 16
      %v4005 = vrot.slane %v4003, 5
      %v4006 = vsel %vm238, %v4001, %v4005
      %v4007 = vshrl.u32 %v3757, 16
      %v4009 = vrot.slane %v4007, 4
      %v4010 = vor.u32 %v4009, %v4005
      %v4011 = vrot.slane %v4010, 4
      %v4013 = vshll.u32 %v3758, 16
      %v4015 = vrot.slane %v4013, 5
      %v4016 = vsel %vm238, %v4011, %v4015
      %v4018 = vshrl.u32 %v3759, 16
      %v4020 = vrot.slane %v4018, 4
      %v4021 = vshll.u32 %v3759, 16
      %v4023 = vrot.slane %v4021, 5
      %v4024 = vor.u32 %v4020, %v4023
      %v4025 = vrot.slane %v4024, 4
      %v4027 = vshll.u32 %v3760, 16
      %v4029 = vrot.slane %v4027, 5
      %v4030 = vsel %vm238, %v4025, %v4029
      %v4031 = vshrl.u32 %v3760, 16
      %v4033 = vrot.slane %v4031, 4
      %v4034 = vor.u32 %v4033, %v4029
      %v4035 = vrot.slane %v4034, 4
      %v4037 = vshll.u32 %v3761, 16
      %v4039 = vrot.slane %v4037, 5
      %v4040 = vsel %vm238, %v4035, %v4039
      %v4042 = vshrl.u32 %v3762, 16
      %v4044 = vrot.slane %v4042, 4
      %v4045 = vshll.u32 %v3762, 16
      %v4047 = vrot.slane %v4045, 5
      %v4048 = vor.u32 %v4044, %v4047
      %v4049 = vrot.slane %v4048, 4
      %v4051 = vshll.u32 %v3763, 16
      %v4053 = vrot.slane %v4051, 5
      %v4054 = vsel %vm238, %v4049, %v4053
      %v4055 = vshrl.u32 %v3763, 16
      %v4057 = vrot.slane %v4055, 4
      %v4058 = vor.u32 %v4057, %v4053
      %v4059 = vrot.slane %v4058, 4
      %v4061 = vshll.u32 %v3764, 16
      %v4063 = vrot.slane %v4061, 5
      %v4064 = vsel %vm238, %v4059, %v4063
      %v4066 = vshrl.u32 %v3765, 16
      %v4068 = vrot.slane %v4066, 4
      %v4069 = vshll.u32 %v3765, 16
      %v4071 = vrot.slane %v4069, 5
      %v4072 = vor.u32 %v4068, %v4071
      %v4073 = vrot.slane %v4072, 4
      %v4075 = vshll.u32 %v3766, 16
      %v4077 = vrot.slane %v4075, 5
      %v4078 = vsel %vm238, %v4073, %v4077
      %v4079 = vshrl.u32 %v3766, 16
      %v4081 = vrot.slane %v4079, 4
      %v4082 = vor.u32 %v4081, %v4077
      %v4083 = vrot.slane %v4082, 4
      %v4085 = vshll.u32 %v3767, 16
      %v4087 = vrot.slane %v4085, 5
      %v4088 = vsel %vm238, %v4083, %v4087
      %v4090 = vshrl.u32 %v3768, 16
      %v4092 = vrot.slane %v4090, 4
      %v4093 = vshll.u32 %v3768, 16
      %v4095 = vrot.slane %v4093, 5
      %v4096 = vor.u32 %v4092, %v4095
      %v4097 = vrot.slane %v4096, 4
      %v4099 = vshll.u32 %v3769, 16
      %v4101 = vrot.slane %v4099, 5
      %v4102 = vsel %vm238, %v4097, %v4101
      %v4103 = vshrl.u32 %v3769, 16
      %v4105 = vrot.slane %v4103, 4
      %v4106 = vor.u32 %v4105, %v4101
      %v4107 = vrot.slane %v4106, 4
      %v4109 = vshll.u32 %v3770, 16
      %v4111 = vrot.slane %v4109, 5
      %v4112 = vsel %vm238, %v4107, %v4111
      %v4114 = vshrl.u32 %v3771, 16
      %v4116 = vrot.slane %v4114, 4
      %v4117 = vshll.u32 %v3771, 16
      %v4119 = vrot.slane %v4117, 5
      %v4120 = vor.u32 %v4116, %v4119
      %v4121 = vrot.slane %v4120, 4
      %v4123 = vshll.u32 %v3772, 16
      %v4125 = vrot.slane %v4123, 5
      %v4126 = vsel %vm238, %v4121, %v4125
      %v4127 = vshrl.u32 %v3772, 16
      %v4129 = vrot.slane %v4127, 4
      %v4130 = vor.u32 %v4129, %v4125
      %v4131 = vrot.slane %v4130, 4
      %v4133 = vshll.u32 %v3773, 16
      %v4135 = vrot.slane %v4133, 5
      %v4136 = vsel %vm238, %v4131, %v4135
      %v4138 = vshrl.u32 %v3774, 16
      %v4140 = vrot.slane %v4138, 4
      %v4141 = vshll.u32 %v3774, 16
      %v4143 = vrot.slane %v4141, 5
      %v4144 = vor.u32 %v4140, %v4143
      %v4145 = vrot.slane %v4144, 4
      %v4147 = vshll.u32 %v3775, 16
      %v4149 = vrot.slane %v4147, 5
      %v4150 = vsel %vm238, %v4145, %v4149
      %v4151 = vshrl.u32 %v3775, 16
      %v4153 = vrot.slane %v4151, 4
      %v4154 = vor.u32 %v4153, %v4149
      %v4155 = vrot.slane %v4154, 4
      %v4157 = vshll.u32 %v3776, 16
      %v4159 = vrot.slane %v4157, 5
      %v4160 = vsel %vm238, %v4155, %v4159
      %s4161 = scalar_lea.vmem %s1, 448
      %v4162 = vld [vmem:[%s4161] sm:$0xf]
      %v4163 = vld [vmem:[%s4161 + $0x4] sm:$0xf]
      %v4164 = vld [vmem:[%s4161 + $0x8] sm:$0xf]
      %v4165 = vld [vmem:[%s4161 + $0xc] sm:$0xf]
      %v4166 = vld [vmem:[%s4161 + $0x10] sm:$0xf]
      %v4167 = vld [vmem:[%s4161 + $0x14] sm:$0xf]
      %v4168 = vld [vmem:[%s4161 + $0x18] sm:$0xf]
      %v4169 = vld [vmem:[%s4161 + $0x1c] sm:$0xf]
      %v4170 = vld [vmem:[%s4161 + $0x20] sm:$0xf]
      %v4171 = vld [vmem:[%s4161 + $0x24] sm:$0xf]
      %v4172 = vld [vmem:[%s4161 + $0x28] sm:$0xf]
      %v4173 = vld [vmem:[%s4161 + $0x2c] sm:$0xf]
      %v4174 = vld [vmem:[%s4161 + $0x30] sm:$0xf]
      %v4175 = vld [vmem:[%s4161 + $0x34] sm:$0xf]
      %v4176 = vld [vmem:[%s4161 + $0x38] sm:$0xf]
      %v4177 = vld [vmem:[%s4161 + $0x3c] sm:$0xf]
      %v4178 = vunpack.c.l.b16 %v3790
      %v4179 = vunpack.c.l.b16 %v3800
      %v4180 = vunpack.c.l.b16 %v3814
      %v4181 = vunpack.c.l.b16 %v3824
      %v4182 = vunpack.c.l.b16 %v3838
      %v4183 = vunpack.c.l.b16 %v3848
      %v4184 = vunpack.c.l.b16 %v3862
      %v4185 = vunpack.c.l.b16 %v3872
      %v4186 = vunpack.c.l.b16 %v3886
      %v4187 = vunpack.c.l.b16 %v3896
      %v4188 = vunpack.c.l.b16 %v3910
      %v4189 = vunpack.c.l.b16 %v3920
      %v4190 = vunpack.c.l.b16 %v3934
      %v4191 = vunpack.c.l.b16 %v3944
      %v4192 = vunpack.c.l.b16 %v3958
      %v4193 = vunpack.c.l.b16 %v3968
      %v4194 = vunpack.c.l.b16 %v3982
      %v4195 = vunpack.c.l.b16 %v3992
      %v4196 = vunpack.c.l.b16 %v4006
      %v4197 = vunpack.c.l.b16 %v4016
      %v4198 = vunpack.c.l.b16 %v4030
      %v4199 = vunpack.c.l.b16 %v4040
      %v4200 = vunpack.c.l.b16 %v4054
      %v4201 = vunpack.c.l.b16 %v4064
      %v4202 = vunpack.c.l.b16 %v4078
      %v4203 = vunpack.c.l.b16 %v4088
      %v4204 = vunpack.c.l.b16 %v4102
      %v4205 = vunpack.c.l.b16 %v4112
      %v4206 = vunpack.c.l.b16 %v4126
      %v4207 = vunpack.c.l.b16 %v4136
      %v4208 = vunpack.c.l.b16 %v4150
      %v4209 = vunpack.c.l.b16 %v4160
      %v4210 = vpack.c.b16 %v4179, %v4178
      %v4211 = vpack.c.b16 %v4181, %v4180
      %v4212 = vpack.c.b16 %v4183, %v4182
      %v4213 = vpack.c.b16 %v4185, %v4184
      %v4214 = vpack.c.b16 %v4187, %v4186
      %v4215 = vpack.c.b16 %v4189, %v4188
      %v4216 = vpack.c.b16 %v4191, %v4190
      %v4217 = vpack.c.b16 %v4193, %v4192
      %v4218 = vpack.c.b16 %v4195, %v4194
      %v4219 = vpack.c.b16 %v4197, %v4196
      %v4220 = vpack.c.b16 %v4199, %v4198
      %v4221 = vpack.c.b16 %v4201, %v4200
      %v4222 = vpack.c.b16 %v4203, %v4202
      %v4223 = vpack.c.b16 %v4205, %v4204
      %v4224 = vpack.c.b16 %v4207, %v4206
      %v4225 = vpack.c.b16 %v4209, %v4208
      %v4258 = vunpack.c.l.b16 %v4162
      %v4259 = vunpack.c.l.b16 %v4163
      %v4260 = vunpack.c.l.b16 %v4164
      %v4261 = vunpack.c.l.b16 %v4165
      %v4262 = vunpack.c.l.b16 %v4166
      %v4263 = vunpack.c.l.b16 %v4167
      %v4264 = vunpack.c.l.b16 %v4168
      %v4265 = vunpack.c.l.b16 %v4169
      %v4266 = vunpack.c.l.b16 %v4170
      %v4267 = vunpack.c.l.b16 %v4171
      %v4268 = vunpack.c.l.b16 %v4172
      %v4269 = vunpack.c.l.b16 %v4173
      %v4270 = vunpack.c.l.b16 %v4174
      %v4271 = vunpack.c.l.b16 %v4175
      %v4272 = vunpack.c.l.b16 %v4176
      %v4273 = vunpack.c.l.b16 %v4177
      %v4274 = vpack.c.b16 %v4259, %v4258
      %v4275 = vpack.c.b16 %v4261, %v4260
      %v4276 = vpack.c.b16 %v4263, %v4262
      %v4277 = vpack.c.b16 %v4265, %v4264
      %v4278 = vpack.c.b16 %v4267, %v4266
      %v4279 = vpack.c.b16 %v4269, %v4268
      %v4280 = vpack.c.b16 %v4271, %v4270
      %v4281 = vpack.c.b16 %v4273, %v4272
      %4290 = vmatprep.subr.bf16.mxu0 0
      %4291 = vmatpush1.bf16.msra.mxu0 %v4274
      %4292 = vmatprep.subr.bf16.mxu0 0
      %4293 = vmatpush1.bf16.msra.mxu0 %v4275
      %4294 = vmatprep.subr.bf16.mxu0 0
      %4295 = vmatpush1.bf16.msra.mxu0 %v4276
      %4296 = vmatprep.subr.bf16.mxu0 0
      %4297 = vmatpush1.bf16.msra.mxu0 %v4277
      %4298 = vmatprep.subr.bf16.mxu0 0
      %4299 = vmatpush1.bf16.msra.mxu0 %v4278
      %4300 = vmatprep.subr.bf16.mxu0 0
      %4301 = vmatpush1.bf16.msra.mxu0 %v4279
      %4302 = vmatprep.subr.bf16.mxu0 0
      %4303 = vmatpush1.bf16.msra.mxu0 %v4280
      %4304 = vmatprep.subr.bf16.mxu0 0
      %4305 = vmatpush1.bf16.msra.mxu0 %v4281
      %4306 = vmatprep.subr.bf16.mxu0 0
      %4307 = vmatpush1.bf16.msra.mxu0 0
      %4308 = vmatprep.subr.bf16.mxu0 0
      %4309 = vmatpush1.bf16.msra.mxu0 0
      %4310 = vmatprep.subr.bf16.mxu0 0
      %4311 = vmatpush1.bf16.msra.mxu0 0
      %4312 = vmatprep.subr.bf16.mxu0 0
      %4313 = vmatpush1.bf16.msra.mxu0 0
      %4314 = vmatprep.subr.bf16.mxu0 0
      %4315 = vmatpush1.bf16.msra.mxu0 0
      %4316 = vmatprep.subr.bf16.mxu0 0
      %4317 = vmatpush1.bf16.msra.mxu0 0
      %4318 = vmatprep.subr.bf16.mxu0 0
      %4319 = vmatpush1.bf16.msra.mxu0 0
      %4320 = vmatprep.subr.bf16.mxu0 0
      %4321 = vmatpush1.bf16.msra.mxu0 0
      %4322 = vmatprep.mubr.bf16.mxu0 0
      %4323 = vmatmul.mubr.bf16.gmra.mrb[0].mxu0 %v4210
      %v4324 = vpop.f32.mrb[0].mxu0
      %v4325 = vadd.f32 0.0, %v4324
      %v4326 = vpop.f32.mrb[0].mxu0
      %v4327 = vpop.f32.mrb[0].mxu0
      %v4328 = vadd.f32 0.0, %v4327
      %v4329 = vpop.f32.mrb[0].mxu0
      %4330 = vmatprep.mubr.bf16.mxu0 0
      %4331 = vmatmul.mubr.bf16.gmra.mrb[0].mxu0 %v4211
      %v4332 = vpop.f32.mrb[0].mxu0
      %v4333 = vadd.f32 0.0, %v4332
      %v4334 = vpop.f32.mrb[0].mxu0
      %v4335 = vpop.f32.mrb[0].mxu0
      %v4336 = vadd.f32 0.0, %v4335
      %v4337 = vpop.f32.mrb[0].mxu0
      %4338 = vmatprep.mubr.bf16.mxu0 0
      %4339 = vmatmul.mubr.bf16.gmra.mrb[0].mxu0 %v4212
      %v4340 = vpop.f32.mrb[0].mxu0
      %v4341 = vadd.f32 0.0, %v4340
      %v4342 = vpop.f32.mrb[0].mxu0
      %v4343 = vpop.f32.mrb[0].mxu0
      %v4344 = vadd.f32 0.0, %v4343
      %v4345 = vpop.f32.mrb[0].mxu0
      %4346 = vmatprep.mubr.bf16.mxu0 0
      %4347 = vmatmul.mubr.bf16.gmra.mrb[0].mxu0 %v4213
      %v4348 = vpop.f32.mrb[0].mxu0
      %v4349 = vadd.f32 0.0, %v4348
      %v4350 = vpop.f32.mrb[0].mxu0
      %v4351 = vpop.f32.mrb[0].mxu0
      %v4352 = vadd.f32 0.0, %v4351
      %v4353 = vpop.f32.mrb[0].mxu0
      %4354 = vmatprep.mubr.bf16.mxu0 0
      %4355 = vmatmul.mubr.bf16.gmra.mrb[0].mxu0 %v4214
      %v4356 = vpop.f32.mrb[0].mxu0
      %v4357 = vadd.f32 0.0, %v4356
      %v4358 = vpop.f32.mrb[0].mxu0
      %v4359 = vpop.f32.mrb[0].mxu0
      %v4360 = vadd.f32 0.0, %v4359
      %v4361 = vpop.f32.mrb[0].mxu0
      %4362 = vmatprep.mubr.bf16.mxu0 0
      %4363 = vmatmul.mubr.bf16.gmra.mrb[0].mxu0 %v4215
      %v4364 = vpop.f32.mrb[0].mxu0
      %v4365 = vadd.f32 0.0, %v4364
      %v4366 = vpop.f32.mrb[0].mxu0
      %v4367 = vpop.f32.mrb[0].mxu0
      %v4368 = vadd.f32 0.0, %v4367
      %v4369 = vpop.f32.mrb[0].mxu0
      %4370 = vmatprep.mubr.bf16.mxu0 0
      %4371 = vmatmul.mubr.bf16.gmra.mrb[0].mxu0 %v4216
      %v4372 = vpop.f32.mrb[0].mxu0
      %v4373 = vadd.f32 0.0, %v4372
      %v4374 = vpop.f32.mrb[0].mxu0
      %v4375 = vpop.f32.mrb[0].mxu0
      %v4376 = vadd.f32 0.0, %v4375
      %v4377 = vpop.f32.mrb[0].mxu0
      %4378 = vmatprep.mubr.bf16.mxu0 0
      %4379 = vmatmul.mubr.bf16.gmra.mrb[0].mxu0 %v4217
      %v4380 = vpop.f32.mrb[0].mxu0
      %v4381 = vadd.f32 0.0, %v4380
      %v4382 = vpop.f32.mrb[0].mxu0
      %v4383 = vpop.f32.mrb[0].mxu0
      %v4384 = vadd.f32 0.0, %v4383
      %v4385 = vpop.f32.mrb[0].mxu0
      %4386 = vmatprep.mubr.bf16.mxu0 0
      %4387 = vmatmul.mubr.bf16.gmra.mrb[0].mxu0 %v4218
      %v4388 = vpop.f32.mrb[0].mxu0
      %v4389 = vadd.f32 0.0, %v4388
      %v4390 = vpop.f32.mrb[0].mxu0
      %v4391 = vpop.f32.mrb[0].mxu0
      %v4392 = vadd.f32 0.0, %v4391
      %v4393 = vpop.f32.mrb[0].mxu0
      %4394 = vmatprep.mubr.bf16.mxu0 0
      %4395 = vmatmul.mubr.bf16.gmra.mrb[0].mxu0 %v4219
      %v4396 = vpop.f32.mrb[0].mxu0
      %v4397 = vadd.f32 0.0, %v4396
      %v4398 = vpop.f32.mrb[0].mxu0
      %v4399 = vpop.f32.mrb[0].mxu0
      %v4400 = vadd.f32 0.0, %v4399
      %v4401 = vpop.f32.mrb[0].mxu0
      %4402 = vmatprep.mubr.bf16.mxu0 0
      %4403 = vmatmul.mubr.bf16.gmra.mrb[0].mxu0 %v4220
      %v4404 = vpop.f32.mrb[0].mxu0
      %v4405 = vadd.f32 0.0, %v4404
      %v4406 = vpop.f32.mrb[0].mxu0
      %v4407 = vpop.f32.mrb[0].mxu0
      %v4408 = vadd.f32 0.0, %v4407
      %v4409 = vpop.f32.mrb[0].mxu0
      %4410 = vmatprep.mubr.bf16.mxu0 0
      %4411 = vmatmul.mubr.bf16.gmra.mrb[0].mxu0 %v4221
      %v4412 = vpop.f32.mrb[0].mxu0
      %v4413 = vadd.f32 0.0, %v4412
      %v4414 = vpop.f32.mrb[0].mxu0
      %v4415 = vpop.f32.mrb[0].mxu0
      %v4416 = vadd.f32 0.0, %v4415
      %v4417 = vpop.f32.mrb[0].mxu0
      %4418 = vmatprep.mubr.bf16.mxu0 0
      %4419 = vmatmul.mubr.bf16.gmra.mrb[0].mxu0 %v4222
      %v4420 = vpop.f32.mrb[0].mxu0
      %v4421 = vadd.f32 0.0, %v4420
      %v4422 = vpop.f32.mrb[0].mxu0
      %v4423 = vpop.f32.mrb[0].mxu0
      %v4424 = vadd.f32 0.0, %v4423
      %v4425 = vpop.f32.mrb[0].mxu0
      %4426 = vmatprep.mubr.bf16.mxu0 0
      %4427 = vmatmul.mubr.bf16.gmra.mrb[0].mxu0 %v4223
      %v4428 = vpop.f32.mrb[0].mxu0
      %v4429 = vadd.f32 0.0, %v4428
      %v4430 = vpop.f32.mrb[0].mxu0
      %v4431 = vpop.f32.mrb[0].mxu0
      %v4432 = vadd.f32 0.0, %v4431
      %v4433 = vpop.f32.mrb[0].mxu0
      %4434 = vmatprep.mubr.bf16.mxu0 0
      %4435 = vmatmul.mubr.bf16.gmra.mrb[0].mxu0 %v4224
      %v4436 = vpop.f32.mrb[0].mxu0
      %v4437 = vadd.f32 0.0, %v4436
      %v4438 = vpop.f32.mrb[0].mxu0
      %v4439 = vpop.f32.mrb[0].mxu0
      %v4440 = vadd.f32 0.0, %v4439
      %v4441 = vpop.f32.mrb[0].mxu0
      %4442 = vmatprep.mubr.bf16.mxu0 0
      %4443 = vmatmul.mubr.bf16.gmra.mrb[0].mxu0 %v4225
      %v4444 = vpop.f32.mrb[0].mxu0
      %v4445 = vadd.f32 0.0, %v4444
      %v4446 = vpop.f32.mrb[0].mxu0
      %v4447 = vpop.f32.mrb[0].mxu0
      %v4448 = vadd.f32 0.0, %v4447
      %v4449 = vpop.f32.mrb[0].mxu0
      %4450 = vdwg.mxu0
      %v4451 = vadd.f32 %v3697, %v4325
      %v4452 = vadd.f32 %v3698, %v4328
      %v4453 = vadd.f32 %v3699, %v4333
      %v4454 = vadd.f32 %v3700, %v4336
      %v4455 = vadd.f32 %v3701, %v4341
      %v4456 = vadd.f32 %v3702, %v4344
      %v4457 = vadd.f32 %v3703, %v4349
      %v4458 = vadd.f32 %v3704, %v4352
      %v4459 = vadd.f32 %v3705, %v4357
      %v4460 = vadd.f32 %v3706, %v4360
      %v4461 = vadd.f32 %v3707, %v4365
      %v4462 = vadd.f32 %v3708, %v4368
      %v4463 = vadd.f32 %v3709, %v4373
      %v4464 = vadd.f32 %v3710, %v4376
      %v4465 = vadd.f32 %v3711, %v4381
      %v4466 = vadd.f32 %v3712, %v4384
      %v4467 = vadd.f32 %v3713, %v4389
      %v4468 = vadd.f32 %v3714, %v4392
      %v4469 = vadd.f32 %v3715, %v4397
      %v4470 = vadd.f32 %v3716, %v4400
      %v4471 = vadd.f32 %v3717, %v4405
      %v4472 = vadd.f32 %v3718, %v4408
      %v4473 = vadd.f32 %v3719, %v4413
      %v4474 = vadd.f32 %v3720, %v4416
      %v4475 = vadd.f32 %v3721, %v4421
      %v4476 = vadd.f32 %v3722, %v4424
      %v4477 = vadd.f32 %v3723, %v4429
      %v4478 = vadd.f32 %v3724, %v4432
      %v4479 = vadd.f32 %v3725, %v4437
      %v4480 = vadd.f32 %v3726, %v4440
      %v4481 = vadd.f32 %v3727, %v4445
      %v4482 = vadd.f32 %v3728, %v4448
      %v4483 = vld [vmem:[%s3342] sm:$0xe]
      %v4484 = vld [vmem:[%s3342 + $0xc] sm:$0xe]
      %v4485 = vld [vmem:[%s3342 + $0x18] sm:$0xe]
      %v4486 = vld [vmem:[%s3342 + $0x24] sm:$0xe]
      %v4487 = vld [vmem:[%s3342 + $0x30] sm:$0xe]
      %v4488 = vld [vmem:[%s3342 + $0x3c] sm:$0xe]
      %v4489 = vld [vmem:[%s3342 + $0x48] sm:$0xe]
      %v4490 = vld [vmem:[%s3342 + $0x54] sm:$0xe]
      %v4491 = vld [vmem:[%s3342 + $0x60] sm:$0xe]
      %v4492 = vld [vmem:[%s3342 + $0x6c] sm:$0xe]
      %v4493 = vld [vmem:[%s3342 + $0x78] sm:$0xe]
      %v4494 = vld [vmem:[%s3342 + $0x84] sm:$0xe]
      %v4495 = vld [vmem:[%s3342 + $0x90] sm:$0xe]
      %v4496 = vld [vmem:[%s3342 + $0x9c] sm:$0xe]
      %v4497 = vld [vmem:[%s3342 + $0xa8] sm:$0xe]
      %v4498 = vld [vmem:[%s3342 + $0xb4] sm:$0xe]
      %v4547 = vrot.slane %v4483, 5
      %v4548 = vrot.slane %v4547, 4
      %v4549 = vrot.slane %v3730, 5
      %v4550 = vsel %vm1268, %v4548, %v4549
      %v4551 = vrot.slane %v4549, 4
      %v4552 = vrot.slane %v3731, 5
      %v4553 = vsel %vm1268, %v4551, %v4552
      %v4554 = vrot.slane %v4484, 5
      %v4555 = vrot.slane %v4554, 4
      %v4556 = vrot.slane %v3733, 5
      %v4557 = vsel %vm1268, %v4555, %v4556
      %v4558 = vrot.slane %v4556, 4
      %v4559 = vrot.slane %v3734, 5
      %v4560 = vsel %vm1268, %v4558, %v4559
      %v4561 = vrot.slane %v4485, 5
      %v4562 = vrot.slane %v4561, 4
      %v4563 = vrot.slane %v3736, 5
      %v4564 = vsel %vm1268, %v4562, %v4563
      %v4565 = vrot.slane %v4563, 4
      %v4566 = vrot.slane %v3737, 5
      %v4567 = vsel %vm1268, %v4565, %v4566
      %v4568 = vrot.slane %v4486, 5
      %v4569 = vrot.slane %v4568, 4
      %v4570 = vrot.slane %v3739, 5
      %v4571 = vsel %vm1268, %v4569, %v4570
      %v4572 = vrot.slane %v4570, 4
      %v4573 = vrot.slane %v3740, 5
      %v4574 = vsel %vm1268, %v4572, %v4573
      %v4575 = vrot.slane %v4487, 5
      %v4576 = vrot.slane %v4575, 4
      %v4577 = vrot.slane %v3742, 5
      %v4578 = vsel %vm1268, %v4576, %v4577
      %v4579 = vrot.slane %v4577, 4
      %v4580 = vrot.slane %v3743, 5
      %v4581 = vsel %vm1268, %v4579, %v4580
      %v4582 = vrot.slane %v4488, 5
      %v4583 = vrot.slane %v4582, 4
      %v4584 = vrot.slane %v3745, 5
      %v4585 = vsel %vm1268, %v4583, %v4584
      %v4586 = vrot.slane %v4584, 4
      %v4587 = vrot.slane %v3746, 5
      %v4588 = vsel %vm1268, %v4586, %v4587
      %v4589 = vrot.slane %v4489, 5
      %v4590 = vrot.slane %v4589, 4
      %v4591 = vrot.slane %v3748, 5
      %v4592 = vsel %vm1268, %v4590, %v4591
      %v4593 = vrot.slane %v4591, 4
      %v4594 = vrot.slane %v3749, 5
      %v4595 = vsel %vm1268, %v4593, %v4594
      %v4596 = vrot.slane %v4490, 5
      %v4597 = vrot.slane %v4596, 4
      %v4598 = vrot.slane %v3751, 5
      %v4599 = vsel %vm1268, %v4597, %v4598
      %v4600 = vrot.slane %v4598, 4
      %v4601 = vrot.slane %v3752, 5
      %v4602 = vsel %vm1268, %v4600, %v4601
      %v4603 = vrot.slane %v4491, 5
      %v4604 = vrot.slane %v4603, 4
      %v4605 = vrot.slane %v3754, 5
      %v4606 = vsel %vm1268, %v4604, %v4605
      %v4607 = vrot.slane %v4605, 4
      %v4608 = vrot.slane %v3755, 5
      %v4609 = vsel %vm1268, %v4607, %v4608
      %v4610 = vrot.slane %v4492, 5
      %v4611 = vrot.slane %v4610, 4
      %v4612 = vrot.slane %v3757, 5
      %v4613 = vsel %vm1268, %v4611, %v4612
      %v4614 = vrot.slane %v4612, 4
      %v4615 = vrot.slane %v3758, 5
      %v4616 = vsel %vm1268, %v4614, %v4615
      %v4617 = vrot.slane %v4493, 5
      %v4618 = vrot.slane %v4617, 4
      %v4619 = vrot.slane %v3760, 5
      %v4620 = vsel %vm1268, %v4618, %v4619
      %v4621 = vrot.slane %v4619, 4
      %v4622 = vrot.slane %v3761, 5
      %v4623 = vsel %vm1268, %v4621, %v4622
      %v4624 = vrot.slane %v4494, 5
      %v4625 = vrot.slane %v4624, 4
      %v4626 = vrot.slane %v3763, 5
      %v4627 = vsel %vm1268, %v4625, %v4626
      %v4628 = vrot.slane %v4626, 4
      %v4629 = vrot.slane %v3764, 5
      %v4630 = vsel %vm1268, %v4628, %v4629
      %v4631 = vrot.slane %v4495, 5
      %v4632 = vrot.slane %v4631, 4
      %v4633 = vrot.slane %v3766, 5
      %v4634 = vsel %vm1268, %v4632, %v4633
      %v4635 = vrot.slane %v4633, 4
      %v4636 = vrot.slane %v3767, 5
      %v4637 = vsel %vm1268, %v4635, %v4636
      %v4638 = vrot.slane %v4496, 5
      %v4639 = vrot.slane %v4638, 4
      %v4640 = vrot.slane %v3769, 5
      %v4641 = vsel %vm1268, %v4639, %v4640
      %v4642 = vrot.slane %v4640, 4
      %v4643 = vrot.slane %v3770, 5
      %v4644 = vsel %vm1268, %v4642, %v4643
      %v4645 = vrot.slane %v4497, 5
      %v4646 = vrot.slane %v4645, 4
      %v4647 = vrot.slane %v3772, 5
      %v4648 = vsel %vm1268, %v4646, %v4647
      %v4649 = vrot.slane %v4647, 4
      %v4650 = vrot.slane %v3773, 5
      %v4651 = vsel %vm1268, %v4649, %v4650
      %v4652 = vrot.slane %v4498, 5
      %v4653 = vrot.slane %v4652, 4
      %v4654 = vrot.slane %v3775, 5
      %v4655 = vsel %vm1268, %v4653, %v4654
      %v4656 = vrot.slane %v4654, 4
      %v4657 = vrot.slane %v3776, 5
      %v4658 = vsel %vm1268, %v4656, %v4657
      %s4659 = scalar_lea.vmem %s1, 512
      %v4660 = vld [vmem:[%s4659] sm:$0xf]
      %v4661 = vld [vmem:[%s4659 + $0x4] sm:$0xf]
      %v4662 = vld [vmem:[%s4659 + $0x8] sm:$0xf]
      %v4663 = vld [vmem:[%s4659 + $0xc] sm:$0xf]
      %v4664 = vld [vmem:[%s4659 + $0x10] sm:$0xf]
      %v4665 = vld [vmem:[%s4659 + $0x14] sm:$0xf]
      %v4666 = vld [vmem:[%s4659 + $0x18] sm:$0xf]
      %v4667 = vld [vmem:[%s4659 + $0x1c] sm:$0xf]
      %v4668 = vld [vmem:[%s4659 + $0x20] sm:$0xf]
      %v4669 = vld [vmem:[%s4659 + $0x24] sm:$0xf]
      %v4670 = vld [vmem:[%s4659 + $0x28] sm:$0xf]
      %v4671 = vld [vmem:[%s4659 + $0x2c] sm:$0xf]
      %v4672 = vld [vmem:[%s4659 + $0x30] sm:$0xf]
      %v4673 = vld [vmem:[%s4659 + $0x34] sm:$0xf]
      %v4674 = vld [vmem:[%s4659 + $0x38] sm:$0xf]
      %v4675 = vld [vmem:[%s4659 + $0x3c] sm:$0xf]
      %v4676 = vunpack.c.l.b16 %v4550
      %v4677 = vunpack.c.l.b16 %v4553
      %v4678 = vunpack.c.l.b16 %v4557
      %v4679 = vunpack.c.l.b16 %v4560
      %v4680 = vunpack.c.l.b16 %v4564
      %v4681 = vunpack.c.l.b16 %v4567
      %v4682 = vunpack.c.l.b16 %v4571
      %v4683 = vunpack.c.l.b16 %v4574
      %v4684 = vunpack.c.l.b16 %v4578
      %v4685 = vunpack.c.l.b16 %v4581
      %v4686 = vunpack.c.l.b16 %v4585
      %v4687 = vunpack.c.l.b16 %v4588
      %v4688 = vunpack.c.l.b16 %v4592
      %v4689 = vunpack.c.l.b16 %v4595
      %v4690 = vunpack.c.l.b16 %v4599
      %v4691 = vunpack.c.l.b16 %v4602
      %v4692 = vunpack.c.l.b16 %v4606
      %v4693 = vunpack.c.l.b16 %v4609
      %v4694 = vunpack.c.l.b16 %v4613
      %v4695 = vunpack.c.l.b16 %v4616
      %v4696 = vunpack.c.l.b16 %v4620
      %v4697 = vunpack.c.l.b16 %v4623
      %v4698 = vunpack.c.l.b16 %v4627
      %v4699 = vunpack.c.l.b16 %v4630
      %v4700 = vunpack.c.l.b16 %v4634
      %v4701 = vunpack.c.l.b16 %v4637
      %v4702 = vunpack.c.l.b16 %v4641
      %v4703 = vunpack.c.l.b16 %v4644
      %v4704 = vunpack.c.l.b16 %v4648
      %v4705 = vunpack.c.l.b16 %v4651
      %v4706 = vunpack.c.l.b16 %v4655
      %v4707 = vunpack.c.l.b16 %v4658
      %v4708 = vpack.c.b16 %v4677, %v4676
      %v4709 = vpack.c.b16 %v4679, %v4678
      %v4710 = vpack.c.b16 %v4681, %v4680
      %v4711 = vpack.c.b16 %v4683, %v4682
      %v4712 = vpack.c.b16 %v4685, %v4684
      %v4713 = vpack.c.b16 %v4687, %v4686
      %v4714 = vpack.c.b16 %v4689, %v4688
      %v4715 = vpack.c.b16 %v4691, %v4690
      %v4716 = vpack.c.b16 %v4693, %v4692
      %v4717 = vpack.c.b16 %v4695, %v4694
      %v4718 = vpack.c.b16 %v4697, %v4696
      %v4719 = vpack.c.b16 %v4699, %v4698
      %v4720 = vpack.c.b16 %v4701, %v4700
      %v4721 = vpack.c.b16 %v4703, %v4702
      %v4722 = vpack.c.b16 %v4705, %v4704
      %v4723 = vpack.c.b16 %v4707, %v4706
      %v4756 = vunpack.c.l.b16 %v4660
      %v4757 = vunpack.c.l.b16 %v4661
      %v4758 = vunpack.c.l.b16 %v4662
      %v4759 = vunpack.c.l.b16 %v4663
      %v4760 = vunpack.c.l.b16 %v4664
      %v4761 = vunpack.c.l.b16 %v4665
      %v4762 = vunpack.c.l.b16 %v4666
      %v4763 = vunpack.c.l.b16 %v4667
      %v4764 = vunpack.c.l.b16 %v4668
      %v4765 = vunpack.c.l.b16 %v4669
      %v4766 = vunpack.c.l.b16 %v4670
      %v4767 = vunpack.c.l.b16 %v4671
      %v4768 = vunpack.c.l.b16 %v4672
      %v4769 = vunpack.c.l.b16 %v4673
      %v4770 = vunpack.c.l.b16 %v4674
      %v4771 = vunpack.c.l.b16 %v4675
      %v4772 = vpack.c.b16 %v4757, %v4756
      %v4773 = vpack.c.b16 %v4759, %v4758
      %v4774 = vpack.c.b16 %v4761, %v4760
      %v4775 = vpack.c.b16 %v4763, %v4762
      %v4776 = vpack.c.b16 %v4765, %v4764
      %v4777 = vpack.c.b16 %v4767, %v4766
      %v4778 = vpack.c.b16 %v4769, %v4768
      %v4779 = vpack.c.b16 %v4771, %v4770
      %4788 = vmatprep.subr.bf16.mxu0 0
      %4789 = vmatpush1.bf16.msra.mxu0 %v4772
      %4790 = vmatprep.subr.bf16.mxu0 0
      %4791 = vmatpush1.bf16.msra.mxu0 %v4773
      %4792 = vmatprep.subr.bf16.mxu0 0
      %4793 = vmatpush1.bf16.msra.mxu0 %v4774
      %4794 = vmatprep.subr.bf16.mxu0 0
      %4795 = vmatpush1.bf16.msra.mxu0 %v4775
      %4796 = vmatprep.subr.bf16.mxu0 0
      %4797 = vmatpush1.bf16.msra.mxu0 %v4776
      %4798 = vmatprep.subr.bf16.mxu0 0
      %4799 = vmatpush1.bf16.msra.mxu0 %v4777
      %4800 = vmatprep.subr.bf16.mxu0 0
      %4801 = vmatpush1.bf16.msra.mxu0 %v4778
      %4802 = vmatprep.subr.bf16.mxu0 0
      %4803 = vmatpush1.bf16.msra.mxu0 %v4779
      %4804 = vmatprep.subr.bf16.mxu0 0
      %4805 = vmatpush1.bf16.msra.mxu0 0
      %4806 = vmatprep.subr.bf16.mxu0 0
      %4807 = vmatpush1.bf16.msra.mxu0 0
      %4808 = vmatprep.subr.bf16.mxu0 0
      %4809 = vmatpush1.bf16.msra.mxu0 0
      %4810 = vmatprep.subr.bf16.mxu0 0
      %4811 = vmatpush1.bf16.msra.mxu0 0
      %4812 = vmatprep.subr.bf16.mxu0 0
      %4813 = vmatpush1.bf16.msra.mxu0 0
      %4814 = vmatprep.subr.bf16.mxu0 0
      %4815 = vmatpush1.bf16.msra.mxu0 0
      %4816 = vmatprep.subr.bf16.mxu0 0
      %4817 = vmatpush1.bf16.msra.mxu0 0
      %4818 = vmatprep.subr.bf16.mxu0 0
      %4819 = vmatpush1.bf16.msra.mxu0 0
      %4820 = vmatprep.mubr.bf16.mxu0 0
      %4821 = vmatmul.mubr.bf16.gmra.mrb[0].mxu0 %v4708
      %v4822 = vpop.f32.mrb[0].mxu0
      %v4823 = vadd.f32 0.0, %v4822
      %v4824 = vpop.f32.mrb[0].mxu0
      %v4825 = vpop.f32.mrb[0].mxu0
      %v4826 = vadd.f32 0.0, %v4825
      %v4827 = vpop.f32.mrb[0].mxu0
      %4828 = vmatprep.mubr.bf16.mxu0 0
      %4829 = vmatmul.mubr.bf16.gmra.mrb[0].mxu0 %v4709
      %v4830 = vpop.f32.mrb[0].mxu0
      %v4831 = vadd.f32 0.0, %v4830
      %v4832 = vpop.f32.mrb[0].mxu0
      %v4833 = vpop.f32.mrb[0].mxu0
      %v4834 = vadd.f32 0.0, %v4833
      %v4835 = vpop.f32.mrb[0].mxu0
      %4836 = vmatprep.mubr.bf16.mxu0 0
      %4837 = vmatmul.mubr.bf16.gmra.mrb[0].mxu0 %v4710
      %v4838 = vpop.f32.mrb[0].mxu0
      %v4839 = vadd.f32 0.0, %v4838
      %v4840 = vpop.f32.mrb[0].mxu0
      %v4841 = vpop.f32.mrb[0].mxu0
      %v4842 = vadd.f32 0.0, %v4841
      %v4843 = vpop.f32.mrb[0].mxu0
      %4844 = vmatprep.mubr.bf16.mxu0 0
      %4845 = vmatmul.mubr.bf16.gmra.mrb[0].mxu0 %v4711
      %v4846 = vpop.f32.mrb[0].mxu0
      %v4847 = vadd.f32 0.0, %v4846
      %v4848 = vpop.f32.mrb[0].mxu0
      %v4849 = vpop.f32.mrb[0].mxu0
      %v4850 = vadd.f32 0.0, %v4849
      %v4851 = vpop.f32.mrb[0].mxu0
      %4852 = vmatprep.mubr.bf16.mxu0 0
      %4853 = vmatmul.mubr.bf16.gmra.mrb[0].mxu0 %v4712
      %v4854 = vpop.f32.mrb[0].mxu0
      %v4855 = vadd.f32 0.0, %v4854
      %v4856 = vpop.f32.mrb[0].mxu0
      %v4857 = vpop.f32.mrb[0].mxu0
      %v4858 = vadd.f32 0.0, %v4857
      %v4859 = vpop.f32.mrb[0].mxu0
      %4860 = vmatprep.mubr.bf16.mxu0 0
      %4861 = vmatmul.mubr.bf16.gmra.mrb[0].mxu0 %v4713
      %v4862 = vpop.f32.mrb[0].mxu0
      %v4863 = vadd.f32 0.0, %v4862
      %v4864 = vpop.f32.mrb[0].mxu0
      %v4865 = vpop.f32.mrb[0].mxu0
      %v4866 = vadd.f32 0.0, %v4865
      %v4867 = vpop.f32.mrb[0].mxu0
      %4868 = vmatprep.mubr.bf16.mxu0 0
      %4869 = vmatmul.mubr.bf16.gmra.mrb[0].mxu0 %v4714
      %v4870 = vpop.f32.mrb[0].mxu0
      %v4871 = vadd.f32 0.0, %v4870
      %v4872 = vpop.f32.mrb[0].mxu0
      %v4873 = vpop.f32.mrb[0].mxu0
      %v4874 = vadd.f32 0.0, %v4873
      %v4875 = vpop.f32.mrb[0].mxu0
      %4876 = vmatprep.mubr.bf16.mxu0 0
      %4877 = vmatmul.mubr.bf16.gmra.mrb[0].mxu0 %v4715
      %v4878 = vpop.f32.mrb[0].mxu0
      %v4879 = vadd.f32 0.0, %v4878
      %v4880 = vpop.f32.mrb[0].mxu0
      %v4881 = vpop.f32.mrb[0].mxu0
      %v4882 = vadd.f32 0.0, %v4881
      %v4883 = vpop.f32.mrb[0].mxu0
      %4884 = vmatprep.mubr.bf16.mxu0 0
      %4885 = vmatmul.mubr.bf16.gmra.mrb[0].mxu0 %v4716
      %v4886 = vpop.f32.mrb[0].mxu0
      %v4887 = vadd.f32 0.0, %v4886
      %v4888 = vpop.f32.mrb[0].mxu0
      %v4889 = vpop.f32.mrb[0].mxu0
      %v4890 = vadd.f32 0.0, %v4889
      %v4891 = vpop.f32.mrb[0].mxu0
      %4892 = vmatprep.mubr.bf16.mxu0 0
      %4893 = vmatmul.mubr.bf16.gmra.mrb[0].mxu0 %v4717
      %v4894 = vpop.f32.mrb[0].mxu0
      %v4895 = vadd.f32 0.0, %v4894
      %v4896 = vpop.f32.mrb[0].mxu0
      %v4897 = vpop.f32.mrb[0].mxu0
      %v4898 = vadd.f32 0.0, %v4897
      %v4899 = vpop.f32.mrb[0].mxu0
      %4900 = vmatprep.mubr.bf16.mxu0 0
      %4901 = vmatmul.mubr.bf16.gmra.mrb[0].mxu0 %v4718
      %v4902 = vpop.f32.mrb[0].mxu0
      %v4903 = vadd.f32 0.0, %v4902
      %v4904 = vpop.f32.mrb[0].mxu0
      %v4905 = vpop.f32.mrb[0].mxu0
      %v4906 = vadd.f32 0.0, %v4905
      %v4907 = vpop.f32.mrb[0].mxu0
      %4908 = vmatprep.mubr.bf16.mxu0 0
      %4909 = vmatmul.mubr.bf16.gmra.mrb[0].mxu0 %v4719
      %v4910 = vpop.f32.mrb[0].mxu0
      %v4911 = vadd.f32 0.0, %v4910
      %v4912 = vpop.f32.mrb[0].mxu0
      %v4913 = vpop.f32.mrb[0].mxu0
      %v4914 = vadd.f32 0.0, %v4913
      %v4915 = vpop.f32.mrb[0].mxu0
      %4916 = vmatprep.mubr.bf16.mxu0 0
      %4917 = vmatmul.mubr.bf16.gmra.mrb[0].mxu0 %v4720
      %v4918 = vpop.f32.mrb[0].mxu0
      %v4919 = vadd.f32 0.0, %v4918
      %v4920 = vpop.f32.mrb[0].mxu0
      %v4921 = vpop.f32.mrb[0].mxu0
      %v4922 = vadd.f32 0.0, %v4921
      %v4923 = vpop.f32.mrb[0].mxu0
      %4924 = vmatprep.mubr.bf16.mxu0 0
      %4925 = vmatmul.mubr.bf16.gmra.mrb[0].mxu0 %v4721
      %v4926 = vpop.f32.mrb[0].mxu0
      %v4927 = vadd.f32 0.0, %v4926
      %v4928 = vpop.f32.mrb[0].mxu0
      %v4929 = vpop.f32.mrb[0].mxu0
      %v4930 = vadd.f32 0.0, %v4929
      %v4931 = vpop.f32.mrb[0].mxu0
      %4932 = vmatprep.mubr.bf16.mxu0 0
      %4933 = vmatmul.mubr.bf16.gmra.mrb[0].mxu0 %v4722
      %v4934 = vpop.f32.mrb[0].mxu0
      %v4935 = vadd.f32 0.0, %v4934
      %v4936 = vpop.f32.mrb[0].mxu0
      %v4937 = vpop.f32.mrb[0].mxu0
      %v4938 = vadd.f32 0.0, %v4937
      %v4939 = vpop.f32.mrb[0].mxu0
      %4940 = vmatprep.mubr.bf16.mxu0 0
      %4941 = vmatmul.mubr.bf16.gmra.mrb[0].mxu0 %v4723
      %v4942 = vpop.f32.mrb[0].mxu0
      %v4943 = vadd.f32 0.0, %v4942
      %v4944 = vpop.f32.mrb[0].mxu0
      %v4945 = vpop.f32.mrb[0].mxu0
      %v4946 = vadd.f32 0.0, %v4945
      %v4947 = vpop.f32.mrb[0].mxu0
      %4948 = vdwg.mxu0
      %v4949 = vadd.f32 %v4451, %v4823
      %v4950 = vadd.f32 %v4452, %v4826
      %v4951 = vadd.f32 %v4453, %v4831
      %v4952 = vadd.f32 %v4454, %v4834
      %v4953 = vadd.f32 %v4455, %v4839
      %v4954 = vadd.f32 %v4456, %v4842
      %v4955 = vadd.f32 %v4457, %v4847
      %v4956 = vadd.f32 %v4458, %v4850
      %v4957 = vadd.f32 %v4459, %v4855
      %v4958 = vadd.f32 %v4460, %v4858
      %v4959 = vadd.f32 %v4461, %v4863
      %v4960 = vadd.f32 %v4462, %v4866
      %v4961 = vadd.f32 %v4463, %v4871
      %v4962 = vadd.f32 %v4464, %v4874
      %v4963 = vadd.f32 %v4465, %v4879
      %v4964 = vadd.f32 %v4466, %v4882
      %v4965 = vadd.f32 %v4467, %v4887
      %v4966 = vadd.f32 %v4468, %v4890
      %v4967 = vadd.f32 %v4469, %v4895
      %v4968 = vadd.f32 %v4470, %v4898
      %v4969 = vadd.f32 %v4471, %v4903
      %v4970 = vadd.f32 %v4472, %v4906
      %v4971 = vadd.f32 %v4473, %v4911
      %v4972 = vadd.f32 %v4474, %v4914
      %v4973 = vadd.f32 %v4475, %v4919
      %v4974 = vadd.f32 %v4476, %v4922
      %v4975 = vadd.f32 %v4477, %v4927
      %v4976 = vadd.f32 %v4478, %v4930
      %v4977 = vadd.f32 %v4479, %v4935
      %v4978 = vadd.f32 %v4480, %v4938
      %v4979 = vadd.f32 %v4481, %v4943
      %v4980 = vadd.f32 %v4482, %v4946
      %v4981 = vld [vmem:[%s2] sm:$0x1]
      %v4983 = vlaneseq
      %v4984 = vshrl.u32 %v4983, 7
      %v4985 = vsub.s32 0, %v4984
      %v4986 = vrot.slane %v4981, %v4985
      %v4988 = vadd.f32 %v4949, %v4986
      %v4989 = vadd.f32 %v4950, %v4986
      %v4990 = vadd.f32 %v4951, %v4986
      %v4991 = vadd.f32 %v4952, %v4986
      %v4992 = vadd.f32 %v4953, %v4986
      %v4993 = vadd.f32 %v4954, %v4986
      %v4994 = vadd.f32 %v4955, %v4986
      %v4995 = vadd.f32 %v4956, %v4986
      %v4996 = vadd.f32 %v4957, %v4986
      %v4997 = vadd.f32 %v4958, %v4986
      %v4998 = vadd.f32 %v4959, %v4986
      %v4999 = vadd.f32 %v4960, %v4986
      %v5000 = vadd.f32 %v4961, %v4986
      %v5001 = vadd.f32 %v4962, %v4986
      %v5002 = vadd.f32 %v4963, %v4986
      %v5003 = vadd.f32 %v4964, %v4986
      %v5004 = vadd.f32 %v4965, %v4986
      %v5005 = vadd.f32 %v4966, %v4986
      %v5006 = vadd.f32 %v4967, %v4986
      %v5007 = vadd.f32 %v4968, %v4986
      %v5008 = vadd.f32 %v4969, %v4986
      %v5009 = vadd.f32 %v4970, %v4986
      %v5010 = vadd.f32 %v4971, %v4986
      %v5011 = vadd.f32 %v4972, %v4986
      %v5012 = vadd.f32 %v4973, %v4986
      %v5013 = vadd.f32 %v4974, %v4986
      %v5014 = vadd.f32 %v4975, %v4986
      %v5015 = vadd.f32 %v4976, %v4986
      %v5016 = vadd.f32 %v4977, %v4986
      %v5017 = vadd.f32 %v4978, %v4986
      %v5018 = vadd.f32 %v4979, %v4986
      %v5019 = vadd.f32 %v4980, %v4986
      %v5020 = vadd.f32 %v4988, %v4989
      %v5021 = vadd.f32 %v5020, %v4990
      %v5022 = vadd.f32 %v5021, %v4991
      %v5023 = vadd.f32 %v5022, %v4992
      %v5024 = vadd.f32 %v5023, %v4993
      %v5025 = vadd.f32 %v5024, %v4994
      %v5026 = vadd.f32 %v5025, %v4995
      %v5027 = vadd.f32 %v5026, %v4996
      %v5028 = vadd.f32 %v5027, %v4997
      %v5029 = vadd.f32 %v5028, %v4998
      %v5030 = vadd.f32 %v5029, %v4999
      %v5031 = vadd.f32 %v5030, %v5000
      %v5032 = vadd.f32 %v5031, %v5001
      %v5033 = vadd.f32 %v5032, %v5002
      %v5034 = vadd.f32 %v5033, %v5003
      %v5035 = vadd.f32 %v5034, %v5004
      %v5036 = vadd.f32 %v5035, %v5005
      %v5037 = vadd.f32 %v5036, %v5006
      %v5038 = vadd.f32 %v5037, %v5007
      %v5039 = vadd.f32 %v5038, %v5008
      %v5040 = vadd.f32 %v5039, %v5009
      %v5041 = vadd.f32 %v5040, %v5010
      %v5042 = vadd.f32 %v5041, %v5011
      %v5043 = vadd.f32 %v5042, %v5012
      %v5044 = vadd.f32 %v5043, %v5013
      %v5045 = vadd.f32 %v5044, %v5014
      %v5046 = vadd.f32 %v5045, %v5015
      %v5047 = vadd.f32 %v5046, %v5016
      %v5048 = vadd.f32 %v5047, %v5017
      %v5049 = vadd.f32 %v5048, %v5018
      %v5050 = vadd.f32 %v5049, %v5019
      %v5051 = vrot.slane %v5050, 4
      %v5052 = vadd.f32 %v5050, %v5051
      %v5053 = vrot.slane %v5052, 2
      %v5054 = vadd.f32 %v5052, %v5053
      %v5055 = vrot.slane %v5054, 1
      %v5056 = vadd.f32 %v5054, %v5055
      %v5057 = vmul.f32 %v5056, 0.00390625
      %v5058 = vsub.f32 %v4988, %v5057
      %v5059 = vsub.f32 %v4989, %v5057
      %v5060 = vsub.f32 %v4990, %v5057
      %v5061 = vsub.f32 %v4991, %v5057
      %v5062 = vsub.f32 %v4992, %v5057
      %v5063 = vsub.f32 %v4993, %v5057
      %v5064 = vsub.f32 %v4994, %v5057
      %v5065 = vsub.f32 %v4995, %v5057
      %v5066 = vsub.f32 %v4996, %v5057
      %v5067 = vsub.f32 %v4997, %v5057
      %v5068 = vsub.f32 %v4998, %v5057
      %v5069 = vsub.f32 %v4999, %v5057
      %v5070 = vsub.f32 %v5000, %v5057
      %v5071 = vsub.f32 %v5001, %v5057
      %v5072 = vsub.f32 %v5002, %v5057
      %v5073 = vsub.f32 %v5003, %v5057
      %v5074 = vsub.f32 %v5004, %v5057
      %v5075 = vsub.f32 %v5005, %v5057
      %v5076 = vsub.f32 %v5006, %v5057
      %v5077 = vsub.f32 %v5007, %v5057
      %v5078 = vsub.f32 %v5008, %v5057
      %v5079 = vsub.f32 %v5009, %v5057
      %v5080 = vsub.f32 %v5010, %v5057
      %v5081 = vsub.f32 %v5011, %v5057
      %v5082 = vsub.f32 %v5012, %v5057
      %v5083 = vsub.f32 %v5013, %v5057
      %v5084 = vsub.f32 %v5014, %v5057
      %v5085 = vsub.f32 %v5015, %v5057
      %v5086 = vsub.f32 %v5016, %v5057
      %v5087 = vsub.f32 %v5017, %v5057
      %v5088 = vsub.f32 %v5018, %v5057
      %v5089 = vsub.f32 %v5019, %v5057
      %v5090 = vmul.f32 %v5058, %v5058
      %v5091 = vmul.f32 %v5059, %v5059
      %v5092 = vmul.f32 %v5060, %v5060
      %v5093 = vmul.f32 %v5061, %v5061
      %v5094 = vmul.f32 %v5062, %v5062
      %v5095 = vmul.f32 %v5063, %v5063
      %v5096 = vmul.f32 %v5064, %v5064
      %v5097 = vmul.f32 %v5065, %v5065
      %v5098 = vmul.f32 %v5066, %v5066
      %v5099 = vmul.f32 %v5067, %v5067
      %v5100 = vmul.f32 %v5068, %v5068
      %v5101 = vmul.f32 %v5069, %v5069
      %v5102 = vmul.f32 %v5070, %v5070
      %v5103 = vmul.f32 %v5071, %v5071
      %v5104 = vmul.f32 %v5072, %v5072
      %v5105 = vmul.f32 %v5073, %v5073
      %v5106 = vmul.f32 %v5074, %v5074
      %v5107 = vmul.f32 %v5075, %v5075
      %v5108 = vmul.f32 %v5076, %v5076
      %v5109 = vmul.f32 %v5077, %v5077
      %v5110 = vmul.f32 %v5078, %v5078
      %v5111 = vmul.f32 %v5079, %v5079
      %v5112 = vmul.f32 %v5080, %v5080
      %v5113 = vmul.f32 %v5081, %v5081
      %v5114 = vmul.f32 %v5082, %v5082
      %v5115 = vmul.f32 %v5083, %v5083
      %v5116 = vmul.f32 %v5084, %v5084
      %v5117 = vmul.f32 %v5085, %v5085
      %v5118 = vmul.f32 %v5086, %v5086
      %v5119 = vmul.f32 %v5087, %v5087
      %v5120 = vmul.f32 %v5088, %v5088
      %v5121 = vmul.f32 %v5089, %v5089
      %v5122 = vadd.f32 %v5090, %v5091
      %v5123 = vadd.f32 %v5122, %v5092
      %v5124 = vadd.f32 %v5123, %v5093
      %v5125 = vadd.f32 %v5124, %v5094
      %v5126 = vadd.f32 %v5125, %v5095
      %v5127 = vadd.f32 %v5126, %v5096
      %v5128 = vadd.f32 %v5127, %v5097
      %v5129 = vadd.f32 %v5128, %v5098
      %v5130 = vadd.f32 %v5129, %v5099
      %v5131 = vadd.f32 %v5130, %v5100
      %v5132 = vadd.f32 %v5131, %v5101
      %v5133 = vadd.f32 %v5132, %v5102
      %v5134 = vadd.f32 %v5133, %v5103
      %v5135 = vadd.f32 %v5134, %v5104
      %v5136 = vadd.f32 %v5135, %v5105
      %v5137 = vadd.f32 %v5136, %v5106
      %v5138 = vadd.f32 %v5137, %v5107
      %v5139 = vadd.f32 %v5138, %v5108
      %v5140 = vadd.f32 %v5139, %v5109
      %v5141 = vadd.f32 %v5140, %v5110
      %v5142 = vadd.f32 %v5141, %v5111
      %v5143 = vadd.f32 %v5142, %v5112
      %v5144 = vadd.f32 %v5143, %v5113
      %v5145 = vadd.f32 %v5144, %v5114
      %v5146 = vadd.f32 %v5145, %v5115
      %v5147 = vadd.f32 %v5146, %v5116
      %v5148 = vadd.f32 %v5147, %v5117
      %v5149 = vadd.f32 %v5148, %v5118
      %v5150 = vadd.f32 %v5149, %v5119
      %v5151 = vadd.f32 %v5150, %v5120
      %v5152 = vadd.f32 %v5151, %v5121
      %v5153 = vrot.slane %v5152, 4
      %v5154 = vadd.f32 %v5152, %v5153
      %v5155 = vrot.slane %v5154, 2
      %v5156 = vadd.f32 %v5154, %v5155
      %v5157 = vrot.slane %v5156, 1
      %v5158 = vadd.f32 %v5156, %v5157
      %v5159 = vmul.f32 %v5158, 0.00390625
      %v5160 = vadd.f32 %v5159, 1e-05
      %v5161 = vrsqrt.pop %v5160
      %v5162 = vmul.f32 %v5058, %v5161
      %v5163 = vmul.f32 %v5059, %v5161
      %v5164 = vmul.f32 %v5060, %v5161
      %v5165 = vmul.f32 %v5061, %v5161
      %v5166 = vmul.f32 %v5062, %v5161
      %v5167 = vmul.f32 %v5063, %v5161
      %v5168 = vmul.f32 %v5064, %v5161
      %v5169 = vmul.f32 %v5065, %v5161
      %v5170 = vmul.f32 %v5066, %v5161
      %v5171 = vmul.f32 %v5067, %v5161
      %v5172 = vmul.f32 %v5068, %v5161
      %v5173 = vmul.f32 %v5069, %v5161
      %v5174 = vmul.f32 %v5070, %v5161
      %v5175 = vmul.f32 %v5071, %v5161
      %v5176 = vmul.f32 %v5072, %v5161
      %v5177 = vmul.f32 %v5073, %v5161
      %v5178 = vmul.f32 %v5074, %v5161
      %v5179 = vmul.f32 %v5075, %v5161
      %v5180 = vmul.f32 %v5076, %v5161
      %v5181 = vmul.f32 %v5077, %v5161
      %v5182 = vmul.f32 %v5078, %v5161
      %v5183 = vmul.f32 %v5079, %v5161
      %v5184 = vmul.f32 %v5080, %v5161
      %v5185 = vmul.f32 %v5081, %v5161
      %v5186 = vmul.f32 %v5082, %v5161
      %v5187 = vmul.f32 %v5083, %v5161
      %v5188 = vmul.f32 %v5084, %v5161
      %v5189 = vmul.f32 %v5085, %v5161
      %v5190 = vmul.f32 %v5086, %v5161
      %v5191 = vmul.f32 %v5087, %v5161
      %v5192 = vmul.f32 %v5088, %v5161
      %v5193 = vmul.f32 %v5089, %v5161
      %v5194 = vmax.f32 %v5162, 0.0
      %v5195 = vmax.f32 %v5163, 0.0
      %v5196 = vmax.f32 %v5164, 0.0
      %v5197 = vmax.f32 %v5165, 0.0
      %v5198 = vmax.f32 %v5166, 0.0
      %v5199 = vmax.f32 %v5167, 0.0
      %v5200 = vmax.f32 %v5168, 0.0
      %v5201 = vmax.f32 %v5169, 0.0
      %v5202 = vmax.f32 %v5170, 0.0
      %v5203 = vmax.f32 %v5171, 0.0
      %v5204 = vmax.f32 %v5172, 0.0
      %v5205 = vmax.f32 %v5173, 0.0
      %v5206 = vmax.f32 %v5174, 0.0
      %v5207 = vmax.f32 %v5175, 0.0
      %v5208 = vmax.f32 %v5176, 0.0
      %v5209 = vmax.f32 %v5177, 0.0
      %v5210 = vmax.f32 %v5178, 0.0
      %v5211 = vmax.f32 %v5179, 0.0
      %v5212 = vmax.f32 %v5180, 0.0
      %v5213 = vmax.f32 %v5181, 0.0
      %v5214 = vmax.f32 %v5182, 0.0
      %v5215 = vmax.f32 %v5183, 0.0
      %v5216 = vmax.f32 %v5184, 0.0
      %v5217 = vmax.f32 %v5185, 0.0
      %v5218 = vmax.f32 %v5186, 0.0
      %v5219 = vmax.f32 %v5187, 0.0
      %v5220 = vmax.f32 %v5188, 0.0
      %v5221 = vmax.f32 %v5189, 0.0
      %v5222 = vmax.f32 %v5190, 0.0
      %v5223 = vmax.f32 %v5191, 0.0
      %v5224 = vmax.f32 %v5192, 0.0
      %v5225 = vmax.f32 %v5193, 0.0
      %v5226 = vpack.c.bf16 %v5195, %v5194
      %v5227 = vpack.c.bf16 %v5197, %v5196
      %v5228 = vpack.c.bf16 %v5199, %v5198
      %v5229 = vpack.c.bf16 %v5201, %v5200
      %v5230 = vpack.c.bf16 %v5203, %v5202
      %v5231 = vpack.c.bf16 %v5205, %v5204
      %v5232 = vpack.c.bf16 %v5207, %v5206
      %v5233 = vpack.c.bf16 %v5209, %v5208
      %v5234 = vpack.c.bf16 %v5211, %v5210
      %v5235 = vpack.c.bf16 %v5213, %v5212
      %v5236 = vpack.c.bf16 %v5215, %v5214
      %v5237 = vpack.c.bf16 %v5217, %v5216
      %v5238 = vpack.c.bf16 %v5219, %v5218
      %v5239 = vpack.c.bf16 %v5221, %v5220
      %v5240 = vpack.c.bf16 %v5223, %v5222
      %v5241 = vpack.c.bf16 %v5225, %v5224
      %v5258 = vunpack.c.l.b16 %v5226
      %v5259 = vunpack.c.h.b16 %v5226
      %v5260 = vunpack.c.l.b16 %v5227
      %v5261 = vunpack.c.h.b16 %v5227
      %v5262 = vunpack.c.l.b16 %v5228
      %v5263 = vunpack.c.h.b16 %v5228
      %v5264 = vunpack.c.l.b16 %v5229
      %v5265 = vunpack.c.h.b16 %v5229
      %v5266 = vunpack.c.l.b16 %v5230
      %v5267 = vunpack.c.h.b16 %v5230
      %v5268 = vunpack.c.l.b16 %v5231
      %v5269 = vunpack.c.h.b16 %v5231
      %v5270 = vunpack.c.l.b16 %v5232
      %v5271 = vunpack.c.h.b16 %v5232
      %v5272 = vunpack.c.l.b16 %v5233
      %v5273 = vunpack.c.h.b16 %v5233
      %v5274 = vunpack.c.l.b16 %v5234
      %v5275 = vunpack.c.h.b16 %v5234
      %v5276 = vunpack.c.l.b16 %v5235
      %v5277 = vunpack.c.h.b16 %v5235
      %v5278 = vunpack.c.l.b16 %v5236
      %v5279 = vunpack.c.h.b16 %v5236
      %v5280 = vunpack.c.l.b16 %v5237
      %v5281 = vunpack.c.h.b16 %v5237
      %v5282 = vunpack.c.l.b16 %v5238
      %v5283 = vunpack.c.h.b16 %v5238
      %v5284 = vunpack.c.l.b16 %v5239
      %v5285 = vunpack.c.h.b16 %v5239
      %v5286 = vunpack.c.l.b16 %v5240
      %v5287 = vunpack.c.h.b16 %v5240
      %v5288 = vunpack.c.l.b16 %v5241
      %v5289 = vunpack.c.h.b16 %v5241
      %v5290 = vpack.c.b16 %v5258, %v5258
      %v5291 = vpack.c.b16 %v5259, %v5259
      %v5292 = vpack.c.b16 %v5260, %v5260
      %v5293 = vpack.c.b16 %v5261, %v5261
      %v5294 = vpack.c.b16 %v5262, %v5262
      %v5295 = vpack.c.b16 %v5263, %v5263
      %v5296 = vpack.c.b16 %v5264, %v5264
      %v5297 = vpack.c.b16 %v5265, %v5265
      %v5298 = vpack.c.b16 %v5266, %v5266
      %v5299 = vpack.c.b16 %v5267, %v5267
      %v5300 = vpack.c.b16 %v5268, %v5268
      %v5301 = vpack.c.b16 %v5269, %v5269
      %v5302 = vpack.c.b16 %v5270, %v5270
      %v5303 = vpack.c.b16 %v5271, %v5271
      %v5304 = vpack.c.b16 %v5272, %v5272
      %v5305 = vpack.c.b16 %v5273, %v5273
      %v5306 = vpack.c.b16 %v5274, %v5274
      %v5307 = vpack.c.b16 %v5275, %v5275
      %v5308 = vpack.c.b16 %v5276, %v5276
      %v5309 = vpack.c.b16 %v5277, %v5277
      %v5310 = vpack.c.b16 %v5278, %v5278
      %v5311 = vpack.c.b16 %v5279, %v5279
      %v5312 = vpack.c.b16 %v5280, %v5280
      %v5313 = vpack.c.b16 %v5281, %v5281
      %v5314 = vpack.c.b16 %v5282, %v5282
      %v5315 = vpack.c.b16 %v5283, %v5283
      %v5316 = vpack.c.b16 %v5284, %v5284
      %v5317 = vpack.c.b16 %v5285, %v5285
      %v5318 = vpack.c.b16 %v5286, %v5286
      %v5319 = vpack.c.b16 %v5287, %v5287
      %v5320 = vpack.c.b16 %v5288, %v5288
      %v5321 = vpack.c.b16 %v5289, %v5289
      %5354 = vst [vmem:[%s170] sm:$0xf] %v5290
      %5355 = vst [vmem:[%s170 + $0x4] sm:$0xf] %v5291
      %5356 = vst [vmem:[%s170 + $0x8] sm:$0xf] %v5292
      %5357 = vst [vmem:[%s170 + $0xc] sm:$0xf] %v5293
      %5358 = vst [vmem:[%s170 + $0x10] sm:$0xf] %v5294
      %5359 = vst [vmem:[%s170 + $0x14] sm:$0xf] %v5295
      %5360 = vst [vmem:[%s170 + $0x18] sm:$0xf] %v5296
      %5361 = vst [vmem:[%s170 + $0x1c] sm:$0xf] %v5297
      %5362 = vst [vmem:[%s170 + $0x20] sm:$0xf] %v5298
      %5363 = vst [vmem:[%s170 + $0x24] sm:$0xf] %v5299
      %5364 = vst [vmem:[%s170 + $0x28] sm:$0xf] %v5300
      %5365 = vst [vmem:[%s170 + $0x2c] sm:$0xf] %v5301
      %5366 = vst [vmem:[%s170 + $0x30] sm:$0xf] %v5302
      %5367 = vst [vmem:[%s170 + $0x34] sm:$0xf] %v5303
      %5368 = vst [vmem:[%s170 + $0x38] sm:$0xf] %v5304
      %5369 = vst [vmem:[%s170 + $0x3c] sm:$0xf] %v5305
      %5370 = vst [vmem:[%s170 + $0x40] sm:$0xf] %v5306
      %5371 = vst [vmem:[%s170 + $0x44] sm:$0xf] %v5307
      %5372 = vst [vmem:[%s170 + $0x48] sm:$0xf] %v5308
      %5373 = vst [vmem:[%s170 + $0x4c] sm:$0xf] %v5309
      %5374 = vst [vmem:[%s170 + $0x50] sm:$0xf] %v5310
      %5375 = vst [vmem:[%s170 + $0x54] sm:$0xf] %v5311
      %5376 = vst [vmem:[%s170 + $0x58] sm:$0xf] %v5312
      %5377 = vst [vmem:[%s170 + $0x5c] sm:$0xf] %v5313
      %5378 = vst [vmem:[%s170 + $0x60] sm:$0xf] %v5314
      %5379 = vst [vmem:[%s170 + $0x64] sm:$0xf] %v5315
      %5380 = vst [vmem:[%s170 + $0x68] sm:$0xf] %v5316
      %5381 = vst [vmem:[%s170 + $0x6c] sm:$0xf] %v5317
      %5382 = vst [vmem:[%s170 + $0x70] sm:$0xf] %v5318
      %5383 = vst [vmem:[%s170 + $0x74] sm:$0xf] %v5319
      %5384 = vst [vmem:[%s170 + $0x78] sm:$0xf] %v5320
      %5385 = vst [vmem:[%s170 + $0x7c] sm:$0xf] %v5321
      %p5386 = scmp.lt.s32.totalorder %s14, 1
      %s5387 = scalar_select %p5386, %s14, 1
      %s5388 = smul.addr %s5387, 32
      %s5389 = smul.addr %s5388, 4
      %s5390 = scalar_lea.vmem %s3, %s5389
      // Predicated region
      $region33: #{a_call__.2} parent=31 // pred_check
        %p5391 = pneg %p100
      $region34: #{a_call__.2} parent=31 // pred_check_branch
        %5393 = sbr.rel (%p5391) target = $region36
      $region35: #{a_call__.2} parent=31 // pred_region
        _
      $region36: #{a_call__.2} parent=31 // pred_fallthru
        _
    $region32: #{a_call__.2} parent=5 // pred_fallthru
      _
    %p5394 = scmp.le.s32.totalorder 2, %s9
    // Predicated region
    $region37: #{a_call__.2} parent=5 // pred_check
      %p5395 = pneg %p5394
    $region38: #{a_call__.2} parent=5 // pred_check_branch
      %5397 = sbr.rel (%p5395) target = $region40
    $region39: #{a_call__.2} parent=5 // pred_region
      %s5398 = ssub.s32 %s9, 2
      // Predicated region
      $region41: #{a_call__.2} parent=39 // pred_check
        %p5399 = pneg %p106
      $region42: #{a_call__.2} parent=39 // pred_check_branch
        %5401 = sbr.rel (%p5399) target = $region44
      $region43: #{a_call__.2} parent=39 // pred_region
        %p5402 = scmp.lt.s32.totalorder %s15, 1
        %s5403 = scalar_select %p5402, %s15, 1
        %s5404 = smul.addr %s5403, 32
        %s5405 = smul.addr %s5404, 4
        %s5406 = scalar_lea.vmem %s3, %s5405
      $region44: #{a_call__.2} parent=39 // pred_fallthru
        _
    $region40: #{a_call__.2} parent=5 // pred_fallthru
      _
  $region6: #{a_call__.2} parent=0 // loop_footer
    %s13 = sadd.s32 1, %s9
  $region7: #{a_call__.2} parent=0 // loop_footer_branch
    %8 = sbr.rel target = $region3
  $region8: #{a_call__.2} parent=0 // loop_exit
    _

// kernel: a_call__.3
$region0: #{a_call__.3}
  #allocation0 [shape = 'u32[]', space=smem, size = 0x4, offset = 0x4, fixed_abs, tag = 'smem constant byte address 0x4 - core index']
  #allocation1 [shape = 'u32[144,128]{1,0:T(1,128)}', space=vmem, size = 0x12000, scoped, tag = 'internal scratch']
  %s0 = inlined_call_operand.vmem [shape: bf16[2,18,18,128], index: 0, kind: input, shape index: {}]
  %s1 = inlined_call_operand.vmem [shape: bf16[3,3,128,128], index: 1, kind: input, shape index: {}]
  %s2 = inlined_call_operand.vmem [shape: f32[1,128], index: 2, kind: input, shape index: {}]
  %s3 = inlined_call_operand.vmem [shape: f32[2,16,16,128], index: 3, kind: input, shape index: {}]
  %s4 = inlined_call_operand.hbm [shape: f32[2,16,16,128], index: 4, kind: output, shape index: {}]
  %s5 = sld [smem:[#allocation0]]
  $region49: #{a_call__.3} parent=0
    _
  %s7 = ssub.s32 1, %s5
  %s8 = scalar_select 0, %s7, %s5
  $region1: #{a_call__.3} parent=0
    #allocation2 [shape = 'u8[262144]{0}', space=vmem, size = 0x40000, scoped, tag = 'output window, operand 0']
    #allocation3 [shape = 's32[2]{0}', space=sflag, size = 0x8, scoped, tag = 'scoped memory for a_call__.3']
    %9 = vsyncpa [#allocation3], 0
    %s10 = scalar_lea.sflag [#allocation3], 1
    %11 = vsyncpa %s10, 0
    loop: start=0, step=1, limit=4
    $region2: #{a_call__.3} parent=1 // loop_pre_header
      _
    $region3: #{a_call__.3} parent=1 // loop_header
      %s13 = sphi 0, %s17
      %p14 = scmp.ge.s32.totalorder %s13, 4
      %s23 = sphi 0, %s25
      %s26 = sphi 0, %s23
      %s27 = sphi 0, %s26
      %s43 = sphi 0, %s27
      %s47 = sphi 0, %s47
      %s49 = sphi 0, %s47
      %s50 = sphi 0, %s49
      %s64 = sphi 0, %s50
      %s68 = sphi 0, %s68
      %s70 = sphi 0, %s68
      %s71 = sphi 0, %s70
      %s85 = sphi 0, %s71
      %s91 = sphi 0, %s93
      %s94 = sphi 0, %s91
      %s95 = sphi 0, %s94
      %s111 = sphi 0, %s95
      %s117 = sphi 0, %s119
      %s120 = sphi 0, %s117
      %s121 = sphi 0, %s120
      %s137 = sphi 0, %s121
    $region4: #{a_call__.3} parent=1 // loop_header_branch
      %16 = sbr.rel (%p14) target = $region8
    $region5: #{a_call__.3} parent=1 // loop_body
      %s18 = ssub.s32 %s13, 1
      %s19 = ssub.s32 %s13, 2
      %s20 = sadd.s32 %s13, 1
      %s21 = ssub.s32 %s13, %s20
      %p22 = scmp.eq.s32.totalorder %s21, 0
      %s24 = sadd.s32 %s23, 1
      %s25 = scalar_select %p22, %s23, %s24
      %p28 = pneg %p22
      %p29 = scmp.eq.s32.totalorder %s13, 1
      %p30 = por %p28, %p29
      %p31 = scmp.ne.s32.totalorder %s23, %s26
      %p32 = scmp.eq.s32.totalorder %s13, 0
      %p33 = por %p31, %p32
      %p34 = scmp.ne.s32.totalorder %s23, %s26
      %p35 = scmp.eq.s32.totalorder %s18, 1
      %p36 = por %p34, %p35
      %p37 = scmp.ne.s32.totalorder %s26, %s27
      %p38 = scmp.eq.s32.totalorder %s18, 0
      %p39 = por %p37, %p38
      %p40 = scmp.ne.s32.totalorder %s26, %s27
      %p41 = scmp.eq.s32.totalorder %s19, 1
      %p42 = por %p40, %p41
      %p44 = scmp.ne.s32.totalorder %s27, %s43
      %p45 = scmp.eq.s32.totalorder %s19, 0
      %p46 = por %p44, %p45
      %s48 = sadd.s32 %s47, 1
      %p51 = scmp.eq.s32.totalorder %s13, 1
      %p52 = scmp.ne.s32.totalorder %s47, %s49
      %p53 = scmp.eq.s32.totalorder %s13, 0
      %p54 = por %p52, %p53
      %p55 = scmp.ne.s32.totalorder %s47, %s49
      %p56 = scmp.eq.s32.totalorder %s18, 1
      %p57 = por %p55, %p56
      %p58 = scmp.ne.s32.totalorder %s49, %s50
      %p59 = scmp.eq.s32.totalorder %s18, 0
      %p60 = por %p58, %p59
      %p61 = scmp.ne.s32.totalorder %s49, %s50
      %p62 = scmp.eq.s32.totalorder %s19, 1
      %p63 = por %p61, %p62
      %p65 = scmp.ne.s32.totalorder %s50, %s64
      %p66 = scmp.eq.s32.totalorder %s19, 0
      %p67 = por %p65, %p66
      %s69 = sadd.s32 %s68, 1
      %p72 = scmp.eq.s32.totalorder %s13, 1
      %p73 = scmp.ne.s32.totalorder %s68, %s70
      %p74 = scmp.eq.s32.totalorder %s13, 0
      %p75 = por %p73, %p74
      %p76 = scmp.ne.s32.totalorder %s68, %s70
      %p77 = scmp.eq.s32.totalorder %s18, 1
      %p78 = por %p76, %p77
      %p79 = scmp.ne.s32.totalorder %s70, %s71
      %p80 = scmp.eq.s32.totalorder %s18, 0
      %p81 = por %p79, %p80
      %p82 = scmp.ne.s32.totalorder %s70, %s71
      %p83 = scmp.eq.s32.totalorder %s19, 1
      %p84 = por %p82, %p83
      %p86 = scmp.ne.s32.totalorder %s71, %s85
      %p87 = scmp.eq.s32.totalorder %s19, 0
      %p88 = por %p86, %p87
      %s89 = ssub.s32 %s13, %s20
      %p90 = scmp.eq.s32.totalorder %s89, 0
      %s92 = sadd.s32 %s91, 1
      %s93 = scalar_select %p90, %s91, %s92
      %p96 = pneg %p90
      %p97 = scmp.eq.s32.totalorder %s13, 1
      %p98 = por %p96, %p97
      %p99 = scmp.ne.s32.totalorder %s91, %s94
      %p100 = scmp.eq.s32.totalorder %s13, 0
      %p101 = por %p99, %p100
      %p102 = scmp.ne.s32.totalorder %s91, %s94
      %p103 = scmp.eq.s32.totalorder %s18, 1
      %p104 = por %p102, %p103
      %p105 = scmp.ne.s32.totalorder %s94, %s95
      %p106 = scmp.eq.s32.totalorder %s18, 0
      %p107 = por %p105, %p106
      %p108 = scmp.ne.s32.totalorder %s94, %s95
      %p109 = scmp.eq.s32.totalorder %s19, 1
      %p110 = por %p108, %p109
      %p112 = scmp.ne.s32.totalorder %s95, %s111
      %p113 = scmp.eq.s32.totalorder %s19, 0
      %p114 = por %p112, %p113
      %s115 = ssub.s32 %s13, %s20
      %p116 = scmp.eq.s32.totalorder %s115, 0
      %s118 = sadd.s32 %s117, 1
      %s119 = scalar_select %p116, %s117, %s118
      %p122 = pneg %p116
      %p123 = scmp.eq.s32.totalorder %s13, 1
      %p124 = por %p122, %p123
      %p125 = scmp.ne.s32.totalorder %s117, %s120
      %p126 = scmp.eq.s32.totalorder %s13, 0
      %p127 = por %p125, %p126
      %p128 = scmp.ne.s32.totalorder %s117, %s120
      %p129 = scmp.eq.s32.totalorder %s18, 1
      %p130 = por %p128, %p129
      %p131 = scmp.ne.s32.totalorder %s120, %s121
      %p132 = scmp.eq.s32.totalorder %s18, 0
      %p133 = por %p131, %p132
      %p134 = scmp.ne.s32.totalorder %s120, %s121
      %p135 = scmp.eq.s32.totalorder %s19, 1
      %p136 = por %p134, %p135
      %p138 = scmp.ne.s32.totalorder %s121, %s137
      %p139 = scmp.eq.s32.totalorder %s19, 0
      %p140 = por %p138, %p139
      %p141 = scmp.le.s32.totalorder 1, %s13
      %p142 = scmp.lt.s32.totalorder %s13, 3
      %p143 = pnand %p141, %p142
      %p144 = pneg %p143
      // Predicated region
      $region9: #{a_call__.3} parent=5 // pred_check
        _
      $region10: #{a_call__.3} parent=5 // pred_check_branch
        %146 = sbr.rel (%p143) target = $region12
      $region11: #{a_call__.3} parent=5 // pred_region
        %s147 = ssub.s32 %s13, 1
        // Predicated region
        $region13: #{a_call__.3} parent=11 // pred_check
          %p148 = pneg %p60
        $region14: #{a_call__.3} parent=11 // pred_check_branch
          %150 = sbr.rel (%p148) target = $region16
        $region15: #{a_call__.3} parent=11 // pred_region
          _
        $region16: #{a_call__.3} parent=11 // pred_fallthru
          _
        // Predicated region
        $region17: #{a_call__.3} parent=11 // pred_check
          %p151 = pneg %p81
        $region18: #{a_call__.3} parent=11 // pred_check_branch
          %153 = sbr.rel (%p151) target = $region20
        $region19: #{a_call__.3} parent=11 // pred_region
          _
        $region20: #{a_call__.3} parent=11 // pred_fallthru
          _
      $region12: #{a_call__.3} parent=5 // pred_fallthru
        _
      %p154 = scmp.lt.s32.totalorder %s13, 2
      // Predicated region
      $region21: #{a_call__.3} parent=5 // pred_check
        %p155 = pneg %p154
      $region22: #{a_call__.3} parent=5 // pred_check_branch
        %157 = sbr.rel (%p155) target = $region24
      $region23: #{a_call__.3} parent=5 // pred_region
        // Predicated region
        $region25: #{a_call__.3} parent=23 // pred_check
          %p158 = pneg %p33
        $region26: #{a_call__.3} parent=23 // pred_check_branch
          %160 = sbr.rel (%p158) target = $region28
        $region27: #{a_call__.3} parent=23 // pred_region
          %p161 = scmp.lt.s32.totalorder %s13, 1
          %s162 = scalar_select %p161, %s13, 1
          %s163 = smul.addr %s162, 54
          %s164 = smul.addr %s163, 4
          %s165 = scalar_lea.vmem %s0, %s164
        $region28: #{a_call__.3} parent=23 // pred_fallthru
          _
        // Predicated region
        $region29: #{a_call__.3} parent=23 // pred_check
          %p166 = pneg %p101
        $region30: #{a_call__.3} parent=23 // pred_check_branch
          %168 = sbr.rel (%p166) target = $region32
        $region31: #{a_call__.3} parent=23 // pred_region
          %p169 = scmp.lt.s32.totalorder %s13, 1
          %s170 = scalar_select %p169, %s13, 1
          %s171 = smul.addr %s170, 32
          %s172 = smul.addr %s171, 8
          %s173 = scalar_lea.vmem %s3, %s172
        $region32: #{a_call__.3} parent=23 // pred_fallthru
          _
      $region24: #{a_call__.3} parent=5 // pred_fallthru
        _
      %p174 = scmp.le.s32.totalorder 1, %s13
      %p175 = scmp.lt.s32.totalorder %s13, 3
      %p176 = pnand %p174, %p175
      %p177 = pneg %p176
      // Predicated region
      $region33: #{a_call__.3} parent=5 // pred_check
        _
      $region34: #{a_call__.3} parent=5 // pred_check_branch
        %179 = sbr.rel (%p176) target = $region36
      $region35: #{a_call__.3} parent=5 // pred_region
        %s180 = ssub.s32 %s13, 1
        %p181 = scmp.lt.s32.totalorder %s18, 1
        %s182 = scalar_select %p181, %s18, 1
        %s183 = smul.addr %s182, 54
        %s184 = smul.addr %s183, 4
        %s185 = scalar_lea.vmem %s0, %s184
        %p186 = pneg %p39
        %p187 = pneg %p36
        %p188 = pneg %p60
        %p189 = pneg %p57
        %p190 = pneg %p81
        %p191 = pneg %p78
        %p192 = scmp.lt.s32.totalorder %s18, 1
        %s193 = scalar_select %p192, %s18, 1
        %s194 = smul.addr %s193, 32
        %s195 = smul.addr %s194, 8
        %s196 = scalar_lea.vmem %s3, %s195
        %p197 = pneg %p107
        %p198 = pneg %p104
        %p199 = pneg %p133
        %p200 = pneg %p130
        %s201 = sand.u32 %s120, 1
        %s202 = scalar_lea.sflag [#allocation3], %s201
        %s203 = sand.u32 %s120, 1
        %s204 = smul.addr %s203, 256
        %s205 = scalar_lea.vmem [#allocation2], %s204
        %p206 = scmp.lt.s32.totalorder %s18, 1
        %s207 = scalar_select %p206, %s18, 1
        %s208 = smul.addr %s207, 54
        %s209 = smul.addr %s208, 4
        %s210 = scalar_lea.vmem %s0, %s209
        %p211 = scmp.lt.s32.totalorder %s18, 1
        %s212 = scalar_select %p211, %s18, 1
        %s213 = smul.addr %s212, 32
        %s214 = smul.addr %s213, 8
        %s215 = scalar_lea.vmem %s3, %s214
        %v217 = vld [vmem:[%s210] sm:$0xf]
        %v218 = vld [vmem:[%s210 + $0x4] sm:$0xf]
        %v219 = vld [vmem:[%s210 + $0xc] sm:$0xf]
        %v220 = vld [vmem:[%s210 + $0x10] sm:$0xf]
        %v221 = vld [vmem:[%s210 + $0x18] sm:$0xf]
        %v222 = vld [vmem:[%s210 + $0x1c] sm:$0xf]
        %v223 = vld [vmem:[%s210 + $0x24] sm:$0xf]
        %v224 = vld [vmem:[%s210 + $0x28] sm:$0xf]
        %v225 = vld [vmem:[%s210 + $0x30] sm:$0xf]
        %v226 = vld [vmem:[%s210 + $0x34] sm:$0xf]
        %v227 = vld [vmem:[%s210 + $0x3c] sm:$0xf]
        %v228 = vld [vmem:[%s210 + $0x40] sm:$0xf]
        %v229 = vld [vmem:[%s210 + $0x48] sm:$0xf]
        %v230 = vld [vmem:[%s210 + $0x4c] sm:$0xf]
        %v231 = vld [vmem:[%s210 + $0x54] sm:$0xf]
        %v232 = vld [vmem:[%s210 + $0x58] sm:$0xf]
        %v233 = vld [vmem:[%s210 + $0x60] sm:$0xf]
        %v234 = vld [vmem:[%s210 + $0x64] sm:$0xf]
        %v235 = vld [vmem:[%s210 + $0x6c] sm:$0xf]
        %v236 = vld [vmem:[%s210 + $0x70] sm:$0xf]
        %v237 = vld [vmem:[%s210 + $0x78] sm:$0xf]
        %v238 = vld [vmem:[%s210 + $0x7c] sm:$0xf]
        %v239 = vld [vmem:[%s210 + $0x84] sm:$0xf]
        %v240 = vld [vmem:[%s210 + $0x88] sm:$0xf]
        %v241 = vld [vmem:[%s210 + $0x90] sm:$0xf]
        %v242 = vld [vmem:[%s210 + $0x94] sm:$0xf]
        %v243 = vld [vmem:[%s210 + $0x9c] sm:$0xf]
        %v244 = vld [vmem:[%s210 + $0xa0] sm:$0xf]
        %v245 = vld [vmem:[%s210 + $0xa8] sm:$0xf]
        %v246 = vld [vmem:[%s210 + $0xac] sm:$0xf]
        %v247 = vld [vmem:[%s210 + $0xb4] sm:$0xf]
        %v248 = vld [vmem:[%s210 + $0xb8] sm:$0xf]
        %v249 = vld [vmem:[%s1] sm:$0xf]
        %v250 = vld [vmem:[%s1 + $0x4] sm:$0xf]
        %v251 = vld [vmem:[%s1 + $0x8] sm:$0xf]
        %v252 = vld [vmem:[%s1 + $0xc] sm:$0xf]
        %v253 = vld [vmem:[%s1 + $0x10] sm:$0xf]
        %v254 = vld [vmem:[%s1 + $0x14] sm:$0xf]
        %v255 = vld [vmem:[%s1 + $0x18] sm:$0xf]
        %v256 = vld [vmem:[%s1 + $0x1c] sm:$0xf]
        %v257 = vld [vmem:[%s1 + $0x20] sm:$0xf]
        %v258 = vld [vmem:[%s1 + $0x24] sm:$0xf]
        %v259 = vld [vmem:[%s1 + $0x28] sm:$0xf]
        %v260 = vld [vmem:[%s1 + $0x2c] sm:$0xf]
        %v261 = vld [vmem:[%s1 + $0x30] sm:$0xf]
        %v262 = vld [vmem:[%s1 + $0x34] sm:$0xf]
        %v263 = vld [vmem:[%s1 + $0x38] sm:$0xf]
        %v264 = vld [vmem:[%s1 + $0x3c] sm:$0xf]
        %v265 = vld [vmem:[%s210 + $0x8] sm:$0x1]
        %v266 = vld [vmem:[%s210 + $0x14] sm:$0x1]
        %v267 = vld [vmem:[%s210 + $0x20] sm:$0x1]
        %v268 = vld [vmem:[%s210 + $0x2c] sm:$0x1]
        %v269 = vld [vmem:[%s210 + $0x38] sm:$0x1]
        %v270 = vld [vmem:[%s210 + $0x44] sm:$0x1]
        %v271 = vld [vmem:[%s210 + $0x50] sm:$0x1]
        %v272 = vld [vmem:[%s210 + $0x5c] sm:$0x1]
        %v273 = vld [vmem:[%s210 + $0x68] sm:$0x1]
        %v274 = vld [vmem:[%s210 + $0x74] sm:$0x1]
        %v275 = vld [vmem:[%s210 + $0x80] sm:$0x1]
        %v276 = vld [vmem:[%s210 + $0x8c] sm:$0x1]
        %v277 = vld [vmem:[%s210 + $0x98] sm:$0x1]
        %v278 = vld [vmem:[%s210 + $0xa4] sm:$0x1]
        %v279 = vld [vmem:[%s210 + $0xb0] sm:$0x1]
        %v280 = vld [vmem:[%s210 + $0xbc] sm:$0x1]
        %vm281 = vsmask.f32 3328
        %vm282 = vsmask.f32 7440
        %vm283 = vmor %vm281, %vm282
        %v285 = vshrl.u32 %v217, 16
        %v287 = vrot.slane %v285, 4
        %v288 = vshll.u32 %v217, 16
        %v290 = vrot.slane %v288, 5
        %v291 = vor.u32 %v287, %v290
        %v292 = vrot.slane %v291, 4
        %v294 = vshll.u32 %v218, 16
        %v296 = vrot.slane %v294, 5
        %v297 = vsel %vm283, %v292, %v296
        %v298 = vshrl.u32 %v218, 16
        %v300 = vrot.slane %v298, 4
        %v301 = vor.u32 %v300, %v296
        %v302 = vrot.slane %v301, 4
        %v304 = vshll.u32 %v265, 16
        %v306 = vrot.slane %v304, 5
        %v307 = vsel %vm283, %v302, %v306
        %v309 = vshrl.u32 %v219, 16
        %v311 = vrot.slane %v309, 4
        %v312 = vshll.u32 %v219, 16
        %v314 = vrot.slane %v312, 5
        %v315 = vor.u32 %v311, %v314
        %v316 = vrot.slane %v315, 4
        %v318 = vshll.u32 %v220, 16
        %v320 = vrot.slane %v318, 5
        %v321 = vsel %vm283, %v316, %v320
        %v322 = vshrl.u32 %v220, 16
        %v324 = vrot.slane %v322, 4
        %v325 = vor.u32 %v324, %v320
        %v326 = vrot.slane %v325, 4
        %v328 = vshll.u32 %v266, 16
        %v330 = vrot.slane %v328, 5
        %v331 = vsel %vm283, %v326, %v330
        %v333 = vshrl.u32 %v221, 16
        %v335 = vrot.slane %v333, 4
        %v336 = vshll.u32 %v221, 16
        %v338 = vrot.slane %v336, 5
        %v339 = vor.u32 %v335, %v338
        %v340 = vrot.slane %v339, 4
        %v342 = vshll.u32 %v222, 16
        %v344 = vrot.slane %v342, 5
        %v345 = vsel %vm283, %v340, %v344
        %v346 = vshrl.u32 %v222, 16
        %v348 = vrot.slane %v346, 4
        %v349 = vor.u32 %v348, %v344
        %v350 = vrot.slane %v349, 4
        %v352 = vshll.u32 %v267, 16
        %v354 = vrot.slane %v352, 5
        %v355 = vsel %vm283, %v350, %v354
        %v357 = vshrl.u32 %v223, 16
        %v359 = vrot.slane %v357, 4
        %v360 = vshll.u32 %v223, 16
        %v362 = vrot.slane %v360, 5
        %v363 = vor.u32 %v359, %v362
        %v364 = vrot.slane %v363, 4
        %v366 = vshll.u32 %v224, 16
        %v368 = vrot.slane %v366, 5
        %v369 = vsel %vm283, %v364, %v368
        %v370 = vshrl.u32 %v224, 16
        %v372 = vrot.slane %v370, 4
        %v373 = vor.u32 %v372, %v368
        %v374 = vrot.slane %v373, 4
        %v376 = vshll.u32 %v268, 16
        %v378 = vrot.slane %v376, 5
        %v379 = vsel %vm283, %v374, %v378
        %v381 = vshrl.u32 %v225, 16
        %v383 = vrot.slane %v381, 4
        %v384 = vshll.u32 %v225, 16
        %v386 = vrot.slane %v384, 5
        %v387 = vor.u32 %v383, %v386
        %v388 = vrot.slane %v387, 4
        %v390 = vshll.u32 %v226, 16
        %v392 = vrot.slane %v390, 5
        %v393 = vsel %vm283, %v388, %v392
        %v394 = vshrl.u32 %v226, 16
        %v396 = vrot.slane %v394, 4
        %v397 = vor.u32 %v396, %v392
        %v398 = vrot.slane %v397, 4
        %v400 = vshll.u32 %v269, 16
        %v402 = vrot.slane %v400, 5
        %v403 = vsel %vm283, %v398, %v402
        %v405 = vshrl.u32 %v227, 16
        %v407 = vrot.slane %v405, 4
        %v408 = vshll.u32 %v227, 16
        %v410 = vrot.slane %v408, 5
        %v411 = vor.u32 %v407, %v410
        %v412 = vrot.slane %v411, 4
        %v414 = vshll.u32 %v228, 16
        %v416 = vrot.slane %v414, 5
        %v417 = vsel %vm283, %v412, %v416
        %v418 = vshrl.u32 %v228, 16
        %v420 = vrot.slane %v418, 4
        %v421 = vor.u32 %v420, %v416
        %v422 = vrot.slane %v421, 4
        %v424 = vshll.u32 %v270, 16
        %v426 = vrot.slane %v424, 5
        %v427 = vsel %vm283, %v422, %v426
        %v429 = vshrl.u32 %v229, 16
        %v431 = vrot.slane %v429, 4
        %v432 = vshll.u32 %v229, 16
        %v434 = vrot.slane %v432, 5
        %v435 = vor.u32 %v431, %v434
        %v436 = vrot.slane %v435, 4
        %v438 = vshll.u32 %v230, 16
        %v440 = vrot.slane %v438, 5
        %v441 = vsel %vm283, %v436, %v440
        %v442 = vshrl.u32 %v230, 16
        %v444 = vrot.slane %v442, 4
        %v445 = vor.u32 %v444, %v440
        %v446 = vrot.slane %v445, 4
        %v448 = vshll.u32 %v271, 16
        %v450 = vrot.slane %v448, 5
        %v451 = vsel %vm283, %v446, %v450
        %v453 = vshrl.u32 %v231, 16
        %v455 = vrot.slane %v453, 4
        %v456 = vshll.u32 %v231, 16
        %v458 = vrot.slane %v456, 5
        %v459 = vor.u32 %v455, %v458
        %v460 = vrot.slane %v459, 4
        %v462 = vshll.u32 %v232, 16
        %v464 = vrot.slane %v462, 5
        %v465 = vsel %vm283, %v460, %v464
        %v466 = vshrl.u32 %v232, 16
        %v468 = vrot.slane %v466, 4
        %v469 = vor.u32 %v468, %v464
        %v470 = vrot.slane %v469, 4
        %v472 = vshll.u32 %v272, 16
        %v474 = vrot.slane %v472, 5
        %v475 = vsel %vm283, %v470, %v474
        %v477 = vshrl.u32 %v233, 16
        %v479 = vrot.slane %v477, 4
        %v480 = vshll.u32 %v233, 16
        %v482 = vrot.slane %v480, 5
        %v483 = vor.u32 %v479, %v482
        %v484 = vrot.slane %v483, 4
        %v486 = vshll.u32 %v234, 16
        %v488 = vrot.slane %v486, 5
        %v489 = vsel %vm283, %v484, %v488
        %v490 = vshrl.u32 %v234, 16
        %v492 = vrot.slane %v490, 4
        %v493 = vor.u32 %v492, %v488
        %v494 = vrot.slane %v493, 4
        %v496 = vshll.u32 %v273, 16
        %v498 = vrot.slane %v496, 5
        %v499 = vsel %vm283, %v494, %v498
        %v501 = vshrl.u32 %v235, 16
        %v503 = vrot.slane %v501, 4
        %v504 = vshll.u32 %v235, 16
        %v506 = vrot.slane %v504, 5
        %v507 = vor.u32 %v503, %v506
        %v508 = vrot.slane %v507, 4
        %v510 = vshll.u32 %v236, 16
        %v512 = vrot.slane %v510, 5
        %v513 = vsel %vm283, %v508, %v512
        %v514 = vshrl.u32 %v236, 16
        %v516 = vrot.slane %v514, 4
        %v517 = vor.u32 %v516, %v512
        %v518 = vrot.slane %v517, 4
        %v520 = vshll.u32 %v274, 16
        %v522 = vrot.slane %v520, 5
        %v523 = vsel %vm283, %v518, %v522
        %v525 = vshrl.u32 %v237, 16
        %v527 = vrot.slane %v525, 4
        %v528 = vshll.u32 %v237, 16
        %v530 = vrot.slane %v528, 5
        %v531 = vor.u32 %v527, %v530
        %v532 = vrot.slane %v531, 4
        %v534 = vshll.u32 %v238, 16
        %v536 = vrot.slane %v534, 5
        %v537 = vsel %vm283, %v532, %v536
        %v538 = vshrl.u32 %v238, 16
        %v540 = vrot.slane %v538, 4
        %v541 = vor.u32 %v540, %v536
        %v542 = vrot.slane %v541, 4
        %v544 = vshll.u32 %v275, 16
        %v546 = vrot.slane %v544, 5
        %v547 = vsel %vm283, %v542, %v546
        %v549 = vshrl.u32 %v239, 16
        %v551 = vrot.slane %v549, 4
        %v552 = vshll.u32 %v239, 16
        %v554 = vrot.slane %v552, 5
        %v555 = vor.u32 %v551, %v554
        %v556 = vrot.slane %v555, 4
        %v558 = vshll.u32 %v240, 16
        %v560 = vrot.slane %v558, 5
        %v561 = vsel %vm283, %v556, %v560
        %v562 = vshrl.u32 %v240, 16
        %v564 = vrot.slane %v562, 4
        %v565 = vor.u32 %v564, %v560
        %v566 = vrot.slane %v565, 4
        %v568 = vshll.u32 %v276, 16
        %v570 = vrot.slane %v568, 5
        %v571 = vsel %vm283, %v566, %v570
        %v573 = vshrl.u32 %v241, 16
        %v575 = vrot.slane %v573, 4
        %v576 = vshll.u32 %v241, 16
        %v578 = vrot.slane %v576, 5
        %v579 = vor.u32 %v575, %v578
        %v580 = vrot.slane %v579, 4
        %v582 = vshll.u32 %v242, 16
        %v584 = vrot.slane %v582, 5
        %v585 = vsel %vm283, %v580, %v584
        %v586 = vshrl.u32 %v242, 16
        %v588 = vrot.slane %v586, 4
        %v589 = vor.u32 %v588, %v584
        %v590 = vrot.slane %v589, 4
        %v592 = vshll.u32 %v277, 16
        %v594 = vrot.slane %v592, 5
        %v595 = vsel %vm283, %v590, %v594
        %v597 = vshrl.u32 %v243, 16
        %v599 = vrot.slane %v597, 4
        %v600 = vshll.u32 %v243, 16
        %v602 = vrot.slane %v600, 5
        %v603 = vor.u32 %v599, %v602
        %v604 = vrot.slane %v603, 4
        %v606 = vshll.u32 %v244, 16
        %v608 = vrot.slane %v606, 5
        %v609 = vsel %vm283, %v604, %v608
        %v610 = vshrl.u32 %v244, 16
        %v612 = vrot.slane %v610, 4
        %v613 = vor.u32 %v612, %v608
        %v614 = vrot.slane %v613, 4
        %v616 = vshll.u32 %v278, 16
        %v618 = vrot.slane %v616, 5
        %v619 = vsel %vm283, %v614, %v618
        %v621 = vshrl.u32 %v245, 16
        %v623 = vrot.slane %v621, 4
        %v624 = vshll.u32 %v245, 16
        %v626 = vrot.slane %v624, 5
        %v627 = vor.u32 %v623, %v626
        %v628 = vrot.slane %v627, 4
        %v630 = vshll.u32 %v246, 16
        %v632 = vrot.slane %v630, 5
        %v633 = vsel %vm283, %v628, %v632
        %v634 = vshrl.u32 %v246, 16
        %v636 = vrot.slane %v634, 4
        %v637 = vor.u32 %v636, %v632
        %v638 = vrot.slane %v637, 4
        %v640 = vshll.u32 %v279, 16
        %v642 = vrot.slane %v640, 5
        %v643 = vsel %vm283, %v638, %v642
        %v645 = vshrl.u32 %v247, 16
        %v647 = vrot.slane %v645, 4
        %v648 = vshll.u32 %v247, 16
        %v650 = vrot.slane %v648, 5
        %v651 = vor.u32 %v647, %v650
        %v652 = vrot.slane %v651, 4
        %v654 = vshll.u32 %v248, 16
        %v656 = vrot.slane %v654, 5
        %v657 = vsel %vm283, %v652, %v656
        %v658 = vshrl.u32 %v248, 16
        %v660 = vrot.slane %v658, 4
        %v661 = vor.u32 %v660, %v656
        %v662 = vrot.slane %v661, 4
        %v664 = vshll.u32 %v280, 16
        %v666 = vrot.slane %v664, 5
        %v667 = vsel %vm283, %v662, %v666
        %s668 = scalar_lea.vmem %s1, 64
        %v669 = vld [vmem:[%s668] sm:$0xf]
        %v670 = vld [vmem:[%s668 + $0x4] sm:$0xf]
        %v671 = vld [vmem:[%s668 + $0x8] sm:$0xf]
        %v672 = vld [vmem:[%s668 + $0xc] sm:$0xf]
        %v673 = vld [vmem:[%s668 + $0x10] sm:$0xf]
        %v674 = vld [vmem:[%s668 + $0x14] sm:$0xf]
        %v675 = vld [vmem:[%s668 + $0x18] sm:$0xf]
        %v676 = vld [vmem:[%s668 + $0x1c] sm:$0xf]
        %v677 = vld [vmem:[%s668 + $0x20] sm:$0xf]
        %v678 = vld [vmem:[%s668 + $0x24] sm:$0xf]
        %v679 = vld [vmem:[%s668 + $0x28] sm:$0xf]
        %v680 = vld [vmem:[%s668 + $0x2c] sm:$0xf]
        %v681 = vld [vmem:[%s668 + $0x30] sm:$0xf]
        %v682 = vld [vmem:[%s668 + $0x34] sm:$0xf]
        %v683 = vld [vmem:[%s668 + $0x38] sm:$0xf]
        %v684 = vld [vmem:[%s668 + $0x3c] sm:$0xf]
        %v685 = vunpack.c.l.b16 %v297
        %v686 = vunpack.c.l.b16 %v307
        %v687 = vunpack.c.l.b16 %v321
        %v688 = vunpack.c.l.b16 %v331
        %v689 = vunpack.c.l.b16 %v345
        %v690 = vunpack.c.l.b16 %v355
        %v691 = vunpack.c.l.b16 %v369
        %v692 = vunpack.c.l.b16 %v379
        %v693 = vunpack.c.l.b16 %v393
        %v694 = vunpack.c.l.b16 %v403
        %v695 = vunpack.c.l.b16 %v417
        %v696 = vunpack.c.l.b16 %v427
        %v697 = vunpack.c.l.b16 %v441
        %v698 = vunpack.c.l.b16 %v451
        %v699 = vunpack.c.l.b16 %v465
        %v700 = vunpack.c.l.b16 %v475
        %v701 = vunpack.c.l.b16 %v489
        %v702 = vunpack.c.l.b16 %v499
        %v703 = vunpack.c.l.b16 %v513
        %v704 = vunpack.c.l.b16 %v523
        %v705 = vunpack.c.l.b16 %v537
        %v706 = vunpack.c.l.b16 %v547
        %v707 = vunpack.c.l.b16 %v561
        %v708 = vunpack.c.l.b16 %v571
        %v709 = vunpack.c.l.b16 %v585
        %v710 = vunpack.c.l.b16 %v595
        %v711 = vunpack.c.l.b16 %v609
        %v712 = vunpack.c.l.b16 %v619
        %v713 = vunpack.c.l.b16 %v633
        %v714 = vunpack.c.l.b16 %v643
        %v715 = vunpack.c.l.b16 %v657
        %v716 = vunpack.c.l.b16 %v667
        %v717 = vpack.c.b16 %v686, %v685
        %v718 = vpack.c.b16 %v688, %v687
        %v719 = vpack.c.b16 %v690, %v689
        %v720 = vpack.c.b16 %v692, %v691
        %v721 = vpack.c.b16 %v694, %v693
        %v722 = vpack.c.b16 %v696, %v695
        %v723 = vpack.c.b16 %v698, %v697
        %v724 = vpack.c.b16 %v700, %v699
        %v725 = vpack.c.b16 %v702, %v701
        %v726 = vpack.c.b16 %v704, %v703
        %v727 = vpack.c.b16 %v706, %v705
        %v728 = vpack.c.b16 %v708, %v707
        %v729 = vpack.c.b16 %v710, %v709
        %v730 = vpack.c.b16 %v712, %v711
        %v731 = vpack.c.b16 %v714, %v713
        %v732 = vpack.c.b16 %v716, %v715
        %v765 = vunpack.c.l.b16 %v669
        %v766 = vunpack.c.l.b16 %v670
        %v767 = vunpack.c.l.b16 %v671
        %v768 = vunpack.c.l.b16 %v672
        %v769 = vunpack.c.l.b16 %v673
        %v770 = vunpack.c.l.b16 %v674
        %v771 = vunpack.c.l.b16 %v675
        %v772 = vunpack.c.l.b16 %v676
        %v773 = vunpack.c.l.b16 %v677
        %v774 = vunpack.c.l.b16 %v678
        %v775 = vunpack.c.l.b16 %v679
        %v776 = vunpack.c.l.b16 %v680
        %v777 = vunpack.c.l.b16 %v681
        %v778 = vunpack.c.l.b16 %v682
        %v779 = vunpack.c.l.b16 %v683
        %v780 = vunpack.c.l.b16 %v684
        %v781 = vpack.c.b16 %v766, %v765
        %v782 = vpack.c.b16 %v768, %v767
        %v783 = vpack.c.b16 %v770, %v769
        %v784 = vpack.c.b16 %v772, %v771
        %v785 = vpack.c.b16 %v774, %v773
        %v786 = vpack.c.b16 %v776, %v775
        %v787 = vpack.c.b16 %v778, %v777
        %v788 = vpack.c.b16 %v780, %v779
        %797 = vmatprep.subr.bf16.mxu0 0
        %798 = vmatpush1.bf16.msra.mxu0 %v781
        %799 = vmatprep.subr.bf16.mxu0 0
        %800 = vmatpush1.bf16.msra.mxu0 %v782
        %801 = vmatprep.subr.bf16.mxu0 0
        %802 = vmatpush1.bf16.msra.mxu0 %v783
        %803 = vmatprep.subr.bf16.mxu0 0
        %804 = vmatpush1.bf16.msra.mxu0 %v784
        %805 = vmatprep.subr.bf16.mxu0 0
        %806 = vmatpush1.bf16.msra.mxu0 %v785
        %807 = vmatprep.subr.bf16.mxu0 0
        %808 = vmatpush1.bf16.msra.mxu0 %v786
        %809 = vmatprep.subr.bf16.mxu0 0
        %810 = vmatpush1.bf16.msra.mxu0 %v787
        %811 = vmatprep.subr.bf16.mxu0 0
        %812 = vmatpush1.bf16.msra.mxu0 %v788
        %813 = vmatprep.subr.bf16.mxu0 0
        %814 = vmatpush1.bf16.msra.mxu0 0
        %815 = vmatprep.subr.bf16.mxu0 0
        %816 = vmatpush1.bf16.msra.mxu0 0
        %817 = vmatprep.subr.bf16.mxu0 0
        %818 = vmatpush1.bf16.msra.mxu0 0
        %819 = vmatprep.subr.bf16.mxu0 0
        %820 = vmatpush1.bf16.msra.mxu0 0
        %821 = vmatprep.subr.bf16.mxu0 0
        %822 = vmatpush1.bf16.msra.mxu0 0
        %823 = vmatprep.subr.bf16.mxu0 0
        %824 = vmatpush1.bf16.msra.mxu0 0
        %825 = vmatprep.subr.bf16.mxu0 0
        %826 = vmatpush1.bf16.msra.mxu0 0
        %827 = vmatprep.subr.bf16.mxu0 0
        %828 = vmatpush1.bf16.msra.mxu0 0
        %829 = vmatprep.mubr.bf16.mxu0 0
        %830 = vmatmul.mubr.bf16.gmra.mrb[0].mxu0 %v717
        %v831 = vpop.f32.mrb[0].mxu0
        %v832 = vadd.f32 0.0, %v831
        %v833 = vpop.f32.mrb[0].mxu0
        %v834 = vpop.f32.mrb[0].mxu0
        %v835 = vadd.f32 0.0, %v834
        %v836 = vpop.f32.mrb[0].mxu0
        %837 = vmatprep.mubr.bf16.mxu0 0
        %838 = vmatmul.mubr.bf16.gmra.mrb[0].mxu0 %v718
        %v839 = vpop.f32.mrb[0].mxu0
        %v840 = vadd.f32 0.0, %v839
        %v841 = vpop.f32.mrb[0].mxu0
        %v842 = vpop.f32.mrb[0].mxu0
        %v843 = vadd.f32 0.0, %v842
        %v844 = vpop.f32.mrb[0].mxu0
        %845 = vmatprep.mubr.bf16.mxu0 0
        %846 = vmatmul.mubr.bf16.gmra.mrb[0].mxu0 %v719
        %v847 = vpop.f32.mrb[0].mxu0
        %v848 = vadd.f32 0.0, %v847
        %v849 = vpop.f32.mrb[0].mxu0
        %v850 = vpop.f32.mrb[0].mxu0
        %v851 = vadd.f32 0.0, %v850
        %v852 = vpop.f32.mrb[0].mxu0
        %853 = vmatprep.mubr.bf16.mxu0 0
        %854 = vmatmul.mubr.bf16.gmra.mrb[0].mxu0 %v720
        %v855 = vpop.f32.mrb[0].mxu0
        %v856 = vadd.f32 0.0, %v855
        %v857 = vpop.f32.mrb[0].mxu0
        %v858 = vpop.f32.mrb[0].mxu0
        %v859 = vadd.f32 0.0, %v858
        %v860 = vpop.f32.mrb[0].mxu0
        %861 = vmatprep.mubr.bf16.mxu0 0
        %862 = vmatmul.mubr.bf16.gmra.mrb[0].mxu0 %v721
        %v863 = vpop.f32.mrb[0].mxu0
        %v864 = vadd.f32 0.0, %v863
        %v865 = vpop.f32.mrb[0].mxu0
        %v866 = vpop.f32.mrb[0].mxu0
        %v867 = vadd.f32 0.0, %v866
        %v868 = vpop.f32.mrb[0].mxu0
        %869 = vmatprep.mubr.bf16.mxu0 0
        %870 = vmatmul.mubr.bf16.gmra.mrb[0].mxu0 %v722
        %v871 = vpop.f32.mrb[0].mxu0
        %v872 = vadd.f32 0.0, %v871
        %v873 = vpop.f32.mrb[0].mxu0
        %v874 = vpop.f32.mrb[0].mxu0
        %v875 = vadd.f32 0.0, %v874
        %v876 = vpop.f32.mrb[0].mxu0
        %877 = vmatprep.mubr.bf16.mxu0 0
        %878 = vmatmul.mubr.bf16.gmra.mrb[0].mxu0 %v723
        %v879 = vpop.f32.mrb[0].mxu0
        %v880 = vadd.f32 0.0, %v879
        %v881 = vpop.f32.mrb[0].mxu0
        %v882 = vpop.f32.mrb[0].mxu0
        %v883 = vadd.f32 0.0, %v882
        %v884 = vpop.f32.mrb[0].mxu0
        %885 = vmatprep.mubr.bf16.mxu0 0
        %886 = vmatmul.mubr.bf16.gmra.mrb[0].mxu0 %v724
        %v887 = vpop.f32.mrb[0].mxu0
        %v888 = vadd.f32 0.0, %v887
        %v889 = vpop.f32.mrb[0].mxu0
        %v890 = vpop.f32.mrb[0].mxu0
        %v891 = vadd.f32 0.0, %v890
        %v892 = vpop.f32.mrb[0].mxu0
        %893 = vmatprep.mubr.bf16.mxu0 0
        %894 = vmatmul.mubr.bf16.gmra.mrb[0].mxu0 %v725
        %v895 = vpop.f32.mrb[0].mxu0
        %v896 = vadd.f32 0.0, %v895
        %v897 = vpop.f32.mrb[0].mxu0
        %v898 = vpop.f32.mrb[0].mxu0
        %v899 = vadd.f32 0.0, %v898
        %v900 = vpop.f32.mrb[0].mxu0
        %901 = vmatprep.mubr.bf16.mxu0 0
        %902 = vmatmul.mubr.bf16.gmra.mrb[0].mxu0 %v726
        %v903 = vpop.f32.mrb[0].mxu0
        %v904 = vadd.f32 0.0, %v903
        %v905 = vpop.f32.mrb[0].mxu0
        %v906 = vpop.f32.mrb[0].mxu0
        %v907 = vadd.f32 0.0, %v906
        %v908 = vpop.f32.mrb[0].mxu0
        %909 = vmatprep.mubr.bf16.mxu0 0
        %910 = vmatmul.mubr.bf16.gmra.mrb[0].mxu0 %v727
        %v911 = vpop.f32.mrb[0].mxu0
        %v912 = vadd.f32 0.0, %v911
        %v913 = vpop.f32.mrb[0].mxu0
        %v914 = vpop.f32.mrb[0].mxu0
        %v915 = vadd.f32 0.0, %v914
        %v916 = vpop.f32.mrb[0].mxu0
        %917 = vmatprep.mubr.bf16.mxu0 0
        %918 = vmatmul.mubr.bf16.gmra.mrb[0].mxu0 %v728
        %v919 = vpop.f32.mrb[0].mxu0
        %v920 = vadd.f32 0.0, %v919
        %v921 = vpop.f32.mrb[0].mxu0
        %v922 = vpop.f32.mrb[0].mxu0
        %v923 = vadd.f32 0.0, %v922
        %v924 = vpop.f32.mrb[0].mxu0
        %925 = vmatprep.mubr.bf16.mxu0 0
        %926 = vmatmul.mubr.bf16.gmra.mrb[0].mxu0 %v729
        %v927 = vpop.f32.mrb[0].mxu0
        %v928 = vadd.f32 0.0, %v927
        %v929 = vpop.f32.mrb[0].mxu0
        %v930 = vpop.f32.mrb[0].mxu0
        %v931 = vadd.f32 0.0, %v930
        %v932 = vpop.f32.mrb[0].mxu0
        %933 = vmatprep.mubr.bf16.mxu0 0
        %934 = vmatmul.mubr.bf16.gmra.mrb[0].mxu0 %v730
        %v935 = vpop.f32.mrb[0].mxu0
        %v936 = vadd.f32 0.0, %v935
        %v937 = vpop.f32.mrb[0].mxu0
        %v938 = vpop.f32.mrb[0].mxu0
        %v939 = vadd.f32 0.0, %v938
        %v940 = vpop.f32.mrb[0].mxu0
        %941 = vmatprep.mubr.bf16.mxu0 0
        %942 = vmatmul.mubr.bf16.gmra.mrb[0].mxu0 %v731
        %v943 = vpop.f32.mrb[0].mxu0
        %v944 = vadd.f32 0.0, %v943
        %v945 = vpop.f32.mrb[0].mxu0
        %v946 = vpop.f32.mrb[0].mxu0
        %v947 = vadd.f32 0.0, %v946
        %v948 = vpop.f32.mrb[0].mxu0
        %949 = vmatprep.mubr.bf16.mxu0 0
        %950 = vmatmul.mubr.bf16.gmra.mrb[0].mxu0 %v732
        %v951 = vpop.f32.mrb[0].mxu0
        %v952 = vadd.f32 0.0, %v951
        %v953 = vpop.f32.mrb[0].mxu0
        %v954 = vpop.f32.mrb[0].mxu0
        %v955 = vadd.f32 0.0, %v954
        %v956 = vpop.f32.mrb[0].mxu0
        %957 = vdwg.mxu0
        %v990 = vunpack.c.l.b16 %v217
        %v991 = vunpack.c.l.b16 %v218
        %v992 = vunpack.c.l.b16 %v219
        %v993 = vunpack.c.l.b16 %v220
        %v994 = vunpack.c.l.b16 %v221
        %v995 = vunpack.c.l.b16 %v222
        %v996 = vunpack.c.l.b16 %v223
        %v997 = vunpack.c.l.b16 %v224
        %v998 = vunpack.c.l.b16 %v225
        %v999 = vunpack.c.l.b16 %v226
        %v1000 = vunpack.c.l.b16 %v227
        %v1001 = vunpack.c.l.b16 %v228
        %v1002 = vunpack.c.l.b16 %v229
        %v1003 = vunpack.c.l.b16 %v230
        %v1004 = vunpack.c.l.b16 %v231
        %v1005 = vunpack.c.l.b16 %v232
        %v1006 = vunpack.c.l.b16 %v233
        %v1007 = vunpack.c.l.b16 %v234
        %v1008 = vunpack.c.l.b16 %v235
        %v1009 = vunpack.c.l.b16 %v236
        %v1010 = vunpack.c.l.b16 %v237
        %v1011 = vunpack.c.l.b16 %v238
        %v1012 = vunpack.c.l.b16 %v239
        %v1013 = vunpack.c.l.b16 %v240
        %v1014 = vunpack.c.l.b16 %v241
        %v1015 = vunpack.c.l.b16 %v242
        %v1016 = vunpack.c.l.b16 %v243
        %v1017 = vunpack.c.l.b16 %v244
        %v1018 = vunpack.c.l.b16 %v245
        %v1019 = vunpack.c.l.b16 %v246
        %v1020 = vunpack.c.l.b16 %v247
        %v1021 = vunpack.c.l.b16 %v248
        %v1022 = vpack.c.b16 %v991, %v990
        %v1023 = vpack.c.b16 %v993, %v992
        %v1024 = vpack.c.b16 %v995, %v994
        %v1025 = vpack.c.b16 %v997, %v996
        %v1026 = vpack.c.b16 %v999, %v998
        %v1027 = vpack.c.b16 %v1001, %v1000
        %v1028 = vpack.c.b16 %v1003, %v1002
        %v1029 = vpack.c.b16 %v1005, %v1004
        %v1030 = vpack.c.b16 %v1007, %v1006
        %v1031 = vpack.c.b16 %v1009, %v1008
        %v1032 = vpack.c.b16 %v1011, %v1010
        %v1033 = vpack.c.b16 %v1013, %v1012
        %v1034 = vpack.c.b16 %v1015, %v1014
        %v1035 = vpack.c.b16 %v1017, %v1016
        %v1036 = vpack.c.b16 %v1019, %v1018
        %v1037 = vpack.c.b16 %v1021, %v1020
        %v1070 = vunpack.c.l.b16 %v249
        %v1071 = vunpack.c.l.b16 %v250
        %v1072 = vunpack.c.l.b16 %v251
        %v1073 = vunpack.c.l.b16 %v252
        %v1074 = vunpack.c.l.b16 %v253
        %v1075 = vunpack.c.l.b16 %v254
        %v1076 = vunpack.c.l.b16 %v255
        %v1077 = vunpack.c.l.b16 %v256
        %v1078 = vunpack.c.l.b16 %v257
        %v1079 = vunpack.c.l.b16 %v258
        %v1080 = vunpack.c.l.b16 %v259
        %v1081 = vunpack.c.l.b16 %v260
        %v1082 = vunpack.c.l.b16 %v261
        %v1083 = vunpack.c.l.b16 %v262
        %v1084 = vunpack.c.l.b16 %v263
        %v1085 = vunpack.c.l.b16 %v264
        %v1086 = vpack.c.b16 %v1071, %v1070
        %v1087 = vpack.c.b16 %v1073, %v1072
        %v1088 = vpack.c.b16 %v1075, %v1074
        %v1089 = vpack.c.b16 %v1077, %v1076
        %v1090 = vpack.c.b16 %v1079, %v1078
        %v1091 = vpack.c.b16 %v1081, %v1080
        %v1092 = vpack.c.b16 %v1083, %v1082
        %v1093 = vpack.c.b16 %v1085, %v1084
        %1102 = vmatprep.subr.bf16.mxu0 0
        %1103 = vmatpush1.bf16.msra.mxu0 %v1086
        %1104 = vmatprep.subr.bf16.mxu0 0
        %1105 = vmatpush1.bf16.msra.mxu0 %v1087
        %1106 = vmatprep.subr.bf16.mxu0 0
        %1107 = vmatpush1.bf16.msra.mxu0 %v1088
        %1108 = vmatprep.subr.bf16.mxu0 0
        %1109 = vmatpush1.bf16.msra.mxu0 %v1089
        %1110 = vmatprep.subr.bf16.mxu0 0
        %1111 = vmatpush1.bf16.msra.mxu0 %v1090
        %1112 = vmatprep.subr.bf16.mxu0 0
        %1113 = vmatpush1.bf16.msra.mxu0 %v1091
        %1114 = vmatprep.subr.bf16.mxu0 0
        %1115 = vmatpush1.bf16.msra.mxu0 %v1092
        %1116 = vmatprep.subr.bf16.mxu0 0
        %1117 = vmatpush1.bf16.msra.mxu0 %v1093
        %1118 = vmatprep.subr.bf16.mxu0 0
        %1119 = vmatpush1.bf16.msra.mxu0 0
        %1120 = vmatprep.subr.bf16.mxu0 0
        %1121 = vmatpush1.bf16.msra.mxu0 0
        %1122 = vmatprep.subr.bf16.mxu0 0
        %1123 = vmatpush1.bf16.msra.mxu0 0
        %1124 = vmatprep.subr.bf16.mxu0 0
        %1125 = vmatpush1.bf16.msra.mxu0 0
        %1126 = vmatprep.subr.bf16.mxu0 0
        %1127 = vmatpush1.bf16.msra.mxu0 0
        %1128 = vmatprep.subr.bf16.mxu0 0
        %1129 = vmatpush1.bf16.msra.mxu0 0
        %1130 = vmatprep.subr.bf16.mxu0 0
        %1131 = vmatpush1.bf16.msra.mxu0 0
        %1132 = vmatprep.subr.bf16.mxu0 0
        %1133 = vmatpush1.bf16.msra.mxu0 0
        %1134 = vmatprep.mubr.bf16.mxu0 0
        %1135 = vmatmul.mubr.bf16.gmra.mrb[0].mxu0 %v1022
        %v1136 = vpop.f32.mrb[0].mxu0
        %v1137 = vadd.f32 %v832, %v1136
        %v1138 = vpop.f32.mrb[0].mxu0
        %v1139 = vpop.f32.mrb[0].mxu0
        %v1140 = vadd.f32 %v835, %v1139
        %v1141 = vpop.f32.mrb[0].mxu0
        %1142 = vmatprep.mubr.bf16.mxu0 0
        %1143 = vmatmul.mubr.bf16.gmra.mrb[0].mxu0 %v1023
        %v1144 = vpop.f32.mrb[0].mxu0
        %v1145 = vadd.f32 %v840, %v1144
        %v1146 = vpop.f32.mrb[0].mxu0
        %v1147 = vpop.f32.mrb[0].mxu0
        %v1148 = vadd.f32 %v843, %v1147
        %v1149 = vpop.f32.mrb[0].mxu0
        %1150 = vmatprep.mubr.bf16.mxu0 0
        %1151 = vmatmul.mubr.bf16.gmra.mrb[0].mxu0 %v1024
        %v1152 = vpop.f32.mrb[0].mxu0
        %v1153 = vadd.f32 %v848, %v1152
        %v1154 = vpop.f32.mrb[0].mxu0
        %v1155 = vpop.f32.mrb[0].mxu0
        %v1156 = vadd.f32 %v851, %v1155
        %v1157 = vpop.f32.mrb[0].mxu0
        %1158 = vmatprep.mubr.bf16.mxu0 0
        %1159 = vmatmul.mubr.bf16.gmra.mrb[0].mxu0 %v1025
        %v1160 = vpop.f32.mrb[0].mxu0
        %v1161 = vadd.f32 %v856, %v1160
        %v1162 = vpop.f32.mrb[0].mxu0
        %v1163 = vpop.f32.mrb[0].mxu0
        %v1164 = vadd.f32 %v859, %v1163
        %v1165 = vpop.f32.mrb[0].mxu0
        %1166 = vmatprep.mubr.bf16.mxu0 0
        %1167 = vmatmul.mubr.bf16.gmra.mrb[0].mxu0 %v1026
        %v1168 = vpop.f32.mrb[0].mxu0
        %v1169 = vadd.f32 %v864, %v1168
        %v1170 = vpop.f32.mrb[0].mxu0
        %v1171 = vpop.f32.mrb[0].mxu0
        %v1172 = vadd.f32 %v867, %v1171
        %v1173 = vpop.f32.mrb[0].mxu0
        %1174 = vmatprep.mubr.bf16.mxu0 0
        %1175 = vmatmul.mubr.bf16.gmra.mrb[0].mxu0 %v1027
        %v1176 = vpop.f32.mrb[0].mxu0
        %v1177 = vadd.f32 %v872, %v1176
        %v1178 = vpop.f32.mrb[0].mxu0
        %v1179 = vpop.f32.mrb[0].mxu0
        %v1180 = vadd.f32 %v875, %v1179
        %v1181 = vpop.f32.mrb[0].mxu0
        %1182 = vmatprep.mubr.bf16.mxu0 0
        %1183 = vmatmul.mubr.bf16.gmra.mrb[0].mxu0 %v1028
        %v1184 = vpop.f32.mrb[0].mxu0
        %v1185 = vadd.f32 %v880, %v1184
        %v1186 = vpop.f32.mrb[0].mxu0
        %v1187 = vpop.f32.mrb[0].mxu0
        %v1188 = vadd.f32 %v883, %v1187
        %v1189 = vpop.f32.mrb[0].mxu0
        %1190 = vmatprep.mubr.bf16.mxu0 0
        %1191 = vmatmul.mubr.bf16.gmra.mrb[0].mxu0 %v1029
        %v1192 = vpop.f32.mrb[0].mxu0
        %v1193 = vadd.f32 %v888, %v1192
        %v1194 = vpop.f32.mrb[0].mxu0
        %v1195 = vpop.f32.mrb[0].mxu0
        %v1196 = vadd.f32 %v891, %v1195
        %v1197 = vpop.f32.mrb[0].mxu0
        %1198 = vmatprep.mubr.bf16.mxu0 0
        %1199 = vmatmul.mubr.bf16.gmra.mrb[0].mxu0 %v1030
        %v1200 = vpop.f32.mrb[0].mxu0
        %v1201 = vadd.f32 %v896, %v1200
        %v1202 = vpop.f32.mrb[0].mxu0
        %v1203 = vpop.f32.mrb[0].mxu0
        %v1204 = vadd.f32 %v899, %v1203
        %v1205 = vpop.f32.mrb[0].mxu0
        %1206 = vmatprep.mubr.bf16.mxu0 0
        %1207 = vmatmul.mubr.bf16.gmra.mrb[0].mxu0 %v1031
        %v1208 = vpop.f32.mrb[0].mxu0
        %v1209 = vadd.f32 %v904, %v1208
        %v1210 = vpop.f32.mrb[0].mxu0
        %v1211 = vpop.f32.mrb[0].mxu0
        %v1212 = vadd.f32 %v907, %v1211
        %v1213 = vpop.f32.mrb[0].mxu0
        %1214 = vmatprep.mubr.bf16.mxu0 0
        %1215 = vmatmul.mubr.bf16.gmra.mrb[0].mxu0 %v1032
        %v1216 = vpop.f32.mrb[0].mxu0
        %v1217 = vadd.f32 %v912, %v1216
        %v1218 = vpop.f32.mrb[0].mxu0
        %v1219 = vpop.f32.mrb[0].mxu0
        %v1220 = vadd.f32 %v915, %v1219
        %v1221 = vpop.f32.mrb[0].mxu0
        %1222 = vmatprep.mubr.bf16.mxu0 0
        %1223 = vmatmul.mubr.bf16.gmra.mrb[0].mxu0 %v1033
        %v1224 = vpop.f32.mrb[0].mxu0
        %v1225 = vadd.f32 %v920, %v1224
        %v1226 = vpop.f32.mrb[0].mxu0
        %v1227 = vpop.f32.mrb[0].mxu0
        %v1228 = vadd.f32 %v923, %v1227
        %v1229 = vpop.f32.mrb[0].mxu0
        %1230 = vmatprep.mubr.bf16.mxu0 0
        %1231 = vmatmul.mubr.bf16.gmra.mrb[0].mxu0 %v1034
        %v1232 = vpop.f32.mrb[0].mxu0
        %v1233 = vadd.f32 %v928, %v1232
        %v1234 = vpop.f32.mrb[0].mxu0
        %v1235 = vpop.f32.mrb[0].mxu0
        %v1236 = vadd.f32 %v931, %v1235
        %v1237 = vpop.f32.mrb[0].mxu0
        %1238 = vmatprep.mubr.bf16.mxu0 0
        %1239 = vmatmul.mubr.bf16.gmra.mrb[0].mxu0 %v1035
        %v1240 = vpop.f32.mrb[0].mxu0
        %v1241 = vadd.f32 %v936, %v1240
        %v1242 = vpop.f32.mrb[0].mxu0
        %v1243 = vpop.f32.mrb[0].mxu0
        %v1244 = vadd.f32 %v939, %v1243
        %v1245 = vpop.f32.mrb[0].mxu0
        %1246 = vmatprep.mubr.bf16.mxu0 0
        %1247 = vmatmul.mubr.bf16.gmra.mrb[0].mxu0 %v1036
        %v1248 = vpop.f32.mrb[0].mxu0
        %v1249 = vadd.f32 %v944, %v1248
        %v1250 = vpop.f32.mrb[0].mxu0
        %v1251 = vpop.f32.mrb[0].mxu0
        %v1252 = vadd.f32 %v947, %v1251
        %v1253 = vpop.f32.mrb[0].mxu0
        %1254 = vmatprep.mubr.bf16.mxu0 0
        %1255 = vmatmul.mubr.bf16.gmra.mrb[0].mxu0 %v1037
        %v1256 = vpop.f32.mrb[0].mxu0
        %v1257 = vadd.f32 %v952, %v1256
        %v1258 = vpop.f32.mrb[0].mxu0
        %v1259 = vpop.f32.mrb[0].mxu0
        %v1260 = vadd.f32 %v955, %v1259
        %v1261 = vpop.f32.mrb[0].mxu0
        %1262 = vdwg.mxu0
        %v1263 = vld [vmem:[%s210] sm:$0xe]
        %v1264 = vld [vmem:[%s210 + $0xc] sm:$0xe]
        %v1265 = vld [vmem:[%s210 + $0x18] sm:$0xe]
        %v1266 = vld [vmem:[%s210 + $0x24] sm:$0xe]
        %v1267 = vld [vmem:[%s210 + $0x30] sm:$0xe]
        %v1268 = vld [vmem:[%s210 + $0x3c] sm:$0xe]
        %v1269 = vld [vmem:[%s210 + $0x48] sm:$0xe]
        %v1270 = vld [vmem:[%s210 + $0x54] sm:$0xe]
        %v1271 = vld [vmem:[%s210 + $0x60] sm:$0xe]
        %v1272 = vld [vmem:[%s210 + $0x6c] sm:$0xe]
        %v1273 = vld [vmem:[%s210 + $0x78] sm:$0xe]
        %v1274 = vld [vmem:[%s210 + $0x84] sm:$0xe]
        %v1275 = vld [vmem:[%s210 + $0x90] sm:$0xe]
        %v1276 = vld [vmem:[%s210 + $0x9c] sm:$0xe]
        %v1277 = vld [vmem:[%s210 + $0xa8] sm:$0xe]
        %v1278 = vld [vmem:[%s210 + $0xb4] sm:$0xe]
        %vm1311 = vcmask 1042432
        %vm1312 = vcmask 1046532
        %vm1313 = vmor %vm1311, %vm1312
        %v1314 = vrot.slane %v1263, 5
        %v1315 = vrot.slane %v1314, 4
        %v1316 = vrot.slane %v218, 5
        %v1317 = vsel %vm1313, %v1315, %v1316
        %v1318 = vrot.slane %v1316, 4
        %v1319 = vrot.slane %v265, 5
        %v1320 = vsel %vm1313, %v1318, %v1319
        %v1321 = vrot.slane %v1264, 5
        %v1322 = vrot.slane %v1321, 4
        %v1323 = vrot.slane %v220, 5
        %v1324 = vsel %vm1313, %v1322, %v1323
        %v1325 = vrot.slane %v1323, 4
        %v1326 = vrot.slane %v266, 5
        %v1327 = vsel %vm1313, %v1325, %v1326
        %v1328 = vrot.slane %v1265, 5
        %v1329 = vrot.slane %v1328, 4
        %v1330 = vrot.slane %v222, 5
        %v1331 = vsel %vm1313, %v1329, %v1330
        %v1332 = vrot.slane %v1330, 4
        %v1333 = vrot.slane %v267, 5
        %v1334 = vsel %vm1313, %v1332, %v1333
        %v1335 = vrot.slane %v1266, 5
        %v1336 = vrot.slane %v1335, 4
        %v1337 = vrot.slane %v224, 5
        %v1338 = vsel %vm1313, %v1336, %v1337
        %v1339 = vrot.slane %v1337, 4
        %v1340 = vrot.slane %v268, 5
        %v1341 = vsel %vm1313, %v1339, %v1340
        %v1342 = vrot.slane %v1267, 5
        %v1343 = vrot.slane %v1342, 4
        %v1344 = vrot.slane %v226, 5
        %v1345 = vsel %vm1313, %v1343, %v1344
        %v1346 = vrot.slane %v1344, 4
        %v1347 = vrot.slane %v269, 5
        %v1348 = vsel %vm1313, %v1346, %v1347
        %v1349 = vrot.slane %v1268, 5
        %v1350 = vrot.slane %v1349, 4
        %v1351 = vrot.slane %v228, 5
        %v1352 = vsel %vm1313, %v1350, %v1351
        %v1353 = vrot.slane %v1351, 4
        %v1354 = vrot.slane %v270, 5
        %v1355 = vsel %vm1313, %v1353, %v1354
        %v1356 = vrot.slane %v1269, 5
        %v1357 = vrot.slane %v1356, 4
        %v1358 = vrot.slane %v230, 5
        %v1359 = vsel %vm1313, %v1357, %v1358
        %v1360 = vrot.slane %v1358, 4
        %v1361 = vrot.slane %v271, 5
        %v1362 = vsel %vm1313, %v1360, %v1361
        %v1363 = vrot.slane %v1270, 5
        %v1364 = vrot.slane %v1363, 4
        %v1365 = vrot.slane %v232, 5
        %v1366 = vsel %vm1313, %v1364, %v1365
        %v1367 = vrot.slane %v1365, 4
        %v1368 = vrot.slane %v272, 5
        %v1369 = vsel %vm1313, %v1367, %v1368
        %v1370 = vrot.slane %v1271, 5
        %v1371 = vrot.slane %v1370, 4
        %v1372 = vrot.slane %v234, 5
        %v1373 = vsel %vm1313, %v1371, %v1372
        %v1374 = vrot.slane %v1372, 4
        %v1375 = vrot.slane %v273, 5
        %v1376 = vsel %vm1313, %v1374, %v1375
        %v1377 = vrot.slane %v1272, 5
        %v1378 = vrot.slane %v1377, 4
        %v1379 = vrot.slane %v236, 5
        %v1380 = vsel %vm1313, %v1378, %v1379
        %v1381 = vrot.slane %v1379, 4
        %v1382 = vrot.slane %v274, 5
        %v1383 = vsel %vm1313, %v1381, %v1382
        %v1384 = vrot.slane %v1273, 5
        %v1385 = vrot.slane %v1384, 4
        %v1386 = vrot.slane %v238, 5
        %v1387 = vsel %vm1313, %v1385, %v1386
        %v1388 = vrot.slane %v1386, 4
        %v1389 = vrot.slane %v275, 5
        %v1390 = vsel %vm1313, %v1388, %v1389
        %v1391 = vrot.slane %v1274, 5
        %v1392 = vrot.slane %v1391, 4
        %v1393 = vrot.slane %v240, 5
        %v1394 = vsel %vm1313, %v1392, %v1393
        %v1395 = vrot.slane %v1393, 4
        %v1396 = vrot.slane %v276, 5
        %v1397 = vsel %vm1313, %v1395, %v1396
        %v1398 = vrot.slane %v1275, 5
        %v1399 = vrot.slane %v1398, 4
        %v1400 = vrot.slane %v242, 5
        %v1401 = vsel %vm1313, %v1399, %v1400
        %v1402 = vrot.slane %v1400, 4
        %v1403 = vrot.slane %v277, 5
        %v1404 = vsel %vm1313, %v1402, %v1403
        %v1405 = vrot.slane %v1276, 5
        %v1406 = vrot.slane %v1405, 4
        %v1407 = vrot.slane %v244, 5
        %v1408 = vsel %vm1313, %v1406, %v1407
        %v1409 = vrot.slane %v1407, 4
        %v1410 = vrot.slane %v278, 5
        %v1411 = vsel %vm1313, %v1409, %v1410
        %v1412 = vrot.slane %v1277, 5
        %v1413 = vrot.slane %v1412, 4
        %v1414 = vrot.slane %v246, 5
        %v1415 = vsel %vm1313, %v1413, %v1414
        %v1416 = vrot.slane %v1414, 4
        %v1417 = vrot.slane %v279, 5
        %v1418 = vsel %vm1313, %v1416, %v1417
        %v1419 = vrot.slane %v1278, 5
        %v1420 = vrot.slane %v1419, 4
        %v1421 = vrot.slane %v248, 5
        %v1422 = vsel %vm1313, %v1420, %v1421
        %v1423 = vrot.slane %v1421, 4
        %v1424 = vrot.slane %v280, 5
        %v1425 = vsel %vm1313, %v1423, %v1424
        %s1426 = scalar_lea.vmem %s1, 128
        %v1427 = vld [vmem:[%s1426] sm:$0xf]
        %v1428 = vld [vmem:[%s1426 + $0x4] sm:$0xf]
        %v1429 = vld [vmem:[%s1426 + $0x8] sm:$0xf]
        %v1430 = vld [vmem:[%s1426 + $0xc] sm:$0xf]
        %v1431 = vld [vmem:[%s1426 + $0x10] sm:$0xf]
        %v1432 = vld [vmem:[%s1426 + $0x14] sm:$0xf]
        %v1433 = vld [vmem:[%s1426 + $0x18] sm:$0xf]
        %v1434 = vld [vmem:[%s1426 + $0x1c] sm:$0xf]
        %v1435 = vld [vmem:[%s1426 + $0x20] sm:$0xf]
        %v1436 = vld [vmem:[%s1426 + $0x24] sm:$0xf]
        %v1437 = vld [vmem:[%s1426 + $0x28] sm:$0xf]
        %v1438 = vld [vmem:[%s1426 + $0x2c] sm:$0xf]
        %v1439 = vld [vmem:[%s1426 + $0x30] sm:$0xf]
        %v1440 = vld [vmem:[%s1426 + $0x34] sm:$0xf]
        %v1441 = vld [vmem:[%s1426 + $0x38] sm:$0xf]
        %v1442 = vld [vmem:[%s1426 + $0x3c] sm:$0xf]
        %v1443 = vunpack.c.l.b16 %v1317
        %v1444 = vunpack.c.l.b16 %v1320
        %v1445 = vunpack.c.l.b16 %v1324
        %v1446 = vunpack.c.l.b16 %v1327
        %v1447 = vunpack.c.l.b16 %v1331
        %v1448 = vunpack.c.l.b16 %v1334
        %v1449 = vunpack.c.l.b16 %v1338
        %v1450 = vunpack.c.l.b16 %v1341
        %v1451 = vunpack.c.l.b16 %v1345
        %v1452 = vunpack.c.l.b16 %v1348
        %v1453 = vunpack.c.l.b16 %v1352
        %v1454 = vunpack.c.l.b16 %v1355
        %v1455 = vunpack.c.l.b16 %v1359
        %v1456 = vunpack.c.l.b16 %v1362
        %v1457 = vunpack.c.l.b16 %v1366
        %v1458 = vunpack.c.l.b16 %v1369
        %v1459 = vunpack.c.l.b16 %v1373
        %v1460 = vunpack.c.l.b16 %v1376
        %v1461 = vunpack.c.l.b16 %v1380
        %v1462 = vunpack.c.l.b16 %v1383
        %v1463 = vunpack.c.l.b16 %v1387
        %v1464 = vunpack.c.l.b16 %v1390
        %v1465 = vunpack.c.l.b16 %v1394
        %v1466 = vunpack.c.l.b16 %v1397
        %v1467 = vunpack.c.l.b16 %v1401
        %v1468 = vunpack.c.l.b16 %v1404
        %v1469 = vunpack.c.l.b16 %v1408
        %v1470 = vunpack.c.l.b16 %v1411
        %v1471 = vunpack.c.l.b16 %v1415
        %v1472 = vunpack.c.l.b16 %v1418
        %v1473 = vunpack.c.l.b16 %v1422
        %v1474 = vunpack.c.l.b16 %v1425
        %v1475 = vpack.c.b16 %v1444, %v1443
        %v1476 = vpack.c.b16 %v1446, %v1445
        %v1477 = vpack.c.b16 %v1448, %v1447
        %v1478 = vpack.c.b16 %v1450, %v1449
        %v1479 = vpack.c.b16 %v1452, %v1451
        %v1480 = vpack.c.b16 %v1454, %v1453
        %v1481 = vpack.c.b16 %v1456, %v1455
        %v1482 = vpack.c.b16 %v1458, %v1457
        %v1483 = vpack.c.b16 %v1460, %v1459
        %v1484 = vpack.c.b16 %v1462, %v1461
        %v1485 = vpack.c.b16 %v1464, %v1463
        %v1486 = vpack.c.b16 %v1466, %v1465
        %v1487 = vpack.c.b16 %v1468, %v1467
        %v1488 = vpack.c.b16 %v1470, %v1469
        %v1489 = vpack.c.b16 %v1472, %v1471
        %v1490 = vpack.c.b16 %v1474, %v1473
        %v1523 = vunpack.c.l.b16 %v1427
        %v1524 = vunpack.c.l.b16 %v1428
        %v1525 = vunpack.c.l.b16 %v1429
        %v1526 = vunpack.c.l.b16 %v1430
        %v1527 = vunpack.c.l.b16 %v1431
        %v1528 = vunpack.c.l.b16 %v1432
        %v1529 = vunpack.c.l.b16 %v1433
        %v1530 = vunpack.c.l.b16 %v1434
        %v1531 = vunpack.c.l.b16 %v1435
        %v1532 = vunpack.c.l.b16 %v1436
        %v1533 = vunpack.c.l.b16 %v1437
        %v1534 = vunpack.c.l.b16 %v1438
        %v1535 = vunpack.c.l.b16 %v1439
        %v1536 = vunpack.c.l.b16 %v1440
        %v1537 = vunpack.c.l.b16 %v1441
        %v1538 = vunpack.c.l.b16 %v1442
        %v1539 = vpack.c.b16 %v1524, %v1523
        %v1540 = vpack.c.b16 %v1526, %v1525
        %v1541 = vpack.c.b16 %v1528, %v1527
        %v1542 = vpack.c.b16 %v1530, %v1529
        %v1543 = vpack.c.b16 %v1532, %v1531
        %v1544 = vpack.c.b16 %v1534, %v1533
        %v1545 = vpack.c.b16 %v1536, %v1535
        %v1546 = vpack.c.b16 %v1538, %v1537
        %1555 = vmatprep.subr.bf16.mxu0 0
        %1556 = vmatpush1.bf16.msra.mxu0 %v1539
        %1557 = vmatprep.subr.bf16.mxu0 0
        %1558 = vmatpush1.bf16.msra.mxu0 %v1540
        %1559 = vmatprep.subr.bf16.mxu0 0
        %1560 = vmatpush1.bf16.msra.mxu0 %v1541
        %1561 = vmatprep.subr.bf16.mxu0 0
        %1562 = vmatpush1.bf16.msra.mxu0 %v1542
        %1563 = vmatprep.subr.bf16.mxu0 0
        %1564 = vmatpush1.bf16.msra.mxu0 %v1543
        %1565 = vmatprep.subr.bf16.mxu0 0
        %1566 = vmatpush1.bf16.msra.mxu0 %v1544
        %1567 = vmatprep.subr.bf16.mxu0 0
        %1568 = vmatpush1.bf16.msra.mxu0 %v1545
        %1569 = vmatprep.subr.bf16.mxu0 0
        %1570 = vmatpush1.bf16.msra.mxu0 %v1546
        %1571 = vmatprep.subr.bf16.mxu0 0
        %1572 = vmatpush1.bf16.msra.mxu0 0
        %1573 = vmatprep.subr.bf16.mxu0 0
        %1574 = vmatpush1.bf16.msra.mxu0 0
        %1575 = vmatprep.subr.bf16.mxu0 0
        %1576 = vmatpush1.bf16.msra.mxu0 0
        %1577 = vmatprep.subr.bf16.mxu0 0
        %1578 = vmatpush1.bf16.msra.mxu0 0
        %1579 = vmatprep.subr.bf16.mxu0 0
        %1580 = vmatpush1.bf16.msra.mxu0 0
        %1581 = vmatprep.subr.bf16.mxu0 0
        %1582 = vmatpush1.bf16.msra.mxu0 0
        %1583 = vmatprep.subr.bf16.mxu0 0
        %1584 = vmatpush1.bf16.msra.mxu0 0
        %1585 = vmatprep.subr.bf16.mxu0 0
        %1586 = vmatpush1.bf16.msra.mxu0 0
        %1587 = vmatprep.mubr.bf16.mxu0 0
        %1588 = vmatmul.mubr.bf16.gmra.mrb[0].mxu0 %v1475
        %v1589 = vpop.f32.mrb[0].mxu0
        %v1590 = vadd.f32 0.0, %v1589
        %v1591 = vpop.f32.mrb[0].mxu0
        %v1592 = vpop.f32.mrb[0].mxu0
        %v1593 = vadd.f32 0.0, %v1592
        %v1594 = vpop.f32.mrb[0].mxu0
        %1595 = vmatprep.mubr.bf16.mxu0 0
        %1596 = vmatmul.mubr.bf16.gmra.mrb[0].mxu0 %v1476
        %v1597 = vpop.f32.mrb[0].mxu0
        %v1598 = vadd.f32 0.0, %v1597
        %v1599 = vpop.f32.mrb[0].mxu0
        %v1600 = vpop.f32.mrb[0].mxu0
        %v1601 = vadd.f32 0.0, %v1600
        %v1602 = vpop.f32.mrb[0].mxu0
        %1603 = vmatprep.mubr.bf16.mxu0 0
        %1604 = vmatmul.mubr.bf16.gmra.mrb[0].mxu0 %v1477
        %v1605 = vpop.f32.mrb[0].mxu0
        %v1606 = vadd.f32 0.0, %v1605
        %v1607 = vpop.f32.mrb[0].mxu0
        %v1608 = vpop.f32.mrb[0].mxu0
        %v1609 = vadd.f32 0.0, %v1608
        %v1610 = vpop.f32.mrb[0].mxu0
        %1611 = vmatprep.mubr.bf16.mxu0 0
        %1612 = vmatmul.mubr.bf16.gmra.mrb[0].mxu0 %v1478
        %v1613 = vpop.f32.mrb[0].mxu0
        %v1614 = vadd.f32 0.0, %v1613
        %v1615 = vpop.f32.mrb[0].mxu0
        %v1616 = vpop.f32.mrb[0].mxu0
        %v1617 = vadd.f32 0.0, %v1616
        %v1618 = vpop.f32.mrb[0].mxu0
        %1619 = vmatprep.mubr.bf16.mxu0 0
        %1620 = vmatmul.mubr.bf16.gmra.mrb[0].mxu0 %v1479
        %v1621 = vpop.f32.mrb[0].mxu0
        %v1622 = vadd.f32 0.0, %v1621
        %v1623 = vpop.f32.mrb[0].mxu0
        %v1624 = vpop.f32.mrb[0].mxu0
        %v1625 = vadd.f32 0.0, %v1624
        %v1626 = vpop.f32.mrb[0].mxu0
        %1627 = vmatprep.mubr.bf16.mxu0 0
        %1628 = vmatmul.mubr.bf16.gmra.mrb[0].mxu0 %v1480
        %v1629 = vpop.f32.mrb[0].mxu0
        %v1630 = vadd.f32 0.0, %v1629
        %v1631 = vpop.f32.mrb[0].mxu0
        %v1632 = vpop.f32.mrb[0].mxu0
        %v1633 = vadd.f32 0.0, %v1632
        %v1634 = vpop.f32.mrb[0].mxu0
        %1635 = vmatprep.mubr.bf16.mxu0 0
        %1636 = vmatmul.mubr.bf16.gmra.mrb[0].mxu0 %v1481
        %v1637 = vpop.f32.mrb[0].mxu0
        %v1638 = vadd.f32 0.0, %v1637
        %v1639 = vpop.f32.mrb[0].mxu0
        %v1640 = vpop.f32.mrb[0].mxu0
        %v1641 = vadd.f32 0.0, %v1640
        %v1642 = vpop.f32.mrb[0].mxu0
        %1643 = vmatprep.mubr.bf16.mxu0 0
        %1644 = vmatmul.mubr.bf16.gmra.mrb[0].mxu0 %v1482
        %v1645 = vpop.f32.mrb[0].mxu0
        %v1646 = vadd.f32 0.0, %v1645
        %v1647 = vpop.f32.mrb[0].mxu0
        %v1648 = vpop.f32.mrb[0].mxu0
        %v1649 = vadd.f32 0.0, %v1648
        %v1650 = vpop.f32.mrb[0].mxu0
        %1651 = vmatprep.mubr.bf16.mxu0 0
        %1652 = vmatmul.mubr.bf16.gmra.mrb[0].mxu0 %v1483
        %v1653 = vpop.f32.mrb[0].mxu0
        %v1654 = vadd.f32 0.0, %v1653
        %v1655 = vpop.f32.mrb[0].mxu0
        %v1656 = vpop.f32.mrb[0].mxu0
        %v1657 = vadd.f32 0.0, %v1656
        %v1658 = vpop.f32.mrb[0].mxu0
        %1659 = vmatprep.mubr.bf16.mxu0 0
        %1660 = vmatmul.mubr.bf16.gmra.mrb[0].mxu0 %v1484
        %v1661 = vpop.f32.mrb[0].mxu0
        %v1662 = vadd.f32 0.0, %v1661
        %v1663 = vpop.f32.mrb[0].mxu0
        %v1664 = vpop.f32.mrb[0].mxu0
        %v1665 = vadd.f32 0.0, %v1664
        %v1666 = vpop.f32.mrb[0].mxu0
        %1667 = vmatprep.mubr.bf16.mxu0 0
        %1668 = vmatmul.mubr.bf16.gmra.mrb[0].mxu0 %v1485
        %v1669 = vpop.f32.mrb[0].mxu0
        %v1670 = vadd.f32 0.0, %v1669
        %v1671 = vpop.f32.mrb[0].mxu0
        %v1672 = vpop.f32.mrb[0].mxu0
        %v1673 = vadd.f32 0.0, %v1672
        %v1674 = vpop.f32.mrb[0].mxu0
        %1675 = vmatprep.mubr.bf16.mxu0 0
        %1676 = vmatmul.mubr.bf16.gmra.mrb[0].mxu0 %v1486
        %v1677 = vpop.f32.mrb[0].mxu0
        %v1678 = vadd.f32 0.0, %v1677
        %v1679 = vpop.f32.mrb[0].mxu0
        %v1680 = vpop.f32.mrb[0].mxu0
        %v1681 = vadd.f32 0.0, %v1680
        %v1682 = vpop.f32.mrb[0].mxu0
        %1683 = vmatprep.mubr.bf16.mxu0 0
        %1684 = vmatmul.mubr.bf16.gmra.mrb[0].mxu0 %v1487
        %v1685 = vpop.f32.mrb[0].mxu0
        %v1686 = vadd.f32 0.0, %v1685
        %v1687 = vpop.f32.mrb[0].mxu0
        %v1688 = vpop.f32.mrb[0].mxu0
        %v1689 = vadd.f32 0.0, %v1688
        %v1690 = vpop.f32.mrb[0].mxu0
        %1691 = vmatprep.mubr.bf16.mxu0 0
        %1692 = vmatmul.mubr.bf16.gmra.mrb[0].mxu0 %v1488
        %v1693 = vpop.f32.mrb[0].mxu0
        %v1694 = vadd.f32 0.0, %v1693
        %v1695 = vpop.f32.mrb[0].mxu0
        %v1696 = vpop.f32.mrb[0].mxu0
        %v1697 = vadd.f32 0.0, %v1696
        %v1698 = vpop.f32.mrb[0].mxu0
        %1699 = vmatprep.mubr.bf16.mxu0 0
        %1700 = vmatmul.mubr.bf16.gmra.mrb[0].mxu0 %v1489
        %v1701 = vpop.f32.mrb[0].mxu0
        %v1702 = vadd.f32 0.0, %v1701
        %v1703 = vpop.f32.mrb[0].mxu0
        %v1704 = vpop.f32.mrb[0].mxu0
        %v1705 = vadd.f32 0.0, %v1704
        %v1706 = vpop.f32.mrb[0].mxu0
        %1707 = vmatprep.mubr.bf16.mxu0 0
        %1708 = vmatmul.mubr.bf16.gmra.mrb[0].mxu0 %v1490
        %v1709 = vpop.f32.mrb[0].mxu0
        %v1710 = vadd.f32 0.0, %v1709
        %v1711 = vpop.f32.mrb[0].mxu0
        %v1712 = vpop.f32.mrb[0].mxu0
        %v1713 = vadd.f32 0.0, %v1712
        %v1714 = vpop.f32.mrb[0].mxu0
        %1715 = vdwg.mxu0
        %v1716 = vadd.f32 %v1137, %v1590
        %v1717 = vadd.f32 %v1140, %v1593
        %v1718 = vadd.f32 %v1145, %v1598
        %v1719 = vadd.f32 %v1148, %v1601
        %v1720 = vadd.f32 %v1153, %v1606
        %v1721 = vadd.f32 %v1156, %v1609
        %v1722 = vadd.f32 %v1161, %v1614
        %v1723 = vadd.f32 %v1164, %v1617
        %v1724 = vadd.f32 %v1169, %v1622
        %v1725 = vadd.f32 %v1172, %v1625
        %v1726 = vadd.f32 %v1177, %v1630
        %v1727 = vadd.f32 %v1180, %v1633
        %v1728 = vadd.f32 %v1185, %v1638
        %v1729 = vadd.f32 %v1188, %v1641
        %v1730 = vadd.f32 %v1193, %v1646
        %v1731 = vadd.f32 %v1196, %v1649
        %v1732 = vadd.f32 %v1201, %v1654
        %v1733 = vadd.f32 %v1204, %v1657
        %v1734 = vadd.f32 %v1209, %v1662
        %v1735 = vadd.f32 %v1212, %v1665
        %v1736 = vadd.f32 %v1217, %v1670
        %v1737 = vadd.f32 %v1220, %v1673
        %v1738 = vadd.f32 %v1225, %v1678
        %v1739 = vadd.f32 %v1228, %v1681
        %v1740 = vadd.f32 %v1233, %v1686
        %v1741 = vadd.f32 %v1236, %v1689
        %v1742 = vadd.f32 %v1241, %v1694
        %v1743 = vadd.f32 %v1244, %v1697
        %v1744 = vadd.f32 %v1249, %v1702
        %v1745 = vadd.f32 %v1252, %v1705
        %v1746 = vadd.f32 %v1257, %v1710
        %v1747 = vadd.f32 %v1260, %v1713
        %s1748 = scalar_lea.vmem %s210, 12
        %v1749 = vld [vmem:[%s1748] sm:$0xf]
        %v1750 = vld [vmem:[%s1748 + $0x4] sm:$0xf]
        %v1751 = vld [vmem:[%s1748 + $0xc] sm:$0xf]
        %v1752 = vld [vmem:[%s1748 + $0x10] sm:$0xf]
        %v1753 = vld [vmem:[%s1748 + $0x18] sm:$0xf]
        %v1754 = vld [vmem:[%s1748 + $0x1c] sm:$0xf]
        %v1755 = vld [vmem:[%s1748 + $0x24] sm:$0xf]
        %v1756 = vld [vmem:[%s1748 + $0x28] sm:$0xf]
        %v1757 = vld [vmem:[%s1748 + $0x30] sm:$0xf]
        %v1758 = vld [vmem:[%s1748 + $0x34] sm:$0xf]
        %v1759 = vld [vmem:[%s1748 + $0x3c] sm:$0xf]
        %v1760 = vld [vmem:[%s1748 + $0x40] sm:$0xf]
        %v1761 = vld [vmem:[%s1748 + $0x48] sm:$0xf]
        %v1762 = vld [vmem:[%s1748 + $0x4c] sm:$0xf]
        %v1763 = vld [vmem:[%s1748 + $0x54] sm:$0xf]
        %v1764 = vld [vmem:[%s1748 + $0x58] sm:$0xf]
        %v1765 = vld [vmem:[%s1748 + $0x60] sm:$0xf]
        %v1766 = vld [vmem:[%s1748 + $0x64] sm:$0xf]
        %v1767 = vld [vmem:[%s1748 + $0x6c] sm:$0xf]
        %v1768 = vld [vmem:[%s1748 + $0x70] sm:$0xf]
        %v1769 = vld [vmem:[%s1748 + $0x78] sm:$0xf]
        %v1770 = vld [vmem:[%s1748 + $0x7c] sm:$0xf]
        %v1771 = vld [vmem:[%s1748 + $0x84] sm:$0xf]
        %v1772 = vld [vmem:[%s1748 + $0x88] sm:$0xf]
        %v1773 = vld [vmem:[%s1748 + $0x90] sm:$0xf]
        %v1774 = vld [vmem:[%s1748 + $0x94] sm:$0xf]
        %v1775 = vld [vmem:[%s1748 + $0x9c] sm:$0xf]
        %v1776 = vld [vmem:[%s1748 + $0xa0] sm:$0xf]
        %v1777 = vld [vmem:[%s1748 + $0xa8] sm:$0xf]
        %v1778 = vld [vmem:[%s1748 + $0xac] sm:$0xf]
        %v1779 = vld [vmem:[%s1748 + $0xb4] sm:$0xf]
        %v1780 = vld [vmem:[%s1748 + $0xb8] sm:$0xf]
        %s1781 = scalar_lea.vmem %s1, 192
        %v1782 = vld [vmem:[%s1781] sm:$0xf]
        %v1783 = vld [vmem:[%s1781 + $0x4] sm:$0xf]
        %v1784 = vld [vmem:[%s1781 + $0x8] sm:$0xf]
        %v1785 = vld [vmem:[%s1781 + $0xc] sm:$0xf]
        %v1786 = vld [vmem:[%s1781 + $0x10] sm:$0xf]
        %v1787 = vld [vmem:[%s1781 + $0x14] sm:$0xf]
        %v1788 = vld [vmem:[%s1781 + $0x18] sm:$0xf]
        %v1789 = vld [vmem:[%s1781 + $0x1c] sm:$0xf]
        %v1790 = vld [vmem:[%s1781 + $0x20] sm:$0xf]
        %v1791 = vld [vmem:[%s1781 + $0x24] sm:$0xf]
        %v1792 = vld [vmem:[%s1781 + $0x28] sm:$0xf]
        %v1793 = vld [vmem:[%s1781 + $0x2c] sm:$0xf]
        %v1794 = vld [vmem:[%s1781 + $0x30] sm:$0xf]
        %v1795 = vld [vmem:[%s1781 + $0x34] sm:$0xf]
        %v1796 = vld [vmem:[%s1781 + $0x38] sm:$0xf]
        %v1797 = vld [vmem:[%s1781 + $0x3c] sm:$0xf]
        %v1830 = vunpack.c.l.b16 %v1749
        %v1831 = vunpack.c.l.b16 %v1750
        %v1832 = vunpack.c.l.b16 %v1751
        %v1833 = vunpack.c.l.b16 %v1752
        %v1834 = vunpack.c.l.b16 %v1753
        %v1835 = vunpack.c.l.b16 %v1754
        %v1836 = vunpack.c.l.b16 %v1755
        %v1837 = vunpack.c.l.b16 %v1756
        %v1838 = vunpack.c.l.b16 %v1757
        %v1839 = vunpack.c.l.b16 %v1758
        %v1840 = vunpack.c.l.b16 %v1759
        %v1841 = vunpack.c.l.b16 %v1760
        %v1842 = vunpack.c.l.b16 %v1761
        %v1843 = vunpack.c.l.b16 %v1762
        %v1844 = vunpack.c.l.b16 %v1763
        %v1845 = vunpack.c.l.b16 %v1764
        %v1846 = vunpack.c.l.b16 %v1765
        %v1847 = vunpack.c.l.b16 %v1766
        %v1848 = vunpack.c.l.b16 %v1767
        %v1849 = vunpack.c.l.b16 %v1768
        %v1850 = vunpack.c.l.b16 %v1769
        %v1851 = vunpack.c.l.b16 %v1770
        %v1852 = vunpack.c.l.b16 %v1771
        %v1853 = vunpack.c.l.b16 %v1772
        %v1854 = vunpack.c.l.b16 %v1773
        %v1855 = vunpack.c.l.b16 %v1774
        %v1856 = vunpack.c.l.b16 %v1775
        %v1857 = vunpack.c.l.b16 %v1776
        %v1858 = vunpack.c.l.b16 %v1777
        %v1859 = vunpack.c.l.b16 %v1778
        %v1860 = vunpack.c.l.b16 %v1779
        %v1861 = vunpack.c.l.b16 %v1780
        %v1862 = vpack.c.b16 %v1831, %v1830
        %v1863 = vpack.c.b16 %v1833, %v1832
        %v1864 = vpack.c.b16 %v1835, %v1834
        %v1865 = vpack.c.b16 %v1837, %v1836
        %v1866 = vpack.c.b16 %v1839, %v1838
        %v1867 = vpack.c.b16 %v1841, %v1840
        %v1868 = vpack.c.b16 %v1843, %v1842
        %v1869 = vpack.c.b16 %v1845, %v1844
        %v1870 = vpack.c.b16 %v1847, %v1846
        %v1871 = vpack.c.b16 %v1849, %v1848
        %v1872 = vpack.c.b16 %v1851, %v1850
        %v1873 = vpack.c.b16 %v1853, %v1852
        %v1874 = vpack.c.b16 %v1855, %v1854
        %v1875 = vpack.c.b16 %v1857, %v1856
        %v1876 = vpack.c.b16 %v1859, %v1858
        %v1877 = vpack.c.b16 %v1861, %v1860
        %v1910 = vunpack.c.l.b16 %v1782
        %v1911 = vunpack.c.l.b16 %v1783
        %v1912 = vunpack.c.l.b16 %v1784
        %v1913 = vunpack.c.l.b16 %v1785
        %v1914 = vunpack.c.l.b16 %v1786
        %v1915 = vunpack.c.l.b16 %v1787
        %v1916 = vunpack.c.l.b16 %v1788
        %v1917 = vunpack.c.l.b16 %v1789
        %v1918 = vunpack.c.l.b16 %v1790
        %v1919 = vunpack.c.l.b16 %v1791
        %v1920 = vunpack.c.l.b16 %v1792
        %v1921 = vunpack.c.l.b16 %v1793
        %v1922 = vunpack.c.l.b16 %v1794
        %v1923 = vunpack.c.l.b16 %v1795
        %v1924 = vunpack.c.l.b16 %v1796
        %v1925 = vunpack.c.l.b16 %v1797
        %v1926 = vpack.c.b16 %v1911, %v1910
        %v1927 = vpack.c.b16 %v1913, %v1912
        %v1928 = vpack.c.b16 %v1915, %v1914
        %v1929 = vpack.c.b16 %v1917, %v1916
        %v1930 = vpack.c.b16 %v1919, %v1918
        %v1931 = vpack.c.b16 %v1921, %v1920
        %v1932 = vpack.c.b16 %v1923, %v1922
        %v1933 = vpack.c.b16 %v1925, %v1924
        %1942 = vmatprep.subr.bf16.mxu0 0
        %1943 = vmatpush1.bf16.msra.mxu0 %v1926
        %1944 = vmatprep.subr.bf16.mxu0 0
        %1945 = vmatpush1.bf16.msra.mxu0 %v1927
        %1946 = vmatprep.subr.bf16.mxu0 0
        %1947 = vmatpush1.bf16.msra.mxu0 %v1928
        %1948 = vmatprep.subr.bf16.mxu0 0
        %1949 = vmatpush1.bf16.msra.mxu0 %v1929
        %1950 = vmatprep.subr.bf16.mxu0 0
        %1951 = vmatpush1.bf16.msra.mxu0 %v1930
        %1952 = vmatprep.subr.bf16.mxu0 0
        %1953 = vmatpush1.bf16.msra.mxu0 %v1931
        %1954 = vmatprep.subr.bf16.mxu0 0
        %1955 = vmatpush1.bf16.msra.mxu0 %v1932
        %1956 = vmatprep.subr.bf16.mxu0 0
        %1957 = vmatpush1.bf16.msra.mxu0 %v1933
        %1958 = vmatprep.subr.bf16.mxu0 0
        %1959 = vmatpush1.bf16.msra.mxu0 0
        %1960 = vmatprep.subr.bf16.mxu0 0
        %1961 = vmatpush1.bf16.msra.mxu0 0
        %1962 = vmatprep.subr.bf16.mxu0 0
        %1963 = vmatpush1.bf16.msra.mxu0 0
        %1964 = vmatprep.subr.bf16.mxu0 0
        %1965 = vmatpush1.bf16.msra.mxu0 0
        %1966 = vmatprep.subr.bf16.mxu0 0
        %1967 = vmatpush1.bf16.msra.mxu0 0
        %1968 = vmatprep.subr.bf16.mxu0 0
        %1969 = vmatpush1.bf16.msra.mxu0 0
        %1970 = vmatprep.subr.bf16.mxu0 0
        %1971 = vmatpush1.bf16.msra.mxu0 0
        %1972 = vmatprep.subr.bf16.mxu0 0
        %1973 = vmatpush1.bf16.msra.mxu0 0
        %1974 = vmatprep.mubr.bf16.mxu0 0
        %1975 = vmatmul.mubr.bf16.gmra.mrb[0].mxu0 %v1862
        %v1976 = vpop.f32.mrb[0].mxu0
        %v1977 = vadd.f32 0.0, %v1976
        %v1978 = vpop.f32.mrb[0].mxu0
        %v1979 = vpop.f32.mrb[0].mxu0
        %v1980 = vadd.f32 0.0, %v1979
        %v1981 = vpop.f32.mrb[0].mxu0
        %1982 = vmatprep.mubr.bf16.mxu0 0
        %1983 = vmatmul.mubr.bf16.gmra.mrb[0].mxu0 %v1863
        %v1984 = vpop.f32.mrb[0].mxu0
        %v1985 = vadd.f32 0.0, %v1984
        %v1986 = vpop.f32.mrb[0].mxu0
        %v1987 = vpop.f32.mrb[0].mxu0
        %v1988 = vadd.f32 0.0, %v1987
        %v1989 = vpop.f32.mrb[0].mxu0
        %1990 = vmatprep.mubr.bf16.mxu0 0
        %1991 = vmatmul.mubr.bf16.gmra.mrb[0].mxu0 %v1864
        %v1992 = vpop.f32.mrb[0].mxu0
        %v1993 = vadd.f32 0.0, %v1992
        %v1994 = vpop.f32.mrb[0].mxu0
        %v1995 = vpop.f32.mrb[0].mxu0
        %v1996 = vadd.f32 0.0, %v1995
        %v1997 = vpop.f32.mrb[0].mxu0
        %1998 = vmatprep.mubr.bf16.mxu0 0
        %1999 = vmatmul.mubr.bf16.gmra.mrb[0].mxu0 %v1865
        %v2000 = vpop.f32.mrb[0].mxu0
        %v2001 = vadd.f32 0.0, %v2000
        %v2002 = vpop.f32.mrb[0].mxu0
        %v2003 = vpop.f32.mrb[0].mxu0
        %v2004 = vadd.f32 0.0, %v2003
        %v2005 = vpop.f32.mrb[0].mxu0
        %2006 = vmatprep.mubr.bf16.mxu0 0
        %2007 = vmatmul.mubr.bf16.gmra.mrb[0].mxu0 %v1866
        %v2008 = vpop.f32.mrb[0].mxu0
        %v2009 = vadd.f32 0.0, %v2008
        %v2010 = vpop.f32.mrb[0].mxu0
        %v2011 = vpop.f32.mrb[0].mxu0
        %v2012 = vadd.f32 0.0, %v2011
        %v2013 = vpop.f32.mrb[0].mxu0
        %2014 = vmatprep.mubr.bf16.mxu0 0
        %2015 = vmatmul.mubr.bf16.gmra.mrb[0].mxu0 %v1867
        %v2016 = vpop.f32.mrb[0].mxu0
        %v2017 = vadd.f32 0.0, %v2016
        %v2018 = vpop.f32.mrb[0].mxu0
        %v2019 = vpop.f32.mrb[0].mxu0
        %v2020 = vadd.f32 0.0, %v2019
        %v2021 = vpop.f32.mrb[0].mxu0
        %2022 = vmatprep.mubr.bf16.mxu0 0
        %2023 = vmatmul.mubr.bf16.gmra.mrb[0].mxu0 %v1868
        %v2024 = vpop.f32.mrb[0].mxu0
        %v2025 = vadd.f32 0.0, %v2024
        %v2026 = vpop.f32.mrb[0].mxu0
        %v2027 = vpop.f32.mrb[0].mxu0
        %v2028 = vadd.f32 0.0, %v2027
        %v2029 = vpop.f32.mrb[0].mxu0
        %2030 = vmatprep.mubr.bf16.mxu0 0
        %2031 = vmatmul.mubr.bf16.gmra.mrb[0].mxu0 %v1869
        %v2032 = vpop.f32.mrb[0].mxu0
        %v2033 = vadd.f32 0.0, %v2032
        %v2034 = vpop.f32.mrb[0].mxu0
        %v2035 = vpop.f32.mrb[0].mxu0
        %v2036 = vadd.f32 0.0, %v2035
        %v2037 = vpop.f32.mrb[0].mxu0
        %2038 = vmatprep.mubr.bf16.mxu0 0
        %2039 = vmatmul.mubr.bf16.gmra.mrb[0].mxu0 %v1870
        %v2040 = vpop.f32.mrb[0].mxu0
        %v2041 = vadd.f32 0.0, %v2040
        %v2042 = vpop.f32.mrb[0].mxu0
        %v2043 = vpop.f32.mrb[0].mxu0
        %v2044 = vadd.f32 0.0, %v2043
        %v2045 = vpop.f32.mrb[0].mxu0
        %2046 = vmatprep.mubr.bf16.mxu0 0
        %2047 = vmatmul.mubr.bf16.gmra.mrb[0].mxu0 %v1871
        %v2048 = vpop.f32.mrb[0].mxu0
        %v2049 = vadd.f32 0.0, %v2048
        %v2050 = vpop.f32.mrb[0].mxu0
        %v2051 = vpop.f32.mrb[0].mxu0
        %v2052 = vadd.f32 0.0, %v2051
        %v2053 = vpop.f32.mrb[0].mxu0
        %2054 = vmatprep.mubr.bf16.mxu0 0
        %2055 = vmatmul.mubr.bf16.gmra.mrb[0].mxu0 %v1872
        %v2056 = vpop.f32.mrb[0].mxu0
        %v2057 = vadd.f32 0.0, %v2056
        %v2058 = vpop.f32.mrb[0].mxu0
        %v2059 = vpop.f32.mrb[0].mxu0
        %v2060 = vadd.f32 0.0, %v2059
        %v2061 = vpop.f32.mrb[0].mxu0
        %2062 = vmatprep.mubr.bf16.mxu0 0
        %2063 = vmatmul.mubr.bf16.gmra.mrb[0].mxu0 %v1873
        %v2064 = vpop.f32.mrb[0].mxu0
        %v2065 = vadd.f32 0.0, %v2064
        %v2066 = vpop.f32.mrb[0].mxu0
        %v2067 = vpop.f32.mrb[0].mxu0
        %v2068 = vadd.f32 0.0, %v2067
        %v2069 = vpop.f32.mrb[0].mxu0
        %2070 = vmatprep.mubr.bf16.mxu0 0
        %2071 = vmatmul.mubr.bf16.gmra.mrb[0].mxu0 %v1874
        %v2072 = vpop.f32.mrb[0].mxu0
        %v2073 = vadd.f32 0.0, %v2072
        %v2074 = vpop.f32.mrb[0].mxu0
        %v2075 = vpop.f32.mrb[0].mxu0
        %v2076 = vadd.f32 0.0, %v2075
        %v2077 = vpop.f32.mrb[0].mxu0
        %2078 = vmatprep.mubr.bf16.mxu0 0
        %2079 = vmatmul.mubr.bf16.gmra.mrb[0].mxu0 %v1875
        %v2080 = vpop.f32.mrb[0].mxu0
        %v2081 = vadd.f32 0.0, %v2080
        %v2082 = vpop.f32.mrb[0].mxu0
        %v2083 = vpop.f32.mrb[0].mxu0
        %v2084 = vadd.f32 0.0, %v2083
        %v2085 = vpop.f32.mrb[0].mxu0
        %2086 = vmatprep.mubr.bf16.mxu0 0
        %2087 = vmatmul.mubr.bf16.gmra.mrb[0].mxu0 %v1876
        %v2088 = vpop.f32.mrb[0].mxu0
        %v2089 = vadd.f32 0.0, %v2088
        %v2090 = vpop.f32.mrb[0].mxu0
        %v2091 = vpop.f32.mrb[0].mxu0
        %v2092 = vadd.f32 0.0, %v2091
        %v2093 = vpop.f32.mrb[0].mxu0
        %2094 = vmatprep.mubr.bf16.mxu0 0
        %2095 = vmatmul.mubr.bf16.gmra.mrb[0].mxu0 %v1877
        %v2096 = vpop.f32.mrb[0].mxu0
        %v2097 = vadd.f32 0.0, %v2096
        %v2098 = vpop.f32.mrb[0].mxu0
        %v2099 = vpop.f32.mrb[0].mxu0
        %v2100 = vadd.f32 0.0, %v2099
        %v2101 = vpop.f32.mrb[0].mxu0
        %2102 = vdwg.mxu0
        %v2103 = vadd.f32 %v1716, %v1977
        %v2104 = vadd.f32 %v1717, %v1980
        %v2105 = vadd.f32 %v1718, %v1985
        %v2106 = vadd.f32 %v1719, %v1988
        %v2107 = vadd.f32 %v1720, %v1993
        %v2108 = vadd.f32 %v1721, %v1996
        %v2109 = vadd.f32 %v1722, %v2001
        %v2110 = vadd.f32 %v1723, %v2004
        %v2111 = vadd.f32 %v1724, %v2009
        %v2112 = vadd.f32 %v1725, %v2012
        %v2113 = vadd.f32 %v1726, %v2017
        %v2114 = vadd.f32 %v1727, %v2020
        %v2115 = vadd.f32 %v1728, %v2025
        %v2116 = vadd.f32 %v1729, %v2028
        %v2117 = vadd.f32 %v1730, %v2033
        %v2118 = vadd.f32 %v1731, %v2036
        %v2119 = vadd.f32 %v1732, %v2041
        %v2120 = vadd.f32 %v1733, %v2044
        %v2121 = vadd.f32 %v1734, %v2049
        %v2122 = vadd.f32 %v1735, %v2052
        %v2123 = vadd.f32 %v1736, %v2057
        %v2124 = vadd.f32 %v1737, %v2060
        %v2125 = vadd.f32 %v1738, %v2065
        %v2126 = vadd.f32 %v1739, %v2068
        %v2127 = vadd.f32 %v1740, %v2073
        %v2128 = vadd.f32 %v1741, %v2076
        %v2129 = vadd.f32 %v1742, %v2081
        %v2130 = vadd.f32 %v1743, %v2084
        %v2131 = vadd.f32 %v1744, %v2089
        %v2132 = vadd.f32 %v1745, %v2092
        %v2133 = vadd.f32 %v1746, %v2097
        %v2134 = vadd.f32 %v1747, %v2100
        %v2135 = vld [vmem:[%s1748] sm:$0xf]
        %v2136 = vld [vmem:[%s1748 + $0x4] sm:$0xf]
        %v2137 = vld [vmem:[%s1748 + $0x8] sm:$0x1]
        %v2138 = vld [vmem:[%s1748 + $0xc] sm:$0xf]
        %v2139 = vld [vmem:[%s1748 + $0x10] sm:$0xf]
        %v2140 = vld [vmem:[%s1748 + $0x14] sm:$0x1]
        %v2141 = vld [vmem:[%s1748 + $0x18] sm:$0xf]
        %v2142 = vld [vmem:[%s1748 + $0x1c] sm:$0xf]
        %v2143 = vld [vmem:[%s1748 + $0x20] sm:$0x1]
        %v2144 = vld [vmem:[%s1748 + $0x24] sm:$0xf]
        %v2145 = vld [vmem:[%s1748 + $0x28] sm:$0xf]
        %v2146 = vld [vmem:[%s1748 + $0x2c] sm:$0x1]
        %v2147 = vld [vmem:[%s1748 + $0x30] sm:$0xf]
        %v2148 = vld [vmem:[%s1748 + $0x34] sm:$0xf]
        %v2149 = vld [vmem:[%s1748 + $0x38] sm:$0x1]
        %v2150 = vld [vmem:[%s1748 + $0x3c] sm:$0xf]
        %v2151 = vld [vmem:[%s1748 + $0x40] sm:$0xf]
        %v2152 = vld [vmem:[%s1748 + $0x44] sm:$0x1]
        %v2153 = vld [vmem:[%s1748 + $0x48] sm:$0xf]
        %v2154 = vld [vmem:[%s1748 + $0x4c] sm:$0xf]
        %v2155 = vld [vmem:[%s1748 + $0x50] sm:$0x1]
        %v2156 = vld [vmem:[%s1748 + $0x54] sm:$0xf]
        %v2157 = vld [vmem:[%s1748 + $0x58] sm:$0xf]
        %v2158 = vld [vmem:[%s1748 + $0x5c] sm:$0x1]
        %v2159 = vld [vmem:[%s1748 + $0x60] sm:$0xf]
        %v2160 = vld [vmem:[%s1748 + $0x64] sm:$0xf]
        %v2161 = vld [vmem:[%s1748 + $0x68] sm:$0x1]
        %v2162 = vld [vmem:[%s1748 + $0x6c] sm:$0xf]
        %v2163 = vld [vmem:[%s1748 + $0x70] sm:$0xf]
        %v2164 = vld [vmem:[%s1748 + $0x74] sm:$0x1]
        %v2165 = vld [vmem:[%s1748 + $0x78] sm:$0xf]
        %v2166 = vld [vmem:[%s1748 + $0x7c] sm:$0xf]
        %v2167 = vld [vmem:[%s1748 + $0x80] sm:$0x1]
        %v2168 = vld [vmem:[%s1748 + $0x84] sm:$0xf]
        %v2169 = vld [vmem:[%s1748 + $0x88] sm:$0xf]
        %v2170 = vld [vmem:[%s1748 + $0x8c] sm:$0x1]
        %v2171 = vld [vmem:[%s1748 + $0x90] sm:$0xf]
        %v2172 = vld [vmem:[%s1748 + $0x94] sm:$0xf]
        %v2173 = vld [vmem:[%s1748 + $0x98] sm:$0x1]
        %v2174 = vld [vmem:[%s1748 + $0x9c] sm:$0xf]
        %v2175 = vld [vmem:[%s1748 + $0xa0] sm:$0xf]
        %v2176 = vld [vmem:[%s1748 + $0xa4] sm:$0x1]
        %v2177 = vld [vmem:[%s1748 + $0xa8] sm:$0xf]
        %v2178 = vld [vmem:[%s1748 + $0xac] sm:$0xf]
        %v2179 = vld [vmem:[%s1748 + $0xb0] sm:$0x1]
        %v2180 = vld [vmem:[%s1748 + $0xb4] sm:$0xf]
        %v2181 = vld [vmem:[%s1748 + $0xb8] sm:$0xf]
        %v2182 = vld [vmem:[%s1748 + $0xbc] sm:$0x1]
        %v2184 = vshrl.u32 %v2135, 16
        %v2186 = vrot.slane %v2184, 4
        %v2187 = vshll.u32 %v2135, 16
        %v2189 = vrot.slane %v2187, 5
        %v2190 = vor.u32 %v2186, %v2189
        %v2191 = vrot.slane %v2190, 4
        %v2193 = vshll.u32 %v2136, 16
        %v2195 = vrot.slane %v2193, 5
        %v2196 = vsel %vm283, %v2191, %v2195
        %v2197 = vshrl.u32 %v2136, 16
        %v2199 = vrot.slane %v2197, 4
        %v2200 = vor.u32 %v2199, %v2195
        %v2201 = vrot.slane %v2200, 4
        %v2203 = vshll.u32 %v2137, 16
        %v2205 = vrot.slane %v2203, 5
        %v2206 = vsel %vm283, %v2201, %v2205
        %v2208 = vshrl.u32 %v2138, 16
        %v2210 = vrot.slane %v2208, 4
        %v2211 = vshll.u32 %v2138, 16
        %v2213 = vrot.slane %v2211, 5
        %v2214 = vor.u32 %v2210, %v2213
        %v2215 = vrot.slane %v2214, 4
        %v2217 = vshll.u32 %v2139, 16
        %v2219 = vrot.slane %v2217, 5
        %v2220 = vsel %vm283, %v2215, %v2219
        %v2221 = vshrl.u32 %v2139, 16
        %v2223 = vrot.slane %v2221, 4
        %v2224 = vor.u32 %v2223, %v2219
        %v2225 = vrot.slane %v2224, 4
        %v2227 = vshll.u32 %v2140, 16
        %v2229 = vrot.slane %v2227, 5
        %v2230 = vsel %vm283, %v2225, %v2229
        %v2232 = vshrl.u32 %v2141, 16
        %v2234 = vrot.slane %v2232, 4
        %v2235 = vshll.u32 %v2141, 16
        %v2237 = vrot.slane %v2235, 5
        %v2238 = vor.u32 %v2234, %v2237
        %v2239 = vrot.slane %v2238, 4
        %v2241 = vshll.u32 %v2142, 16
        %v2243 = vrot.slane %v2241, 5
        %v2244 = vsel %vm283, %v2239, %v2243
        %v2245 = vshrl.u32 %v2142, 16
        %v2247 = vrot.slane %v2245, 4
        %v2248 = vor.u32 %v2247, %v2243
        %v2249 = vrot.slane %v2248, 4
        %v2251 = vshll.u32 %v2143, 16
        %v2253 = vrot.slane %v2251, 5
        %v2254 = vsel %vm283, %v2249, %v2253
        %v2256 = vshrl.u32 %v2144, 16
        %v2258 = vrot.slane %v2256, 4
        %v2259 = vshll.u32 %v2144, 16
        %v2261 = vrot.slane %v2259, 5
        %v2262 = vor.u32 %v2258, %v2261
        %v2263 = vrot.slane %v2262, 4
        %v2265 = vshll.u32 %v2145, 16
        %v2267 = vrot.slane %v2265, 5
        %v2268 = vsel %vm283, %v2263, %v2267
        %v2269 = vshrl.u32 %v2145, 16
        %v2271 = vrot.slane %v2269, 4
        %v2272 = vor.u32 %v2271, %v2267
        %v2273 = vrot.slane %v2272, 4
        %v2275 = vshll.u32 %v2146, 16
        %v2277 = vrot.slane %v2275, 5
        %v2278 = vsel %vm283, %v2273, %v2277
        %v2280 = vshrl.u32 %v2147, 16
        %v2282 = vrot.slane %v2280, 4
        %v2283 = vshll.u32 %v2147, 16
        %v2285 = vrot.slane %v2283, 5
        %v2286 = vor.u32 %v2282, %v2285
        %v2287 = vrot.slane %v2286, 4
        %v2289 = vshll.u32 %v2148, 16
        %v2291 = vrot.slane %v2289, 5
        %v2292 = vsel %vm283, %v2287, %v2291
        %v2293 = vshrl.u32 %v2148, 16
        %v2295 = vrot.slane %v2293, 4
        %v2296 = vor.u32 %v2295, %v2291
        %v2297 = vrot.slane %v2296, 4
        %v2299 = vshll.u32 %v2149, 16
        %v2301 = vrot.slane %v2299, 5
        %v2302 = vsel %vm283, %v2297, %v2301
        %v2304 = vshrl.u32 %v2150, 16
        %v2306 = vrot.slane %v2304, 4
        %v2307 = vshll.u32 %v2150, 16
        %v2309 = vrot.slane %v2307, 5
        %v2310 = vor.u32 %v2306, %v2309
        %v2311 = vrot.slane %v2310, 4
        %v2313 = vshll.u32 %v2151, 16
        %v2315 = vrot.slane %v2313, 5
        %v2316 = vsel %vm283, %v2311, %v2315
        %v2317 = vshrl.u32 %v2151, 16
        %v2319 = vrot.slane %v2317, 4
        %v2320 = vor.u32 %v2319, %v2315
        %v2321 = vrot.slane %v2320, 4
        %v2323 = vshll.u32 %v2152, 16
        %v2325 = vrot.slane %v2323, 5
        %v2326 = vsel %vm283, %v2321, %v2325
        %v2328 = vshrl.u32 %v2153, 16
        %v2330 = vrot.slane %v2328, 4
        %v2331 = vshll.u32 %v2153, 16
        %v2333 = vrot.slane %v2331, 5
        %v2334 = vor.u32 %v2330, %v2333
        %v2335 = vrot.slane %v2334, 4
        %v2337 = vshll.u32 %v2154, 16
        %v2339 = vrot.slane %v2337, 5
        %v2340 = vsel %vm283, %v2335, %v2339
        %v2341 = vshrl.u32 %v2154, 16
        %v2343 = vrot.slane %v2341, 4
        %v2344 = vor.u32 %v2343, %v2339
        %v2345 = vrot.slane %v2344, 4
        %v2347 = vshll.u32 %v2155, 16
        %v2349 = vrot.slane %v2347, 5
        %v2350 = vsel %vm283, %v2345, %v2349
        %v2352 = vshrl.u32 %v2156, 16
        %v2354 = vrot.slane %v2352, 4
        %v2355 = vshll.u32 %v2156, 16
        %v2357 = vrot.slane %v2355, 5
        %v2358 = vor.u32 %v2354, %v2357
        %v2359 = vrot.slane %v2358, 4
        %v2361 = vshll.u32 %v2157, 16
        %v2363 = vrot.slane %v2361, 5
        %v2364 = vsel %vm283, %v2359, %v2363
        %v2365 = vshrl.u32 %v2157, 16
        %v2367 = vrot.slane %v2365, 4
        %v2368 = vor.u32 %v2367, %v2363
        %v2369 = vrot.slane %v2368, 4
        %v2371 = vshll.u32 %v2158, 16
        %v2373 = vrot.slane %v2371, 5
        %v2374 = vsel %vm283, %v2369, %v2373
        %v2376 = vshrl.u32 %v2159, 16
        %v2378 = vrot.slane %v2376, 4
        %v2379 = vshll.u32 %v2159, 16
        %v2381 = vrot.slane %v2379, 5
        %v2382 = vor.u32 %v2378, %v2381
        %v2383 = vrot.slane %v2382, 4
        %v2385 = vshll.u32 %v2160, 16
        %v2387 = vrot.slane %v2385, 5
        %v2388 = vsel %vm283, %v2383, %v2387
        %v2389 = vshrl.u32 %v2160, 16
        %v2391 = vrot.slane %v2389, 4
        %v2392 = vor.u32 %v2391, %v2387
        %v2393 = vrot.slane %v2392, 4
        %v2395 = vshll.u32 %v2161, 16
        %v2397 = vrot.slane %v2395, 5
        %v2398 = vsel %vm283, %v2393, %v2397
        %v2400 = vshrl.u32 %v2162, 16
        %v2402 = vrot.slane %v2400, 4
        %v2403 = vshll.u32 %v2162, 16
        %v2405 = vrot.slane %v2403, 5
        %v2406 = vor.u32 %v2402, %v2405
        %v2407 = vrot.slane %v2406, 4
        %v2409 = vshll.u32 %v2163, 16
        %v2411 = vrot.slane %v2409, 5
        %v2412 = vsel %vm283, %v2407, %v2411
        %v2413 = vshrl.u32 %v2163, 16
        %v2415 = vrot.slane %v2413, 4
        %v2416 = vor.u32 %v2415, %v2411
        %v2417 = vrot.slane %v2416, 4
        %v2419 = vshll.u32 %v2164, 16
        %v2421 = vrot.slane %v2419, 5
        %v2422 = vsel %vm283, %v2417, %v2421
        %v2424 = vshrl.u32 %v2165, 16
        %v2426 = vrot.slane %v2424, 4
        %v2427 = vshll.u32 %v2165, 16
        %v2429 = vrot.slane %v2427, 5
        %v2430 = vor.u32 %v2426, %v2429
        %v2431 = vrot.slane %v2430, 4
        %v2433 = vshll.u32 %v2166, 16
        %v2435 = vrot.slane %v2433, 5
        %v2436 = vsel %vm283, %v2431, %v2435
        %v2437 = vshrl.u32 %v2166, 16
        %v2439 = vrot.slane %v2437, 4
        %v2440 = vor.u32 %v2439, %v2435
        %v2441 = vrot.slane %v2440, 4
        %v2443 = vshll.u32 %v2167, 16
        %v2445 = vrot.slane %v2443, 5
        %v2446 = vsel %vm283, %v2441, %v2445
        %v2448 = vshrl.u32 %v2168, 16
        %v2450 = vrot.slane %v2448, 4
        %v2451 = vshll.u32 %v2168, 16
        %v2453 = vrot.slane %v2451, 5
        %v2454 = vor.u32 %v2450, %v2453
        %v2455 = vrot.slane %v2454, 4
        %v2457 = vshll.u32 %v2169, 16
        %v2459 = vrot.slane %v2457, 5
        %v2460 = vsel %vm283, %v2455, %v2459
        %v2461 = vshrl.u32 %v2169, 16
        %v2463 = vrot.slane %v2461, 4
        %v2464 = vor.u32 %v2463, %v2459
        %v2465 = vrot.slane %v2464, 4
        %v2467 = vshll.u32 %v2170, 16
        %v2469 = vrot.slane %v2467, 5
        %v2470 = vsel %vm283, %v2465, %v2469
        %v2472 = vshrl.u32 %v2171, 16
        %v2474 = vrot.slane %v2472, 4
        %v2475 = vshll.u32 %v2171, 16
        %v2477 = vrot.slane %v2475, 5
        %v2478 = vor.u32 %v2474, %v2477
        %v2479 = vrot.slane %v2478, 4
        %v2481 = vshll.u32 %v2172, 16
        %v2483 = vrot.slane %v2481, 5
        %v2484 = vsel %vm283, %v2479, %v2483
        %v2485 = vshrl.u32 %v2172, 16
        %v2487 = vrot.slane %v2485, 4
        %v2488 = vor.u32 %v2487, %v2483
        %v2489 = vrot.slane %v2488, 4
        %v2491 = vshll.u32 %v2173, 16
        %v2493 = vrot.slane %v2491, 5
        %v2494 = vsel %vm283, %v2489, %v2493
        %v2496 = vshrl.u32 %v2174, 16
        %v2498 = vrot.slane %v2496, 4
        %v2499 = vshll.u32 %v2174, 16
        %v2501 = vrot.slane %v2499, 5
        %v2502 = vor.u32 %v2498, %v2501
        %v2503 = vrot.slane %v2502, 4
        %v2505 = vshll.u32 %v2175, 16
        %v2507 = vrot.slane %v2505, 5
        %v2508 = vsel %vm283, %v2503, %v2507
        %v2509 = vshrl.u32 %v2175, 16
        %v2511 = vrot.slane %v2509, 4
        %v2512 = vor.u32 %v2511, %v2507
        %v2513 = vrot.slane %v2512, 4
        %v2515 = vshll.u32 %v2176, 16
        %v2517 = vrot.slane %v2515, 5
        %v2518 = vsel %vm283, %v2513, %v2517
        %v2520 = vshrl.u32 %v2177, 16
        %v2522 = vrot.slane %v2520, 4
        %v2523 = vshll.u32 %v2177, 16
        %v2525 = vrot.slane %v2523, 5
        %v2526 = vor.u32 %v2522, %v2525
        %v2527 = vrot.slane %v2526, 4
        %v2529 = vshll.u32 %v2178, 16
        %v2531 = vrot.slane %v2529, 5
        %v2532 = vsel %vm283, %v2527, %v2531
        %v2533 = vshrl.u32 %v2178, 16
        %v2535 = vrot.slane %v2533, 4
        %v2536 = vor.u32 %v2535, %v2531
        %v2537 = vrot.slane %v2536, 4
        %v2539 = vshll.u32 %v2179, 16
        %v2541 = vrot.slane %v2539, 5
        %v2542 = vsel %vm283, %v2537, %v2541
        %v2544 = vshrl.u32 %v2180, 16
        %v2546 = vrot.slane %v2544, 4
        %v2547 = vshll.u32 %v2180, 16
        %v2549 = vrot.slane %v2547, 5
        %v2550 = vor.u32 %v2546, %v2549
        %v2551 = vrot.slane %v2550, 4
        %v2553 = vshll.u32 %v2181, 16
        %v2555 = vrot.slane %v2553, 5
        %v2556 = vsel %vm283, %v2551, %v2555
        %v2557 = vshrl.u32 %v2181, 16
        %v2559 = vrot.slane %v2557, 4
        %v2560 = vor.u32 %v2559, %v2555
        %v2561 = vrot.slane %v2560, 4
        %v2563 = vshll.u32 %v2182, 16
        %v2565 = vrot.slane %v2563, 5
        %v2566 = vsel %vm283, %v2561, %v2565
        %s2567 = scalar_lea.vmem %s1, 256
        %v2568 = vld [vmem:[%s2567] sm:$0xf]
        %v2569 = vld [vmem:[%s2567 + $0x4] sm:$0xf]
        %v2570 = vld [vmem:[%s2567 + $0x8] sm:$0xf]
        %v2571 = vld [vmem:[%s2567 + $0xc] sm:$0xf]
        %v2572 = vld [vmem:[%s2567 + $0x10] sm:$0xf]
        %v2573 = vld [vmem:[%s2567 + $0x14] sm:$0xf]
        %v2574 = vld [vmem:[%s2567 + $0x18] sm:$0xf]
        %v2575 = vld [vmem:[%s2567 + $0x1c] sm:$0xf]
        %v2576 = vld [vmem:[%s2567 + $0x20] sm:$0xf]
        %v2577 = vld [vmem:[%s2567 + $0x24] sm:$0xf]
        %v2578 = vld [vmem:[%s2567 + $0x28] sm:$0xf]
        %v2579 = vld [vmem:[%s2567 + $0x2c] sm:$0xf]
        %v2580 = vld [vmem:[%s2567 + $0x30] sm:$0xf]
        %v2581 = vld [vmem:[%s2567 + $0x34] sm:$0xf]
        %v2582 = vld [vmem:[%s2567 + $0x38] sm:$0xf]
        %v2583 = vld [vmem:[%s2567 + $0x3c] sm:$0xf]
        %v2584 = vunpack.c.l.b16 %v2196
        %v2585 = vunpack.c.l.b16 %v2206
        %v2586 = vunpack.c.l.b16 %v2220
        %v2587 = vunpack.c.l.b16 %v2230
        %v2588 = vunpack.c.l.b16 %v2244
        %v2589 = vunpack.c.l.b16 %v2254
        %v2590 = vunpack.c.l.b16 %v2268
        %v2591 = vunpack.c.l.b16 %v2278
        %v2592 = vunpack.c.l.b16 %v2292
        %v2593 = vunpack.c.l.b16 %v2302
        %v2594 = vunpack.c.l.b16 %v2316
        %v2595 = vunpack.c.l.b16 %v2326
        %v2596 = vunpack.c.l.b16 %v2340
        %v2597 = vunpack.c.l.b16 %v2350
        %v2598 = vunpack.c.l.b16 %v2364
        %v2599 = vunpack.c.l.b16 %v2374
        %v2600 = vunpack.c.l.b16 %v2388
        %v2601 = vunpack.c.l.b16 %v2398
        %v2602 = vunpack.c.l.b16 %v2412
        %v2603 = vunpack.c.l.b16 %v2422
        %v2604 = vunpack.c.l.b16 %v2436
        %v2605 = vunpack.c.l.b16 %v2446
        %v2606 = vunpack.c.l.b16 %v2460
        %v2607 = vunpack.c.l.b16 %v2470
        %v2608 = vunpack.c.l.b16 %v2484
        %v2609 = vunpack.c.l.b16 %v2494
        %v2610 = vunpack.c.l.b16 %v2508
        %v2611 = vunpack.c.l.b16 %v2518
        %v2612 = vunpack.c.l.b16 %v2532
        %v2613 = vunpack.c.l.b16 %v2542
        %v2614 = vunpack.c.l.b16 %v2556
        %v2615 = vunpack.c.l.b16 %v2566
        %v2616 = vpack.c.b16 %v2585, %v2584
        %v2617 = vpack.c.b16 %v2587, %v2586
        %v2618 = vpack.c.b16 %v2589, %v2588
        %v2619 = vpack.c.b16 %v2591, %v2590
        %v2620 = vpack.c.b16 %v2593, %v2592
        %v2621 = vpack.c.b16 %v2595, %v2594
        %v2622 = vpack.c.b16 %v2597, %v2596
        %v2623 = vpack.c.b16 %v2599, %v2598
        %v2624 = vpack.c.b16 %v2601, %v2600
        %v2625 = vpack.c.b16 %v2603, %v2602
        %v2626 = vpack.c.b16 %v2605, %v2604
        %v2627 = vpack.c.b16 %v2607, %v2606
        %v2628 = vpack.c.b16 %v2609, %v2608
        %v2629 = vpack.c.b16 %v2611, %v2610
        %v2630 = vpack.c.b16 %v2613, %v2612
        %v2631 = vpack.c.b16 %v2615, %v2614
        %v2664 = vunpack.c.l.b16 %v2568
        %v2665 = vunpack.c.l.b16 %v2569
        %v2666 = vunpack.c.l.b16 %v2570
        %v2667 = vunpack.c.l.b16 %v2571
        %v2668 = vunpack.c.l.b16 %v2572
        %v2669 = vunpack.c.l.b16 %v2573
        %v2670 = vunpack.c.l.b16 %v2574
        %v2671 = vunpack.c.l.b16 %v2575
        %v2672 = vunpack.c.l.b16 %v2576
        %v2673 = vunpack.c.l.b16 %v2577
        %v2674 = vunpack.c.l.b16 %v2578
        %v2675 = vunpack.c.l.b16 %v2579
        %v2676 = vunpack.c.l.b16 %v2580
        %v2677 = vunpack.c.l.b16 %v2581
        %v2678 = vunpack.c.l.b16 %v2582
        %v2679 = vunpack.c.l.b16 %v2583
        %v2680 = vpack.c.b16 %v2665, %v2664
        %v2681 = vpack.c.b16 %v2667, %v2666
        %v2682 = vpack.c.b16 %v2669, %v2668
        %v2683 = vpack.c.b16 %v2671, %v2670
        %v2684 = vpack.c.b16 %v2673, %v2672
        %v2685 = vpack.c.b16 %v2675, %v2674
        %v2686 = vpack.c.b16 %v2677, %v2676
        %v2687 = vpack.c.b16 %v2679, %v2678
        %2696 = vmatprep.subr.bf16.mxu0 0
        %2697 = vmatpush1.bf16.msra.mxu0 %v2680
        %2698 = vmatprep.subr.bf16.mxu0 0
        %2699 = vmatpush1.bf16.msra.mxu0 %v2681
        %2700 = vmatprep.subr.bf16.mxu0 0
        %2701 = vmatpush1.bf16.msra.mxu0 %v2682
        %2702 = vmatprep.subr.bf16.mxu0 0
        %2703 = vmatpush1.bf16.msra.mxu0 %v2683
        %2704 = vmatprep.subr.bf16.mxu0 0
        %2705 = vmatpush1.bf16.msra.mxu0 %v2684
        %2706 = vmatprep.subr.bf16.mxu0 0
        %2707 = vmatpush1.bf16.msra.mxu0 %v2685
        %2708 = vmatprep.subr.bf16.mxu0 0
        %2709 = vmatpush1.bf16.msra.mxu0 %v2686
        %2710 = vmatprep.subr.bf16.mxu0 0
        %2711 = vmatpush1.bf16.msra.mxu0 %v2687
        %2712 = vmatprep.subr.bf16.mxu0 0
        %2713 = vmatpush1.bf16.msra.mxu0 0
        %2714 = vmatprep.subr.bf16.mxu0 0
        %2715 = vmatpush1.bf16.msra.mxu0 0
        %2716 = vmatprep.subr.bf16.mxu0 0
        %2717 = vmatpush1.bf16.msra.mxu0 0
        %2718 = vmatprep.subr.bf16.mxu0 0
        %2719 = vmatpush1.bf16.msra.mxu0 0
        %2720 = vmatprep.subr.bf16.mxu0 0
        %2721 = vmatpush1.bf16.msra.mxu0 0
        %2722 = vmatprep.subr.bf16.mxu0 0
        %2723 = vmatpush1.bf16.msra.mxu0 0
        %2724 = vmatprep.subr.bf16.mxu0 0
        %2725 = vmatpush1.bf16.msra.mxu0 0
        %2726 = vmatprep.subr.bf16.mxu0 0
        %2727 = vmatpush1.bf16.msra.mxu0 0
        %2728 = vmatprep.mubr.bf16.mxu0 0
        %2729 = vmatmul.mubr.bf16.gmra.mrb[0].mxu0 %v2616
        %v2730 = vpop.f32.mrb[0].mxu0
        %v2731 = vadd.f32 0.0, %v2730
        %v2732 = vpop.f32.mrb[0].mxu0
        %v2733 = vpop.f32.mrb[0].mxu0
        %v2734 = vadd.f32 0.0, %v2733
        %v2735 = vpop.f32.mrb[0].mxu0
        %2736 = vmatprep.mubr.bf16.mxu0 0
        %2737 = vmatmul.mubr.bf16.gmra.mrb[0].mxu0 %v2617
        %v2738 = vpop.f32.mrb[0].mxu0
        %v2739 = vadd.f32 0.0, %v2738
        %v2740 = vpop.f32.mrb[0].mxu0
        %v2741 = vpop.f32.mrb[0].mxu0
        %v2742 = vadd.f32 0.0, %v2741
        %v2743 = vpop.f32.mrb[0].mxu0
        %2744 = vmatprep.mubr.bf16.mxu0 0
        %2745 = vmatmul.mubr.bf16.gmra.mrb[0].mxu0 %v2618
        %v2746 = vpop.f32.mrb[0].mxu0
        %v2747 = vadd.f32 0.0, %v2746
        %v2748 = vpop.f32.mrb[0].mxu0
        %v2749 = vpop.f32.mrb[0].mxu0
        %v2750 = vadd.f32 0.0, %v2749
        %v2751 = vpop.f32.mrb[0].mxu0
        %2752 = vmatprep.mubr.bf16.mxu0 0
        %2753 = vmatmul.mubr.bf16.gmra.mrb[0].mxu0 %v2619
        %v2754 = vpop.f32.mrb[0].mxu0
        %v2755 = vadd.f32 0.0, %v2754
        %v2756 = vpop.f32.mrb[0].mxu0
        %v2757 = vpop.f32.mrb[0].mxu0
        %v2758 = vadd.f32 0.0, %v2757
        %v2759 = vpop.f32.mrb[0].mxu0
        %2760 = vmatprep.mubr.bf16.mxu0 0
        %2761 = vmatmul.mubr.bf16.gmra.mrb[0].mxu0 %v2620
        %v2762 = vpop.f32.mrb[0].mxu0
        %v2763 = vadd.f32 0.0, %v2762
        %v2764 = vpop.f32.mrb[0].mxu0
        %v2765 = vpop.f32.mrb[0].mxu0
        %v2766 = vadd.f32 0.0, %v2765
        %v2767 = vpop.f32.mrb[0].mxu0
        %2768 = vmatprep.mubr.bf16.mxu0 0
        %2769 = vmatmul.mubr.bf16.gmra.mrb[0].mxu0 %v2621
        %v2770 = vpop.f32.mrb[0].mxu0
        %v2771 = vadd.f32 0.0, %v2770
        %v2772 = vpop.f32.mrb[0].mxu0
        %v2773 = vpop.f32.mrb[0].mxu0
        %v2774 = vadd.f32 0.0, %v2773
        %v2775 = vpop.f32.mrb[0].mxu0
        %2776 = vmatprep.mubr.bf16.mxu0 0
        %2777 = vmatmul.mubr.bf16.gmra.mrb[0].mxu0 %v2622
        %v2778 = vpop.f32.mrb[0].mxu0
        %v2779 = vadd.f32 0.0, %v2778
        %v2780 = vpop.f32.mrb[0].mxu0
        %v2781 = vpop.f32.mrb[0].mxu0
        %v2782 = vadd.f32 0.0, %v2781
        %v2783 = vpop.f32.mrb[0].mxu0
        %2784 = vmatprep.mubr.bf16.mxu0 0
        %2785 = vmatmul.mubr.bf16.gmra.mrb[0].mxu0 %v2623
        %v2786 = vpop.f32.mrb[0].mxu0
        %v2787 = vadd.f32 0.0, %v2786
        %v2788 = vpop.f32.mrb[0].mxu0
        %v2789 = vpop.f32.mrb[0].mxu0
        %v2790 = vadd.f32 0.0, %v2789
        %v2791 = vpop.f32.mrb[0].mxu0
        %2792 = vmatprep.mubr.bf16.mxu0 0
        %2793 = vmatmul.mubr.bf16.gmra.mrb[0].mxu0 %v2624
        %v2794 = vpop.f32.mrb[0].mxu0
        %v2795 = vadd.f32 0.0, %v2794
        %v2796 = vpop.f32.mrb[0].mxu0
        %v2797 = vpop.f32.mrb[0].mxu0
        %v2798 = vadd.f32 0.0, %v2797
        %v2799 = vpop.f32.mrb[0].mxu0
        %2800 = vmatprep.mubr.bf16.mxu0 0
        %2801 = vmatmul.mubr.bf16.gmra.mrb[0].mxu0 %v2625
        %v2802 = vpop.f32.mrb[0].mxu0
        %v2803 = vadd.f32 0.0, %v2802
        %v2804 = vpop.f32.mrb[0].mxu0
        %v2805 = vpop.f32.mrb[0].mxu0
        %v2806 = vadd.f32 0.0, %v2805
        %v2807 = vpop.f32.mrb[0].mxu0
        %2808 = vmatprep.mubr.bf16.mxu0 0
        %2809 = vmatmul.mubr.bf16.gmra.mrb[0].mxu0 %v2626
        %v2810 = vpop.f32.mrb[0].mxu0
        %v2811 = vadd.f32 0.0, %v2810
        %v2812 = vpop.f32.mrb[0].mxu0
        %v2813 = vpop.f32.mrb[0].mxu0
        %v2814 = vadd.f32 0.0, %v2813
        %v2815 = vpop.f32.mrb[0].mxu0
        %2816 = vmatprep.mubr.bf16.mxu0 0
        %2817 = vmatmul.mubr.bf16.gmra.mrb[0].mxu0 %v2627
        %v2818 = vpop.f32.mrb[0].mxu0
        %v2819 = vadd.f32 0.0, %v2818
        %v2820 = vpop.f32.mrb[0].mxu0
        %v2821 = vpop.f32.mrb[0].mxu0
        %v2822 = vadd.f32 0.0, %v2821
        %v2823 = vpop.f32.mrb[0].mxu0
        %2824 = vmatprep.mubr.bf16.mxu0 0
        %2825 = vmatmul.mubr.bf16.gmra.mrb[0].mxu0 %v2628
        %v2826 = vpop.f32.mrb[0].mxu0
        %v2827 = vadd.f32 0.0, %v2826
        %v2828 = vpop.f32.mrb[0].mxu0
        %v2829 = vpop.f32.mrb[0].mxu0
        %v2830 = vadd.f32 0.0, %v2829
        %v2831 = vpop.f32.mrb[0].mxu0
        %2832 = vmatprep.mubr.bf16.mxu0 0
        %2833 = vmatmul.mubr.bf16.gmra.mrb[0].mxu0 %v2629
        %v2834 = vpop.f32.mrb[0].mxu0
        %v2835 = vadd.f32 0.0, %v2834
        %v2836 = vpop.f32.mrb[0].mxu0
        %v2837 = vpop.f32.mrb[0].mxu0
        %v2838 = vadd.f32 0.0, %v2837
        %v2839 = vpop.f32.mrb[0].mxu0
        %2840 = vmatprep.mubr.bf16.mxu0 0
        %2841 = vmatmul.mubr.bf16.gmra.mrb[0].mxu0 %v2630
        %v2842 = vpop.f32.mrb[0].mxu0
        %v2843 = vadd.f32 0.0, %v2842
        %v2844 = vpop.f32.mrb[0].mxu0
        %v2845 = vpop.f32.mrb[0].mxu0
        %v2846 = vadd.f32 0.0, %v2845
        %v2847 = vpop.f32.mrb[0].mxu0
        %2848 = vmatprep.mubr.bf16.mxu0 0
        %2849 = vmatmul.mubr.bf16.gmra.mrb[0].mxu0 %v2631
        %v2850 = vpop.f32.mrb[0].mxu0
        %v2851 = vadd.f32 0.0, %v2850
        %v2852 = vpop.f32.mrb[0].mxu0
        %v2853 = vpop.f32.mrb[0].mxu0
        %v2854 = vadd.f32 0.0, %v2853
        %v2855 = vpop.f32.mrb[0].mxu0
        %2856 = vdwg.mxu0
        %v2857 = vadd.f32 %v2103, %v2731
        %v2858 = vadd.f32 %v2104, %v2734
        %v2859 = vadd.f32 %v2105, %v2739
        %v2860 = vadd.f32 %v2106, %v2742
        %v2861 = vadd.f32 %v2107, %v2747
        %v2862 = vadd.f32 %v2108, %v2750
        %v2863 = vadd.f32 %v2109, %v2755
        %v2864 = vadd.f32 %v2110, %v2758
        %v2865 = vadd.f32 %v2111, %v2763
        %v2866 = vadd.f32 %v2112, %v2766
        %v2867 = vadd.f32 %v2113, %v2771
        %v2868 = vadd.f32 %v2114, %v2774
        %v2869 = vadd.f32 %v2115, %v2779
        %v2870 = vadd.f32 %v2116, %v2782
        %v2871 = vadd.f32 %v2117, %v2787
        %v2872 = vadd.f32 %v2118, %v2790
        %v2873 = vadd.f32 %v2119, %v2795
        %v2874 = vadd.f32 %v2120, %v2798
        %v2875 = vadd.f32 %v2121, %v2803
        %v2876 = vadd.f32 %v2122, %v2806
        %v2877 = vadd.f32 %v2123, %v2811
        %v2878 = vadd.f32 %v2124, %v2814
        %v2879 = vadd.f32 %v2125, %v2819
        %v2880 = vadd.f32 %v2126, %v2822
        %v2881 = vadd.f32 %v2127, %v2827
        %v2882 = vadd.f32 %v2128, %v2830
        %v2883 = vadd.f32 %v2129, %v2835
        %v2884 = vadd.f32 %v2130, %v2838
        %v2885 = vadd.f32 %v2131, %v2843
        %v2886 = vadd.f32 %v2132, %v2846
        %v2887 = vadd.f32 %v2133, %v2851
        %v2888 = vadd.f32 %v2134, %v2854
        %v2889 = vld [vmem:[%s1748] sm:$0xe]
        %v2890 = vld [vmem:[%s1748 + $0xc] sm:$0xe]
        %v2891 = vld [vmem:[%s1748 + $0x18] sm:$0xe]
        %v2892 = vld [vmem:[%s1748 + $0x24] sm:$0xe]
        %v2893 = vld [vmem:[%s1748 + $0x30] sm:$0xe]
        %v2894 = vld [vmem:[%s1748 + $0x3c] sm:$0xe]
        %v2895 = vld [vmem:[%s1748 + $0x48] sm:$0xe]
        %v2896 = vld [vmem:[%s1748 + $0x54] sm:$0xe]
        %v2897 = vld [vmem:[%s1748 + $0x60] sm:$0xe]
        %v2898 = vld [vmem:[%s1748 + $0x6c] sm:$0xe]
        %v2899 = vld [vmem:[%s1748 + $0x78] sm:$0xe]
        %v2900 = vld [vmem:[%s1748 + $0x84] sm:$0xe]
        %v2901 = vld [vmem:[%s1748 + $0x90] sm:$0xe]
        %v2902 = vld [vmem:[%s1748 + $0x9c] sm:$0xe]
        %v2903 = vld [vmem:[%s1748 + $0xa8] sm:$0xe]
        %v2904 = vld [vmem:[%s1748 + $0xb4] sm:$0xe]
        %v2953 = vrot.slane %v2889, 5
        %v2954 = vrot.slane %v2953, 4
        %v2955 = vrot.slane %v2136, 5
        %v2956 = vsel %vm1313, %v2954, %v2955
        %v2957 = vrot.slane %v2955, 4
        %v2958 = vrot.slane %v2137, 5
        %v2959 = vsel %vm1313, %v2957, %v2958
        %v2960 = vrot.slane %v2890, 5
        %v2961 = vrot.slane %v2960, 4
        %v2962 = vrot.slane %v2139, 5
        %v2963 = vsel %vm1313, %v2961, %v2962
        %v2964 = vrot.slane %v2962, 4
        %v2965 = vrot.slane %v2140, 5
        %v2966 = vsel %vm1313, %v2964, %v2965
        %v2967 = vrot.slane %v2891, 5
        %v2968 = vrot.slane %v2967, 4
        %v2969 = vrot.slane %v2142, 5
        %v2970 = vsel %vm1313, %v2968, %v2969
        %v2971 = vrot.slane %v2969, 4
        %v2972 = vrot.slane %v2143, 5
        %v2973 = vsel %vm1313, %v2971, %v2972
        %v2974 = vrot.slane %v2892, 5
        %v2975 = vrot.slane %v2974, 4
        %v2976 = vrot.slane %v2145, 5
        %v2977 = vsel %vm1313, %v2975, %v2976
        %v2978 = vrot.slane %v2976, 4
        %v2979 = vrot.slane %v2146, 5
        %v2980 = vsel %vm1313, %v2978, %v2979
        %v2981 = vrot.slane %v2893, 5
        %v2982 = vrot.slane %v2981, 4
        %v2983 = vrot.slane %v2148, 5
        %v2984 = vsel %vm1313, %v2982, %v2983
        %v2985 = vrot.slane %v2983, 4
        %v2986 = vrot.slane %v2149, 5
        %v2987 = vsel %vm1313, %v2985, %v2986
        %v2988 = vrot.slane %v2894, 5
        %v2989 = vrot.slane %v2988, 4
        %v2990 = vrot.slane %v2151, 5
        %v2991 = vsel %vm1313, %v2989, %v2990
        %v2992 = vrot.slane %v2990, 4
        %v2993 = vrot.slane %v2152, 5
        %v2994 = vsel %vm1313, %v2992, %v2993
        %v2995 = vrot.slane %v2895, 5
        %v2996 = vrot.slane %v2995, 4
        %v2997 = vrot.slane %v2154, 5
        %v2998 = vsel %vm1313, %v2996, %v2997
        %v2999 = vrot.slane %v2997, 4
        %v3000 = vrot.slane %v2155, 5
        %v3001 = vsel %vm1313, %v2999, %v3000
        %v3002 = vrot.slane %v2896, 5
        %v3003 = vrot.slane %v3002, 4
        %v3004 = vrot.slane %v2157, 5
        %v3005 = vsel %vm1313, %v3003, %v3004
        %v3006 = vrot.slane %v3004, 4
        %v3007 = vrot.slane %v2158, 5
        %v3008 = vsel %vm1313, %v3006, %v3007
        %v3009 = vrot.slane %v2897, 5
        %v3010 = vrot.slane %v3009, 4
        %v3011 = vrot.slane %v2160, 5
        %v3012 = vsel %vm1313, %v3010, %v3011
        %v3013 = vrot.slane %v3011, 4
        %v3014 = vrot.slane %v2161, 5
        %v3015 = vsel %vm1313, %v3013, %v3014
        %v3016 = vrot.slane %v2898, 5
        %v3017 = vrot.slane %v3016, 4
        %v3018 = vrot.slane %v2163, 5
        %v3019 = vsel %vm1313, %v3017, %v3018
        %v3020 = vrot.slane %v3018, 4
        %v3021 = vrot.slane %v2164, 5
        %v3022 = vsel %vm1313, %v3020, %v3021
        %v3023 = vrot.slane %v2899, 5
        %v3024 = vrot.slane %v3023, 4
        %v3025 = vrot.slane %v2166, 5
        %v3026 = vsel %vm1313, %v3024, %v3025
        %v3027 = vrot.slane %v3025, 4
        %v3028 = vrot.slane %v2167, 5
        %v3029 = vsel %vm1313, %v3027, %v3028
        %v3030 = vrot.slane %v2900, 5
        %v3031 = vrot.slane %v3030, 4
        %v3032 = vrot.slane %v2169, 5
        %v3033 = vsel %vm1313, %v3031, %v3032
        %v3034 = vrot.slane %v3032, 4
        %v3035 = vrot.slane %v2170, 5
        %v3036 = vsel %vm1313, %v3034, %v3035
        %v3037 = vrot.slane %v2901, 5
        %v3038 = vrot.slane %v3037, 4
        %v3039 = vrot.slane %v2172, 5
        %v3040 = vsel %vm1313, %v3038, %v3039
        %v3041 = vrot.slane %v3039, 4
        %v3042 = vrot.slane %v2173, 5
        %v3043 = vsel %vm1313, %v3041, %v3042
        %v3044 = vrot.slane %v2902, 5
        %v3045 = vrot.slane %v3044, 4
        %v3046 = vrot.slane %v2175, 5
        %v3047 = vsel %vm1313, %v3045, %v3046
        %v3048 = vrot.slane %v3046, 4
        %v3049 = vrot.slane %v2176, 5
        %v3050 = vsel %vm1313, %v3048, %v3049
        %v3051 = vrot.slane %v2903, 5
        %v3052 = vrot.slane %v3051, 4
        %v3053 = vrot.slane %v2178, 5
        %v3054 = vsel %vm1313, %v3052, %v3053
        %v3055 = vrot.slane %v3053, 4
        %v3056 = vrot.slane %v2179, 5
        %v3057 = vsel %vm1313, %v3055, %v3056
        %v3058 = vrot.slane %v2904, 5
        %v3059 = vrot.slane %v3058, 4
        %v3060 = vrot.slane %v2181, 5
        %v3061 = vsel %vm1313, %v3059, %v3060
        %v3062 = vrot.slane %v3060, 4
        %v3063 = vrot.slane %v2182, 5
        %v3064 = vsel %vm1313, %v3062, %v3063
        %s3065 = scalar_lea.vmem %s1, 320
        %v3066 = vld [vmem:[%s3065] sm:$0xf]
        %v3067 = vld [vmem:[%s3065 + $0x4] sm:$0xf]
        %v3068 = vld [vmem:[%s3065 + $0x8] sm:$0xf]
        %v3069 = vld [vmem:[%s3065 + $0xc] sm:$0xf]
        %v3070 = vld [vmem:[%s3065 + $0x10] sm:$0xf]
        %v3071 = vld [vmem:[%s3065 + $0x14] sm:$0xf]
        %v3072 = vld [vmem:[%s3065 + $0x18] sm:$0xf]
        %v3073 = vld [vmem:[%s3065 + $0x1c] sm:$0xf]
        %v3074 = vld [vmem:[%s3065 + $0x20] sm:$0xf]
        %v3075 = vld [vmem:[%s3065 + $0x24] sm:$0xf]
        %v3076 = vld [vmem:[%s3065 + $0x28] sm:$0xf]
        %v3077 = vld [vmem:[%s3065 + $0x2c] sm:$0xf]
        %v3078 = vld [vmem:[%s3065 + $0x30] sm:$0xf]
        %v3079 = vld [vmem:[%s3065 + $0x34] sm:$0xf]
        %v3080 = vld [vmem:[%s3065 + $0x38] sm:$0xf]
        %v3081 = vld [vmem:[%s3065 + $0x3c] sm:$0xf]
        %v3082 = vunpack.c.l.b16 %v2956
        %v3083 = vunpack.c.l.b16 %v2959
        %v3084 = vunpack.c.l.b16 %v2963
        %v3085 = vunpack.c.l.b16 %v2966
        %v3086 = vunpack.c.l.b16 %v2970
        %v3087 = vunpack.c.l.b16 %v2973
        %v3088 = vunpack.c.l.b16 %v2977
        %v3089 = vunpack.c.l.b16 %v2980
        %v3090 = vunpack.c.l.b16 %v2984
        %v3091 = vunpack.c.l.b16 %v2987
        %v3092 = vunpack.c.l.b16 %v2991
        %v3093 = vunpack.c.l.b16 %v2994
        %v3094 = vunpack.c.l.b16 %v2998
        %v3095 = vunpack.c.l.b16 %v3001
        %v3096 = vunpack.c.l.b16 %v3005
        %v3097 = vunpack.c.l.b16 %v3008
        %v3098 = vunpack.c.l.b16 %v3012
        %v3099 = vunpack.c.l.b16 %v3015
        %v3100 = vunpack.c.l.b16 %v3019
        %v3101 = vunpack.c.l.b16 %v3022
        %v3102 = vunpack.c.l.b16 %v3026
        %v3103 = vunpack.c.l.b16 %v3029
        %v3104 = vunpack.c.l.b16 %v3033
        %v3105 = vunpack.c.l.b16 %v3036
        %v3106 = vunpack.c.l.b16 %v3040
        %v3107 = vunpack.c.l.b16 %v3043
        %v3108 = vunpack.c.l.b16 %v3047
        %v3109 = vunpack.c.l.b16 %v3050
        %v3110 = vunpack.c.l.b16 %v3054
        %v3111 = vunpack.c.l.b16 %v3057
        %v3112 = vunpack.c.l.b16 %v3061
        %v3113 = vunpack.c.l.b16 %v3064
        %v3114 = vpack.c.b16 %v3083, %v3082
        %v3115 = vpack.c.b16 %v3085, %v3084
        %v3116 = vpack.c.b16 %v3087, %v3086
        %v3117 = vpack.c.b16 %v3089, %v3088
        %v3118 = vpack.c.b16 %v3091, %v3090
        %v3119 = vpack.c.b16 %v3093, %v3092
        %v3120 = vpack.c.b16 %v3095, %v3094
        %v3121 = vpack.c.b16 %v3097, %v3096
        %v3122 = vpack.c.b16 %v3099, %v3098
        %v3123 = vpack.c.b16 %v3101, %v3100
        %v3124 = vpack.c.b16 %v3103, %v3102
        %v3125 = vpack.c.b16 %v3105, %v3104
        %v3126 = vpack.c.b16 %v3107, %v3106
        %v3127 = vpack.c.b16 %v3109, %v3108
        %v3128 = vpack.c.b16 %v3111, %v3110
        %v3129 = vpack.c.b16 %v3113, %v3112
        %v3162 = vunpack.c.l.b16 %v3066
        %v3163 = vunpack.c.l.b16 %v3067
        %v3164 = vunpack.c.l.b16 %v3068
        %v3165 = vunpack.c.l.b16 %v3069
        %v3166 = vunpack.c.l.b16 %v3070
        %v3167 = vunpack.c.l.b16 %v3071
        %v3168 = vunpack.c.l.b16 %v3072
        %v3169 = vunpack.c.l.b16 %v3073
        %v3170 = vunpack.c.l.b16 %v3074
        %v3171 = vunpack.c.l.b16 %v3075
        %v3172 = vunpack.c.l.b16 %v3076
        %v3173 = vunpack.c.l.b16 %v3077
        %v3174 = vunpack.c.l.b16 %v3078
        %v3175 = vunpack.c.l.b16 %v3079
        %v3176 = vunpack.c.l.b16 %v3080
        %v3177 = vunpack.c.l.b16 %v3081
        %v3178 = vpack.c.b16 %v3163, %v3162
        %v3179 = vpack.c.b16 %v3165, %v3164
        %v3180 = vpack.c.b16 %v3167, %v3166
        %v3181 = vpack.c.b16 %v3169, %v3168
        %v3182 = vpack.c.b16 %v3171, %v3170
        %v3183 = vpack.c.b16 %v3173, %v3172
        %v3184 = vpack.c.b16 %v3175, %v3174
        %v3185 = vpack.c.b16 %v3177, %v3176
        %3194 = vmatprep.subr.bf16.mxu0 0
        %3195 = vmatpush1.bf16.msra.mxu0 %v3178
        %3196 = vmatprep.subr.bf16.mxu0 0
        %3197 = vmatpush1.bf16.msra.mxu0 %v3179
        %3198 = vmatprep.subr.bf16.mxu0 0
        %3199 = vmatpush1.bf16.msra.mxu0 %v3180
        %3200 = vmatprep.subr.bf16.mxu0 0
        %3201 = vmatpush1.bf16.msra.mxu0 %v3181
        %3202 = vmatprep.subr.bf16.mxu0 0
        %3203 = vmatpush1.bf16.msra.mxu0 %v3182
        %3204 = vmatprep.subr.bf16.mxu0 0
        %3205 = vmatpush1.bf16.msra.mxu0 %v3183
        %3206 = vmatprep.subr.bf16.mxu0 0
        %3207 = vmatpush1.bf16.msra.mxu0 %v3184
        %3208 = vmatprep.subr.bf16.mxu0 0
        %3209 = vmatpush1.bf16.msra.mxu0 %v3185
        %3210 = vmatprep.subr.bf16.mxu0 0
        %3211 = vmatpush1.bf16.msra.mxu0 0
        %3212 = vmatprep.subr.bf16.mxu0 0
        %3213 = vmatpush1.bf16.msra.mxu0 0
        %3214 = vmatprep.subr.bf16.mxu0 0
        %3215 = vmatpush1.bf16.msra.mxu0 0
        %3216 = vmatprep.subr.bf16.mxu0 0
        %3217 = vmatpush1.bf16.msra.mxu0 0
        %3218 = vmatprep.subr.bf16.mxu0 0
        %3219 = vmatpush1.bf16.msra.mxu0 0
        %3220 = vmatprep.subr.bf16.mxu0 0
        %3221 = vmatpush1.bf16.msra.mxu0 0
        %3222 = vmatprep.subr.bf16.mxu0 0
        %3223 = vmatpush1.bf16.msra.mxu0 0
        %3224 = vmatprep.subr.bf16.mxu0 0
        %3225 = vmatpush1.bf16.msra.mxu0 0
        %3226 = vmatprep.mubr.bf16.mxu0 0
        %3227 = vmatmul.mubr.bf16.gmra.mrb[0].mxu0 %v3114
        %v3228 = vpop.f32.mrb[0].mxu0
        %v3229 = vadd.f32 0.0, %v3228
        %v3230 = vpop.f32.mrb[0].mxu0
        %v3231 = vpop.f32.mrb[0].mxu0
        %v3232 = vadd.f32 0.0, %v3231
        %v3233 = vpop.f32.mrb[0].mxu0
        %3234 = vmatprep.mubr.bf16.mxu0 0
        %3235 = vmatmul.mubr.bf16.gmra.mrb[0].mxu0 %v3115
        %v3236 = vpop.f32.mrb[0].mxu0
        %v3237 = vadd.f32 0.0, %v3236
        %v3238 = vpop.f32.mrb[0].mxu0
        %v3239 = vpop.f32.mrb[0].mxu0
        %v3240 = vadd.f32 0.0, %v3239
        %v3241 = vpop.f32.mrb[0].mxu0
        %3242 = vmatprep.mubr.bf16.mxu0 0
        %3243 = vmatmul.mubr.bf16.gmra.mrb[0].mxu0 %v3116
        %v3244 = vpop.f32.mrb[0].mxu0
        %v3245 = vadd.f32 0.0, %v3244
        %v3246 = vpop.f32.mrb[0].mxu0
        %v3247 = vpop.f32.mrb[0].mxu0
        %v3248 = vadd.f32 0.0, %v3247
        %v3249 = vpop.f32.mrb[0].mxu0
        %3250 = vmatprep.mubr.bf16.mxu0 0
        %3251 = vmatmul.mubr.bf16.gmra.mrb[0].mxu0 %v3117
        %v3252 = vpop.f32.mrb[0].mxu0
        %v3253 = vadd.f32 0.0, %v3252
        %v3254 = vpop.f32.mrb[0].mxu0
        %v3255 = vpop.f32.mrb[0].mxu0
        %v3256 = vadd.f32 0.0, %v3255
        %v3257 = vpop.f32.mrb[0].mxu0
        %3258 = vmatprep.mubr.bf16.mxu0 0
        %3259 = vmatmul.mubr.bf16.gmra.mrb[0].mxu0 %v3118
        %v3260 = vpop.f32.mrb[0].mxu0
        %v3261 = vadd.f32 0.0, %v3260
        %v3262 = vpop.f32.mrb[0].mxu0
        %v3263 = vpop.f32.mrb[0].mxu0
        %v3264 = vadd.f32 0.0, %v3263
        %v3265 = vpop.f32.mrb[0].mxu0
        %3266 = vmatprep.mubr.bf16.mxu0 0
        %3267 = vmatmul.mubr.bf16.gmra.mrb[0].mxu0 %v3119
        %v3268 = vpop.f32.mrb[0].mxu0
        %v3269 = vadd.f32 0.0, %v3268
        %v3270 = vpop.f32.mrb[0].mxu0
        %v3271 = vpop.f32.mrb[0].mxu0
        %v3272 = vadd.f32 0.0, %v3271
        %v3273 = vpop.f32.mrb[0].mxu0
        %3274 = vmatprep.mubr.bf16.mxu0 0
        %3275 = vmatmul.mubr.bf16.gmra.mrb[0].mxu0 %v3120
        %v3276 = vpop.f32.mrb[0].mxu0
        %v3277 = vadd.f32 0.0, %v3276
        %v3278 = vpop.f32.mrb[0].mxu0
        %v3279 = vpop.f32.mrb[0].mxu0
        %v3280 = vadd.f32 0.0, %v3279
        %v3281 = vpop.f32.mrb[0].mxu0
        %3282 = vmatprep.mubr.bf16.mxu0 0
        %3283 = vmatmul.mubr.bf16.gmra.mrb[0].mxu0 %v3121
        %v3284 = vpop.f32.mrb[0].mxu0
        %v3285 = vadd.f32 0.0, %v3284
        %v3286 = vpop.f32.mrb[0].mxu0
        %v3287 = vpop.f32.mrb[0].mxu0
        %v3288 = vadd.f32 0.0, %v3287
        %v3289 = vpop.f32.mrb[0].mxu0
        %3290 = vmatprep.mubr.bf16.mxu0 0
        %3291 = vmatmul.mubr.bf16.gmra.mrb[0].mxu0 %v3122
        %v3292 = vpop.f32.mrb[0].mxu0
        %v3293 = vadd.f32 0.0, %v3292
        %v3294 = vpop.f32.mrb[0].mxu0
        %v3295 = vpop.f32.mrb[0].mxu0
        %v3296 = vadd.f32 0.0, %v3295
        %v3297 = vpop.f32.mrb[0].mxu0
        %3298 = vmatprep.mubr.bf16.mxu0 0
        %3299 = vmatmul.mubr.bf16.gmra.mrb[0].mxu0 %v3123
        %v3300 = vpop.f32.mrb[0].mxu0
        %v3301 = vadd.f32 0.0, %v3300
        %v3302 = vpop.f32.mrb[0].mxu0
        %v3303 = vpop.f32.mrb[0].mxu0
        %v3304 = vadd.f32 0.0, %v3303
        %v3305 = vpop.f32.mrb[0].mxu0
        %3306 = vmatprep.mubr.bf16.mxu0 0
        %3307 = vmatmul.mubr.bf16.gmra.mrb[0].mxu0 %v3124
        %v3308 = vpop.f32.mrb[0].mxu0
        %v3309 = vadd.f32 0.0, %v3308
        %v3310 = vpop.f32.mrb[0].mxu0
        %v3311 = vpop.f32.mrb[0].mxu0
        %v3312 = vadd.f32 0.0, %v3311
        %v3313 = vpop.f32.mrb[0].mxu0
        %3314 = vmatprep.mubr.bf16.mxu0 0
        %3315 = vmatmul.mubr.bf16.gmra.mrb[0].mxu0 %v3125
        %v3316 = vpop.f32.mrb[0].mxu0
        %v3317 = vadd.f32 0.0, %v3316
        %v3318 = vpop.f32.mrb[0].mxu0
        %v3319 = vpop.f32.mrb[0].mxu0
        %v3320 = vadd.f32 0.0, %v3319
        %v3321 = vpop.f32.mrb[0].mxu0
        %3322 = vmatprep.mubr.bf16.mxu0 0
        %3323 = vmatmul.mubr.bf16.gmra.mrb[0].mxu0 %v3126
        %v3324 = vpop.f32.mrb[0].mxu0
        %v3325 = vadd.f32 0.0, %v3324
        %v3326 = vpop.f32.mrb[0].mxu0
        %v3327 = vpop.f32.mrb[0].mxu0
        %v3328 = vadd.f32 0.0, %v3327
        %v3329 = vpop.f32.mrb[0].mxu0
        %3330 = vmatprep.mubr.bf16.mxu0 0
        %3331 = vmatmul.mubr.bf16.gmra.mrb[0].mxu0 %v3127
        %v3332 = vpop.f32.mrb[0].mxu0
        %v3333 = vadd.f32 0.0, %v3332
        %v3334 = vpop.f32.mrb[0].mxu0
        %v3335 = vpop.f32.mrb[0].mxu0
        %v3336 = vadd.f32 0.0, %v3335
        %v3337 = vpop.f32.mrb[0].mxu0
        %3338 = vmatprep.mubr.bf16.mxu0 0
        %3339 = vmatmul.mubr.bf16.gmra.mrb[0].mxu0 %v3128
        %v3340 = vpop.f32.mrb[0].mxu0
        %v3341 = vadd.f32 0.0, %v3340
        %v3342 = vpop.f32.mrb[0].mxu0
        %v3343 = vpop.f32.mrb[0].mxu0
        %v3344 = vadd.f32 0.0, %v3343
        %v3345 = vpop.f32.mrb[0].mxu0
        %3346 = vmatprep.mubr.bf16.mxu0 0
        %3347 = vmatmul.mubr.bf16.gmra.mrb[0].mxu0 %v3129
        %v3348 = vpop.f32.mrb[0].mxu0
        %v3349 = vadd.f32 0.0, %v3348
        %v3350 = vpop.f32.mrb[0].mxu0
        %v3351 = vpop.f32.mrb[0].mxu0
        %v3352 = vadd.f32 0.0, %v3351
        %v3353 = vpop.f32.mrb[0].mxu0
        %3354 = vdwg.mxu0
        %v3355 = vadd.f32 %v2857, %v3229
        %v3356 = vadd.f32 %v2858, %v3232
        %v3357 = vadd.f32 %v2859, %v3237
        %v3358 = vadd.f32 %v2860, %v3240
        %v3359 = vadd.f32 %v2861, %v3245
        %v3360 = vadd.f32 %v2862, %v3248
        %v3361 = vadd.f32 %v2863, %v3253
        %v3362 = vadd.f32 %v2864, %v3256
        %v3363 = vadd.f32 %v2865, %v3261
        %v3364 = vadd.f32 %v2866, %v3264
        %v3365 = vadd.f32 %v2867, %v3269
        %v3366 = vadd.f32 %v2868, %v3272
        %v3367 = vadd.f32 %v2869, %v3277
        %v3368 = vadd.f32 %v2870, %v3280
        %v3369 = vadd.f32 %v2871, %v3285
        %v3370 = vadd.f32 %v2872, %v3288
        %v3371 = vadd.f32 %v2873, %v3293
        %v3372 = vadd.f32 %v2874, %v3296
        %v3373 = vadd.f32 %v2875, %v3301
        %v3374 = vadd.f32 %v2876, %v3304
        %v3375 = vadd.f32 %v2877, %v3309
        %v3376 = vadd.f32 %v2878, %v3312
        %v3377 = vadd.f32 %v2879, %v3317
        %v3378 = vadd.f32 %v2880, %v3320
        %v3379 = vadd.f32 %v2881, %v3325
        %v3380 = vadd.f32 %v2882, %v3328
        %v3381 = vadd.f32 %v2883, %v3333
        %v3382 = vadd.f32 %v2884, %v3336
        %v3383 = vadd.f32 %v2885, %v3341
        %v3384 = vadd.f32 %v2886, %v3344
        %v3385 = vadd.f32 %v2887, %v3349
        %v3386 = vadd.f32 %v2888, %v3352
        %s3387 = scalar_lea.vmem %s210, 24
        %v3388 = vld [vmem:[%s3387] sm:$0xf]
        %v3389 = vld [vmem:[%s3387 + $0x4] sm:$0xf]
        %v3390 = vld [vmem:[%s3387 + $0xc] sm:$0xf]
        %v3391 = vld [vmem:[%s3387 + $0x10] sm:$0xf]
        %v3392 = vld [vmem:[%s3387 + $0x18] sm:$0xf]
        %v3393 = vld [vmem:[%s3387 + $0x1c] sm:$0xf]
        %v3394 = vld [vmem:[%s3387 + $0x24] sm:$0xf]
        %v3395 = vld [vmem:[%s3387 + $0x28] sm:$0xf]
        %v3396 = vld [vmem:[%s3387 + $0x30] sm:$0xf]
        %v3397 = vld [vmem:[%s3387 + $0x34] sm:$0xf]
        %v3398 = vld [vmem:[%s3387 + $0x3c] sm:$0xf]
        %v3399 = vld [vmem:[%s3387 + $0x40] sm:$0xf]
        %v3400 = vld [vmem:[%s3387 + $0x48] sm:$0xf]
        %v3401 = vld [vmem:[%s3387 + $0x4c] sm:$0xf]
        %v3402 = vld [vmem:[%s3387 + $0x54] sm:$0xf]
        %v3403 = vld [vmem:[%s3387 + $0x58] sm:$0xf]
        %v3404 = vld [vmem:[%s3387 + $0x60] sm:$0xf]
        %v3405 = vld [vmem:[%s3387 + $0x64] sm:$0xf]
        %v3406 = vld [vmem:[%s3387 + $0x6c] sm:$0xf]
        %v3407 = vld [vmem:[%s3387 + $0x70] sm:$0xf]
        %v3408 = vld [vmem:[%s3387 + $0x78] sm:$0xf]
        %v3409 = vld [vmem:[%s3387 + $0x7c] sm:$0xf]
        %v3410 = vld [vmem:[%s3387 + $0x84] sm:$0xf]
        %v3411 = vld [vmem:[%s3387 + $0x88] sm:$0xf]
        %v3412 = vld [vmem:[%s3387 + $0x90] sm:$0xf]
        %v3413 = vld [vmem:[%s3387 + $0x94] sm:$0xf]
        %v3414 = vld [vmem:[%s3387 + $0x9c] sm:$0xf]
        %v3415 = vld [vmem:[%s3387 + $0xa0] sm:$0xf]
        %v3416 = vld [vmem:[%s3387 + $0xa8] sm:$0xf]
        %v3417 = vld [vmem:[%s3387 + $0xac] sm:$0xf]
        %v3418 = vld [vmem:[%s3387 + $0xb4] sm:$0xf]
        %v3419 = vld [vmem:[%s3387 + $0xb8] sm:$0xf]
        %s3420 = scalar_lea.vmem %s1, 384
        %v3421 = vld [vmem:[%s3420] sm:$0xf]
        %v3422 = vld [vmem:[%s3420 + $0x4] sm:$0xf]
        %v3423 = vld [vmem:[%s3420 + $0x8] sm:$0xf]
        %v3424 = vld [vmem:[%s3420 + $0xc] sm:$0xf]
        %v3425 = vld [vmem:[%s3420 + $0x10] sm:$0xf]
        %v3426 = vld [vmem:[%s3420 + $0x14] sm:$0xf]
        %v3427 = vld [vmem:[%s3420 + $0x18] sm:$0xf]
        %v3428 = vld [vmem:[%s3420 + $0x1c] sm:$0xf]
        %v3429 = vld [vmem:[%s3420 + $0x20] sm:$0xf]
        %v3430 = vld [vmem:[%s3420 + $0x24] sm:$0xf]
        %v3431 = vld [vmem:[%s3420 + $0x28] sm:$0xf]
        %v3432 = vld [vmem:[%s3420 + $0x2c] sm:$0xf]
        %v3433 = vld [vmem:[%s3420 + $0x30] sm:$0xf]
        %v3434 = vld [vmem:[%s3420 + $0x34] sm:$0xf]
        %v3435 = vld [vmem:[%s3420 + $0x38] sm:$0xf]
        %v3436 = vld [vmem:[%s3420 + $0x3c] sm:$0xf]
        %v3469 = vunpack.c.l.b16 %v3388
        %v3470 = vunpack.c.l.b16 %v3389
        %v3471 = vunpack.c.l.b16 %v3390
        %v3472 = vunpack.c.l.b16 %v3391
        %v3473 = vunpack.c.l.b16 %v3392
        %v3474 = vunpack.c.l.b16 %v3393
        %v3475 = vunpack.c.l.b16 %v3394
        %v3476 = vunpack.c.l.b16 %v3395
        %v3477 = vunpack.c.l.b16 %v3396
        %v3478 = vunpack.c.l.b16 %v3397
        %v3479 = vunpack.c.l.b16 %v3398
        %v3480 = vunpack.c.l.b16 %v3399
        %v3481 = vunpack.c.l.b16 %v3400
        %v3482 = vunpack.c.l.b16 %v3401
        %v3483 = vunpack.c.l.b16 %v3402
        %v3484 = vunpack.c.l.b16 %v3403
        %v3485 = vunpack.c.l.b16 %v3404
        %v3486 = vunpack.c.l.b16 %v3405
        %v3487 = vunpack.c.l.b16 %v3406
        %v3488 = vunpack.c.l.b16 %v3407
        %v3489 = vunpack.c.l.b16 %v3408
        %v3490 = vunpack.c.l.b16 %v3409
        %v3491 = vunpack.c.l.b16 %v3410
        %v3492 = vunpack.c.l.b16 %v3411
        %v3493 = vunpack.c.l.b16 %v3412
        %v3494 = vunpack.c.l.b16 %v3413
        %v3495 = vunpack.c.l.b16 %v3414
        %v3496 = vunpack.c.l.b16 %v3415
        %v3497 = vunpack.c.l.b16 %v3416
        %v3498 = vunpack.c.l.b16 %v3417
        %v3499 = vunpack.c.l.b16 %v3418
        %v3500 = vunpack.c.l.b16 %v3419
        %v3501 = vpack.c.b16 %v3470, %v3469
        %v3502 = vpack.c.b16 %v3472, %v3471
        %v3503 = vpack.c.b16 %v3474, %v3473
        %v3504 = vpack.c.b16 %v3476, %v3475
        %v3505 = vpack.c.b16 %v3478, %v3477
        %v3506 = vpack.c.b16 %v3480, %v3479
        %v3507 = vpack.c.b16 %v3482, %v3481
        %v3508 = vpack.c.b16 %v3484, %v3483
        %v3509 = vpack.c.b16 %v3486, %v3485
        %v3510 = vpack.c.b16 %v3488, %v3487
        %v3511 = vpack.c.b16 %v3490, %v3489
        %v3512 = vpack.c.b16 %v3492, %v3491
        %v3513 = vpack.c.b16 %v3494, %v3493
        %v3514 = vpack.c.b16 %v3496, %v3495
        %v3515 = vpack.c.b16 %v3498, %v3497
        %v3516 = vpack.c.b16 %v3500, %v3499
        %v3549 = vunpack.c.l.b16 %v3421
        %v3550 = vunpack.c.l.b16 %v3422
        %v3551 = vunpack.c.l.b16 %v3423
        %v3552 = vunpack.c.l.b16 %v3424
        %v3553 = vunpack.c.l.b16 %v3425
        %v3554 = vunpack.c.l.b16 %v3426
        %v3555 = vunpack.c.l.b16 %v3427
        %v3556 = vunpack.c.l.b16 %v3428
        %v3557 = vunpack.c.l.b16 %v3429
        %v3558 = vunpack.c.l.b16 %v3430
        %v3559 = vunpack.c.l.b16 %v3431
        %v3560 = vunpack.c.l.b16 %v3432
        %v3561 = vunpack.c.l.b16 %v3433
        %v3562 = vunpack.c.l.b16 %v3434
        %v3563 = vunpack.c.l.b16 %v3435
        %v3564 = vunpack.c.l.b16 %v3436
        %v3565 = vpack.c.b16 %v3550, %v3549
        %v3566 = vpack.c.b16 %v3552, %v3551
        %v3567 = vpack.c.b16 %v3554, %v3553
        %v3568 = vpack.c.b16 %v3556, %v3555
        %v3569 = vpack.c.b16 %v3558, %v3557
        %v3570 = vpack.c.b16 %v3560, %v3559
        %v3571 = vpack.c.b16 %v3562, %v3561
        %v3572 = vpack.c.b16 %v3564, %v3563
        %3581 = vmatprep.subr.bf16.mxu0 0
        %3582 = vmatpush1.bf16.msra.mxu0 %v3565
        %3583 = vmatprep.subr.bf16.mxu0 0
        %3584 = vmatpush1.bf16.msra.mxu0 %v3566
        %3585 = vmatprep.subr.bf16.mxu0 0
        %3586 = vmatpush1.bf16.msra.mxu0 %v3567
        %3587 = vmatprep.subr.bf16.mxu0 0
        %3588 = vmatpush1.bf16.msra.mxu0 %v3568
        %3589 = vmatprep.subr.bf16.mxu0 0
        %3590 = vmatpush1.bf16.msra.mxu0 %v3569
        %3591 = vmatprep.subr.bf16.mxu0 0
        %3592 = vmatpush1.bf16.msra.mxu0 %v3570
        %3593 = vmatprep.subr.bf16.mxu0 0
        %3594 = vmatpush1.bf16.msra.mxu0 %v3571
        %3595 = vmatprep.subr.bf16.mxu0 0
        %3596 = vmatpush1.bf16.msra.mxu0 %v3572
        %3597 = vmatprep.subr.bf16.mxu0 0
        %3598 = vmatpush1.bf16.msra.mxu0 0
        %3599 = vmatprep.subr.bf16.mxu0 0
        %3600 = vmatpush1.bf16.msra.mxu0 0
        %3601 = vmatprep.subr.bf16.mxu0 0
        %3602 = vmatpush1.bf16.msra.mxu0 0
        %3603 = vmatprep.subr.bf16.mxu0 0
        %3604 = vmatpush1.bf16.msra.mxu0 0
        %3605 = vmatprep.subr.bf16.mxu0 0
        %3606 = vmatpush1.bf16.msra.mxu0 0
        %3607 = vmatprep.subr.bf16.mxu0 0
        %3608 = vmatpush1.bf16.msra.mxu0 0
        %3609 = vmatprep.subr.bf16.mxu0 0
        %3610 = vmatpush1.bf16.msra.mxu0 0
        %3611 = vmatprep.subr.bf16.mxu0 0
        %3612 = vmatpush1.bf16.msra.mxu0 0
        %3613 = vmatprep.mubr.bf16.mxu0 0
        %3614 = vmatmul.mubr.bf16.gmra.mrb[0].mxu0 %v3501
        %v3615 = vpop.f32.mrb[0].mxu0
        %v3616 = vadd.f32 0.0, %v3615
        %v3617 = vpop.f32.mrb[0].mxu0
        %v3618 = vpop.f32.mrb[0].mxu0
        %v3619 = vadd.f32 0.0, %v3618
        %v3620 = vpop.f32.mrb[0].mxu0
        %3621 = vmatprep.mubr.bf16.mxu0 0
        %3622 = vmatmul.mubr.bf16.gmra.mrb[0].mxu0 %v3502
        %v3623 = vpop.f32.mrb[0].mxu0
        %v3624 = vadd.f32 0.0, %v3623
        %v3625 = vpop.f32.mrb[0].mxu0
        %v3626 = vpop.f32.mrb[0].mxu0
        %v3627 = vadd.f32 0.0, %v3626
        %v3628 = vpop.f32.mrb[0].mxu0
        %3629 = vmatprep.mubr.bf16.mxu0 0
        %3630 = vmatmul.mubr.bf16.gmra.mrb[0].mxu0 %v3503
        %v3631 = vpop.f32.mrb[0].mxu0
        %v3632 = vadd.f32 0.0, %v3631
        %v3633 = vpop.f32.mrb[0].mxu0
        %v3634 = vpop.f32.mrb[0].mxu0
        %v3635 = vadd.f32 0.0, %v3634
        %v3636 = vpop.f32.mrb[0].mxu0
        %3637 = vmatprep.mubr.bf16.mxu0 0
        %3638 = vmatmul.mubr.bf16.gmra.mrb[0].mxu0 %v3504
        %v3639 = vpop.f32.mrb[0].mxu0
        %v3640 = vadd.f32 0.0, %v3639
        %v3641 = vpop.f32.mrb[0].mxu0
        %v3642 = vpop.f32.mrb[0].mxu0
        %v3643 = vadd.f32 0.0, %v3642
        %v3644 = vpop.f32.mrb[0].mxu0
        %3645 = vmatprep.mubr.bf16.mxu0 0
        %3646 = vmatmul.mubr.bf16.gmra.mrb[0].mxu0 %v3505
        %v3647 = vpop.f32.mrb[0].mxu0
        %v3648 = vadd.f32 0.0, %v3647
        %v3649 = vpop.f32.mrb[0].mxu0
        %v3650 = vpop.f32.mrb[0].mxu0
        %v3651 = vadd.f32 0.0, %v3650
        %v3652 = vpop.f32.mrb[0].mxu0
        %3653 = vmatprep.mubr.bf16.mxu0 0
        %3654 = vmatmul.mubr.bf16.gmra.mrb[0].mxu0 %v3506
        %v3655 = vpop.f32.mrb[0].mxu0
        %v3656 = vadd.f32 0.0, %v3655
        %v3657 = vpop.f32.mrb[0].mxu0
        %v3658 = vpop.f32.mrb[0].mxu0
        %v3659 = vadd.f32 0.0, %v3658
        %v3660 = vpop.f32.mrb[0].mxu0
        %3661 = vmatprep.mubr.bf16.mxu0 0
        %3662 = vmatmul.mubr.bf16.gmra.mrb[0].mxu0 %v3507
        %v3663 = vpop.f32.mrb[0].mxu0
        %v3664 = vadd.f32 0.0, %v3663
        %v3665 = vpop.f32.mrb[0].mxu0
        %v3666 = vpop.f32.mrb[0].mxu0
        %v3667 = vadd.f32 0.0, %v3666
        %v3668 = vpop.f32.mrb[0].mxu0
        %3669 = vmatprep.mubr.bf16.mxu0 0
        %3670 = vmatmul.mubr.bf16.gmra.mrb[0].mxu0 %v3508
        %v3671 = vpop.f32.mrb[0].mxu0
        %v3672 = vadd.f32 0.0, %v3671
        %v3673 = vpop.f32.mrb[0].mxu0
        %v3674 = vpop.f32.mrb[0].mxu0
        %v3675 = vadd.f32 0.0, %v3674
        %v3676 = vpop.f32.mrb[0].mxu0
        %3677 = vmatprep.mubr.bf16.mxu0 0
        %3678 = vmatmul.mubr.bf16.gmra.mrb[0].mxu0 %v3509
        %v3679 = vpop.f32.mrb[0].mxu0
        %v3680 = vadd.f32 0.0, %v3679
        %v3681 = vpop.f32.mrb[0].mxu0
        %v3682 = vpop.f32.mrb[0].mxu0
        %v3683 = vadd.f32 0.0, %v3682
        %v3684 = vpop.f32.mrb[0].mxu0
        %3685 = vmatprep.mubr.bf16.mxu0 0
        %3686 = vmatmul.mubr.bf16.gmra.mrb[0].mxu0 %v3510
        %v3687 = vpop.f32.mrb[0].mxu0
        %v3688 = vadd.f32 0.0, %v3687
        %v3689 = vpop.f32.mrb[0].mxu0
        %v3690 = vpop.f32.mrb[0].mxu0
        %v3691 = vadd.f32 0.0, %v3690
        %v3692 = vpop.f32.mrb[0].mxu0
        %3693 = vmatprep.mubr.bf16.mxu0 0
        %3694 = vmatmul.mubr.bf16.gmra.mrb[0].mxu0 %v3511
        %v3695 = vpop.f32.mrb[0].mxu0
        %v3696 = vadd.f32 0.0, %v3695
        %v3697 = vpop.f32.mrb[0].mxu0
        %v3698 = vpop.f32.mrb[0].mxu0
        %v3699 = vadd.f32 0.0, %v3698
        %v3700 = vpop.f32.mrb[0].mxu0
        %3701 = vmatprep.mubr.bf16.mxu0 0
        %3702 = vmatmul.mubr.bf16.gmra.mrb[0].mxu0 %v3512
        %v3703 = vpop.f32.mrb[0].mxu0
        %v3704 = vadd.f32 0.0, %v3703
        %v3705 = vpop.f32.mrb[0].mxu0
        %v3706 = vpop.f32.mrb[0].mxu0
        %v3707 = vadd.f32 0.0, %v3706
        %v3708 = vpop.f32.mrb[0].mxu0
        %3709 = vmatprep.mubr.bf16.mxu0 0
        %3710 = vmatmul.mubr.bf16.gmra.mrb[0].mxu0 %v3513
        %v3711 = vpop.f32.mrb[0].mxu0
        %v3712 = vadd.f32 0.0, %v3711
        %v3713 = vpop.f32.mrb[0].mxu0
        %v3714 = vpop.f32.mrb[0].mxu0
        %v3715 = vadd.f32 0.0, %v3714
        %v3716 = vpop.f32.mrb[0].mxu0
        %3717 = vmatprep.mubr.bf16.mxu0 0
        %3718 = vmatmul.mubr.bf16.gmra.mrb[0].mxu0 %v3514
        %v3719 = vpop.f32.mrb[0].mxu0
        %v3720 = vadd.f32 0.0, %v3719
        %v3721 = vpop.f32.mrb[0].mxu0
        %v3722 = vpop.f32.mrb[0].mxu0
        %v3723 = vadd.f32 0.0, %v3722
        %v3724 = vpop.f32.mrb[0].mxu0
        %3725 = vmatprep.mubr.bf16.mxu0 0
        %3726 = vmatmul.mubr.bf16.gmra.mrb[0].mxu0 %v3515
        %v3727 = vpop.f32.mrb[0].mxu0
        %v3728 = vadd.f32 0.0, %v3727
        %v3729 = vpop.f32.mrb[0].mxu0
        %v3730 = vpop.f32.mrb[0].mxu0
        %v3731 = vadd.f32 0.0, %v3730
        %v3732 = vpop.f32.mrb[0].mxu0
        %3733 = vmatprep.mubr.bf16.mxu0 0
        %3734 = vmatmul.mubr.bf16.gmra.mrb[0].mxu0 %v3516
        %v3735 = vpop.f32.mrb[0].mxu0
        %v3736 = vadd.f32 0.0, %v3735
        %v3737 = vpop.f32.mrb[0].mxu0
        %v3738 = vpop.f32.mrb[0].mxu0
        %v3739 = vadd.f32 0.0, %v3738
        %v3740 = vpop.f32.mrb[0].mxu0
        %3741 = vdwg.mxu0
        %v3742 = vadd.f32 %v3355, %v3616
        %v3743 = vadd.f32 %v3356, %v3619
        %v3744 = vadd.f32 %v3357, %v3624
        %v3745 = vadd.f32 %v3358, %v3627
        %v3746 = vadd.f32 %v3359, %v3632
        %v3747 = vadd.f32 %v3360, %v3635
        %v3748 = vadd.f32 %v3361, %v3640
        %v3749 = vadd.f32 %v3362, %v3643
        %v3750 = vadd.f32 %v3363, %v3648
        %v3751 = vadd.f32 %v3364, %v3651
        %v3752 = vadd.f32 %v3365, %v3656
        %v3753 = vadd.f32 %v3366, %v3659
        %v3754 = vadd.f32 %v3367, %v3664
        %v3755 = vadd.f32 %v3368, %v3667
        %v3756 = vadd.f32 %v3369, %v3672
        %v3757 = vadd.f32 %v3370, %v3675
        %v3758 = vadd.f32 %v3371, %v3680
        %v3759 = vadd.f32 %v3372, %v3683
        %v3760 = vadd.f32 %v3373, %v3688
        %v3761 = vadd.f32 %v3374, %v3691
        %v3762 = vadd.f32 %v3375, %v3696
        %v3763 = vadd.f32 %v3376, %v3699
        %v3764 = vadd.f32 %v3377, %v3704
        %v3765 = vadd.f32 %v3378, %v3707
        %v3766 = vadd.f32 %v3379, %v3712
        %v3767 = vadd.f32 %v3380, %v3715
        %v3768 = vadd.f32 %v3381, %v3720
        %v3769 = vadd.f32 %v3382, %v3723
        %v3770 = vadd.f32 %v3383, %v3728
        %v3771 = vadd.f32 %v3384, %v3731
        %v3772 = vadd.f32 %v3385, %v3736
        %v3773 = vadd.f32 %v3386, %v3739
        %v3774 = vld [vmem:[%s3387] sm:$0xf]
        %v3775 = vld [vmem:[%s3387 + $0x4] sm:$0xf]
        %v3776 = vld [vmem:[%s3387 + $0x8] sm:$0x1]
        %v3777 = vld [vmem:[%s3387 + $0xc] sm:$0xf]
        %v3778 = vld [vmem:[%s3387 + $0x10] sm:$0xf]
        %v3779 = vld [vmem:[%s3387 + $0x14] sm:$0x1]
        %v3780 = vld [vmem:[%s3387 + $0x18] sm:$0xf]
        %v3781 = vld [vmem:[%s3387 + $0x1c] sm:$0xf]
        %v3782 = vld [vmem:[%s3387 + $0x20] sm:$0x1]
        %v3783 = vld [vmem:[%s3387 + $0x24] sm:$0xf]
        %v3784 = vld [vmem:[%s3387 + $0x28] sm:$0xf]
        %v3785 = vld [vmem:[%s3387 + $0x2c] sm:$0x1]
        %v3786 = vld [vmem:[%s3387 + $0x30] sm:$0xf]
        %v3787 = vld [vmem:[%s3387 + $0x34] sm:$0xf]
        %v3788 = vld [vmem:[%s3387 + $0x38] sm:$0x1]
        %v3789 = vld [vmem:[%s3387 + $0x3c] sm:$0xf]
        %v3790 = vld [vmem:[%s3387 + $0x40] sm:$0xf]
        %v3791 = vld [vmem:[%s3387 + $0x44] sm:$0x1]
        %v3792 = vld [vmem:[%s3387 + $0x48] sm:$0xf]
        %v3793 = vld [vmem:[%s3387 + $0x4c] sm:$0xf]
        %v3794 = vld [vmem:[%s3387 + $0x50] sm:$0x1]
        %v3795 = vld [vmem:[%s3387 + $0x54] sm:$0xf]
        %v3796 = vld [vmem:[%s3387 + $0x58] sm:$0xf]
        %v3797 = vld [vmem:[%s3387 + $0x5c] sm:$0x1]
        %v3798 = vld [vmem:[%s3387 + $0x60] sm:$0xf]
        %v3799 = vld [vmem:[%s3387 + $0x64] sm:$0xf]
        %v3800 = vld [vmem:[%s3387 + $0x68] sm:$0x1]
        %v3801 = vld [vmem:[%s3387 + $0x6c] sm:$0xf]
        %v3802 = vld [vmem:[%s3387 + $0x70] sm:$0xf]
        %v3803 = vld [vmem:[%s3387 + $0x74] sm:$0x1]
        %v3804 = vld [vmem:[%s3387 + $0x78] sm:$0xf]
        %v3805 = vld [vmem:[%s3387 + $0x7c] sm:$0xf]
        %v3806 = vld [vmem:[%s3387 + $0x80] sm:$0x1]
        %v3807 = vld [vmem:[%s3387 + $0x84] sm:$0xf]
        %v3808 = vld [vmem:[%s3387 + $0x88] sm:$0xf]
        %v3809 = vld [vmem:[%s3387 + $0x8c] sm:$0x1]
        %v3810 = vld [vmem:[%s3387 + $0x90] sm:$0xf]
        %v3811 = vld [vmem:[%s3387 + $0x94] sm:$0xf]
        %v3812 = vld [vmem:[%s3387 + $0x98] sm:$0x1]
        %v3813 = vld [vmem:[%s3387 + $0x9c] sm:$0xf]
        %v3814 = vld [vmem:[%s3387 + $0xa0] sm:$0xf]
        %v3815 = vld [vmem:[%s3387 + $0xa4] sm:$0x1]
        %v3816 = vld [vmem:[%s3387 + $0xa8] sm:$0xf]
        %v3817 = vld [vmem:[%s3387 + $0xac] sm:$0xf]
        %v3818 = vld [vmem:[%s3387 + $0xb0] sm:$0x1]
        %v3819 = vld [vmem:[%s3387 + $0xb4] sm:$0xf]
        %v3820 = vld [vmem:[%s3387 + $0xb8] sm:$0xf]
        %v3821 = vld [vmem:[%s3387 + $0xbc] sm:$0x1]
        %v3823 = vshrl.u32 %v3774, 16
        %v3825 = vrot.slane %v3823, 4
        %v3826 = vshll.u32 %v3774, 16
        %v3828 = vrot.slane %v3826, 5
        %v3829 = vor.u32 %v3825, %v3828
        %v3830 = vrot.slane %v3829, 4
        %v3832 = vshll.u32 %v3775, 16
        %v3834 = vrot.slane %v3832, 5
        %v3835 = vsel %vm283, %v3830, %v3834
        %v3836 = vshrl.u32 %v3775, 16
        %v3838 = vrot.slane %v3836, 4
        %v3839 = vor.u32 %v3838, %v3834
        %v3840 = vrot.slane %v3839, 4
        %v3842 = vshll.u32 %v3776, 16
        %v3844 = vrot.slane %v3842, 5
        %v3845 = vsel %vm283, %v3840, %v3844
        %v3847 = vshrl.u32 %v3777, 16
        %v3849 = vrot.slane %v3847, 4
        %v3850 = vshll.u32 %v3777, 16
        %v3852 = vrot.slane %v3850, 5
        %v3853 = vor.u32 %v3849, %v3852
        %v3854 = vrot.slane %v3853, 4
        %v3856 = vshll.u32 %v3778, 16
        %v3858 = vrot.slane %v3856, 5
        %v3859 = vsel %vm283, %v3854, %v3858
        %v3860 = vshrl.u32 %v3778, 16
        %v3862 = vrot.slane %v3860, 4
        %v3863 = vor.u32 %v3862, %v3858
        %v3864 = vrot.slane %v3863, 4
        %v3866 = vshll.u32 %v3779, 16
        %v3868 = vrot.slane %v3866, 5
        %v3869 = vsel %vm283, %v3864, %v3868
        %v3871 = vshrl.u32 %v3780, 16
        %v3873 = vrot.slane %v3871, 4
        %v3874 = vshll.u32 %v3780, 16
        %v3876 = vrot.slane %v3874, 5
        %v3877 = vor.u32 %v3873, %v3876
        %v3878 = vrot.slane %v3877, 4
        %v3880 = vshll.u32 %v3781, 16
        %v3882 = vrot.slane %v3880, 5
        %v3883 = vsel %vm283, %v3878, %v3882
        %v3884 = vshrl.u32 %v3781, 16
        %v3886 = vrot.slane %v3884, 4
        %v3887 = vor.u32 %v3886, %v3882
        %v3888 = vrot.slane %v3887, 4
        %v3890 = vshll.u32 %v3782, 16
        %v3892 = vrot.slane %v3890, 5
        %v3893 = vsel %vm283, %v3888, %v3892
        %v3895 = vshrl.u32 %v3783, 16
        %v3897 = vrot.slane %v3895, 4
        %v3898 = vshll.u32 %v3783, 16
        %v3900 = vrot.slane %v3898, 5
        %v3901 = vor.u32 %v3897, %v3900
        %v3902 = vrot.slane %v3901, 4
        %v3904 = vshll.u32 %v3784, 16
        %v3906 = vrot.slane %v3904, 5
        %v3907 = vsel %vm283, %v3902, %v3906
        %v3908 = vshrl.u32 %v3784, 16
        %v3910 = vrot.slane %v3908, 4
        %v3911 = vor.u32 %v3910, %v3906
        %v3912 = vrot.slane %v3911, 4
        %v3914 = vshll.u32 %v3785, 16
        %v3916 = vrot.slane %v3914, 5
        %v3917 = vsel %vm283, %v3912, %v3916
        %v3919 = vshrl.u32 %v3786, 16
        %v3921 = vrot.slane %v3919, 4
        %v3922 = vshll.u32 %v3786, 16
        %v3924 = vrot.slane %v3922, 5
        %v3925 = vor.u32 %v3921, %v3924
        %v3926 = vrot.slane %v3925, 4
        %v3928 = vshll.u32 %v3787, 16
        %v3930 = vrot.slane %v3928, 5
        %v3931 = vsel %vm283, %v3926, %v3930
        %v3932 = vshrl.u32 %v3787, 16
        %v3934 = vrot.slane %v3932, 4
        %v3935 = vor.u32 %v3934, %v3930
        %v3936 = vrot.slane %v3935, 4
        %v3938 = vshll.u32 %v3788, 16
        %v3940 = vrot.slane %v3938, 5
        %v3941 = vsel %vm283, %v3936, %v3940
        %v3943 = vshrl.u32 %v3789, 16
        %v3945 = vrot.slane %v3943, 4
        %v3946 = vshll.u32 %v3789, 16
        %v3948 = vrot.slane %v3946, 5
        %v3949 = vor.u32 %v3945, %v3948
        %v3950 = vrot.slane %v3949, 4
        %v3952 = vshll.u32 %v3790, 16
        %v3954 = vrot.slane %v3952, 5
        %v3955 = vsel %vm283, %v3950, %v3954
        %v3956 = vshrl.u32 %v3790, 16
        %v3958 = vrot.slane %v3956, 4
        %v3959 = vor.u32 %v3958, %v3954
        %v3960 = vrot.slane %v3959, 4
        %v3962 = vshll.u32 %v3791, 16
        %v3964 = vrot.slane %v3962, 5
        %v3965 = vsel %vm283, %v3960, %v3964
        %v3967 = vshrl.u32 %v3792, 16
        %v3969 = vrot.slane %v3967, 4
        %v3970 = vshll.u32 %v3792, 16
        %v3972 = vrot.slane %v3970, 5
        %v3973 = vor.u32 %v3969, %v3972
        %v3974 = vrot.slane %v3973, 4
        %v3976 = vshll.u32 %v3793, 16
        %v3978 = vrot.slane %v3976, 5
        %v3979 = vsel %vm283, %v3974, %v3978
        %v3980 = vshrl.u32 %v3793, 16
        %v3982 = vrot.slane %v3980, 4
        %v3983 = vor.u32 %v3982, %v3978
        %v3984 = vrot.slane %v3983, 4
        %v3986 = vshll.u32 %v3794, 16
        %v3988 = vrot.slane %v3986, 5
        %v3989 = vsel %vm283, %v3984, %v3988
        %v3991 = vshrl.u32 %v3795, 16
        %v3993 = vrot.slane %v3991, 4
        %v3994 = vshll.u32 %v3795, 16
        %v3996 = vrot.slane %v3994, 5
        %v3997 = vor.u32 %v3993, %v3996
        %v3998 = vrot.slane %v3997, 4
        %v4000 = vshll.u32 %v3796, 16
        %v4002 = vrot.slane %v4000, 5
        %v4003 = vsel %vm283, %v3998, %v4002
        %v4004 = vshrl.u32 %v3796, 16
        %v4006 = vrot.slane %v4004, 4
        %v4007 = vor.u32 %v4006, %v4002
        %v4008 = vrot.slane %v4007, 4
        %v4010 = vshll.u32 %v3797, 16
        %v4012 = vrot.slane %v4010, 5
        %v4013 = vsel %vm283, %v4008, %v4012
        %v4015 = vshrl.u32 %v3798, 16
        %v4017 = vrot.slane %v4015, 4
        %v4018 = vshll.u32 %v3798, 16
        %v4020 = vrot.slane %v4018, 5
        %v4021 = vor.u32 %v4017, %v4020
        %v4022 = vrot.slane %v4021, 4
        %v4024 = vshll.u32 %v3799, 16
        %v4026 = vrot.slane %v4024, 5
        %v4027 = vsel %vm283, %v4022, %v4026
        %v4028 = vshrl.u32 %v3799, 16
        %v4030 = vrot.slane %v4028, 4
        %v4031 = vor.u32 %v4030, %v4026
        %v4032 = vrot.slane %v4031, 4
        %v4034 = vshll.u32 %v3800, 16
        %v4036 = vrot.slane %v4034, 5
        %v4037 = vsel %vm283, %v4032, %v4036
        %v4039 = vshrl.u32 %v3801, 16
        %v4041 = vrot.slane %v4039, 4
        %v4042 = vshll.u32 %v3801, 16
        %v4044 = vrot.slane %v4042, 5
        %v4045 = vor.u32 %v4041, %v4044
        %v4046 = vrot.slane %v4045, 4
        %v4048 = vshll.u32 %v3802, 16
        %v4050 = vrot.slane %v4048, 5
        %v4051 = vsel %vm283, %v4046, %v4050
        %v4052 = vshrl.u32 %v3802, 16
        %v4054 = vrot.slane %v4052, 4
        %v4055 = vor.u32 %v4054, %v4050
        %v4056 = vrot.slane %v4055, 4
        %v4058 = vshll.u32 %v3803, 16
        %v4060 = vrot.slane %v4058, 5
        %v4061 = vsel %vm283, %v4056, %v4060
        %v4063 = vshrl.u32 %v3804, 16
        %v4065 = vrot.slane %v4063, 4
        %v4066 = vshll.u32 %v3804, 16
        %v4068 = vrot.slane %v4066, 5
        %v4069 = vor.u32 %v4065, %v4068
        %v4070 = vrot.slane %v4069, 4
        %v4072 = vshll.u32 %v3805, 16
        %v4074 = vrot.slane %v4072, 5
        %v4075 = vsel %vm283, %v4070, %v4074
        %v4076 = vshrl.u32 %v3805, 16
        %v4078 = vrot.slane %v4076, 4
        %v4079 = vor.u32 %v4078, %v4074
        %v4080 = vrot.slane %v4079, 4
        %v4082 = vshll.u32 %v3806, 16
        %v4084 = vrot.slane %v4082, 5
        %v4085 = vsel %vm283, %v4080, %v4084
        %v4087 = vshrl.u32 %v3807, 16
        %v4089 = vrot.slane %v4087, 4
        %v4090 = vshll.u32 %v3807, 16
        %v4092 = vrot.slane %v4090, 5
        %v4093 = vor.u32 %v4089, %v4092
        %v4094 = vrot.slane %v4093, 4
        %v4096 = vshll.u32 %v3808, 16
        %v4098 = vrot.slane %v4096, 5
        %v4099 = vsel %vm283, %v4094, %v4098
        %v4100 = vshrl.u32 %v3808, 16
        %v4102 = vrot.slane %v4100, 4
        %v4103 = vor.u32 %v4102, %v4098
        %v4104 = vrot.slane %v4103, 4
        %v4106 = vshll.u32 %v3809, 16
        %v4108 = vrot.slane %v4106, 5
        %v4109 = vsel %vm283, %v4104, %v4108
        %v4111 = vshrl.u32 %v3810, 16
        %v4113 = vrot.slane %v4111, 4
        %v4114 = vshll.u32 %v3810, 16
        %v4116 = vrot.slane %v4114, 5
        %v4117 = vor.u32 %v4113, %v4116
        %v4118 = vrot.slane %v4117, 4
        %v4120 = vshll.u32 %v3811, 16
        %v4122 = vrot.slane %v4120, 5
        %v4123 = vsel %vm283, %v4118, %v4122
        %v4124 = vshrl.u32 %v3811, 16
        %v4126 = vrot.slane %v4124, 4
        %v4127 = vor.u32 %v4126, %v4122
        %v4128 = vrot.slane %v4127, 4
        %v4130 = vshll.u32 %v3812, 16
        %v4132 = vrot.slane %v4130, 5
        %v4133 = vsel %vm283, %v4128, %v4132
        %v4135 = vshrl.u32 %v3813, 16
        %v4137 = vrot.slane %v4135, 4
        %v4138 = vshll.u32 %v3813, 16
        %v4140 = vrot.slane %v4138, 5
        %v4141 = vor.u32 %v4137, %v4140
        %v4142 = vrot.slane %v4141, 4
        %v4144 = vshll.u32 %v3814, 16
        %v4146 = vrot.slane %v4144, 5
        %v4147 = vsel %vm283, %v4142, %v4146
        %v4148 = vshrl.u32 %v3814, 16
        %v4150 = vrot.slane %v4148, 4
        %v4151 = vor.u32 %v4150, %v4146
        %v4152 = vrot.slane %v4151, 4
        %v4154 = vshll.u32 %v3815, 16
        %v4156 = vrot.slane %v4154, 5
        %v4157 = vsel %vm283, %v4152, %v4156
        %v4159 = vshrl.u32 %v3816, 16
        %v4161 = vrot.slane %v4159, 4
        %v4162 = vshll.u32 %v3816, 16
        %v4164 = vrot.slane %v4162, 5
        %v4165 = vor.u32 %v4161, %v4164
        %v4166 = vrot.slane %v4165, 4
        %v4168 = vshll.u32 %v3817, 16
        %v4170 = vrot.slane %v4168, 5
        %v4171 = vsel %vm283, %v4166, %v4170
        %v4172 = vshrl.u32 %v3817, 16
        %v4174 = vrot.slane %v4172, 4
        %v4175 = vor.u32 %v4174, %v4170
        %v4176 = vrot.slane %v4175, 4
        %v4178 = vshll.u32 %v3818, 16
        %v4180 = vrot.slane %v4178, 5
        %v4181 = vsel %vm283, %v4176, %v4180
        %v4183 = vshrl.u32 %v3819, 16
        %v4185 = vrot.slane %v4183, 4
        %v4186 = vshll.u32 %v3819, 16
        %v4188 = vrot.slane %v4186, 5
        %v4189 = vor.u32 %v4185, %v4188
        %v4190 = vrot.slane %v4189, 4
        %v4192 = vshll.u32 %v3820, 16
        %v4194 = vrot.slane %v4192, 5
        %v4195 = vsel %vm283, %v4190, %v4194
        %v4196 = vshrl.u32 %v3820, 16
        %v4198 = vrot.slane %v4196, 4
        %v4199 = vor.u32 %v4198, %v4194
        %v4200 = vrot.slane %v4199, 4
        %v4202 = vshll.u32 %v3821, 16
        %v4204 = vrot.slane %v4202, 5
        %v4205 = vsel %vm283, %v4200, %v4204
        %s4206 = scalar_lea.vmem %s1, 448
        %v4207 = vld [vmem:[%s4206] sm:$0xf]
        %v4208 = vld [vmem:[%s4206 + $0x4] sm:$0xf]
        %v4209 = vld [vmem:[%s4206 + $0x8] sm:$0xf]
        %v4210 = vld [vmem:[%s4206 + $0xc] sm:$0xf]
        %v4211 = vld [vmem:[%s4206 + $0x10] sm:$0xf]
        %v4212 = vld [vmem:[%s4206 + $0x14] sm:$0xf]
        %v4213 = vld [vmem:[%s4206 + $0x18] sm:$0xf]
        %v4214 = vld [vmem:[%s4206 + $0x1c] sm:$0xf]
        %v4215 = vld [vmem:[%s4206 + $0x20] sm:$0xf]
        %v4216 = vld [vmem:[%s4206 + $0x24] sm:$0xf]
        %v4217 = vld [vmem:[%s4206 + $0x28] sm:$0xf]
        %v4218 = vld [vmem:[%s4206 + $0x2c] sm:$0xf]
        %v4219 = vld [vmem:[%s4206 + $0x30] sm:$0xf]
        %v4220 = vld [vmem:[%s4206 + $0x34] sm:$0xf]
        %v4221 = vld [vmem:[%s4206 + $0x38] sm:$0xf]
        %v4222 = vld [vmem:[%s4206 + $0x3c] sm:$0xf]
        %v4223 = vunpack.c.l.b16 %v3835
        %v4224 = vunpack.c.l.b16 %v3845
        %v4225 = vunpack.c.l.b16 %v3859
        %v4226 = vunpack.c.l.b16 %v3869
        %v4227 = vunpack.c.l.b16 %v3883
        %v4228 = vunpack.c.l.b16 %v3893
        %v4229 = vunpack.c.l.b16 %v3907
        %v4230 = vunpack.c.l.b16 %v3917
        %v4231 = vunpack.c.l.b16 %v3931
        %v4232 = vunpack.c.l.b16 %v3941
        %v4233 = vunpack.c.l.b16 %v3955
        %v4234 = vunpack.c.l.b16 %v3965
        %v4235 = vunpack.c.l.b16 %v3979
        %v4236 = vunpack.c.l.b16 %v3989
        %v4237 = vunpack.c.l.b16 %v4003
        %v4238 = vunpack.c.l.b16 %v4013
        %v4239 = vunpack.c.l.b16 %v4027
        %v4240 = vunpack.c.l.b16 %v4037
        %v4241 = vunpack.c.l.b16 %v4051
        %v4242 = vunpack.c.l.b16 %v4061
        %v4243 = vunpack.c.l.b16 %v4075
        %v4244 = vunpack.c.l.b16 %v4085
        %v4245 = vunpack.c.l.b16 %v4099
        %v4246 = vunpack.c.l.b16 %v4109
        %v4247 = vunpack.c.l.b16 %v4123
        %v4248 = vunpack.c.l.b16 %v4133
        %v4249 = vunpack.c.l.b16 %v4147
        %v4250 = vunpack.c.l.b16 %v4157
        %v4251 = vunpack.c.l.b16 %v4171
        %v4252 = vunpack.c.l.b16 %v4181
        %v4253 = vunpack.c.l.b16 %v4195
        %v4254 = vunpack.c.l.b16 %v4205
        %v4255 = vpack.c.b16 %v4224, %v4223
        %v4256 = vpack.c.b16 %v4226, %v4225
        %v4257 = vpack.c.b16 %v4228, %v4227
        %v4258 = vpack.c.b16 %v4230, %v4229
        %v4259 = vpack.c.b16 %v4232, %v4231
        %v4260 = vpack.c.b16 %v4234, %v4233
        %v4261 = vpack.c.b16 %v4236, %v4235
        %v4262 = vpack.c.b16 %v4238, %v4237
        %v4263 = vpack.c.b16 %v4240, %v4239
        %v4264 = vpack.c.b16 %v4242, %v4241
        %v4265 = vpack.c.b16 %v4244, %v4243
        %v4266 = vpack.c.b16 %v4246, %v4245
        %v4267 = vpack.c.b16 %v4248, %v4247
        %v4268 = vpack.c.b16 %v4250, %v4249
        %v4269 = vpack.c.b16 %v4252, %v4251
        %v4270 = vpack.c.b16 %v4254, %v4253
        %v4303 = vunpack.c.l.b16 %v4207
        %v4304 = vunpack.c.l.b16 %v4208
        %v4305 = vunpack.c.l.b16 %v4209
        %v4306 = vunpack.c.l.b16 %v4210
        %v4307 = vunpack.c.l.b16 %v4211
        %v4308 = vunpack.c.l.b16 %v4212
        %v4309 = vunpack.c.l.b16 %v4213
        %v4310 = vunpack.c.l.b16 %v4214
        %v4311 = vunpack.c.l.b16 %v4215
        %v4312 = vunpack.c.l.b16 %v4216
        %v4313 = vunpack.c.l.b16 %v4217
        %v4314 = vunpack.c.l.b16 %v4218
        %v4315 = vunpack.c.l.b16 %v4219
        %v4316 = vunpack.c.l.b16 %v4220
        %v4317 = vunpack.c.l.b16 %v4221
        %v4318 = vunpack.c.l.b16 %v4222
        %v4319 = vpack.c.b16 %v4304, %v4303
        %v4320 = vpack.c.b16 %v4306, %v4305
        %v4321 = vpack.c.b16 %v4308, %v4307
        %v4322 = vpack.c.b16 %v4310, %v4309
        %v4323 = vpack.c.b16 %v4312, %v4311
        %v4324 = vpack.c.b16 %v4314, %v4313
        %v4325 = vpack.c.b16 %v4316, %v4315
        %v4326 = vpack.c.b16 %v4318, %v4317
        %4335 = vmatprep.subr.bf16.mxu0 0
        %4336 = vmatpush1.bf16.msra.mxu0 %v4319
        %4337 = vmatprep.subr.bf16.mxu0 0
        %4338 = vmatpush1.bf16.msra.mxu0 %v4320
        %4339 = vmatprep.subr.bf16.mxu0 0
        %4340 = vmatpush1.bf16.msra.mxu0 %v4321
        %4341 = vmatprep.subr.bf16.mxu0 0
        %4342 = vmatpush1.bf16.msra.mxu0 %v4322
        %4343 = vmatprep.subr.bf16.mxu0 0
        %4344 = vmatpush1.bf16.msra.mxu0 %v4323
        %4345 = vmatprep.subr.bf16.mxu0 0
        %4346 = vmatpush1.bf16.msra.mxu0 %v4324
        %4347 = vmatprep.subr.bf16.mxu0 0
        %4348 = vmatpush1.bf16.msra.mxu0 %v4325
        %4349 = vmatprep.subr.bf16.mxu0 0
        %4350 = vmatpush1.bf16.msra.mxu0 %v4326
        %4351 = vmatprep.subr.bf16.mxu0 0
        %4352 = vmatpush1.bf16.msra.mxu0 0
        %4353 = vmatprep.subr.bf16.mxu0 0
        %4354 = vmatpush1.bf16.msra.mxu0 0
        %4355 = vmatprep.subr.bf16.mxu0 0
        %4356 = vmatpush1.bf16.msra.mxu0 0
        %4357 = vmatprep.subr.bf16.mxu0 0
        %4358 = vmatpush1.bf16.msra.mxu0 0
        %4359 = vmatprep.subr.bf16.mxu0 0
        %4360 = vmatpush1.bf16.msra.mxu0 0
        %4361 = vmatprep.subr.bf16.mxu0 0
        %4362 = vmatpush1.bf16.msra.mxu0 0
        %4363 = vmatprep.subr.bf16.mxu0 0
        %4364 = vmatpush1.bf16.msra.mxu0 0
        %4365 = vmatprep.subr.bf16.mxu0 0
        %4366 = vmatpush1.bf16.msra.mxu0 0
        %4367 = vmatprep.mubr.bf16.mxu0 0
        %4368 = vmatmul.mubr.bf16.gmra.mrb[0].mxu0 %v4255
        %v4369 = vpop.f32.mrb[0].mxu0
        %v4370 = vadd.f32 0.0, %v4369
        %v4371 = vpop.f32.mrb[0].mxu0
        %v4372 = vpop.f32.mrb[0].mxu0
        %v4373 = vadd.f32 0.0, %v4372
        %v4374 = vpop.f32.mrb[0].mxu0
        %4375 = vmatprep.mubr.bf16.mxu0 0
        %4376 = vmatmul.mubr.bf16.gmra.mrb[0].mxu0 %v4256
        %v4377 = vpop.f32.mrb[0].mxu0
        %v4378 = vadd.f32 0.0, %v4377
        %v4379 = vpop.f32.mrb[0].mxu0
        %v4380 = vpop.f32.mrb[0].mxu0
        %v4381 = vadd.f32 0.0, %v4380
        %v4382 = vpop.f32.mrb[0].mxu0
        %4383 = vmatprep.mubr.bf16.mxu0 0
        %4384 = vmatmul.mubr.bf16.gmra.mrb[0].mxu0 %v4257
        %v4385 = vpop.f32.mrb[0].mxu0
        %v4386 = vadd.f32 0.0, %v4385
        %v4387 = vpop.f32.mrb[0].mxu0
        %v4388 = vpop.f32.mrb[0].mxu0
        %v4389 = vadd.f32 0.0, %v4388
        %v4390 = vpop.f32.mrb[0].mxu0
        %4391 = vmatprep.mubr.bf16.mxu0 0
        %4392 = vmatmul.mubr.bf16.gmra.mrb[0].mxu0 %v4258
        %v4393 = vpop.f32.mrb[0].mxu0
        %v4394 = vadd.f32 0.0, %v4393
        %v4395 = vpop.f32.mrb[0].mxu0
        %v4396 = vpop.f32.mrb[0].mxu0
        %v4397 = vadd.f32 0.0, %v4396
        %v4398 = vpop.f32.mrb[0].mxu0
        %4399 = vmatprep.mubr.bf16.mxu0 0
        %4400 = vmatmul.mubr.bf16.gmra.mrb[0].mxu0 %v4259
        %v4401 = vpop.f32.mrb[0].mxu0
        %v4402 = vadd.f32 0.0, %v4401
        %v4403 = vpop.f32.mrb[0].mxu0
        %v4404 = vpop.f32.mrb[0].mxu0
        %v4405 = vadd.f32 0.0, %v4404
        %v4406 = vpop.f32.mrb[0].mxu0
        %4407 = vmatprep.mubr.bf16.mxu0 0
        %4408 = vmatmul.mubr.bf16.gmra.mrb[0].mxu0 %v4260
        %v4409 = vpop.f32.mrb[0].mxu0
        %v4410 = vadd.f32 0.0, %v4409
        %v4411 = vpop.f32.mrb[0].mxu0
        %v4412 = vpop.f32.mrb[0].mxu0
        %v4413 = vadd.f32 0.0, %v4412
        %v4414 = vpop.f32.mrb[0].mxu0
        %4415 = vmatprep.mubr.bf16.mxu0 0
        %4416 = vmatmul.mubr.bf16.gmra.mrb[0].mxu0 %v4261
        %v4417 = vpop.f32.mrb[0].mxu0
        %v4418 = vadd.f32 0.0, %v4417
        %v4419 = vpop.f32.mrb[0].mxu0
        %v4420 = vpop.f32.mrb[0].mxu0
        %v4421 = vadd.f32 0.0, %v4420
        %v4422 = vpop.f32.mrb[0].mxu0
        %4423 = vmatprep.mubr.bf16.mxu0 0
        %4424 = vmatmul.mubr.bf16.gmra.mrb[0].mxu0 %v4262
        %v4425 = vpop.f32.mrb[0].mxu0
        %v4426 = vadd.f32 0.0, %v4425
        %v4427 = vpop.f32.mrb[0].mxu0
        %v4428 = vpop.f32.mrb[0].mxu0
        %v4429 = vadd.f32 0.0, %v4428
        %v4430 = vpop.f32.mrb[0].mxu0
        %4431 = vmatprep.mubr.bf16.mxu0 0
        %4432 = vmatmul.mubr.bf16.gmra.mrb[0].mxu0 %v4263
        %v4433 = vpop.f32.mrb[0].mxu0
        %v4434 = vadd.f32 0.0, %v4433
        %v4435 = vpop.f32.mrb[0].mxu0
        %v4436 = vpop.f32.mrb[0].mxu0
        %v4437 = vadd.f32 0.0, %v4436
        %v4438 = vpop.f32.mrb[0].mxu0
        %4439 = vmatprep.mubr.bf16.mxu0 0
        %4440 = vmatmul.mubr.bf16.gmra.mrb[0].mxu0 %v4264
        %v4441 = vpop.f32.mrb[0].mxu0
        %v4442 = vadd.f32 0.0, %v4441
        %v4443 = vpop.f32.mrb[0].mxu0
        %v4444 = vpop.f32.mrb[0].mxu0
        %v4445 = vadd.f32 0.0, %v4444
        %v4446 = vpop.f32.mrb[0].mxu0
        %4447 = vmatprep.mubr.bf16.mxu0 0
        %4448 = vmatmul.mubr.bf16.gmra.mrb[0].mxu0 %v4265
        %v4449 = vpop.f32.mrb[0].mxu0
        %v4450 = vadd.f32 0.0, %v4449
        %v4451 = vpop.f32.mrb[0].mxu0
        %v4452 = vpop.f32.mrb[0].mxu0
        %v4453 = vadd.f32 0.0, %v4452
        %v4454 = vpop.f32.mrb[0].mxu0
        %4455 = vmatprep.mubr.bf16.mxu0 0
        %4456 = vmatmul.mubr.bf16.gmra.mrb[0].mxu0 %v4266
        %v4457 = vpop.f32.mrb[0].mxu0
        %v4458 = vadd.f32 0.0, %v4457
        %v4459 = vpop.f32.mrb[0].mxu0
        %v4460 = vpop.f32.mrb[0].mxu0
        %v4461 = vadd.f32 0.0, %v4460
        %v4462 = vpop.f32.mrb[0].mxu0
        %4463 = vmatprep.mubr.bf16.mxu0 0
        %4464 = vmatmul.mubr.bf16.gmra.mrb[0].mxu0 %v4267
        %v4465 = vpop.f32.mrb[0].mxu0
        %v4466 = vadd.f32 0.0, %v4465
        %v4467 = vpop.f32.mrb[0].mxu0
        %v4468 = vpop.f32.mrb[0].mxu0
        %v4469 = vadd.f32 0.0, %v4468
        %v4470 = vpop.f32.mrb[0].mxu0
        %4471 = vmatprep.mubr.bf16.mxu0 0
        %4472 = vmatmul.mubr.bf16.gmra.mrb[0].mxu0 %v4268
        %v4473 = vpop.f32.mrb[0].mxu0
        %v4474 = vadd.f32 0.0, %v4473
        %v4475 = vpop.f32.mrb[0].mxu0
        %v4476 = vpop.f32.mrb[0].mxu0
        %v4477 = vadd.f32 0.0, %v4476
        %v4478 = vpop.f32.mrb[0].mxu0
        %4479 = vmatprep.mubr.bf16.mxu0 0
        %4480 = vmatmul.mubr.bf16.gmra.mrb[0].mxu0 %v4269
        %v4481 = vpop.f32.mrb[0].mxu0
        %v4482 = vadd.f32 0.0, %v4481
        %v4483 = vpop.f32.mrb[0].mxu0
        %v4484 = vpop.f32.mrb[0].mxu0
        %v4485 = vadd.f32 0.0, %v4484
        %v4486 = vpop.f32.mrb[0].mxu0
        %4487 = vmatprep.mubr.bf16.mxu0 0
        %4488 = vmatmul.mubr.bf16.gmra.mrb[0].mxu0 %v4270
        %v4489 = vpop.f32.mrb[0].mxu0
        %v4490 = vadd.f32 0.0, %v4489
        %v4491 = vpop.f32.mrb[0].mxu0
        %v4492 = vpop.f32.mrb[0].mxu0
        %v4493 = vadd.f32 0.0, %v4492
        %v4494 = vpop.f32.mrb[0].mxu0
        %4495 = vdwg.mxu0
        %v4496 = vadd.f32 %v3742, %v4370
        %v4497 = vadd.f32 %v3743, %v4373
        %v4498 = vadd.f32 %v3744, %v4378
        %v4499 = vadd.f32 %v3745, %v4381
        %v4500 = vadd.f32 %v3746, %v4386
        %v4501 = vadd.f32 %v3747, %v4389
        %v4502 = vadd.f32 %v3748, %v4394
        %v4503 = vadd.f32 %v3749, %v4397
        %v4504 = vadd.f32 %v3750, %v4402
        %v4505 = vadd.f32 %v3751, %v4405
        %v4506 = vadd.f32 %v3752, %v4410
        %v4507 = vadd.f32 %v3753, %v4413
        %v4508 = vadd.f32 %v3754, %v4418
        %v4509 = vadd.f32 %v3755, %v4421
        %v4510 = vadd.f32 %v3756, %v4426
        %v4511 = vadd.f32 %v3757, %v4429
        %v4512 = vadd.f32 %v3758, %v4434
        %v4513 = vadd.f32 %v3759, %v4437
        %v4514 = vadd.f32 %v3760, %v4442
        %v4515 = vadd.f32 %v3761, %v4445
        %v4516 = vadd.f32 %v3762, %v4450
        %v4517 = vadd.f32 %v3763, %v4453
        %v4518 = vadd.f32 %v3764, %v4458
        %v4519 = vadd.f32 %v3765, %v4461
        %v4520 = vadd.f32 %v3766, %v4466
        %v4521 = vadd.f32 %v3767, %v4469
        %v4522 = vadd.f32 %v3768, %v4474
        %v4523 = vadd.f32 %v3769, %v4477
        %v4524 = vadd.f32 %v3770, %v4482
        %v4525 = vadd.f32 %v3771, %v4485
        %v4526 = vadd.f32 %v3772, %v4490
        %v4527 = vadd.f32 %v3773, %v4493
        %v4528 = vld [vmem:[%s3387] sm:$0xe]
        %v4529 = vld [vmem:[%s3387 + $0xc] sm:$0xe]
        %v4530 = vld [vmem:[%s3387 + $0x18] sm:$0xe]
        %v4531 = vld [vmem:[%s3387 + $0x24] sm:$0xe]
        %v4532 = vld [vmem:[%s3387 + $0x30] sm:$0xe]
        %v4533 = vld [vmem:[%s3387 + $0x3c] sm:$0xe]
        %v4534 = vld [vmem:[%s3387 + $0x48] sm:$0xe]
        %v4535 = vld [vmem:[%s3387 + $0x54] sm:$0xe]
        %v4536 = vld [vmem:[%s3387 + $0x60] sm:$0xe]
        %v4537 = vld [vmem:[%s3387 + $0x6c] sm:$0xe]
        %v4538 = vld [vmem:[%s3387 + $0x78] sm:$0xe]
        %v4539 = vld [vmem:[%s3387 + $0x84] sm:$0xe]
        %v4540 = vld [vmem:[%s3387 + $0x90] sm:$0xe]
        %v4541 = vld [vmem:[%s3387 + $0x9c] sm:$0xe]
        %v4542 = vld [vmem:[%s3387 + $0xa8] sm:$0xe]
        %v4543 = vld [vmem:[%s3387 + $0xb4] sm:$0xe]
        %v4592 = vrot.slane %v4528, 5
        %v4593 = vrot.slane %v4592, 4
        %v4594 = vrot.slane %v3775, 5
        %v4595 = vsel %vm1313, %v4593, %v4594
        %v4596 = vrot.slane %v4594, 4
        %v4597 = vrot.slane %v3776, 5
        %v4598 = vsel %vm1313, %v4596, %v4597
        %v4599 = vrot.slane %v4529, 5
        %v4600 = vrot.slane %v4599, 4
        %v4601 = vrot.slane %v3778, 5
        %v4602 = vsel %vm1313, %v4600, %v4601
        %v4603 = vrot.slane %v4601, 4
        %v4604 = vrot.slane %v3779, 5
        %v4605 = vsel %vm1313, %v4603, %v4604
        %v4606 = vrot.slane %v4530, 5
        %v4607 = vrot.slane %v4606, 4
        %v4608 = vrot.slane %v3781, 5
        %v4609 = vsel %vm1313, %v4607, %v4608
        %v4610 = vrot.slane %v4608, 4
        %v4611 = vrot.slane %v3782, 5
        %v4612 = vsel %vm1313, %v4610, %v4611
        %v4613 = vrot.slane %v4531, 5
        %v4614 = vrot.slane %v4613, 4
        %v4615 = vrot.slane %v3784, 5
        %v4616 = vsel %vm1313, %v4614, %v4615
        %v4617 = vrot.slane %v4615, 4
        %v4618 = vrot.slane %v3785, 5
        %v4619 = vsel %vm1313, %v4617, %v4618
        %v4620 = vrot.slane %v4532, 5
        %v4621 = vrot.slane %v4620, 4
        %v4622 = vrot.slane %v3787, 5
        %v4623 = vsel %vm1313, %v4621, %v4622
        %v4624 = vrot.slane %v4622, 4
        %v4625 = vrot.slane %v3788, 5
        %v4626 = vsel %vm1313, %v4624, %v4625
        %v4627 = vrot.slane %v4533, 5
        %v4628 = vrot.slane %v4627, 4
        %v4629 = vrot.slane %v3790, 5
        %v4630 = vsel %vm1313, %v4628, %v4629
        %v4631 = vrot.slane %v4629, 4
        %v4632 = vrot.slane %v3791, 5
        %v4633 = vsel %vm1313, %v4631, %v4632
        %v4634 = vrot.slane %v4534, 5
        %v4635 = vrot.slane %v4634, 4
        %v4636 = vrot.slane %v3793, 5
        %v4637 = vsel %vm1313, %v4635, %v4636
        %v4638 = vrot.slane %v4636, 4
        %v4639 = vrot.slane %v3794, 5
        %v4640 = vsel %vm1313, %v4638, %v4639
        %v4641 = vrot.slane %v4535, 5
        %v4642 = vrot.slane %v4641, 4
        %v4643 = vrot.slane %v3796, 5
        %v4644 = vsel %vm1313, %v4642, %v4643
        %v4645 = vrot.slane %v4643, 4
        %v4646 = vrot.slane %v3797, 5
        %v4647 = vsel %vm1313, %v4645, %v4646
        %v4648 = vrot.slane %v4536, 5
        %v4649 = vrot.slane %v4648, 4
        %v4650 = vrot.slane %v3799, 5
        %v4651 = vsel %vm1313, %v4649, %v4650
        %v4652 = vrot.slane %v4650, 4
        %v4653 = vrot.slane %v3800, 5
        %v4654 = vsel %vm1313, %v4652, %v4653
        %v4655 = vrot.slane %v4537, 5
        %v4656 = vrot.slane %v4655, 4
        %v4657 = vrot.slane %v3802, 5
        %v4658 = vsel %vm1313, %v4656, %v4657
        %v4659 = vrot.slane %v4657, 4
        %v4660 = vrot.slane %v3803, 5
        %v4661 = vsel %vm1313, %v4659, %v4660
        %v4662 = vrot.slane %v4538, 5
        %v4663 = vrot.slane %v4662, 4
        %v4664 = vrot.slane %v3805, 5
        %v4665 = vsel %vm1313, %v4663, %v4664
        %v4666 = vrot.slane %v4664, 4
        %v4667 = vrot.slane %v3806, 5
        %v4668 = vsel %vm1313, %v4666, %v4667
        %v4669 = vrot.slane %v4539, 5
        %v4670 = vrot.slane %v4669, 4
        %v4671 = vrot.slane %v3808, 5
        %v4672 = vsel %vm1313, %v4670, %v4671
        %v4673 = vrot.slane %v4671, 4
        %v4674 = vrot.slane %v3809, 5
        %v4675 = vsel %vm1313, %v4673, %v4674
        %v4676 = vrot.slane %v4540, 5
        %v4677 = vrot.slane %v4676, 4
        %v4678 = vrot.slane %v3811, 5
        %v4679 = vsel %vm1313, %v4677, %v4678
        %v4680 = vrot.slane %v4678, 4
        %v4681 = vrot.slane %v3812, 5
        %v4682 = vsel %vm1313, %v4680, %v4681
        %v4683 = vrot.slane %v4541, 5
        %v4684 = vrot.slane %v4683, 4
        %v4685 = vrot.slane %v3814, 5
        %v4686 = vsel %vm1313, %v4684, %v4685
        %v4687 = vrot.slane %v4685, 4
        %v4688 = vrot.slane %v3815, 5
        %v4689 = vsel %vm1313, %v4687, %v4688
        %v4690 = vrot.slane %v4542, 5
        %v4691 = vrot.slane %v4690, 4
        %v4692 = vrot.slane %v3817, 5
        %v4693 = vsel %vm1313, %v4691, %v4692
        %v4694 = vrot.slane %v4692, 4
        %v4695 = vrot.slane %v3818, 5
        %v4696 = vsel %vm1313, %v4694, %v4695
        %v4697 = vrot.slane %v4543, 5
        %v4698 = vrot.slane %v4697, 4
        %v4699 = vrot.slane %v3820, 5
        %v4700 = vsel %vm1313, %v4698, %v4699
        %v4701 = vrot.slane %v4699, 4
        %v4702 = vrot.slane %v3821, 5
        %v4703 = vsel %vm1313, %v4701, %v4702
        %s4704 = scalar_lea.vmem %s1, 512
        %v4705 = vld [vmem:[%s4704] sm:$0xf]
        %v4706 = vld [vmem:[%s4704 + $0x4] sm:$0xf]
        %v4707 = vld [vmem:[%s4704 + $0x8] sm:$0xf]
        %v4708 = vld [vmem:[%s4704 + $0xc] sm:$0xf]
        %v4709 = vld [vmem:[%s4704 + $0x10] sm:$0xf]
        %v4710 = vld [vmem:[%s4704 + $0x14] sm:$0xf]
        %v4711 = vld [vmem:[%s4704 + $0x18] sm:$0xf]
        %v4712 = vld [vmem:[%s4704 + $0x1c] sm:$0xf]
        %v4713 = vld [vmem:[%s4704 + $0x20] sm:$0xf]
        %v4714 = vld [vmem:[%s4704 + $0x24] sm:$0xf]
        %v4715 = vld [vmem:[%s4704 + $0x28] sm:$0xf]
        %v4716 = vld [vmem:[%s4704 + $0x2c] sm:$0xf]
        %v4717 = vld [vmem:[%s4704 + $0x30] sm:$0xf]
        %v4718 = vld [vmem:[%s4704 + $0x34] sm:$0xf]
        %v4719 = vld [vmem:[%s4704 + $0x38] sm:$0xf]
        %v4720 = vld [vmem:[%s4704 + $0x3c] sm:$0xf]
        %v4721 = vunpack.c.l.b16 %v4595
        %v4722 = vunpack.c.l.b16 %v4598
        %v4723 = vunpack.c.l.b16 %v4602
        %v4724 = vunpack.c.l.b16 %v4605
        %v4725 = vunpack.c.l.b16 %v4609
        %v4726 = vunpack.c.l.b16 %v4612
        %v4727 = vunpack.c.l.b16 %v4616
        %v4728 = vunpack.c.l.b16 %v4619
        %v4729 = vunpack.c.l.b16 %v4623
        %v4730 = vunpack.c.l.b16 %v4626
        %v4731 = vunpack.c.l.b16 %v4630
        %v4732 = vunpack.c.l.b16 %v4633
        %v4733 = vunpack.c.l.b16 %v4637
        %v4734 = vunpack.c.l.b16 %v4640
        %v4735 = vunpack.c.l.b16 %v4644
        %v4736 = vunpack.c.l.b16 %v4647
        %v4737 = vunpack.c.l.b16 %v4651
        %v4738 = vunpack.c.l.b16 %v4654
        %v4739 = vunpack.c.l.b16 %v4658
        %v4740 = vunpack.c.l.b16 %v4661
        %v4741 = vunpack.c.l.b16 %v4665
        %v4742 = vunpack.c.l.b16 %v4668
        %v4743 = vunpack.c.l.b16 %v4672
        %v4744 = vunpack.c.l.b16 %v4675
        %v4745 = vunpack.c.l.b16 %v4679
        %v4746 = vunpack.c.l.b16 %v4682
        %v4747 = vunpack.c.l.b16 %v4686
        %v4748 = vunpack.c.l.b16 %v4689
        %v4749 = vunpack.c.l.b16 %v4693
        %v4750 = vunpack.c.l.b16 %v4696
        %v4751 = vunpack.c.l.b16 %v4700
        %v4752 = vunpack.c.l.b16 %v4703
        %v4753 = vpack.c.b16 %v4722, %v4721
        %v4754 = vpack.c.b16 %v4724, %v4723
        %v4755 = vpack.c.b16 %v4726, %v4725
        %v4756 = vpack.c.b16 %v4728, %v4727
        %v4757 = vpack.c.b16 %v4730, %v4729
        %v4758 = vpack.c.b16 %v4732, %v4731
        %v4759 = vpack.c.b16 %v4734, %v4733
        %v4760 = vpack.c.b16 %v4736, %v4735
        %v4761 = vpack.c.b16 %v4738, %v4737
        %v4762 = vpack.c.b16 %v4740, %v4739
        %v4763 = vpack.c.b16 %v4742, %v4741
        %v4764 = vpack.c.b16 %v4744, %v4743
        %v4765 = vpack.c.b16 %v4746, %v4745
        %v4766 = vpack.c.b16 %v4748, %v4747
        %v4767 = vpack.c.b16 %v4750, %v4749
        %v4768 = vpack.c.b16 %v4752, %v4751
        %v4801 = vunpack.c.l.b16 %v4705
        %v4802 = vunpack.c.l.b16 %v4706
        %v4803 = vunpack.c.l.b16 %v4707
        %v4804 = vunpack.c.l.b16 %v4708
        %v4805 = vunpack.c.l.b16 %v4709
        %v4806 = vunpack.c.l.b16 %v4710
        %v4807 = vunpack.c.l.b16 %v4711
        %v4808 = vunpack.c.l.b16 %v4712
        %v4809 = vunpack.c.l.b16 %v4713
        %v4810 = vunpack.c.l.b16 %v4714
        %v4811 = vunpack.c.l.b16 %v4715
        %v4812 = vunpack.c.l.b16 %v4716
        %v4813 = vunpack.c.l.b16 %v4717
        %v4814 = vunpack.c.l.b16 %v4718
        %v4815 = vunpack.c.l.b16 %v4719
        %v4816 = vunpack.c.l.b16 %v4720
        %v4817 = vpack.c.b16 %v4802, %v4801
        %v4818 = vpack.c.b16 %v4804, %v4803
        %v4819 = vpack.c.b16 %v4806, %v4805
        %v4820 = vpack.c.b16 %v4808, %v4807
        %v4821 = vpack.c.b16 %v4810, %v4809
        %v4822 = vpack.c.b16 %v4812, %v4811
        %v4823 = vpack.c.b16 %v4814, %v4813
        %v4824 = vpack.c.b16 %v4816, %v4815
        %4833 = vmatprep.subr.bf16.mxu0 0
        %4834 = vmatpush1.bf16.msra.mxu0 %v4817
        %4835 = vmatprep.subr.bf16.mxu0 0
        %4836 = vmatpush1.bf16.msra.mxu0 %v4818
        %4837 = vmatprep.subr.bf16.mxu0 0
        %4838 = vmatpush1.bf16.msra.mxu0 %v4819
        %4839 = vmatprep.subr.bf16.mxu0 0
        %4840 = vmatpush1.bf16.msra.mxu0 %v4820
        %4841 = vmatprep.subr.bf16.mxu0 0
        %4842 = vmatpush1.bf16.msra.mxu0 %v4821
        %4843 = vmatprep.subr.bf16.mxu0 0
        %4844 = vmatpush1.bf16.msra.mxu0 %v4822
        %4845 = vmatprep.subr.bf16.mxu0 0
        %4846 = vmatpush1.bf16.msra.mxu0 %v4823
        %4847 = vmatprep.subr.bf16.mxu0 0
        %4848 = vmatpush1.bf16.msra.mxu0 %v4824
        %4849 = vmatprep.subr.bf16.mxu0 0
        %4850 = vmatpush1.bf16.msra.mxu0 0
        %4851 = vmatprep.subr.bf16.mxu0 0
        %4852 = vmatpush1.bf16.msra.mxu0 0
        %4853 = vmatprep.subr.bf16.mxu0 0
        %4854 = vmatpush1.bf16.msra.mxu0 0
        %4855 = vmatprep.subr.bf16.mxu0 0
        %4856 = vmatpush1.bf16.msra.mxu0 0
        %4857 = vmatprep.subr.bf16.mxu0 0
        %4858 = vmatpush1.bf16.msra.mxu0 0
        %4859 = vmatprep.subr.bf16.mxu0 0
        %4860 = vmatpush1.bf16.msra.mxu0 0
        %4861 = vmatprep.subr.bf16.mxu0 0
        %4862 = vmatpush1.bf16.msra.mxu0 0
        %4863 = vmatprep.subr.bf16.mxu0 0
        %4864 = vmatpush1.bf16.msra.mxu0 0
        %4865 = vmatprep.mubr.bf16.mxu0 0
        %4866 = vmatmul.mubr.bf16.gmra.mrb[0].mxu0 %v4753
        %v4867 = vpop.f32.mrb[0].mxu0
        %v4868 = vadd.f32 0.0, %v4867
        %v4869 = vpop.f32.mrb[0].mxu0
        %v4870 = vpop.f32.mrb[0].mxu0
        %v4871 = vadd.f32 0.0, %v4870
        %v4872 = vpop.f32.mrb[0].mxu0
        %4873 = vmatprep.mubr.bf16.mxu0 0
        %4874 = vmatmul.mubr.bf16.gmra.mrb[0].mxu0 %v4754
        %v4875 = vpop.f32.mrb[0].mxu0
        %v4876 = vadd.f32 0.0, %v4875
        %v4877 = vpop.f32.mrb[0].mxu0
        %v4878 = vpop.f32.mrb[0].mxu0
        %v4879 = vadd.f32 0.0, %v4878
        %v4880 = vpop.f32.mrb[0].mxu0
        %4881 = vmatprep.mubr.bf16.mxu0 0
        %4882 = vmatmul.mubr.bf16.gmra.mrb[0].mxu0 %v4755
        %v4883 = vpop.f32.mrb[0].mxu0
        %v4884 = vadd.f32 0.0, %v4883
        %v4885 = vpop.f32.mrb[0].mxu0
        %v4886 = vpop.f32.mrb[0].mxu0
        %v4887 = vadd.f32 0.0, %v4886
        %v4888 = vpop.f32.mrb[0].mxu0
        %4889 = vmatprep.mubr.bf16.mxu0 0
        %4890 = vmatmul.mubr.bf16.gmra.mrb[0].mxu0 %v4756
        %v4891 = vpop.f32.mrb[0].mxu0
        %v4892 = vadd.f32 0.0, %v4891
        %v4893 = vpop.f32.mrb[0].mxu0
        %v4894 = vpop.f32.mrb[0].mxu0
        %v4895 = vadd.f32 0.0, %v4894
        %v4896 = vpop.f32.mrb[0].mxu0
        %4897 = vmatprep.mubr.bf16.mxu0 0
        %4898 = vmatmul.mubr.bf16.gmra.mrb[0].mxu0 %v4757
        %v4899 = vpop.f32.mrb[0].mxu0
        %v4900 = vadd.f32 0.0, %v4899
        %v4901 = vpop.f32.mrb[0].mxu0
        %v4902 = vpop.f32.mrb[0].mxu0
        %v4903 = vadd.f32 0.0, %v4902
        %v4904 = vpop.f32.mrb[0].mxu0
        %4905 = vmatprep.mubr.bf16.mxu0 0
        %4906 = vmatmul.mubr.bf16.gmra.mrb[0].mxu0 %v4758
        %v4907 = vpop.f32.mrb[0].mxu0
        %v4908 = vadd.f32 0.0, %v4907
        %v4909 = vpop.f32.mrb[0].mxu0
        %v4910 = vpop.f32.mrb[0].mxu0
        %v4911 = vadd.f32 0.0, %v4910
        %v4912 = vpop.f32.mrb[0].mxu0
        %4913 = vmatprep.mubr.bf16.mxu0 0
        %4914 = vmatmul.mubr.bf16.gmra.mrb[0].mxu0 %v4759
        %v4915 = vpop.f32.mrb[0].mxu0
        %v4916 = vadd.f32 0.0, %v4915
        %v4917 = vpop.f32.mrb[0].mxu0
        %v4918 = vpop.f32.mrb[0].mxu0
        %v4919 = vadd.f32 0.0, %v4918
        %v4920 = vpop.f32.mrb[0].mxu0
        %4921 = vmatprep.mubr.bf16.mxu0 0
        %4922 = vmatmul.mubr.bf16.gmra.mrb[0].mxu0 %v4760
        %v4923 = vpop.f32.mrb[0].mxu0
        %v4924 = vadd.f32 0.0, %v4923
        %v4925 = vpop.f32.mrb[0].mxu0
        %v4926 = vpop.f32.mrb[0].mxu0
        %v4927 = vadd.f32 0.0, %v4926
        %v4928 = vpop.f32.mrb[0].mxu0
        %4929 = vmatprep.mubr.bf16.mxu0 0
        %4930 = vmatmul.mubr.bf16.gmra.mrb[0].mxu0 %v4761
        %v4931 = vpop.f32.mrb[0].mxu0
        %v4932 = vadd.f32 0.0, %v4931
        %v4933 = vpop.f32.mrb[0].mxu0
        %v4934 = vpop.f32.mrb[0].mxu0
        %v4935 = vadd.f32 0.0, %v4934
        %v4936 = vpop.f32.mrb[0].mxu0
        %4937 = vmatprep.mubr.bf16.mxu0 0
        %4938 = vmatmul.mubr.bf16.gmra.mrb[0].mxu0 %v4762
        %v4939 = vpop.f32.mrb[0].mxu0
        %v4940 = vadd.f32 0.0, %v4939
        %v4941 = vpop.f32.mrb[0].mxu0
        %v4942 = vpop.f32.mrb[0].mxu0
        %v4943 = vadd.f32 0.0, %v4942
        %v4944 = vpop.f32.mrb[0].mxu0
        %4945 = vmatprep.mubr.bf16.mxu0 0
        %4946 = vmatmul.mubr.bf16.gmra.mrb[0].mxu0 %v4763
        %v4947 = vpop.f32.mrb[0].mxu0
        %v4948 = vadd.f32 0.0, %v4947
        %v4949 = vpop.f32.mrb[0].mxu0
        %v4950 = vpop.f32.mrb[0].mxu0
        %v4951 = vadd.f32 0.0, %v4950
        %v4952 = vpop.f32.mrb[0].mxu0
        %4953 = vmatprep.mubr.bf16.mxu0 0
        %4954 = vmatmul.mubr.bf16.gmra.mrb[0].mxu0 %v4764
        %v4955 = vpop.f32.mrb[0].mxu0
        %v4956 = vadd.f32 0.0, %v4955
        %v4957 = vpop.f32.mrb[0].mxu0
        %v4958 = vpop.f32.mrb[0].mxu0
        %v4959 = vadd.f32 0.0, %v4958
        %v4960 = vpop.f32.mrb[0].mxu0
        %4961 = vmatprep.mubr.bf16.mxu0 0
        %4962 = vmatmul.mubr.bf16.gmra.mrb[0].mxu0 %v4765
        %v4963 = vpop.f32.mrb[0].mxu0
        %v4964 = vadd.f32 0.0, %v4963
        %v4965 = vpop.f32.mrb[0].mxu0
        %v4966 = vpop.f32.mrb[0].mxu0
        %v4967 = vadd.f32 0.0, %v4966
        %v4968 = vpop.f32.mrb[0].mxu0
        %4969 = vmatprep.mubr.bf16.mxu0 0
        %4970 = vmatmul.mubr.bf16.gmra.mrb[0].mxu0 %v4766
        %v4971 = vpop.f32.mrb[0].mxu0
        %v4972 = vadd.f32 0.0, %v4971
        %v4973 = vpop.f32.mrb[0].mxu0
        %v4974 = vpop.f32.mrb[0].mxu0
        %v4975 = vadd.f32 0.0, %v4974
        %v4976 = vpop.f32.mrb[0].mxu0
        %4977 = vmatprep.mubr.bf16.mxu0 0
        %4978 = vmatmul.mubr.bf16.gmra.mrb[0].mxu0 %v4767
        %v4979 = vpop.f32.mrb[0].mxu0
        %v4980 = vadd.f32 0.0, %v4979
        %v4981 = vpop.f32.mrb[0].mxu0
        %v4982 = vpop.f32.mrb[0].mxu0
        %v4983 = vadd.f32 0.0, %v4982
        %v4984 = vpop.f32.mrb[0].mxu0
        %4985 = vmatprep.mubr.bf16.mxu0 0
        %4986 = vmatmul.mubr.bf16.gmra.mrb[0].mxu0 %v4768
        %v4987 = vpop.f32.mrb[0].mxu0
        %v4988 = vadd.f32 0.0, %v4987
        %v4989 = vpop.f32.mrb[0].mxu0
        %v4990 = vpop.f32.mrb[0].mxu0
        %v4991 = vadd.f32 0.0, %v4990
        %v4992 = vpop.f32.mrb[0].mxu0
        %4993 = vdwg.mxu0
        %v4994 = vadd.f32 %v4496, %v4868
        %v4995 = vadd.f32 %v4497, %v4871
        %v4996 = vadd.f32 %v4498, %v4876
        %v4997 = vadd.f32 %v4499, %v4879
        %v4998 = vadd.f32 %v4500, %v4884
        %v4999 = vadd.f32 %v4501, %v4887
        %v5000 = vadd.f32 %v4502, %v4892
        %v5001 = vadd.f32 %v4503, %v4895
        %v5002 = vadd.f32 %v4504, %v4900
        %v5003 = vadd.f32 %v4505, %v4903
        %v5004 = vadd.f32 %v4506, %v4908
        %v5005 = vadd.f32 %v4507, %v4911
        %v5006 = vadd.f32 %v4508, %v4916
        %v5007 = vadd.f32 %v4509, %v4919
        %v5008 = vadd.f32 %v4510, %v4924
        %v5009 = vadd.f32 %v4511, %v4927
        %v5010 = vadd.f32 %v4512, %v4932
        %v5011 = vadd.f32 %v4513, %v4935
        %v5012 = vadd.f32 %v4514, %v4940
        %v5013 = vadd.f32 %v4515, %v4943
        %v5014 = vadd.f32 %v4516, %v4948
        %v5015 = vadd.f32 %v4517, %v4951
        %v5016 = vadd.f32 %v4518, %v4956
        %v5017 = vadd.f32 %v4519, %v4959
        %v5018 = vadd.f32 %v4520, %v4964
        %v5019 = vadd.f32 %v4521, %v4967
        %v5020 = vadd.f32 %v4522, %v4972
        %v5021 = vadd.f32 %v4523, %v4975
        %v5022 = vadd.f32 %v4524, %v4980
        %v5023 = vadd.f32 %v4525, %v4983
        %v5024 = vadd.f32 %v4526, %v4988
        %v5025 = vadd.f32 %v4527, %v4991
        %v5026 = vld [vmem:[%s2] sm:$0x1]
        %v5028 = vlaneseq
        %v5029 = vshrl.u32 %v5028, 7
        %v5030 = vsub.s32 0, %v5029
        %v5031 = vrot.slane %v5026, %v5030
        %v5033 = vadd.f32 %v4994, %v5031
        %v5034 = vadd.f32 %v4995, %v5031
        %v5035 = vadd.f32 %v4996, %v5031
        %v5036 = vadd.f32 %v4997, %v5031
        %v5037 = vadd.f32 %v4998, %v5031
        %v5038 = vadd.f32 %v4999, %v5031
        %v5039 = vadd.f32 %v5000, %v5031
        %v5040 = vadd.f32 %v5001, %v5031
        %v5041 = vadd.f32 %v5002, %v5031
        %v5042 = vadd.f32 %v5003, %v5031
        %v5043 = vadd.f32 %v5004, %v5031
        %v5044 = vadd.f32 %v5005, %v5031
        %v5045 = vadd.f32 %v5006, %v5031
        %v5046 = vadd.f32 %v5007, %v5031
        %v5047 = vadd.f32 %v5008, %v5031
        %v5048 = vadd.f32 %v5009, %v5031
        %v5049 = vadd.f32 %v5010, %v5031
        %v5050 = vadd.f32 %v5011, %v5031
        %v5051 = vadd.f32 %v5012, %v5031
        %v5052 = vadd.f32 %v5013, %v5031
        %v5053 = vadd.f32 %v5014, %v5031
        %v5054 = vadd.f32 %v5015, %v5031
        %v5055 = vadd.f32 %v5016, %v5031
        %v5056 = vadd.f32 %v5017, %v5031
        %v5057 = vadd.f32 %v5018, %v5031
        %v5058 = vadd.f32 %v5019, %v5031
        %v5059 = vadd.f32 %v5020, %v5031
        %v5060 = vadd.f32 %v5021, %v5031
        %v5061 = vadd.f32 %v5022, %v5031
        %v5062 = vadd.f32 %v5023, %v5031
        %v5063 = vadd.f32 %v5024, %v5031
        %v5064 = vadd.f32 %v5025, %v5031
        %v5065 = vadd.f32 %v5033, %v5034
        %v5066 = vadd.f32 %v5065, %v5035
        %v5067 = vadd.f32 %v5066, %v5036
        %v5068 = vadd.f32 %v5067, %v5037
        %v5069 = vadd.f32 %v5068, %v5038
        %v5070 = vadd.f32 %v5069, %v5039
        %v5071 = vadd.f32 %v5070, %v5040
        %v5072 = vadd.f32 %v5071, %v5041
        %v5073 = vadd.f32 %v5072, %v5042
        %v5074 = vadd.f32 %v5073, %v5043
        %v5075 = vadd.f32 %v5074, %v5044
        %v5076 = vadd.f32 %v5075, %v5045
        %v5077 = vadd.f32 %v5076, %v5046
        %v5078 = vadd.f32 %v5077, %v5047
        %v5079 = vadd.f32 %v5078, %v5048
        %v5080 = vadd.f32 %v5079, %v5049
        %v5081 = vadd.f32 %v5080, %v5050
        %v5082 = vadd.f32 %v5081, %v5051
        %v5083 = vadd.f32 %v5082, %v5052
        %v5084 = vadd.f32 %v5083, %v5053
        %v5085 = vadd.f32 %v5084, %v5054
        %v5086 = vadd.f32 %v5085, %v5055
        %v5087 = vadd.f32 %v5086, %v5056
        %v5088 = vadd.f32 %v5087, %v5057
        %v5089 = vadd.f32 %v5088, %v5058
        %v5090 = vadd.f32 %v5089, %v5059
        %v5091 = vadd.f32 %v5090, %v5060
        %v5092 = vadd.f32 %v5091, %v5061
        %v5093 = vadd.f32 %v5092, %v5062
        %v5094 = vadd.f32 %v5093, %v5063
        %v5095 = vadd.f32 %v5094, %v5064
        %v5096 = vrot.slane %v5095, 4
        %v5097 = vadd.f32 %v5095, %v5096
        %v5098 = vrot.slane %v5097, 2
        %v5099 = vadd.f32 %v5097, %v5098
        %v5100 = vrot.slane %v5099, 1
        %v5101 = vadd.f32 %v5099, %v5100
        %v5102 = vmul.f32 %v5101, 0.00390625
        %v5103 = vsub.f32 %v5033, %v5102
        %v5104 = vsub.f32 %v5034, %v5102
        %v5105 = vsub.f32 %v5035, %v5102
        %v5106 = vsub.f32 %v5036, %v5102
        %v5107 = vsub.f32 %v5037, %v5102
        %v5108 = vsub.f32 %v5038, %v5102
        %v5109 = vsub.f32 %v5039, %v5102
        %v5110 = vsub.f32 %v5040, %v5102
        %v5111 = vsub.f32 %v5041, %v5102
        %v5112 = vsub.f32 %v5042, %v5102
        %v5113 = vsub.f32 %v5043, %v5102
        %v5114 = vsub.f32 %v5044, %v5102
        %v5115 = vsub.f32 %v5045, %v5102
        %v5116 = vsub.f32 %v5046, %v5102
        %v5117 = vsub.f32 %v5047, %v5102
        %v5118 = vsub.f32 %v5048, %v5102
        %v5119 = vsub.f32 %v5049, %v5102
        %v5120 = vsub.f32 %v5050, %v5102
        %v5121 = vsub.f32 %v5051, %v5102
        %v5122 = vsub.f32 %v5052, %v5102
        %v5123 = vsub.f32 %v5053, %v5102
        %v5124 = vsub.f32 %v5054, %v5102
        %v5125 = vsub.f32 %v5055, %v5102
        %v5126 = vsub.f32 %v5056, %v5102
        %v5127 = vsub.f32 %v5057, %v5102
        %v5128 = vsub.f32 %v5058, %v5102
        %v5129 = vsub.f32 %v5059, %v5102
        %v5130 = vsub.f32 %v5060, %v5102
        %v5131 = vsub.f32 %v5061, %v5102
        %v5132 = vsub.f32 %v5062, %v5102
        %v5133 = vsub.f32 %v5063, %v5102
        %v5134 = vsub.f32 %v5064, %v5102
        %v5135 = vmul.f32 %v5103, %v5103
        %v5136 = vmul.f32 %v5104, %v5104
        %v5137 = vmul.f32 %v5105, %v5105
        %v5138 = vmul.f32 %v5106, %v5106
        %v5139 = vmul.f32 %v5107, %v5107
        %v5140 = vmul.f32 %v5108, %v5108
        %v5141 = vmul.f32 %v5109, %v5109
        %v5142 = vmul.f32 %v5110, %v5110
        %v5143 = vmul.f32 %v5111, %v5111
        %v5144 = vmul.f32 %v5112, %v5112
        %v5145 = vmul.f32 %v5113, %v5113
        %v5146 = vmul.f32 %v5114, %v5114
        %v5147 = vmul.f32 %v5115, %v5115
        %v5148 = vmul.f32 %v5116, %v5116
        %v5149 = vmul.f32 %v5117, %v5117
        %v5150 = vmul.f32 %v5118, %v5118
        %v5151 = vmul.f32 %v5119, %v5119
        %v5152 = vmul.f32 %v5120, %v5120
        %v5153 = vmul.f32 %v5121, %v5121
        %v5154 = vmul.f32 %v5122, %v5122
        %v5155 = vmul.f32 %v5123, %v5123
        %v5156 = vmul.f32 %v5124, %v5124
        %v5157 = vmul.f32 %v5125, %v5125
        %v5158 = vmul.f32 %v5126, %v5126
        %v5159 = vmul.f32 %v5127, %v5127
        %v5160 = vmul.f32 %v5128, %v5128
        %v5161 = vmul.f32 %v5129, %v5129
        %v5162 = vmul.f32 %v5130, %v5130
        %v5163 = vmul.f32 %v5131, %v5131
        %v5164 = vmul.f32 %v5132, %v5132
        %v5165 = vmul.f32 %v5133, %v5133
        %v5166 = vmul.f32 %v5134, %v5134
        %v5167 = vadd.f32 %v5135, %v5136
        %v5168 = vadd.f32 %v5167, %v5137
        %v5169 = vadd.f32 %v5168, %v5138
        %v5170 = vadd.f32 %v5169, %v5139
        %v5171 = vadd.f32 %v5170, %v5140
        %v5172 = vadd.f32 %v5171, %v5141
        %v5173 = vadd.f32 %v5172, %v5142
        %v5174 = vadd.f32 %v5173, %v5143
        %v5175 = vadd.f32 %v5174, %v5144
        %v5176 = vadd.f32 %v5175, %v5145
        %v5177 = vadd.f32 %v5176, %v5146
        %v5178 = vadd.f32 %v5177, %v5147
        %v5179 = vadd.f32 %v5178, %v5148
        %v5180 = vadd.f32 %v5179, %v5149
        %v5181 = vadd.f32 %v5180, %v5150
        %v5182 = vadd.f32 %v5181, %v5151
        %v5183 = vadd.f32 %v5182, %v5152
        %v5184 = vadd.f32 %v5183, %v5153
        %v5185 = vadd.f32 %v5184, %v5154
        %v5186 = vadd.f32 %v5185, %v5155
        %v5187 = vadd.f32 %v5186, %v5156
        %v5188 = vadd.f32 %v5187, %v5157
        %v5189 = vadd.f32 %v5188, %v5158
        %v5190 = vadd.f32 %v5189, %v5159
        %v5191 = vadd.f32 %v5190, %v5160
        %v5192 = vadd.f32 %v5191, %v5161
        %v5193 = vadd.f32 %v5192, %v5162
        %v5194 = vadd.f32 %v5193, %v5163
        %v5195 = vadd.f32 %v5194, %v5164
        %v5196 = vadd.f32 %v5195, %v5165
        %v5197 = vadd.f32 %v5196, %v5166
        %v5198 = vrot.slane %v5197, 4
        %v5199 = vadd.f32 %v5197, %v5198
        %v5200 = vrot.slane %v5199, 2
        %v5201 = vadd.f32 %v5199, %v5200
        %v5202 = vrot.slane %v5201, 1
        %v5203 = vadd.f32 %v5201, %v5202
        %v5204 = vmul.f32 %v5203, 0.00390625
        %v5205 = vadd.f32 %v5204, 1e-05
        %v5206 = vrsqrt.pop %v5205
        %v5207 = vmul.f32 %v5103, %v5206
        %v5208 = vmul.f32 %v5104, %v5206
        %v5209 = vmul.f32 %v5105, %v5206
        %v5210 = vmul.f32 %v5106, %v5206
        %v5211 = vmul.f32 %v5107, %v5206
        %v5212 = vmul.f32 %v5108, %v5206
        %v5213 = vmul.f32 %v5109, %v5206
        %v5214 = vmul.f32 %v5110, %v5206
        %v5215 = vmul.f32 %v5111, %v5206
        %v5216 = vmul.f32 %v5112, %v5206
        %v5217 = vmul.f32 %v5113, %v5206
        %v5218 = vmul.f32 %v5114, %v5206
        %v5219 = vmul.f32 %v5115, %v5206
        %v5220 = vmul.f32 %v5116, %v5206
        %v5221 = vmul.f32 %v5117, %v5206
        %v5222 = vmul.f32 %v5118, %v5206
        %v5223 = vmul.f32 %v5119, %v5206
        %v5224 = vmul.f32 %v5120, %v5206
        %v5225 = vmul.f32 %v5121, %v5206
        %v5226 = vmul.f32 %v5122, %v5206
        %v5227 = vmul.f32 %v5123, %v5206
        %v5228 = vmul.f32 %v5124, %v5206
        %v5229 = vmul.f32 %v5125, %v5206
        %v5230 = vmul.f32 %v5126, %v5206
        %v5231 = vmul.f32 %v5127, %v5206
        %v5232 = vmul.f32 %v5128, %v5206
        %v5233 = vmul.f32 %v5129, %v5206
        %v5234 = vmul.f32 %v5130, %v5206
        %v5235 = vmul.f32 %v5131, %v5206
        %v5236 = vmul.f32 %v5132, %v5206
        %v5237 = vmul.f32 %v5133, %v5206
        %v5238 = vmul.f32 %v5134, %v5206
        %v5239 = vld [vmem:[%s215] sm:$0xff]
        %v5240 = vld [vmem:[%s215 + $0x8] sm:$0xff]
        %v5241 = vld [vmem:[%s215 + $0x10] sm:$0xff]
        %v5242 = vld [vmem:[%s215 + $0x18] sm:$0xff]
        %v5243 = vld [vmem:[%s215 + $0x20] sm:$0xff]
        %v5244 = vld [vmem:[%s215 + $0x28] sm:$0xff]
        %v5245 = vld [vmem:[%s215 + $0x30] sm:$0xff]
        %v5246 = vld [vmem:[%s215 + $0x38] sm:$0xff]
        %v5247 = vld [vmem:[%s215 + $0x40] sm:$0xff]
        %v5248 = vld [vmem:[%s215 + $0x48] sm:$0xff]
        %v5249 = vld [vmem:[%s215 + $0x50] sm:$0xff]
        %v5250 = vld [vmem:[%s215 + $0x58] sm:$0xff]
        %v5251 = vld [vmem:[%s215 + $0x60] sm:$0xff]
        %v5252 = vld [vmem:[%s215 + $0x68] sm:$0xff]
        %v5253 = vld [vmem:[%s215 + $0x70] sm:$0xff]
        %v5254 = vld [vmem:[%s215 + $0x78] sm:$0xff]
        %v5255 = vld [vmem:[%s215 + $0x80] sm:$0xff]
        %v5256 = vld [vmem:[%s215 + $0x88] sm:$0xff]
        %v5257 = vld [vmem:[%s215 + $0x90] sm:$0xff]
        %v5258 = vld [vmem:[%s215 + $0x98] sm:$0xff]
        %v5259 = vld [vmem:[%s215 + $0xa0] sm:$0xff]
        %v5260 = vld [vmem:[%s215 + $0xa8] sm:$0xff]
        %v5261 = vld [vmem:[%s215 + $0xb0] sm:$0xff]
        %v5262 = vld [vmem:[%s215 + $0xb8] sm:$0xff]
        %v5263 = vld [vmem:[%s215 + $0xc0] sm:$0xff]
        %v5264 = vld [vmem:[%s215 + $0xc8] sm:$0xff]
        %v5265 = vld [vmem:[%s215 + $0xd0] sm:$0xff]
        %v5266 = vld [vmem:[%s215 + $0xd8] sm:$0xff]
        %v5267 = vld [vmem:[%s215 + $0xe0] sm:$0xff]
        %v5268 = vld [vmem:[%s215 + $0xe8] sm:$0xff]
        %v5269 = vld [vmem:[%s215 + $0xf0] sm:$0xff]
        %v5270 = vld [vmem:[%s215 + $0xf8] sm:$0xff]
        %v5271 = vadd.f32 %v5207, %v5239
        %v5272 = vadd.f32 %v5208, %v5240
        %v5273 = vadd.f32 %v5209, %v5241
        %v5274 = vadd.f32 %v5210, %v5242
        %v5275 = vadd.f32 %v5211, %v5243
        %v5276 = vadd.f32 %v5212, %v5244
        %v5277 = vadd.f32 %v5213, %v5245
        %v5278 = vadd.f32 %v5214, %v5246
        %v5279 = vadd.f32 %v5215, %v5247
        %v5280 = vadd.f32 %v5216, %v5248
        %v5281 = vadd.f32 %v5217, %v5249
        %v5282 = vadd.f32 %v5218, %v5250
        %v5283 = vadd.f32 %v5219, %v5251
        %v5284 = vadd.f32 %v5220, %v5252
        %v5285 = vadd.f32 %v5221, %v5253
        %v5286 = vadd.f32 %v5222, %v5254
        %v5287 = vadd.f32 %v5223, %v5255
        %v5288 = vadd.f32 %v5224, %v5256
        %v5289 = vadd.f32 %v5225, %v5257
        %v5290 = vadd.f32 %v5226, %v5258
        %v5291 = vadd.f32 %v5227, %v5259
        %v5292 = vadd.f32 %v5228, %v5260
        %v5293 = vadd.f32 %v5229, %v5261
        %v5294 = vadd.f32 %v5230, %v5262
        %v5295 = vadd.f32 %v5231, %v5263
        %v5296 = vadd.f32 %v5232, %v5264
        %v5297 = vadd.f32 %v5233, %v5265
        %v5298 = vadd.f32 %v5234, %v5266
        %v5299 = vadd.f32 %v5235, %v5267
        %v5300 = vadd.f32 %v5236, %v5268
        %v5301 = vadd.f32 %v5237, %v5269
        %v5302 = vadd.f32 %v5238, %v5270
        %5303 = vst [vmem:[%s205] sm:$0xff] %v5271
        %5304 = vst [vmem:[%s205 + $0x8] sm:$0xff] %v5272
        %5305 = vst [vmem:[%s205 + $0x10] sm:$0xff] %v5273
        %5306 = vst [vmem:[%s205 + $0x18] sm:$0xff] %v5274
        %5307 = vst [vmem:[%s205 + $0x20] sm:$0xff] %v5275
        %5308 = vst [vmem:[%s205 + $0x28] sm:$0xff] %v5276
        %5309 = vst [vmem:[%s205 + $0x30] sm:$0xff] %v5277
        %5310 = vst [vmem:[%s205 + $0x38] sm:$0xff] %v5278
        %5311 = vst [vmem:[%s205 + $0x40] sm:$0xff] %v5279
        %5312 = vst [vmem:[%s205 + $0x48] sm:$0xff] %v5280
        %5313 = vst [vmem:[%s205 + $0x50] sm:$0xff] %v5281
        %5314 = vst [vmem:[%s205 + $0x58] sm:$0xff] %v5282
        %5315 = vst [vmem:[%s205 + $0x60] sm:$0xff] %v5283
        %5316 = vst [vmem:[%s205 + $0x68] sm:$0xff] %v5284
        %5317 = vst [vmem:[%s205 + $0x70] sm:$0xff] %v5285
        %5318 = vst [vmem:[%s205 + $0x78] sm:$0xff] %v5286
        %5319 = vst [vmem:[%s205 + $0x80] sm:$0xff] %v5287
        %5320 = vst [vmem:[%s205 + $0x88] sm:$0xff] %v5288
        %5321 = vst [vmem:[%s205 + $0x90] sm:$0xff] %v5289
        %5322 = vst [vmem:[%s205 + $0x98] sm:$0xff] %v5290
        %5323 = vst [vmem:[%s205 + $0xa0] sm:$0xff] %v5291
        %5324 = vst [vmem:[%s205 + $0xa8] sm:$0xff] %v5292
        %5325 = vst [vmem:[%s205 + $0xb0] sm:$0xff] %v5293
        %5326 = vst [vmem:[%s205 + $0xb8] sm:$0xff] %v5294
        %5327 = vst [vmem:[%s205 + $0xc0] sm:$0xff] %v5295
        %5328 = vst [vmem:[%s205 + $0xc8] sm:$0xff] %v5296
        %5329 = vst [vmem:[%s205 + $0xd0] sm:$0xff] %v5297
        %5330 = vst [vmem:[%s205 + $0xd8] sm:$0xff] %v5298
        %5331 = vst [vmem:[%s205 + $0xe0] sm:$0xff] %v5299
        %5332 = vst [vmem:[%s205 + $0xe8] sm:$0xff] %v5300
        %5333 = vst [vmem:[%s205 + $0xf0] sm:$0xff] %v5301
        %5334 = vst [vmem:[%s205 + $0xf8] sm:$0xff] %v5302
        %s5335 = sand.u32 %s120, 1
        %s5336 = scalar_lea.sflag [#allocation3], %s5335
        %s5337 = sand.u32 %s120, 1
        %s5338 = smul.addr %s5337, 256
        %s5339 = scalar_lea.vmem [#allocation2], %s5338
        // Predicated region
        $region37: #{a_call__.3} parent=35 // pred_check
          %p5340 = pneg %p130
        $region38: #{a_call__.3} parent=35 // pred_check_branch
          %5342 = sbr.rel (%p5340) target = $region40
        $region39: #{a_call__.3} parent=35 // pred_region
          %s5344 = ssub.s32 4096, 4096
          %5345 = vsyncadd %s5336, %s5344
          %s5346 = smul.addr %s18, 32
          %s5347 = smul.addr %s5346, 128
          %s5348 = scalar_lea.hbm %s4, %s5347
          %s5349 = sshll.u32 %s5339, 4
          %s5350 = int_to_ptr.vmem [resolvable:$true] %s5349
          %5355 = dma.vmem_to_hbm [thread:$0]  %s5350, 4096, %s5348, %s5336, 128, 128, 8
        $region40: #{a_call__.3} parent=35 // pred_fallthru
          _
      $region36: #{a_call__.3} parent=5 // pred_fallthru
        _
      %p5356 = scmp.le.s32.totalorder 2, %s13
      // Predicated region
      $region41: #{a_call__.3} parent=5 // pred_check
        %p5357 = pneg %p5356
      $region42: #{a_call__.3} parent=5 // pred_check_branch
        %5359 = sbr.rel (%p5357) target = $region44
      $region43: #{a_call__.3} parent=5 // pred_region
        %s5360 = ssub.s32 %s13, 2
        // Predicated region
        $region45: #{a_call__.3} parent=43 // pred_check
          %p5361 = pneg %p136
        $region46: #{a_call__.3} parent=43 // pred_check_branch
          %5363 = sbr.rel (%p5361) target = $region48
        $region47: #{a_call__.3} parent=43 // pred_region
          %s5364 = sand.u32 %s121, 1
          %s5365 = scalar_lea.sflag [#allocation3], %s5364
          %s5366 = sand.u32 %s121, 1
          %s5367 = smul.addr %s5366, 256
          %s5368 = scalar_lea.vmem [#allocation2], %s5367
          %5369 = dma.done %s5365, 4096
        $region48: #{a_call__.3} parent=43 // pred_fallthru
          _
      $region44: #{a_call__.3} parent=5 // pred_fallthru
        _
    $region6: #{a_call__.3} parent=1 // loop_footer
      %s17 = sadd.s32 1, %s13
    $region7: #{a_call__.3} parent=1 // loop_footer_branch
      %12 = sbr.rel target = $region3
    $region8: #{a_call__.3} parent=1 // loop_exit
      _
    %5370 = vsyncpa [#allocation3], 1
    %s5371 = scalar_lea.sflag [#allocation3], 1
    %5372 = vsyncpa %s5371, 1

</llo_original>
